<compile_context>
chip_gen: v6e
topology: v6e:2x2x1
jax: 0.10.0
libtpu: 0.0.40
codegen_flags: <defaults>
</compile_context>

<pallas_src>
import functools

import jax
import jax.numpy as jnp
from jax.experimental import pallas as pl
from jax.experimental.pallas import tpu as pltpu

HIDDEN_DIM = 64
INNER_DIM = 128
NUM_HEADS = 8


# -----------------------------------------------------------------------------
# Fully fused forward kernel (single grid point; whole working set < 1 MiB VMEM).
# -----------------------------------------------------------------------------
def _fused_kernel(*refs, num_layers, num_heads):
    # refs = [x, w0x, b0, w0h, (wc_l, b_l) * (num_layers-1),
    #         wq_h, wk_h, wv_h, wproj_h, bproj, wfc1, bfc1, out, seq_scratch]
    x_ref, w0x_ref, b0_ref, w0h_ref = refs[:4]
    rest = refs[4:]
    deep_refs = [(rest[2 * l], rest[2 * l + 1]) for l in range(num_layers - 1)]
    rest = rest[2 * (num_layers - 1):]
    (wq_ref, wk_ref, wv_ref, wproj_ref, bproj_ref,
     wfc1_ref, bfc1_ref, out_ref, seq_ref) = rest

    B, T, D = x_ref.shape
    H = w0h_ref.shape[0]
    C = H
    N = T
    nh = num_heads
    hd = C // nh
    f32 = jnp.float32

    # ---------------- LSTM ----------------
    def cell(gates, c_prev):
        # gate columns are pre-ordered [i, f, o | g]
        sig = jax.nn.sigmoid(gates[:, :3 * H])      # one contiguous 3H slab
        g = jnp.tanh(gates[:, 3 * H:])              # trailing H slab
        i_g = sig[:, :H]
        f_g = sig[:, H:2 * H]
        o_g = sig[:, 2 * H:]
        c_new = f_g * c_prev + i_g * g
        h_new = o_g * jnp.tanh(c_new)
        return h_new, c_new

    # Layer-0 input-to-gate projections for all timesteps in ONE matmul
    # (bias b0 = bih0 + bhh0 folded in).
    x2 = x_ref[...].reshape(B * T, D)                                   # rows (b, t)
    gx0 = jnp.dot(x2, w0x_ref[...], preferred_element_type=f32) + b0_ref[...]
    gx0 = gx0.reshape(B, T, 4 * H)

    w0h = w0h_ref[...]
    deep_w = [(wc_ref[...], b_ref[...]) for wc_ref, b_ref in deep_refs]

    zeros = jnp.zeros((B, H), f32)
    hs = [zeros] * num_layers
    cs = [zeros] * num_layers
    for t in range(T):  # static unroll; T is small, all state stays in VMEM/vregs
        g0 = gx0[:, t, :] + jnp.dot(hs[0], w0h, preferred_element_type=f32)
        hs[0], cs[0] = cell(g0, cs[0])
        for l in range(1, num_layers):
            wc, bl = deep_w[l - 1]
            # one fused K=2H matmul: [input(h from layer below) | hidden(h_self)]
            gl = jnp.dot(jnp.concatenate([hs[l - 1], hs[l]], axis=-1), wc,
                         preferred_element_type=f32) + bl
            hs[l], cs[l] = cell(gl, cs[l])
        # LSTM output sequence stays in VMEM scratch (never touches HBM)
        seq_ref[:, t:t + 1, :] = hs[num_layers - 1][:, None, :]

    seq = seq_ref[...]                               # (B, N, C)

    # ---------------- Attention (head-batched) ----------------
    scale = float(hd) ** -0.5
    xa = seq.reshape(B * N, C)                       # rows (b, n)
    xab = jnp.broadcast_to(xa[None, :, :], (nh, B * N, C))
    q = jnp.einsum('zrc,zcd->zrd', xab, wq_ref[...],
                   preferred_element_type=f32).reshape(nh * B, N, hd)
    k = jnp.einsum('zrc,zcd->zrd', xab, wk_ref[...],
                   preferred_element_type=f32).reshape(nh * B, N, hd)
    v = jnp.einsum('zrc,zcd->zrd', xab, wv_ref[...],
                   preferred_element_type=f32).reshape(nh * B, N, hd)

    s = jnp.einsum('znd,zmd->znm', q, k, preferred_element_type=f32) * scale
    s = s - jnp.max(s, axis=-1, keepdims=True)
    p = jnp.exp(s)
    p = p * pl.reciprocal(jnp.sum(p, axis=-1, keepdims=True), approx=True)
    o = jnp.einsum('znm,zmd->znd', p, v, preferred_element_type=f32)  # (nh*B, N, hd)

    # mean over sequence commutes with the (linear) output projection, so reduce
    # first, then project per head and sum over heads (no lane-dim head concat).
    omean = jnp.mean(o, axis=1).reshape(nh, B, hd)                    # (nh, B, hd)
    pm = jnp.einsum('hbd,hdc->hbc', omean, wproj_ref[...],
                    preferred_element_type=f32)                       # (nh, B, C)
    x_avg = jnp.sum(pm, axis=0) + bproj_ref[...]                      # (B, C)

    # ---------------- fc_1 + ReLU ----------------
    # fc_2 exists in the PyTorch module but is never used in forward(); omitted.
    y = jnp.dot(x_avg, wfc1_ref[...], preferred_element_type=f32) + bfc1_ref[...]
    out_ref[...] = jnp.maximum(y, 0.0)                                # (B, inner)


def _full_spec(arr):
    nd = arr.ndim
    return pl.BlockSpec(arr.shape, lambda i, _nd=nd: (0,) * _nd)


def attention_model_forward(params, x_btd, *, num_heads=NUM_HEADS):
    """x_btd: (B, T, input_dim) float32 -> (B, inner_dim) float32."""
    B, T, _ = x_btd.shape
    num_layers = params["num_layers"]
    H = params["w0h"].shape[0]
    inner = params["wfc1"].shape[1]

    flat_inputs = [x_btd, params["w0x"], params["b0"], params["w0h"]]
    for layer in params["deep"]:
        flat_inputs += [layer["wc"], layer["b"]]
    flat_inputs += [params["wq_h"], params["wk_h"], params["wv_h"],
                    params["wproj_h"], params["bproj"],
                    params["wfc1"], params["bfc1"]]

    kernel = functools.partial(_fused_kernel, num_layers=num_layers,
                               num_heads=num_heads)
    return pl.pallas_call(
        kernel,
        out_shape=jax.ShapeDtypeStruct((B, inner), jnp.float32),
        grid=(1,),
        in_specs=[_full_spec(a) for a in flat_inputs],
        out_specs=pl.BlockSpec((B, inner), lambda i: (0, 0)),
        scratch_shapes=[pltpu.VMEM((B, T, H), jnp.float32)],  # LSTM output sequence
        compiler_params=pltpu.CompilerParams(dimension_semantics=("arbitrary",)),
    )(*flat_inputs)


# -----------------------------------------------------------------------------
# Parameter construction (PyTorch layouts, then pre-transposed / reordered for TPU)
# -----------------------------------------------------------------------------
def init_params(key, input_dim, hidden_dim, num_layers, inner_dim,
                num_heads=NUM_HEADS):
    H = hidden_dim
    C = hidden_dim
    hd = C // num_heads
    scale = 0.1

    def nrm(k, shape):
        return scale * jax.random.normal(k, shape, jnp.float32)

    def reorder(w):  # last dim 4H in PyTorch gate order [i, f, g, o] -> [i, f, o, g]
        return jnp.concatenate([w[..., :2 * H], w[..., 3 * H:], w[..., 2 * H:3 * H]],
                               axis=-1)

    params = {"num_layers": num_layers}

    # LSTM layer 0
    key, k1, k2, k3, k4 = jax.random.split(key, 5)
    wih0 = nrm(k1, (4 * H, input_dim))          # PyTorch layout (4H, D)
    whh0 = nrm(k2, (4 * H, H))
    bih0 = nrm(k3, (4 * H,))
    bhh0 = nrm(k4, (4 * H,))
    params["w0x"] = reorder(wih0.T)                                   # (D, 4H)
    params["w0h"] = reorder(whh0.T)                                   # (H, 4H)
    params["b0"] = reorder((bih0 + bhh0).reshape(1, 4 * H))           # (1, 4H)

    # deeper LSTM layers: fused [input(h below); hidden(h self)] weight (2H, 4H)
    deep = []
    for _ in range(num_layers - 1):
        key, k1, k2, k3, k4 = jax.random.split(key, 5)
        wih = nrm(k1, (4 * H, H))
        whh = nrm(k2, (4 * H, H))
        bih = nrm(k3, (4 * H,))
        bhh = nrm(k4, (4 * H,))
        wc = jnp.concatenate([reorder(wih.T), reorder(whh.T)], axis=0)  # (2H, 4H)
        deep.append({"wc": wc, "b": reorder((bih + bhh).reshape(1, 4 * H))})
    params["deep"] = deep

    # Attention + fc_1
    key, k1, k2, k3, k4, k5 = jax.random.split(key, 6)
    wqkv = nrm(k1, (3 * C, C))                  # qkv_bias=False
    wproj = nrm(k2, (C, C))
    bproj = nrm(k3, (C,))
    w1 = nrm(k4, (inner_dim, C))
    b1 = nrm(k5, (inner_dim,))

    wqkv_t = wqkv.T                             # (C, 3C), cols [q | k | v], head-major

    def split_heads(w_cc):                      # (C, C) -> (nh, C, hd)
        return w_cc.reshape(C, num_heads, hd).transpose(1, 0, 2)

    params["wq_h"] = split_heads(wqkv_t[:, :C])
    params["wk_h"] = split_heads(wqkv_t[:, C:2 * C])
    params["wv_h"] = split_heads(wqkv_t[:, 2 * C:])
    params["wproj_h"] = wproj.T.reshape(num_heads, hd, C)             # (nh, hd, C)
    params["bproj"] = bproj.reshape(1, C)
    params["wfc1"] = w1.T                                             # (C, inner)
    params["bfc1"] = b1.reshape(1, inner_dim)
    # fc_2 exists in the module but is never used in forward(); omitted.
    return params


if __name__ == "__main__":
    # small, deterministic example: batch=2, seq=8, channel(input_dim)=4, 2 LSTM layers
    B, T, channel, num_layers = 2, 8, 4, 2

    key = jax.random.PRNGKey(0)
    key, kx, kp = jax.random.split(key, 3)
    x = jax.random.normal(kx, (B, T, channel), jnp.float32)

    params = init_params(kp, channel, HIDDEN_DIM, num_layers, INNER_DIM)

    out = attention_model_forward(params, x)
    out = jax.block_until_ready(out)
    assert out.shape == (B, INNER_DIM), out.shape
    print("KERNEL_OK")
</pallas_src>

<mosaic_0001>
module attributes {stable_mosaic.version = 11 : i64} {
  func.func @_fused_kernel(%arg0: i32, %arg1: memref<2x8x4xf32, #tpu.memory_space<vmem>>, %arg2: memref<4x256xf32, #tpu.memory_space<vmem>>, %arg3: memref<1x256xf32, #tpu.memory_space<vmem>>, %arg4: memref<64x256xf32, #tpu.memory_space<vmem>>, %arg5: memref<128x256xf32, #tpu.memory_space<vmem>>, %arg6: memref<1x256xf32, #tpu.memory_space<vmem>>, %arg7: memref<8x64x8xf32, #tpu.memory_space<vmem>>, %arg8: memref<8x64x8xf32, #tpu.memory_space<vmem>>, %arg9: memref<8x64x8xf32, #tpu.memory_space<vmem>>, %arg10: memref<8x8x64xf32, #tpu.memory_space<vmem>>, %arg11: memref<1x64xf32, #tpu.memory_space<vmem>>, %arg12: memref<64x128xf32, #tpu.memory_space<vmem>>, %arg13: memref<1x128xf32, #tpu.memory_space<vmem>>, %arg14: memref<2x128xf32, #tpu.memory_space<vmem>>, %arg15: memref<2x8x64xf32, #tpu.memory_space<vmem>>) attributes {dimension_semantics = [#tpu.dimension_semantics<arbitrary>], iteration_bounds = array<i64: 1>, scalar_prefetch = 0 : i64, scratch_operands = 1 : i64, tpu.core_type = #tpu.core_type<tc>, window_params = [{pipeline_mode = #tpu.pipeline_mode<synchronous>, transform_indices = @transform_0, window_bounds = array<i64: 2, 8, 4>}, {pipeline_mode = #tpu.pipeline_mode<synchronous>, transform_indices = @transform_1, window_bounds = array<i64: 4, 256>}, {pipeline_mode = #tpu.pipeline_mode<synchronous>, transform_indices = @transform_2, window_bounds = array<i64: 1, 256>}, {pipeline_mode = #tpu.pipeline_mode<synchronous>, transform_indices = @transform_3, window_bounds = array<i64: 64, 256>}, {pipeline_mode = #tpu.pipeline_mode<synchronous>, transform_indices = @transform_4, window_bounds = array<i64: 128, 256>}, {pipeline_mode = #tpu.pipeline_mode<synchronous>, transform_indices = @transform_5, window_bounds = array<i64: 1, 256>}, {pipeline_mode = #tpu.pipeline_mode<synchronous>, transform_indices = @transform_6, window_bounds = array<i64: 8, 64, 8>}, {pipeline_mode = #tpu.pipeline_mode<synchronous>, transform_indices = @transform_7, window_bounds = array<i64: 8, 64, 8>}, {pipeline_mode = #tpu.pipeline_mode<synchronous>, transform_indices = @transform_8, window_bounds = array<i64: 8, 64, 8>}, {pipeline_mode = #tpu.pipeline_mode<synchronous>, transform_indices = @transform_9, window_bounds = array<i64: 8, 8, 64>}, {pipeline_mode = #tpu.pipeline_mode<synchronous>, transform_indices = @transform_10, window_bounds = array<i64: 1, 64>}, {pipeline_mode = #tpu.pipeline_mode<synchronous>, transform_indices = @transform_11, window_bounds = array<i64: 64, 128>}, {pipeline_mode = #tpu.pipeline_mode<synchronous>, transform_indices = @transform_12, window_bounds = array<i64: 1, 128>}, {pipeline_mode = #tpu.pipeline_mode<synchronous>, transform_indices = @transform_13, window_bounds = array<i64: 2, 128>}]} {
    %c0 = arith.constant 0 : index
    %c0_0 = arith.constant 0 : index
    %c0_1 = arith.constant 0 : index
    %0 = vector.load %arg1[%c0, %c0_0, %c0_1] : memref<2x8x4xf32, #tpu.memory_space<vmem>>, vector<2x8x4xf32>
    %1 = vector.shape_cast %0 : vector<2x8x4xf32> to vector<16x4xf32>
    %c0_2 = arith.constant 0 : index
    %c0_3 = arith.constant 0 : index
    %2 = vector.load %arg2[%c0_2, %c0_3] : memref<4x256xf32, #tpu.memory_space<vmem>>, vector<4x256xf32>
    %cst = arith.constant dense<0.000000e+00> : vector<16x256xf32>
    %3 = tpu.matmul %1, %2, %cst {dimension_numbers = #tpu.dot_dimension_numbers<[1], [0], [0], [1], [0, 0, 1, 1], [], []>} : vector<16x4xf32>, vector<4x256xf32>, vector<16x256xf32> -> vector<16x256xf32>
    %c0_4 = arith.constant 0 : index
    %c0_5 = arith.constant 0 : index
    %4 = vector.load %arg3[%c0_4, %c0_5] : memref<1x256xf32, #tpu.memory_space<vmem>>, vector<1x256xf32>
    %5 = vector.broadcast %4 : vector<1x256xf32> to vector<16x256xf32>
    %6 = arith.addf %3, %5 : vector<16x256xf32>
    %7 = vector.shape_cast %6 : vector<16x256xf32> to vector<2x8x256xf32>
    %c0_6 = arith.constant 0 : index
    %c0_7 = arith.constant 0 : index
    %8 = vector.load %arg4[%c0_6, %c0_7] : memref<64x256xf32, #tpu.memory_space<vmem>>, vector<64x256xf32>
    %c0_8 = arith.constant 0 : index
    %c0_9 = arith.constant 0 : index
    %9 = vector.load %arg5[%c0_8, %c0_9] : memref<128x256xf32, #tpu.memory_space<vmem>>, vector<128x256xf32>
    %c0_10 = arith.constant 0 : index
    %c0_11 = arith.constant 0 : index
    %10 = vector.load %arg6[%c0_10, %c0_11] : memref<1x256xf32, #tpu.memory_space<vmem>>, vector<1x256xf32>
    %cst_12 = arith.constant 0.000000e+00 : f32
    %11 = vector.broadcast %cst_12 : f32 to vector<2x64xf32>
    %12 = vector.extract_strided_slice %7 {offsets = [0, 0, 0], sizes = [2, 1, 256], strides = [1, 1, 1]} : vector<2x8x256xf32> to vector<2x1x256xf32>
    %13 = vector.shape_cast %12 : vector<2x1x256xf32> to vector<2x256xf32>
    %cst_13 = arith.constant dense<0.000000e+00> : vector<2x256xf32>
    %14 = tpu.matmul %11, %8, %cst_13 {dimension_numbers = #tpu.dot_dimension_numbers<[1], [0], [0], [1], [0, 0, 1, 1], [], []>} : vector<2x64xf32>, vector<64x256xf32>, vector<2x256xf32> -> vector<2x256xf32>
    %15 = arith.addf %13, %14 : vector<2x256xf32>
    %16 = vector.extract_strided_slice %15 {offsets = [0, 0], sizes = [2, 192], strides = [1, 1]} : vector<2x256xf32> to vector<2x192xf32>
    %17 = arith.negf %16 : vector<2x192xf32>
    %18 = math.exp %17 : vector<2x192xf32>
    %cst_14 = arith.constant 1.000000e+00 : f32
    %19 = vector.broadcast %cst_14 : f32 to vector<2x192xf32>
    %20 = arith.addf %19, %18 : vector<2x192xf32>
    %21 = arith.divf %19, %20 : vector<2x192xf32>
    %22 = vector.extract_strided_slice %15 {offsets = [0, 192], sizes = [2, 64], strides = [1, 1]} : vector<2x256xf32> to vector<2x64xf32>
    %23 = math.tanh %22 : vector<2x64xf32>
    %24 = vector.extract_strided_slice %21 {offsets = [0, 0], sizes = [2, 64], strides = [1, 1]} : vector<2x192xf32> to vector<2x64xf32>
    %25 = vector.extract_strided_slice %21 {offsets = [0, 64], sizes = [2, 64], strides = [1, 1]} : vector<2x192xf32> to vector<2x64xf32>
    %26 = vector.extract_strided_slice %21 {offsets = [0, 128], sizes = [2, 64], strides = [1, 1]} : vector<2x192xf32> to vector<2x64xf32>
    %27 = arith.mulf %25, %11 : vector<2x64xf32>
    %28 = arith.mulf %24, %23 : vector<2x64xf32>
    %29 = arith.addf %27, %28 : vector<2x64xf32>
    %30 = math.tanh %29 : vector<2x64xf32>
    %31 = arith.mulf %26, %30 : vector<2x64xf32>
    %32 = tpu.concatenate %31, %11 in 1 : vector<2x64xf32>, vector<2x64xf32> -> vector<2x128xf32>
    %cst_15 = arith.constant dense<0.000000e+00> : vector<2x256xf32>
    %33 = tpu.matmul %32, %9, %cst_15 {dimension_numbers = #tpu.dot_dimension_numbers<[1], [0], [0], [1], [0, 0, 1, 1], [], []>} : vector<2x128xf32>, vector<128x256xf32>, vector<2x256xf32> -> vector<2x256xf32>
    %34 = vector.broadcast %10 : vector<1x256xf32> to vector<2x256xf32>
    %35 = arith.addf %33, %34 : vector<2x256xf32>
    %36 = vector.extract_strided_slice %35 {offsets = [0, 0], sizes = [2, 192], strides = [1, 1]} : vector<2x256xf32> to vector<2x192xf32>
    %37 = arith.negf %36 : vector<2x192xf32>
    %38 = math.exp %37 : vector<2x192xf32>
    %cst_16 = arith.constant 1.000000e+00 : f32
    %39 = vector.broadcast %cst_16 : f32 to vector<2x192xf32>
    %40 = arith.addf %39, %38 : vector<2x192xf32>
    %41 = arith.divf %39, %40 : vector<2x192xf32>
    %42 = vector.extract_strided_slice %35 {offsets = [0, 192], sizes = [2, 64], strides = [1, 1]} : vector<2x256xf32> to vector<2x64xf32>
    %43 = math.tanh %42 : vector<2x64xf32>
    %44 = vector.extract_strided_slice %41 {offsets = [0, 0], sizes = [2, 64], strides = [1, 1]} : vector<2x192xf32> to vector<2x64xf32>
    %45 = vector.extract_strided_slice %41 {offsets = [0, 64], sizes = [2, 64], strides = [1, 1]} : vector<2x192xf32> to vector<2x64xf32>
    %46 = vector.extract_strided_slice %41 {offsets = [0, 128], sizes = [2, 64], strides = [1, 1]} : vector<2x192xf32> to vector<2x64xf32>
    %47 = arith.mulf %45, %11 : vector<2x64xf32>
    %48 = arith.mulf %44, %43 : vector<2x64xf32>
    %49 = arith.addf %47, %48 : vector<2x64xf32>
    %50 = math.tanh %49 : vector<2x64xf32>
    %51 = arith.mulf %46, %50 : vector<2x64xf32>
    %52 = vector.shape_cast %51 : vector<2x64xf32> to vector<2x1x64xf32>
    %c0_17 = arith.constant 0 : index
    %c0_18 = arith.constant 0 : index
    %c0_19 = arith.constant 0 : index
    %53 = vector.load %arg15[%c0_17, %c0_18, %c0_19] : memref<2x8x64xf32, #tpu.memory_space<vmem>>, vector<2x1x64xf32>
    tpu.vector_store %arg15[%c0_17, %c0_18, %c0_19], %52 {strides = array<i32>} : memref<2x8x64xf32, #tpu.memory_space<vmem>>, vector<2x1x64xf32>,
    %54 = vector.extract_strided_slice %7 {offsets = [0, 1, 0], sizes = [2, 1, 256], strides = [1, 1, 1]} : vector<2x8x256xf32> to vector<2x1x256xf32>
    %55 = vector.shape_cast %54 : vector<2x1x256xf32> to vector<2x256xf32>
    %cst_20 = arith.constant dense<0.000000e+00> : vector<2x256xf32>
    %56 = tpu.matmul %31, %8, %cst_20 {dimension_numbers = #tpu.dot_dimension_numbers<[1], [0], [0], [1], [0, 0, 1, 1], [], []>} : vector<2x64xf32>, vector<64x256xf32>, vector<2x256xf32> -> vector<2x256xf32>
    %57 = arith.addf %55, %56 : vector<2x256xf32>
    %58 = vector.extract_strided_slice %57 {offsets = [0, 0], sizes = [2, 192], strides = [1, 1]} : vector<2x256xf32> to vector<2x192xf32>
    %59 = arith.negf %58 : vector<2x192xf32>
    %60 = math.exp %59 : vector<2x192xf32>
    %cst_21 = arith.constant 1.000000e+00 : f32
    %61 = vector.broadcast %cst_21 : f32 to vector<2x192xf32>
    %62 = arith.addf %61, %60 : vector<2x192xf32>
    %63 = arith.divf %61, %62 : vector<2x192xf32>
    %64 = vector.extract_strided_slice %57 {offsets = [0, 192], sizes = [2, 64], strides = [1, 1]} : vector<2x256xf32> to vector<2x64xf32>
    %65 = math.tanh %64 : vector<2x64xf32>
    %66 = vector.extract_strided_slice %63 {offsets = [0, 0], sizes = [2, 64], strides = [1, 1]} : vector<2x192xf32> to vector<2x64xf32>
    %67 = vector.extract_strided_slice %63 {offsets = [0, 64], sizes = [2, 64], strides = [1, 1]} : vector<2x192xf32> to vector<2x64xf32>
    %68 = vector.extract_strided_slice %63 {offsets = [0, 128], sizes = [2, 64], strides = [1, 1]} : vector<2x192xf32> to vector<2x64xf32>
    %69 = arith.mulf %67, %29 : vector<2x64xf32>
    %70 = arith.mulf %66, %65 : vector<2x64xf32>
    %71 = arith.addf %69, %70 : vector<2x64xf32>
    %72 = math.tanh %71 : vector<2x64xf32>
    %73 = arith.mulf %68, %72 : vector<2x64xf32>
    %74 = tpu.concatenate %73, %51 in 1 : vector<2x64xf32>, vector<2x64xf32> -> vector<2x128xf32>
    %cst_22 = arith.constant dense<0.000000e+00> : vector<2x256xf32>
    %75 = tpu.matmul %74, %9, %cst_22 {dimension_numbers = #tpu.dot_dimension_numbers<[1], [0], [0], [1], [0, 0, 1, 1], [], []>} : vector<2x128xf32>, vector<128x256xf32>, vector<2x256xf32> -> vector<2x256xf32>
    %76 = vector.broadcast %10 : vector<1x256xf32> to vector<2x256xf32>
    %77 = arith.addf %75, %76 : vector<2x256xf32>
    %78 = vector.extract_strided_slice %77 {offsets = [0, 0], sizes = [2, 192], strides = [1, 1]} : vector<2x256xf32> to vector<2x192xf32>
    %79 = arith.negf %78 : vector<2x192xf32>
    %80 = math.exp %79 : vector<2x192xf32>
    %cst_23 = arith.constant 1.000000e+00 : f32
    %81 = vector.broadcast %cst_23 : f32 to vector<2x192xf32>
    %82 = arith.addf %81, %80 : vector<2x192xf32>
    %83 = arith.divf %81, %82 : vector<2x192xf32>
    %84 = vector.extract_strided_slice %77 {offsets = [0, 192], sizes = [2, 64], strides = [1, 1]} : vector<2x256xf32> to vector<2x64xf32>
    %85 = math.tanh %84 : vector<2x64xf32>
    %86 = vector.extract_strided_slice %83 {offsets = [0, 0], sizes = [2, 64], strides = [1, 1]} : vector<2x192xf32> to vector<2x64xf32>
    %87 = vector.extract_strided_slice %83 {offsets = [0, 64], sizes = [2, 64], strides = [1, 1]} : vector<2x192xf32> to vector<2x64xf32>
    %88 = vector.extract_strided_slice %83 {offsets = [0, 128], sizes = [2, 64], strides = [1, 1]} : vector<2x192xf32> to vector<2x64xf32>
    %89 = arith.mulf %87, %49 : vector<2x64xf32>
    %90 = arith.mulf %86, %85 : vector<2x64xf32>
    %91 = arith.addf %89, %90 : vector<2x64xf32>
    %92 = math.tanh %91 : vector<2x64xf32>
    %93 = arith.mulf %88, %92 : vector<2x64xf32>
    %94 = vector.shape_cast %93 : vector<2x64xf32> to vector<2x1x64xf32>
    %c0_24 = arith.constant 0 : index
    %c1 = arith.constant 1 : index
    %c0_25 = arith.constant 0 : index
    %95 = vector.load %arg15[%c0_24, %c1, %c0_25] : memref<2x8x64xf32, #tpu.memory_space<vmem>>, vector<2x1x64xf32>
    tpu.vector_store %arg15[%c0_24, %c1, %c0_25], %94 {strides = array<i32>} : memref<2x8x64xf32, #tpu.memory_space<vmem>>, vector<2x1x64xf32>,
    %96 = vector.extract_strided_slice %7 {offsets = [0, 2, 0], sizes = [2, 1, 256], strides = [1, 1, 1]} : vector<2x8x256xf32> to vector<2x1x256xf32>
    %97 = vector.shape_cast %96 : vector<2x1x256xf32> to vector<2x256xf32>
    %cst_26 = arith.constant dense<0.000000e+00> : vector<2x256xf32>
    %98 = tpu.matmul %73, %8, %cst_26 {dimension_numbers = #tpu.dot_dimension_numbers<[1], [0], [0], [1], [0, 0, 1, 1], [], []>} : vector<2x64xf32>, vector<64x256xf32>, vector<2x256xf32> -> vector<2x256xf32>
    %99 = arith.addf %97, %98 : vector<2x256xf32>
    %100 = vector.extract_strided_slice %99 {offsets = [0, 0], sizes = [2, 192], strides = [1, 1]} : vector<2x256xf32> to vector<2x192xf32>
    %101 = arith.negf %100 : vector<2x192xf32>
    %102 = math.exp %101 : vector<2x192xf32>
    %cst_27 = arith.constant 1.000000e+00 : f32
    %103 = vector.broadcast %cst_27 : f32 to vector<2x192xf32>
    %104 = arith.addf %103, %102 : vector<2x192xf32>
    %105 = arith.divf %103, %104 : vector<2x192xf32>
    %106 = vector.extract_strided_slice %99 {offsets = [0, 192], sizes = [2, 64], strides = [1, 1]} : vector<2x256xf32> to vector<2x64xf32>
    %107 = math.tanh %106 : vector<2x64xf32>
    %108 = vector.extract_strided_slice %105 {offsets = [0, 0], sizes = [2, 64], strides = [1, 1]} : vector<2x192xf32> to vector<2x64xf32>
    %109 = vector.extract_strided_slice %105 {offsets = [0, 64], sizes = [2, 64], strides = [1, 1]} : vector<2x192xf32> to vector<2x64xf32>
    %110 = vector.extract_strided_slice %105 {offsets = [0, 128], sizes = [2, 64], strides = [1, 1]} : vector<2x192xf32> to vector<2x64xf32>
    %111 = arith.mulf %109, %71 : vector<2x64xf32>
    %112 = arith.mulf %108, %107 : vector<2x64xf32>
    %113 = arith.addf %111, %112 : vector<2x64xf32>
    %114 = math.tanh %113 : vector<2x64xf32>
    %115 = arith.mulf %110, %114 : vector<2x64xf32>
    %116 = tpu.concatenate %115, %93 in 1 : vector<2x64xf32>, vector<2x64xf32> -> vector<2x128xf32>
    %cst_28 = arith.constant dense<0.000000e+00> : vector<2x256xf32>
    %117 = tpu.matmul %116, %9, %cst_28 {dimension_numbers = #tpu.dot_dimension_numbers<[1], [0], [0], [1], [0, 0, 1, 1], [], []>} : vector<2x128xf32>, vector<128x256xf32>, vector<2x256xf32> -> vector<2x256xf32>
    %118 = vector.broadcast %10 : vector<1x256xf32> to vector<2x256xf32>
    %119 = arith.addf %117, %118 : vector<2x256xf32>
    %120 = vector.extract_strided_slice %119 {offsets = [0, 0], sizes = [2, 192], strides = [1, 1]} : vector<2x256xf32> to vector<2x192xf32>
    %121 = arith.negf %120 : vector<2x192xf32>
    %122 = math.exp %121 : vector<2x192xf32>
    %cst_29 = arith.constant 1.000000e+00 : f32
    %123 = vector.broadcast %cst_29 : f32 to vector<2x192xf32>
    %124 = arith.addf %123, %122 : vector<2x192xf32>
    %125 = arith.divf %123, %124 : vector<2x192xf32>
    %126 = vector.extract_strided_slice %119 {offsets = [0, 192], sizes = [2, 64], strides = [1, 1]} : vector<2x256xf32> to vector<2x64xf32>
    %127 = math.tanh %126 : vector<2x64xf32>
    %128 = vector.extract_strided_slice %125 {offsets = [0, 0], sizes = [2, 64], strides = [1, 1]} : vector<2x192xf32> to vector<2x64xf32>
    %129 = vector.extract_strided_slice %125 {offsets = [0, 64], sizes = [2, 64], strides = [1, 1]} : vector<2x192xf32> to vector<2x64xf32>
    %130 = vector.extract_strided_slice %125 {offsets = [0, 128], sizes = [2, 64], strides = [1, 1]} : vector<2x192xf32> to vector<2x64xf32>
    %131 = arith.mulf %129, %91 : vector<2x64xf32>
    %132 = arith.mulf %128, %127 : vector<2x64xf32>
    %133 = arith.addf %131, %132 : vector<2x64xf32>
    %134 = math.tanh %133 : vector<2x64xf32>
    %135 = arith.mulf %130, %134 : vector<2x64xf32>
    %136 = vector.shape_cast %135 : vector<2x64xf32> to vector<2x1x64xf32>
    %c0_30 = arith.constant 0 : index
    %c2 = arith.constant 2 : index
    %c0_31 = arith.constant 0 : index
    %137 = vector.load %arg15[%c0_30, %c2, %c0_31] : memref<2x8x64xf32, #tpu.memory_space<vmem>>, vector<2x1x64xf32>
    tpu.vector_store %arg15[%c0_30, %c2, %c0_31], %136 {strides = array<i32>} : memref<2x8x64xf32, #tpu.memory_space<vmem>>, vector<2x1x64xf32>,
    %138 = vector.extract_strided_slice %7 {offsets = [0, 3, 0], sizes = [2, 1, 256], strides = [1, 1, 1]} : vector<2x8x256xf32> to vector<2x1x256xf32>
    %139 = vector.shape_cast %138 : vector<2x1x256xf32> to vector<2x256xf32>
    %cst_32 = arith.constant dense<0.000000e+00> : vector<2x256xf32>
    %140 = tpu.matmul %115, %8, %cst_32 {dimension_numbers = #tpu.dot_dimension_numbers<[1], [0], [0], [1], [0, 0, 1, 1], [], []>} : vector<2x64xf32>, vector<64x256xf32>, vector<2x256xf32> -> vector<2x256xf32>
    %141 = arith.addf %139, %140 : vector<2x256xf32>
    %142 = vector.extract_strided_slice %141 {offsets = [0, 0], sizes = [2, 192], strides = [1, 1]} : vector<2x256xf32> to vector<2x192xf32>
    %143 = arith.negf %142 : vector<2x192xf32>
    %144 = math.exp %143 : vector<2x192xf32>
    %cst_33 = arith.constant 1.000000e+00 : f32
    %145 = vector.broadcast %cst_33 : f32 to vector<2x192xf32>
    %146 = arith.addf %145, %144 : vector<2x192xf32>
    %147 = arith.divf %145, %146 : vector<2x192xf32>
    %148 = vector.extract_strided_slice %141 {offsets = [0, 192], sizes = [2, 64], strides = [1, 1]} : vector<2x256xf32> to vector<2x64xf32>
    %149 = math.tanh %148 : vector<2x64xf32>
    %150 = vector.extract_strided_slice %147 {offsets = [0, 0], sizes = [2, 64], strides = [1, 1]} : vector<2x192xf32> to vector<2x64xf32>
    %151 = vector.extract_strided_slice %147 {offsets = [0, 64], sizes = [2, 64], strides = [1, 1]} : vector<2x192xf32> to vector<2x64xf32>
    %152 = vector.extract_strided_slice %147 {offsets = [0, 128], sizes = [2, 64], strides = [1, 1]} : vector<2x192xf32> to vector<2x64xf32>
    %153 = arith.mulf %151, %113 : vector<2x64xf32>
    %154 = arith.mulf %150, %149 : vector<2x64xf32>
    %155 = arith.addf %153, %154 : vector<2x64xf32>
    %156 = math.tanh %155 : vector<2x64xf32>
    %157 = arith.mulf %152, %156 : vector<2x64xf32>
    %158 = tpu.concatenate %157, %135 in 1 : vector<2x64xf32>, vector<2x64xf32> -> vector<2x128xf32>
    %cst_34 = arith.constant dense<0.000000e+00> : vector<2x256xf32>
    %159 = tpu.matmul %158, %9, %cst_34 {dimension_numbers = #tpu.dot_dimension_numbers<[1], [0], [0], [1], [0, 0, 1, 1], [], []>} : vector<2x128xf32>, vector<128x256xf32>, vector<2x256xf32> -> vector<2x256xf32>
    %160 = vector.broadcast %10 : vector<1x256xf32> to vector<2x256xf32>
    %161 = arith.addf %159, %160 : vector<2x256xf32>
    %162 = vector.extract_strided_slice %161 {offsets = [0, 0], sizes = [2, 192], strides = [1, 1]} : vector<2x256xf32> to vector<2x192xf32>
    %163 = arith.negf %162 : vector<2x192xf32>
    %164 = math.exp %163 : vector<2x192xf32>
    %cst_35 = arith.constant 1.000000e+00 : f32
    %165 = vector.broadcast %cst_35 : f32 to vector<2x192xf32>
    %166 = arith.addf %165, %164 : vector<2x192xf32>
    %167 = arith.divf %165, %166 : vector<2x192xf32>
    %168 = vector.extract_strided_slice %161 {offsets = [0, 192], sizes = [2, 64], strides = [1, 1]} : vector<2x256xf32> to vector<2x64xf32>
    %169 = math.tanh %168 : vector<2x64xf32>
    %170 = vector.extract_strided_slice %167 {offsets = [0, 0], sizes = [2, 64], strides = [1, 1]} : vector<2x192xf32> to vector<2x64xf32>
    %171 = vector.extract_strided_slice %167 {offsets = [0, 64], sizes = [2, 64], strides = [1, 1]} : vector<2x192xf32> to vector<2x64xf32>
    %172 = vector.extract_strided_slice %167 {offsets = [0, 128], sizes = [2, 64], strides = [1, 1]} : vector<2x192xf32> to vector<2x64xf32>
    %173 = arith.mulf %171, %133 : vector<2x64xf32>
    %174 = arith.mulf %170, %169 : vector<2x64xf32>
    %175 = arith.addf %173, %174 : vector<2x64xf32>
    %176 = math.tanh %175 : vector<2x64xf32>
    %177 = arith.mulf %172, %176 : vector<2x64xf32>
    %178 = vector.shape_cast %177 : vector<2x64xf32> to vector<2x1x64xf32>
    %c0_36 = arith.constant 0 : index
    %c3 = arith.constant 3 : index
    %c0_37 = arith.constant 0 : index
    %179 = vector.load %arg15[%c0_36, %c3, %c0_37] : memref<2x8x64xf32, #tpu.memory_space<vmem>>, vector<2x1x64xf32>
    tpu.vector_store %arg15[%c0_36, %c3, %c0_37], %178 {strides = array<i32>} : memref<2x8x64xf32, #tpu.memory_space<vmem>>, vector<2x1x64xf32>,
    %180 = vector.extract_strided_slice %7 {offsets = [0, 4, 0], sizes = [2, 1, 256], strides = [1, 1, 1]} : vector<2x8x256xf32> to vector<2x1x256xf32>
    %181 = vector.shape_cast %180 : vector<2x1x256xf32> to vector<2x256xf32>
    %cst_38 = arith.constant dense<0.000000e+00> : vector<2x256xf32>
    %182 = tpu.matmul %157, %8, %cst_38 {dimension_numbers = #tpu.dot_dimension_numbers<[1], [0], [0], [1], [0, 0, 1, 1], [], []>} : vector<2x64xf32>, vector<64x256xf32>, vector<2x256xf32> -> vector<2x256xf32>
    %183 = arith.addf %181, %182 : vector<2x256xf32>
    %184 = vector.extract_strided_slice %183 {offsets = [0, 0], sizes = [2, 192], strides = [1, 1]} : vector<2x256xf32> to vector<2x192xf32>
    %185 = arith.negf %184 : vector<2x192xf32>
    %186 = math.exp %185 : vector<2x192xf32>
    %cst_39 = arith.constant 1.000000e+00 : f32
    %187 = vector.broadcast %cst_39 : f32 to vector<2x192xf32>
    %188 = arith.addf %187, %186 : vector<2x192xf32>
    %189 = arith.divf %187, %188 : vector<2x192xf32>
    %190 = vector.extract_strided_slice %183 {offsets = [0, 192], sizes = [2, 64], strides = [1, 1]} : vector<2x256xf32> to vector<2x64xf32>
    %191 = math.tanh %190 : vector<2x64xf32>
    %192 = vector.extract_strided_slice %189 {offsets = [0, 0], sizes = [2, 64], strides = [1, 1]} : vector<2x192xf32> to vector<2x64xf32>
    %193 = vector.extract_strided_slice %189 {offsets = [0, 64], sizes = [2, 64], strides = [1, 1]} : vector<2x192xf32> to vector<2x64xf32>
    %194 = vector.extract_strided_slice %189 {offsets = [0, 128], sizes = [2, 64], strides = [1, 1]} : vector<2x192xf32> to vector<2x64xf32>
    %195 = arith.mulf %193, %155 : vector<2x64xf32>
    %196 = arith.mulf %192, %191 : vector<2x64xf32>
    %197 = arith.addf %195, %196 : vector<2x64xf32>
    %198 = math.tanh %197 : vector<2x64xf32>
    %199 = arith.mulf %194, %198 : vector<2x64xf32>
    %200 = tpu.concatenate %199, %177 in 1 : vector<2x64xf32>, vector<2x64xf32> -> vector<2x128xf32>
    %cst_40 = arith.constant dense<0.000000e+00> : vector<2x256xf32>
    %201 = tpu.matmul %200, %9, %cst_40 {dimension_numbers = #tpu.dot_dimension_numbers<[1], [0], [0], [1], [0, 0, 1, 1], [], []>} : vector<2x128xf32>, vector<128x256xf32>, vector<2x256xf32> -> vector<2x256xf32>
    %202 = vector.broadcast %10 : vector<1x256xf32> to vector<2x256xf32>
    %203 = arith.addf %201, %202 : vector<2x256xf32>
    %204 = vector.extract_strided_slice %203 {offsets = [0, 0], sizes = [2, 192], strides = [1, 1]} : vector<2x256xf32> to vector<2x192xf32>
    %205 = arith.negf %204 : vector<2x192xf32>
    %206 = math.exp %205 : vector<2x192xf32>
    %cst_41 = arith.constant 1.000000e+00 : f32
    %207 = vector.broadcast %cst_41 : f32 to vector<2x192xf32>
    %208 = arith.addf %207, %206 : vector<2x192xf32>
    %209 = arith.divf %207, %208 : vector<2x192xf32>
    %210 = vector.extract_strided_slice %203 {offsets = [0, 192], sizes = [2, 64], strides = [1, 1]} : vector<2x256xf32> to vector<2x64xf32>
    %211 = math.tanh %210 : vector<2x64xf32>
    %212 = vector.extract_strided_slice %209 {offsets = [0, 0], sizes = [2, 64], strides = [1, 1]} : vector<2x192xf32> to vector<2x64xf32>
    %213 = vector.extract_strided_slice %209 {offsets = [0, 64], sizes = [2, 64], strides = [1, 1]} : vector<2x192xf32> to vector<2x64xf32>
    %214 = vector.extract_strided_slice %209 {offsets = [0, 128], sizes = [2, 64], strides = [1, 1]} : vector<2x192xf32> to vector<2x64xf32>
    %215 = arith.mulf %213, %175 : vector<2x64xf32>
    %216 = arith.mulf %212, %211 : vector<2x64xf32>
    %217 = arith.addf %215, %216 : vector<2x64xf32>
    %218 = math.tanh %217 : vector<2x64xf32>
    %219 = arith.mulf %214, %218 : vector<2x64xf32>
    %220 = vector.shape_cast %219 : vector<2x64xf32> to vector<2x1x64xf32>
    %c0_42 = arith.constant 0 : index
    %c4 = arith.constant 4 : index
    %c0_43 = arith.constant 0 : index
    %221 = vector.load %arg15[%c0_42, %c4, %c0_43] : memref<2x8x64xf32, #tpu.memory_space<vmem>>, vector<2x1x64xf32>
    tpu.vector_store %arg15[%c0_42, %c4, %c0_43], %220 {strides = array<i32>} : memref<2x8x64xf32, #tpu.memory_space<vmem>>, vector<2x1x64xf32>,
    %222 = vector.extract_strided_slice %7 {offsets = [0, 5, 0], sizes = [2, 1, 256], strides = [1, 1, 1]} : vector<2x8x256xf32> to vector<2x1x256xf32>
    %223 = vector.shape_cast %222 : vector<2x1x256xf32> to vector<2x256xf32>
    %cst_44 = arith.constant dense<0.000000e+00> : vector<2x256xf32>
    %224 = tpu.matmul %199, %8, %cst_44 {dimension_numbers = #tpu.dot_dimension_numbers<[1], [0], [0], [1], [0, 0, 1, 1], [], []>} : vector<2x64xf32>, vector<64x256xf32>, vector<2x256xf32> -> vector<2x256xf32>
    %225 = arith.addf %223, %224 : vector<2x256xf32>
    %226 = vector.extract_strided_slice %225 {offsets = [0, 0], sizes = [2, 192], strides = [1, 1]} : vector<2x256xf32> to vector<2x192xf32>
    %227 = arith.negf %226 : vector<2x192xf32>
    %228 = math.exp %227 : vector<2x192xf32>
    %cst_45 = arith.constant 1.000000e+00 : f32
    %229 = vector.broadcast %cst_45 : f32 to vector<2x192xf32>
    %230 = arith.addf %229, %228 : vector<2x192xf32>
    %231 = arith.divf %229, %230 : vector<2x192xf32>
    %232 = vector.extract_strided_slice %225 {offsets = [0, 192], sizes = [2, 64], strides = [1, 1]} : vector<2x256xf32> to vector<2x64xf32>
    %233 = math.tanh %232 : vector<2x64xf32>
    %234 = vector.extract_strided_slice %231 {offsets = [0, 0], sizes = [2, 64], strides = [1, 1]} : vector<2x192xf32> to vector<2x64xf32>
    %235 = vector.extract_strided_slice %231 {offsets = [0, 64], sizes = [2, 64], strides = [1, 1]} : vector<2x192xf32> to vector<2x64xf32>
    %236 = vector.extract_strided_slice %231 {offsets = [0, 128], sizes = [2, 64], strides = [1, 1]} : vector<2x192xf32> to vector<2x64xf32>
    %237 = arith.mulf %235, %197 : vector<2x64xf32>
    %238 = arith.mulf %234, %233 : vector<2x64xf32>
    %239 = arith.addf %237, %238 : vector<2x64xf32>
    %240 = math.tanh %239 : vector<2x64xf32>
    %241 = arith.mulf %236, %240 : vector<2x64xf32>
    %242 = tpu.concatenate %241, %219 in 1 : vector<2x64xf32>, vector<2x64xf32> -> vector<2x128xf32>
    %cst_46 = arith.constant dense<0.000000e+00> : vector<2x256xf32>
    %243 = tpu.matmul %242, %9, %cst_46 {dimension_numbers = #tpu.dot_dimension_numbers<[1], [0], [0], [1], [0, 0, 1, 1], [], []>} : vector<2x128xf32>, vector<128x256xf32>, vector<2x256xf32> -> vector<2x256xf32>
    %244 = vector.broadcast %10 : vector<1x256xf32> to vector<2x256xf32>
    %245 = arith.addf %243, %244 : vector<2x256xf32>
    %246 = vector.extract_strided_slice %245 {offsets = [0, 0], sizes = [2, 192], strides = [1, 1]} : vector<2x256xf32> to vector<2x192xf32>
    %247 = arith.negf %246 : vector<2x192xf32>
    %248 = math.exp %247 : vector<2x192xf32>
    %cst_47 = arith.constant 1.000000e+00 : f32
    %249 = vector.broadcast %cst_47 : f32 to vector<2x192xf32>
    %250 = arith.addf %249, %248 : vector<2x192xf32>
    %251 = arith.divf %249, %250 : vector<2x192xf32>
    %252 = vector.extract_strided_slice %245 {offsets = [0, 192], sizes = [2, 64], strides = [1, 1]} : vector<2x256xf32> to vector<2x64xf32>
    %253 = math.tanh %252 : vector<2x64xf32>
    %254 = vector.extract_strided_slice %251 {offsets = [0, 0], sizes = [2, 64], strides = [1, 1]} : vector<2x192xf32> to vector<2x64xf32>
    %255 = vector.extract_strided_slice %251 {offsets = [0, 64], sizes = [2, 64], strides = [1, 1]} : vector<2x192xf32> to vector<2x64xf32>
    %256 = vector.extract_strided_slice %251 {offsets = [0, 128], sizes = [2, 64], strides = [1, 1]} : vector<2x192xf32> to vector<2x64xf32>
    %257 = arith.mulf %255, %217 : vector<2x64xf32>
    %258 = arith.mulf %254, %253 : vector<2x64xf32>
    %259 = arith.addf %257, %258 : vector<2x64xf32>
    %260 = math.tanh %259 : vector<2x64xf32>
    %261 = arith.mulf %256, %260 : vector<2x64xf32>
    %262 = vector.shape_cast %261 : vector<2x64xf32> to vector<2x1x64xf32>
    %c0_48 = arith.constant 0 : index
    %c5 = arith.constant 5 : index
    %c0_49 = arith.constant 0 : index
    %263 = vector.load %arg15[%c0_48, %c5, %c0_49] : memref<2x8x64xf32, #tpu.memory_space<vmem>>, vector<2x1x64xf32>
    tpu.vector_store %arg15[%c0_48, %c5, %c0_49], %262 {strides = array<i32>} : memref<2x8x64xf32, #tpu.memory_space<vmem>>, vector<2x1x64xf32>,
    %264 = vector.extract_strided_slice %7 {offsets = [0, 6, 0], sizes = [2, 1, 256], strides = [1, 1, 1]} : vector<2x8x256xf32> to vector<2x1x256xf32>
    %265 = vector.shape_cast %264 : vector<2x1x256xf32> to vector<2x256xf32>
    %cst_50 = arith.constant dense<0.000000e+00> : vector<2x256xf32>
    %266 = tpu.matmul %241, %8, %cst_50 {dimension_numbers = #tpu.dot_dimension_numbers<[1], [0], [0], [1], [0, 0, 1, 1], [], []>} : vector<2x64xf32>, vector<64x256xf32>, vector<2x256xf32> -> vector<2x256xf32>
    %267 = arith.addf %265, %266 : vector<2x256xf32>
    %268 = vector.extract_strided_slice %267 {offsets = [0, 0], sizes = [2, 192], strides = [1, 1]} : vector<2x256xf32> to vector<2x192xf32>
    %269 = arith.negf %268 : vector<2x192xf32>
    %270 = math.exp %269 : vector<2x192xf32>
    %cst_51 = arith.constant 1.000000e+00 : f32
    %271 = vector.broadcast %cst_51 : f32 to vector<2x192xf32>
    %272 = arith.addf %271, %270 : vector<2x192xf32>
    %273 = arith.divf %271, %272 : vector<2x192xf32>
    %274 = vector.extract_strided_slice %267 {offsets = [0, 192], sizes = [2, 64], strides = [1, 1]} : vector<2x256xf32> to vector<2x64xf32>
    %275 = math.tanh %274 : vector<2x64xf32>
    %276 = vector.extract_strided_slice %273 {offsets = [0, 0], sizes = [2, 64], strides = [1, 1]} : vector<2x192xf32> to vector<2x64xf32>
    %277 = vector.extract_strided_slice %273 {offsets = [0, 64], sizes = [2, 64], strides = [1, 1]} : vector<2x192xf32> to vector<2x64xf32>
    %278 = vector.extract_strided_slice %273 {offsets = [0, 128], sizes = [2, 64], strides = [1, 1]} : vector<2x192xf32> to vector<2x64xf32>
    %279 = arith.mulf %277, %239 : vector<2x64xf32>
    %280 = arith.mulf %276, %275 : vector<2x64xf32>
    %281 = arith.addf %279, %280 : vector<2x64xf32>
    %282 = math.tanh %281 : vector<2x64xf32>
    %283 = arith.mulf %278, %282 : vector<2x64xf32>
    %284 = tpu.concatenate %283, %261 in 1 : vector<2x64xf32>, vector<2x64xf32> -> vector<2x128xf32>
    %cst_52 = arith.constant dense<0.000000e+00> : vector<2x256xf32>
    %285 = tpu.matmul %284, %9, %cst_52 {dimension_numbers = #tpu.dot_dimension_numbers<[1], [0], [0], [1], [0, 0, 1, 1], [], []>} : vector<2x128xf32>, vector<128x256xf32>, vector<2x256xf32> -> vector<2x256xf32>
    %286 = vector.broadcast %10 : vector<1x256xf32> to vector<2x256xf32>
    %287 = arith.addf %285, %286 : vector<2x256xf32>
    %288 = vector.extract_strided_slice %287 {offsets = [0, 0], sizes = [2, 192], strides = [1, 1]} : vector<2x256xf32> to vector<2x192xf32>
    %289 = arith.negf %288 : vector<2x192xf32>
    %290 = math.exp %289 : vector<2x192xf32>
    %cst_53 = arith.constant 1.000000e+00 : f32
    %291 = vector.broadcast %cst_53 : f32 to vector<2x192xf32>
    %292 = arith.addf %291, %290 : vector<2x192xf32>
    %293 = arith.divf %291, %292 : vector<2x192xf32>
    %294 = vector.extract_strided_slice %287 {offsets = [0, 192], sizes = [2, 64], strides = [1, 1]} : vector<2x256xf32> to vector<2x64xf32>
    %295 = math.tanh %294 : vector<2x64xf32>
    %296 = vector.extract_strided_slice %293 {offsets = [0, 0], sizes = [2, 64], strides = [1, 1]} : vector<2x192xf32> to vector<2x64xf32>
    %297 = vector.extract_strided_slice %293 {offsets = [0, 64], sizes = [2, 64], strides = [1, 1]} : vector<2x192xf32> to vector<2x64xf32>
    %298 = vector.extract_strided_slice %293 {offsets = [0, 128], sizes = [2, 64], strides = [1, 1]} : vector<2x192xf32> to vector<2x64xf32>
    %299 = arith.mulf %297, %259 : vector<2x64xf32>
    %300 = arith.mulf %296, %295 : vector<2x64xf32>
    %301 = arith.addf %299, %300 : vector<2x64xf32>
    %302 = math.tanh %301 : vector<2x64xf32>
    %303 = arith.mulf %298, %302 : vector<2x64xf32>
    %304 = vector.shape_cast %303 : vector<2x64xf32> to vector<2x1x64xf32>
    %c0_54 = arith.constant 0 : index
    %c6 = arith.constant 6 : index
    %c0_55 = arith.constant 0 : index
    %305 = vector.load %arg15[%c0_54, %c6, %c0_55] : memref<2x8x64xf32, #tpu.memory_space<vmem>>, vector<2x1x64xf32>
    tpu.vector_store %arg15[%c0_54, %c6, %c0_55], %304 {strides = array<i32>} : memref<2x8x64xf32, #tpu.memory_space<vmem>>, vector<2x1x64xf32>,
    %306 = vector.extract_strided_slice %7 {offsets = [0, 7, 0], sizes = [2, 1, 256], strides = [1, 1, 1]} : vector<2x8x256xf32> to vector<2x1x256xf32>
    %307 = vector.shape_cast %306 : vector<2x1x256xf32> to vector<2x256xf32>
    %cst_56 = arith.constant dense<0.000000e+00> : vector<2x256xf32>
    %308 = tpu.matmul %283, %8, %cst_56 {dimension_numbers = #tpu.dot_dimension_numbers<[1], [0], [0], [1], [0, 0, 1, 1], [], []>} : vector<2x64xf32>, vector<64x256xf32>, vector<2x256xf32> -> vector<2x256xf32>
    %309 = arith.addf %307, %308 : vector<2x256xf32>
    %310 = vector.extract_strided_slice %309 {offsets = [0, 0], sizes = [2, 192], strides = [1, 1]} : vector<2x256xf32> to vector<2x192xf32>
    %311 = arith.negf %310 : vector<2x192xf32>
    %312 = math.exp %311 : vector<2x192xf32>
    %cst_57 = arith.constant 1.000000e+00 : f32
    %313 = vector.broadcast %cst_57 : f32 to vector<2x192xf32>
    %314 = arith.addf %313, %312 : vector<2x192xf32>
    %315 = arith.divf %313, %314 : vector<2x192xf32>
    %316 = vector.extract_strided_slice %309 {offsets = [0, 192], sizes = [2, 64], strides = [1, 1]} : vector<2x256xf32> to vector<2x64xf32>
    %317 = math.tanh %316 : vector<2x64xf32>
    %318 = vector.extract_strided_slice %315 {offsets = [0, 0], sizes = [2, 64], strides = [1, 1]} : vector<2x192xf32> to vector<2x64xf32>
    %319 = vector.extract_strided_slice %315 {offsets = [0, 64], sizes = [2, 64], strides = [1, 1]} : vector<2x192xf32> to vector<2x64xf32>
    %320 = vector.extract_strided_slice %315 {offsets = [0, 128], sizes = [2, 64], strides = [1, 1]} : vector<2x192xf32> to vector<2x64xf32>
    %321 = arith.mulf %319, %281 : vector<2x64xf32>
    %322 = arith.mulf %318, %317 : vector<2x64xf32>
    %323 = arith.addf %321, %322 : vector<2x64xf32>
    %324 = math.tanh %323 : vector<2x64xf32>
    %325 = arith.mulf %320, %324 : vector<2x64xf32>
    %326 = tpu.concatenate %325, %303 in 1 : vector<2x64xf32>, vector<2x64xf32> -> vector<2x128xf32>
    %cst_58 = arith.constant dense<0.000000e+00> : vector<2x256xf32>
    %327 = tpu.matmul %326, %9, %cst_58 {dimension_numbers = #tpu.dot_dimension_numbers<[1], [0], [0], [1], [0, 0, 1, 1], [], []>} : vector<2x128xf32>, vector<128x256xf32>, vector<2x256xf32> -> vector<2x256xf32>
    %328 = vector.broadcast %10 : vector<1x256xf32> to vector<2x256xf32>
    %329 = arith.addf %327, %328 : vector<2x256xf32>
    %330 = vector.extract_strided_slice %329 {offsets = [0, 0], sizes = [2, 192], strides = [1, 1]} : vector<2x256xf32> to vector<2x192xf32>
    %331 = arith.negf %330 : vector<2x192xf32>
    %332 = math.exp %331 : vector<2x192xf32>
    %cst_59 = arith.constant 1.000000e+00 : f32
    %333 = vector.broadcast %cst_59 : f32 to vector<2x192xf32>
    %334 = arith.addf %333, %332 : vector<2x192xf32>
    %335 = arith.divf %333, %334 : vector<2x192xf32>
    %336 = vector.extract_strided_slice %329 {offsets = [0, 192], sizes = [2, 64], strides = [1, 1]} : vector<2x256xf32> to vector<2x64xf32>
    %337 = math.tanh %336 : vector<2x64xf32>
    %338 = vector.extract_strided_slice %335 {offsets = [0, 0], sizes = [2, 64], strides = [1, 1]} : vector<2x192xf32> to vector<2x64xf32>
    %339 = vector.extract_strided_slice %335 {offsets = [0, 64], sizes = [2, 64], strides = [1, 1]} : vector<2x192xf32> to vector<2x64xf32>
    %340 = vector.extract_strided_slice %335 {offsets = [0, 128], sizes = [2, 64], strides = [1, 1]} : vector<2x192xf32> to vector<2x64xf32>
    %341 = arith.mulf %339, %301 : vector<2x64xf32>
    %342 = arith.mulf %338, %337 : vector<2x64xf32>
    %343 = arith.addf %341, %342 : vector<2x64xf32>
    %344 = math.tanh %343 : vector<2x64xf32>
    %345 = arith.mulf %340, %344 : vector<2x64xf32>
    %346 = vector.shape_cast %345 : vector<2x64xf32> to vector<2x1x64xf32>
    %c0_60 = arith.constant 0 : index
    %c7 = arith.constant 7 : index
    %c0_61 = arith.constant 0 : index
    %347 = vector.load %arg15[%c0_60, %c7, %c0_61] : memref<2x8x64xf32, #tpu.memory_space<vmem>>, vector<2x1x64xf32>
    tpu.vector_store %arg15[%c0_60, %c7, %c0_61], %346 {strides = array<i32>} : memref<2x8x64xf32, #tpu.memory_space<vmem>>, vector<2x1x64xf32>,
    %c0_62 = arith.constant 0 : index
    %c0_63 = arith.constant 0 : index
    %c0_64 = arith.constant 0 : index
    %348 = vector.load %arg15[%c0_62, %c0_63, %c0_64] : memref<2x8x64xf32, #tpu.memory_space<vmem>>, vector<2x8x64xf32>
    %349 = vector.shape_cast %348 : vector<2x8x64xf32> to vector<16x64xf32>
    %350 = vector.shape_cast %349 : vector<16x64xf32> to vector<1x16x64xf32>
    %351 = vector.shape_cast %350 : vector<1x16x64xf32> to vector<1x16x64xf32>
    %352 = vector.broadcast %351 : vector<1x16x64xf32> to vector<8x16x64xf32>
    %c0_65 = arith.constant 0 : index
    %c0_66 = arith.constant 0 : index
    %c0_67 = arith.constant 0 : index
    %353 = vector.load %arg7[%c0_65, %c0_66, %c0_67] : memref<8x64x8xf32, #tpu.memory_space<vmem>>, vector<8x64x8xf32>
    "tpu.trace_start"() <{level = 10 : i32, message = "zrc,zcd->zrd"}> : () -> ()
    %cst_68 = arith.constant dense<0.000000e+00> : vector<8x16x8xf32>
    %354 = tpu.matmul %352, %353, %cst_68 {dimension_numbers = #tpu.dot_dimension_numbers<[2], [1], [1], [2], [0, 0, 0, 1, 1, 2], [0], [0]>} : vector<8x16x64xf32>, vector<8x64x8xf32>, vector<8x16x8xf32> -> vector<8x16x8xf32>
    "tpu.trace_stop"() : () -> ()
    %355 = vector.shape_cast %354 : vector<8x16x8xf32> to vector<16x8x8xf32>
    %c0_69 = arith.constant 0 : index
    %c0_70 = arith.constant 0 : index
    %c0_71 = arith.constant 0 : index
    %356 = vector.load %arg8[%c0_69, %c0_70, %c0_71] : memref<8x64x8xf32, #tpu.memory_space<vmem>>, vector<8x64x8xf32>
    "tpu.trace_start"() <{level = 10 : i32, message = "zrc,zcd->zrd"}> : () -> ()
    %cst_72 = arith.constant dense<0.000000e+00> : vector<8x16x8xf32>
    %357 = tpu.matmul %352, %356, %cst_72 {dimension_numbers = #tpu.dot_dimension_numbers<[2], [1], [1], [2], [0, 0, 0, 1, 1, 2], [0], [0]>} : vector<8x16x64xf32>, vector<8x64x8xf32>, vector<8x16x8xf32> -> vector<8x16x8xf32>
    "tpu.trace_stop"() : () -> ()
    %358 = vector.shape_cast %357 : vector<8x16x8xf32> to vector<16x8x8xf32>
    %c0_73 = arith.constant 0 : index
    %c0_74 = arith.constant 0 : index
    %c0_75 = arith.constant 0 : index
    %359 = vector.load %arg9[%c0_73, %c0_74, %c0_75] : memref<8x64x8xf32, #tpu.memory_space<vmem>>, vector<8x64x8xf32>
    "tpu.trace_start"() <{level = 10 : i32, message = "zrc,zcd->zrd"}> : () -> ()
    %cst_76 = arith.constant dense<0.000000e+00> : vector<8x16x8xf32>
    %360 = tpu.matmul %352, %359, %cst_76 {dimension_numbers = #tpu.dot_dimension_numbers<[2], [1], [1], [2], [0, 0, 0, 1, 1, 2], [0], [0]>} : vector<8x16x64xf32>, vector<8x64x8xf32>, vector<8x16x8xf32> -> vector<8x16x8xf32>
    "tpu.trace_stop"() : () -> ()
    %361 = vector.shape_cast %360 : vector<8x16x8xf32> to vector<16x8x8xf32>
    "tpu.trace_start"() <{level = 10 : i32, message = "znd,zmd->znm"}> : () -> ()
    %cst_77 = arith.constant dense<0.000000e+00> : vector<16x8x8xf32>
    %362 = tpu.matmul %355, %358, %cst_77 {dimension_numbers = #tpu.dot_dimension_numbers<[2], [2], [1], [1], [0, 0, 0, 1, 1, 1], [0], [0]>} : vector<16x8x8xf32>, vector<16x8x8xf32>, vector<16x8x8xf32> -> vector<16x8x8xf32>
    "tpu.trace_stop"() : () -> ()
    %cst_78 = arith.constant 0.353553385 : f32
    %363 = vector.broadcast %cst_78 : f32 to vector<16x8x8xf32>
    %364 = arith.mulf %362, %363 : vector<16x8x8xf32>
    %cst_79 = arith.constant dense<0xFF800000> : vector<16x8xf32>
    %365 = vector.multi_reduction <maximumf>, %364, %cst_79 [2] : vector<16x8x8xf32> to vector<16x8xf32>
    %366 = vector.shape_cast %365 : vector<16x8xf32> to vector<16x8x1xf32>
    %367 = vector.broadcast %366 : vector<16x8x1xf32> to vector<16x8x8xf32>
    %368 = arith.subf %364, %367 : vector<16x8x8xf32>
    %369 = math.exp %368 : vector<16x8x8xf32>
    %cst_80 = arith.constant dense<0.000000e+00> : vector<16x8xf32>
    %370 = vector.multi_reduction <add>, %369, %cst_80 [2] : vector<16x8x8xf32> to vector<16x8xf32>
    %371 = vector.shape_cast %370 : vector<16x8xf32> to vector<16x8x1xf32>
    %372 = tpu.reciprocal %371 {approx = true} : vector<16x8x1xf32> -> vector<16x8x1xf32>
    %373 = vector.broadcast %372 : vector<16x8x1xf32> to vector<16x8x8xf32>
    %374 = arith.mulf %369, %373 : vector<16x8x8xf32>
    "tpu.trace_start"() <{level = 10 : i32, message = "znm,zmd->znd"}> : () -> ()
    %cst_81 = arith.constant dense<0.000000e+00> : vector<16x8x8xf32>
    %375 = tpu.matmul %374, %361, %cst_81 {dimension_numbers = #tpu.dot_dimension_numbers<[2], [1], [1], [2], [0, 0, 0, 1, 1, 2], [0], [0]>} : vector<16x8x8xf32>, vector<16x8x8xf32>, vector<16x8x8xf32> -> vector<16x8x8xf32>
    "tpu.trace_stop"() : () -> ()
    %cst_82 = arith.constant dense<0.000000e+00> : vector<16x8xf32>
    %376 = vector.multi_reduction <add>, %375, %cst_82 [1] : vector<16x8x8xf32> to vector<16x8xf32>
    %cst_83 = arith.constant 8.000000e+00 : f32
    %377 = vector.broadcast %cst_83 : f32 to vector<16x8xf32>
    %378 = arith.divf %376, %377 : vector<16x8xf32>
    %379 = vector.shape_cast %378 : vector<16x8xf32> to vector<8x2x8xf32>
    %c0_84 = arith.constant 0 : index
    %c0_85 = arith.constant 0 : index
    %c0_86 = arith.constant 0 : index
    %380 = vector.load %arg10[%c0_84, %c0_85, %c0_86] : memref<8x8x64xf32, #tpu.memory_space<vmem>>, vector<8x8x64xf32>
    "tpu.trace_start"() <{level = 10 : i32, message = "hbd,hdc->hbc"}> : () -> ()
    %cst_87 = arith.constant dense<0.000000e+00> : vector<8x2x64xf32>
    %381 = tpu.matmul %379, %380, %cst_87 {dimension_numbers = #tpu.dot_dimension_numbers<[2], [1], [1], [2], [0, 0, 0, 1, 1, 2], [0], [0]>} : vector<8x2x8xf32>, vector<8x8x64xf32>, vector<8x2x64xf32> -> vector<8x2x64xf32>
    "tpu.trace_stop"() : () -> ()
    %cst_88 = arith.constant dense<0.000000e+00> : vector<2x64xf32>
    %382 = vector.multi_reduction <add>, %381, %cst_88 [0] : vector<8x2x64xf32> to vector<2x64xf32>
    %c0_89 = arith.constant 0 : index
    %c0_90 = arith.constant 0 : index
    %383 = vector.load %arg11[%c0_89, %c0_90] : memref<1x64xf32, #tpu.memory_space<vmem>>, vector<1x64xf32>
    %384 = vector.broadcast %383 : vector<1x64xf32> to vector<2x64xf32>
    %385 = arith.addf %382, %384 : vector<2x64xf32>
    %c0_91 = arith.constant 0 : index
    %c0_92 = arith.constant 0 : index
    %386 = vector.load %arg12[%c0_91, %c0_92] : memref<64x128xf32, #tpu.memory_space<vmem>>, vector<64x128xf32>
    %cst_93 = arith.constant dense<0.000000e+00> : vector<2x128xf32>
    %387 = tpu.matmul %385, %386, %cst_93 {dimension_numbers = #tpu.dot_dimension_numbers<[1], [0], [0], [1], [0, 0, 1, 1], [], []>} : vector<2x64xf32>, vector<64x128xf32>, vector<2x128xf32> -> vector<2x128xf32>
    %c0_94 = arith.constant 0 : index
    %c0_95 = arith.constant 0 : index
    %388 = vector.load %arg13[%c0_94, %c0_95] : memref<1x128xf32, #tpu.memory_space<vmem>>, vector<1x128xf32>
    %389 = vector.broadcast %388 : vector<1x128xf32> to vector<2x128xf32>
    %390 = arith.addf %387, %389 : vector<2x128xf32>
    %cst_96 = arith.constant 0.000000e+00 : f32
    %391 = vector.broadcast %cst_96 : f32 to vector<2x128xf32>
    %392 = arith.maximumf %390, %391 : vector<2x128xf32>
    %c0_97 = arith.constant 0 : index
    %c0_98 = arith.constant 0 : index
    %393 = vector.load %arg14[%c0_97, %c0_98] : memref<2x128xf32, #tpu.memory_space<vmem>>, vector<2x128xf32>
    tpu.vector_store %arg14[%c0_97, %c0_98], %392 {strides = array<i32>} : memref<2x128xf32, #tpu.memory_space<vmem>>, vector<2x128xf32>,
    return
  }
  func.func @transform_0(%arg0: i32) -> (i32, i32, i32) {
    %c0_i32 = arith.constant 0 : i32
    %c0_i32_0 = arith.constant 0 : i32
    %c0_i32_1 = arith.constant 0 : i32
    %c0_i32_2 = arith.constant 0 : i32
    return %c0_i32, %c0_i32_0, %c0_i32_1 : i32, i32, i32
  }
  func.func @transform_1(%arg0: i32) -> (i32, i32) {
    %c0_i32 = arith.constant 0 : i32
    %c0_i32_0 = arith.constant 0 : i32
    %c0_i32_1 = arith.constant 0 : i32
    return %c0_i32, %c0_i32_0 : i32, i32
  }
  func.func @transform_2(%arg0: i32) -> (i32, i32) {
    %c0_i32 = arith.constant 0 : i32
    %c0_i32_0 = arith.constant 0 : i32
    %c0_i32_1 = arith.constant 0 : i32
    return %c0_i32, %c0_i32_0 : i32, i32
  }
  func.func @transform_3(%arg0: i32) -> (i32, i32) {
    %c0_i32 = arith.constant 0 : i32
    %c0_i32_0 = arith.constant 0 : i32
    %c0_i32_1 = arith.constant 0 : i32
    return %c0_i32, %c0_i32_0 : i32, i32
  }
  func.func @transform_4(%arg0: i32) -> (i32, i32) {
    %c0_i32 = arith.constant 0 : i32
    %c0_i32_0 = arith.constant 0 : i32
    %c0_i32_1 = arith.constant 0 : i32
    return %c0_i32, %c0_i32_0 : i32, i32
  }
  func.func @transform_5(%arg0: i32) -> (i32, i32) {
    %c0_i32 = arith.constant 0 : i32
    %c0_i32_0 = arith.constant 0 : i32
    %c0_i32_1 = arith.constant 0 : i32
    return %c0_i32, %c0_i32_0 : i32, i32
  }
  func.func @transform_6(%arg0: i32) -> (i32, i32, i32) {
    %c0_i32 = arith.constant 0 : i32
    %c0_i32_0 = arith.constant 0 : i32
    %c0_i32_1 = arith.constant 0 : i32
    %c0_i32_2 = arith.constant 0 : i32
    return %c0_i32, %c0_i32_0, %c0_i32_1 : i32, i32, i32
  }
  func.func @transform_7(%arg0: i32) -> (i32, i32, i32) {
    %c0_i32 = arith.constant 0 : i32
    %c0_i32_0 = arith.constant 0 : i32
    %c0_i32_1 = arith.constant 0 : i32
    %c0_i32_2 = arith.constant 0 : i32
    return %c0_i32, %c0_i32_0, %c0_i32_1 : i32, i32, i32
  }
  func.func @transform_8(%arg0: i32) -> (i32, i32, i32) {
    %c0_i32 = arith.constant 0 : i32
    %c0_i32_0 = arith.constant 0 : i32
    %c0_i32_1 = arith.constant 0 : i32
    %c0_i32_2 = arith.constant 0 : i32
    return %c0_i32, %c0_i32_0, %c0_i32_1 : i32, i32, i32
  }
  func.func @transform_9(%arg0: i32) -> (i32, i32, i32) {
    %c0_i32 = arith.constant 0 : i32
    %c0_i32_0 = arith.constant 0 : i32
    %c0_i32_1 = arith.constant 0 : i32
    %c0_i32_2 = arith.constant 0 : i32
    return %c0_i32, %c0_i32_0, %c0_i32_1 : i32, i32, i32
  }
  func.func @transform_10(%arg0: i32) -> (i32, i32) {
    %c0_i32 = arith.constant 0 : i32
    %c0_i32_0 = arith.constant 0 : i32
    %c0_i32_1 = arith.constant 0 : i32
    return %c0_i32, %c0_i32_0 : i32, i32
  }
  func.func @transform_11(%arg0: i32) -> (i32, i32) {
    %c0_i32 = arith.constant 0 : i32
    %c0_i32_0 = arith.constant 0 : i32
    %c0_i32_1 = arith.constant 0 : i32
    return %c0_i32, %c0_i32_0 : i32, i32
  }
  func.func @transform_12(%arg0: i32) -> (i32, i32) {
    %c0_i32 = arith.constant 0 : i32
    %c0_i32_0 = arith.constant 0 : i32
    %c0_i32_1 = arith.constant 0 : i32
    return %c0_i32, %c0_i32_0 : i32, i32
  }
  func.func @transform_13(%arg0: i32) -> (i32, i32) {
    %c0_i32 = arith.constant 0 : i32
    %c0_i32_0 = arith.constant 0 : i32
    %c0_i32_1 = arith.constant 0 : i32
    return %c0_i32, %c0_i32_0 : i32, i32
  }
}

</mosaic_0001>

<llo_original>
// kernel: tpu_custom_call.1
$region0: #{tpu_custom_call.1}
  #allocation0 [shape = 'u32[]', space=smem, size = 0x4, offset = 0x4, fixed_abs, tag = 'smem constant byte address 0x4 - core index']
  #allocation1 [shape = 'u32[144,128]{1,0:T(1,128)}', space=vmem, size = 0x12000, scoped, tag = 'internal scratch']
  #allocation2 [shape = 'f32[2,8,64]{2,1,0:T(8,128)}', space=vmem, size = 0x2000, scoped, tag = 'scratch operand']
  %s0 = inlined_call_operand.vmem [shape: f32[2,8,4], index: 0, kind: input, shape index: {}]
  %s1 = inlined_call_operand.vmem [shape: f32[4,256], index: 1, kind: input, shape index: {}]
  %s2 = inlined_call_operand.vmem [shape: f32[1,256], index: 2, kind: input, shape index: {}]
  %s3 = inlined_call_operand.vmem [shape: f32[64,256], index: 3, kind: input, shape index: {}]
  %s4 = inlined_call_operand.vmem [shape: f32[128,256], index: 4, kind: input, shape index: {}]
  %s5 = inlined_call_operand.vmem [shape: f32[1,256], index: 5, kind: input, shape index: {}]
  %s6 = inlined_call_operand.vmem [shape: f32[8,64,8], index: 6, kind: input, shape index: {}]
  %s7 = inlined_call_operand.vmem [shape: f32[8,64,8], index: 7, kind: input, shape index: {}]
  %s8 = inlined_call_operand.vmem [shape: f32[8,64,8], index: 8, kind: input, shape index: {}]
  %s9 = inlined_call_operand.vmem [shape: f32[8,8,64], index: 9, kind: input, shape index: {}]
  %s10 = inlined_call_operand.vmem [shape: f32[1,64], index: 10, kind: input, shape index: {}]
  %s11 = inlined_call_operand.vmem [shape: f32[64,128], index: 11, kind: input, shape index: {}]
  %s12 = inlined_call_operand.vmem [shape: f32[1,128], index: 12, kind: input, shape index: {}]
  %s13 = inlined_call_operand.hbm [shape: f32[2,128], index: 13, kind: output, shape index: {}]
  %s14 = sld [smem:[#allocation0]]
  $region62: #{tpu_custom_call.1} parent=0
    _
  %s16 = ssub.s32 1, %s14
  %s17 = scalar_select 0, %s16, %s14
  $region1: #{tpu_custom_call.1} parent=0
    #allocation3 [shape = 'u8[1024]{0}', space=vmem, size = 0x400, scoped, tag = 'output window, operand 0, single buffered']
    #allocation4 [shape = 's32[1]{0}', space=sflag, size = 0x4, scoped, tag = 'scoped memory for tpu_custom_call.1']
    %18 = vsyncpa [#allocation4], 0
    // Predicated region
    $region2: #{tpu_custom_call.1} parent=1 // pred_check
      _
    $region3: #{tpu_custom_call.1} parent=1 // pred_check_branch
      %20 = sbr.rel (0) target = $region5
    $region4: #{tpu_custom_call.1} parent=1 // pred_region
      _
    $region5: #{tpu_custom_call.1} parent=1 // pred_fallthru
      _
    // Predicated region
    $region6: #{tpu_custom_call.1} parent=1 // pred_check
      _
    $region7: #{tpu_custom_call.1} parent=1 // pred_check_branch
      %22 = sbr.rel (0) target = $region9
    $region8: #{tpu_custom_call.1} parent=1 // pred_region
      _
    $region9: #{tpu_custom_call.1} parent=1 // pred_fallthru
      _
    // Predicated region
    $region10: #{tpu_custom_call.1} parent=1 // pred_check
      _
    $region11: #{tpu_custom_call.1} parent=1 // pred_check_branch
      %24 = sbr.rel (0) target = $region13
    $region12: #{tpu_custom_call.1} parent=1 // pred_region
      _
    $region13: #{tpu_custom_call.1} parent=1 // pred_fallthru
      _
    // Predicated region
    $region14: #{tpu_custom_call.1} parent=1 // pred_check
      _
    $region15: #{tpu_custom_call.1} parent=1 // pred_check_branch
      %26 = sbr.rel (0) target = $region17
    $region16: #{tpu_custom_call.1} parent=1 // pred_region
      _
    $region17: #{tpu_custom_call.1} parent=1 // pred_fallthru
      _
    // Predicated region
    $region18: #{tpu_custom_call.1} parent=1 // pred_check
      _
    $region19: #{tpu_custom_call.1} parent=1 // pred_check_branch
      %28 = sbr.rel (0) target = $region21
    $region20: #{tpu_custom_call.1} parent=1 // pred_region
      _
    $region21: #{tpu_custom_call.1} parent=1 // pred_fallthru
      _
    // Predicated region
    $region22: #{tpu_custom_call.1} parent=1 // pred_check
      _
    $region23: #{tpu_custom_call.1} parent=1 // pred_check_branch
      %30 = sbr.rel (0) target = $region25
    $region24: #{tpu_custom_call.1} parent=1 // pred_region
      _
    $region25: #{tpu_custom_call.1} parent=1 // pred_fallthru
      _
    // Predicated region
    $region26: #{tpu_custom_call.1} parent=1 // pred_check
      _
    $region27: #{tpu_custom_call.1} parent=1 // pred_check_branch
      %32 = sbr.rel (0) target = $region29
    $region28: #{tpu_custom_call.1} parent=1 // pred_region
      _
    $region29: #{tpu_custom_call.1} parent=1 // pred_fallthru
      _
    // Predicated region
    $region30: #{tpu_custom_call.1} parent=1 // pred_check
      _
    $region31: #{tpu_custom_call.1} parent=1 // pred_check_branch
      %34 = sbr.rel (0) target = $region33
    $region32: #{tpu_custom_call.1} parent=1 // pred_region
      _
    $region33: #{tpu_custom_call.1} parent=1 // pred_fallthru
      _
    // Predicated region
    $region34: #{tpu_custom_call.1} parent=1 // pred_check
      _
    $region35: #{tpu_custom_call.1} parent=1 // pred_check_branch
      %36 = sbr.rel (0) target = $region37
    $region36: #{tpu_custom_call.1} parent=1 // pred_region
      _
    $region37: #{tpu_custom_call.1} parent=1 // pred_fallthru
      _
    // Predicated region
    $region38: #{tpu_custom_call.1} parent=1 // pred_check
      _
    $region39: #{tpu_custom_call.1} parent=1 // pred_check_branch
      %38 = sbr.rel (0) target = $region41
    $region40: #{tpu_custom_call.1} parent=1 // pred_region
      _
    $region41: #{tpu_custom_call.1} parent=1 // pred_fallthru
      _
    // Predicated region
    $region42: #{tpu_custom_call.1} parent=1 // pred_check
      _
    $region43: #{tpu_custom_call.1} parent=1 // pred_check_branch
      %40 = sbr.rel (0) target = $region45
    $region44: #{tpu_custom_call.1} parent=1 // pred_region
      _
    $region45: #{tpu_custom_call.1} parent=1 // pred_fallthru
      _
    // Predicated region
    $region46: #{tpu_custom_call.1} parent=1 // pred_check
      _
    $region47: #{tpu_custom_call.1} parent=1 // pred_check_branch
      %42 = sbr.rel (0) target = $region49
    $region48: #{tpu_custom_call.1} parent=1 // pred_region
      _
    $region49: #{tpu_custom_call.1} parent=1 // pred_fallthru
      _
    // Predicated region
    $region50: #{tpu_custom_call.1} parent=1 // pred_check
      _
    $region51: #{tpu_custom_call.1} parent=1 // pred_check_branch
      %44 = sbr.rel (0) target = $region53
    $region52: #{tpu_custom_call.1} parent=1 // pred_region
      _
    $region53: #{tpu_custom_call.1} parent=1 // pred_fallthru
      _
    %v45 = vld [vmem:[%s0] sm:$0xff]
    %v46 = vld [vmem:[%s0 + $0x8] sm:$0xff]
    %v47 = vld [vmem:[%s1] sm:$0xff]
    %v48 = vld [vmem:[%s2] sm:$0x3]
    %v50 = vlaneseq
    %v51 = vshrl.u32 %v50, 7
    %v52 = vsub.s32 0, %v51
    %v53 = vrot.slane %v48, %v52
    %v54 = vlaneseq
    %v55 = vshrl.u32 %v54, 7
    %v56 = vsub.s32 1, %v55
    %v57 = vrot.slane %v48, %v56
    %v61 = vcombine.high %v47, %v47
    %vm62 = vcmask 31744
    %v64 = vsel %vm62, %v45, 0
    %v67 = vsel %vm62, %v46, 0
    %vm69 = vcmask 1043456
    %v70 = vsel %vm69, %v47, 0
    %v72 = vsel %vm69, %v61, 0
    %74 = vmatprep.subr.mxu0 0.0
    %75 = vmatpush1.msra.mxu0 0.0
    %76 = vmatprep.subr.mxu0 0.0
    %77 = vmatpush1.msra.mxu0 0.0
    %78 = vmatprep.subr.mxu0 0.0
    %79 = vmatpush1.msra.mxu0 0.0
    %80 = vmatprep.subr.mxu0 0.0
    %81 = vmatpush1.msra.mxu0 0.0
    %82 = vmatprep.subr.mxu0 0.0
    %83 = vmatpush1.msra.mxu0 0.0
    %84 = vmatprep.subr.mxu0 0.0
    %85 = vmatpush1.msra.mxu0 0.0
    %86 = vmatprep.subr.mxu0 0.0
    %87 = vmatpush1.msra.mxu0 0.0
    %88 = vmatprep.subr.mxu0 0.0
    %89 = vmatpush1.msra.mxu0 0.0
    %90 = vmatprep.subr.mxu0 0.0
    %91 = vmatpush1.msra.mxu0 0.0
    %92 = vmatprep.subr.mxu0 0.0
    %93 = vmatpush1.msra.mxu0 0.0
    %94 = vmatprep.subr.mxu0 0.0
    %95 = vmatpush1.msra.mxu0 0.0
    %96 = vmatprep.subr.mxu0 0.0
    %97 = vmatpush1.msra.mxu0 0.0
    %98 = vmatprep.subr.mxu0 0.0
    %99 = vmatpush1.msra.mxu0 0.0
    %100 = vmatprep.subr.mxu0 0.0
    %101 = vmatpush1.msra.mxu0 0.0
    %102 = vmatprep.subr.mxu0 0.0
    %103 = vmatpush1.msra.mxu0 0.0
    %104 = vmatprep.subr.mxu0 %v72
    %105 = vmatpush1.msra.mxu0 %v70
    %106 = vmatprep.subr.mxu0 0.0
    %107 = vmatpush2.msra.mxu0 0.0
    %108 = vmatprep.subr.mxu0 0.0
    %109 = vmatpush2.msra.mxu0 0.0
    %110 = vmatprep.subr.mxu0 0.0
    %111 = vmatpush2.msra.mxu0 0.0
    %112 = vmatprep.subr.mxu0 0.0
    %113 = vmatpush2.msra.mxu0 0.0
    %114 = vmatprep.subr.mxu0 0.0
    %115 = vmatpush2.msra.mxu0 0.0
    %116 = vmatprep.subr.mxu0 0.0
    %117 = vmatpush2.msra.mxu0 0.0
    %118 = vmatprep.subr.mxu0 0.0
    %119 = vmatpush2.msra.mxu0 0.0
    %120 = vmatprep.subr.mxu0 0.0
    %121 = vmatpush2.msra.mxu0 0.0
    %122 = vmatprep.subr.mxu0 0.0
    %123 = vmatpush2.msra.mxu0 0.0
    %124 = vmatprep.subr.mxu0 0.0
    %125 = vmatpush2.msra.mxu0 0.0
    %126 = vmatprep.subr.mxu0 0.0
    %127 = vmatpush2.msra.mxu0 0.0
    %128 = vmatprep.subr.mxu0 0.0
    %129 = vmatpush2.msra.mxu0 0.0
    %130 = vmatprep.subr.mxu0 0.0
    %131 = vmatpush2.msra.mxu0 0.0
    %132 = vmatprep.subr.mxu0 0.0
    %133 = vmatpush2.msra.mxu0 0.0
    %134 = vmatprep.subr.mxu0 0.0
    %135 = vmatpush2.msra.mxu0 0.0
    %136 = vmatprep.subr.mxu0 0.0
    %137 = vmatpush2.msra.mxu0 0.0
    %138 = vmatprep.mubr.f32.mxu0 0.0
    %139 = vmatmul.mubr.f32.gmra.mxu0 %v64
    %v140 = vpop.f32.mrf.mxu0
    %v141 = vadd.f32 %v53, %v140
    %v142 = vpop.f32.mrf.mxu0
    %v143 = vadd.f32 %v57, %v142
    %144 = vmatprep.mubr.f32.mxu0 0.0
    %145 = vmatmul.mubr.f32.gmra.mxu0 %v67
    %v146 = vpop.f32.mrf.mxu0
    %v147 = vadd.f32 %v53, %v146
    %v148 = vpop.f32.mrf.mxu0
    %v149 = vadd.f32 %v57, %v148
    %150 = vdwg.mxu0
    %v151 = vld [vmem:[%s3] sm:$0xff]
    %v152 = vld [vmem:[%s3 + $0x8] sm:$0xff]
    %v153 = vld [vmem:[%s3 + $0x10] sm:$0xff]
    %v154 = vld [vmem:[%s3 + $0x18] sm:$0xff]
    %v155 = vld [vmem:[%s3 + $0x20] sm:$0xff]
    %v156 = vld [vmem:[%s3 + $0x28] sm:$0xff]
    %v157 = vld [vmem:[%s3 + $0x30] sm:$0xff]
    %v158 = vld [vmem:[%s3 + $0x38] sm:$0xff]
    %v159 = vld [vmem:[%s3 + $0x40] sm:$0xff]
    %v160 = vld [vmem:[%s3 + $0x48] sm:$0xff]
    %v161 = vld [vmem:[%s3 + $0x50] sm:$0xff]
    %v162 = vld [vmem:[%s3 + $0x58] sm:$0xff]
    %v163 = vld [vmem:[%s3 + $0x60] sm:$0xff]
    %v164 = vld [vmem:[%s3 + $0x68] sm:$0xff]
    %v165 = vld [vmem:[%s3 + $0x70] sm:$0xff]
    %v166 = vld [vmem:[%s3 + $0x78] sm:$0xff]
    %v167 = vld [vmem:[%s4] sm:$0xff]
    %v168 = vld [vmem:[%s4 + $0x8] sm:$0xff]
    %v169 = vld [vmem:[%s4 + $0x10] sm:$0xff]
    %v170 = vld [vmem:[%s4 + $0x18] sm:$0xff]
    %v171 = vld [vmem:[%s4 + $0x20] sm:$0xff]
    %v172 = vld [vmem:[%s4 + $0x28] sm:$0xff]
    %v173 = vld [vmem:[%s4 + $0x30] sm:$0xff]
    %v174 = vld [vmem:[%s4 + $0x38] sm:$0xff]
    %v175 = vld [vmem:[%s4 + $0x40] sm:$0xff]
    %v176 = vld [vmem:[%s4 + $0x48] sm:$0xff]
    %v177 = vld [vmem:[%s4 + $0x50] sm:$0xff]
    %v178 = vld [vmem:[%s4 + $0x58] sm:$0xff]
    %v179 = vld [vmem:[%s4 + $0x60] sm:$0xff]
    %v180 = vld [vmem:[%s4 + $0x68] sm:$0xff]
    %v181 = vld [vmem:[%s4 + $0x70] sm:$0xff]
    %v182 = vld [vmem:[%s4 + $0x78] sm:$0xff]
    %v183 = vld [vmem:[%s4 + $0x80] sm:$0xff]
    %v184 = vld [vmem:[%s4 + $0x88] sm:$0xff]
    %v185 = vld [vmem:[%s4 + $0x90] sm:$0xff]
    %v186 = vld [vmem:[%s4 + $0x98] sm:$0xff]
    %v187 = vld [vmem:[%s4 + $0xa0] sm:$0xff]
    %v188 = vld [vmem:[%s4 + $0xa8] sm:$0xff]
    %v189 = vld [vmem:[%s4 + $0xb0] sm:$0xff]
    %v190 = vld [vmem:[%s4 + $0xb8] sm:$0xff]
    %v191 = vld [vmem:[%s4 + $0xc0] sm:$0xff]
    %v192 = vld [vmem:[%s4 + $0xc8] sm:$0xff]
    %v193 = vld [vmem:[%s4 + $0xd0] sm:$0xff]
    %v194 = vld [vmem:[%s4 + $0xd8] sm:$0xff]
    %v195 = vld [vmem:[%s4 + $0xe0] sm:$0xff]
    %v196 = vld [vmem:[%s4 + $0xe8] sm:$0xff]
    %v197 = vld [vmem:[%s4 + $0xf0] sm:$0xff]
    %v198 = vld [vmem:[%s4 + $0xf8] sm:$0xff]
    %v199 = vld [vmem:[%s5] sm:$0x3]
    %vm200 = vcmask 523264
    %v202 = vsel %vm200, 0.0, 0
    %204 = vmatprep.subr.mxu0 0.0
    %205 = vmatpush1.msra.mxu0 0.0
    %206 = vmatprep.subr.mxu0 0.0
    %207 = vmatpush1.msra.mxu0 0.0
    %208 = vmatprep.subr.mxu0 0.0
    %209 = vmatpush1.msra.mxu0 0.0
    %210 = vmatprep.subr.mxu0 0.0
    %211 = vmatpush1.msra.mxu0 0.0
    %212 = vmatprep.subr.mxu0 0.0
    %213 = vmatpush1.msra.mxu0 0.0
    %214 = vmatprep.subr.mxu0 0.0
    %215 = vmatpush1.msra.mxu0 0.0
    %216 = vmatprep.subr.mxu0 0.0
    %217 = vmatpush1.msra.mxu0 0.0
    %218 = vmatprep.subr.mxu0 0.0
    %219 = vmatpush1.msra.mxu0 0.0
    %220 = vmatprep.subr.mxu0 %v166
    %221 = vmatpush1.msra.mxu0 %v165
    %222 = vmatprep.subr.mxu0 %v164
    %223 = vmatpush1.msra.mxu0 %v163
    %224 = vmatprep.subr.mxu0 %v162
    %225 = vmatpush1.msra.mxu0 %v161
    %226 = vmatprep.subr.mxu0 %v160
    %227 = vmatpush1.msra.mxu0 %v159
    %228 = vmatprep.subr.mxu0 %v158
    %229 = vmatpush1.msra.mxu0 %v157
    %230 = vmatprep.subr.mxu0 %v156
    %231 = vmatpush1.msra.mxu0 %v155
    %232 = vmatprep.subr.mxu0 %v154
    %233 = vmatpush1.msra.mxu0 %v153
    %234 = vmatprep.subr.mxu0 %v152
    %235 = vmatpush1.msra.mxu0 %v151
    %236 = vmatprep.subr.mxu0 0.0
    %237 = vmatpush2.msra.mxu0 0.0
    %238 = vmatprep.subr.mxu0 0.0
    %239 = vmatpush2.msra.mxu0 0.0
    %240 = vmatprep.subr.mxu0 0.0
    %241 = vmatpush2.msra.mxu0 0.0
    %242 = vmatprep.subr.mxu0 0.0
    %243 = vmatpush2.msra.mxu0 0.0
    %244 = vmatprep.subr.mxu0 0.0
    %245 = vmatpush2.msra.mxu0 0.0
    %246 = vmatprep.subr.mxu0 0.0
    %247 = vmatpush2.msra.mxu0 0.0
    %248 = vmatprep.subr.mxu0 0.0
    %249 = vmatpush2.msra.mxu0 0.0
    %250 = vmatprep.subr.mxu0 0.0
    %251 = vmatpush2.msra.mxu0 0.0
    %252 = vmatprep.subr.mxu0 0.0
    %253 = vmatpush2.msra.mxu0 0.0
    %254 = vmatprep.subr.mxu0 0.0
    %255 = vmatpush2.msra.mxu0 0.0
    %256 = vmatprep.subr.mxu0 0.0
    %257 = vmatpush2.msra.mxu0 0.0
    %258 = vmatprep.subr.mxu0 0.0
    %259 = vmatpush2.msra.mxu0 0.0
    %260 = vmatprep.subr.mxu0 0.0
    %261 = vmatpush2.msra.mxu0 0.0
    %262 = vmatprep.subr.mxu0 0.0
    %263 = vmatpush2.msra.mxu0 0.0
    %264 = vmatprep.subr.mxu0 0.0
    %265 = vmatpush2.msra.mxu0 0.0
    %266 = vmatprep.subr.mxu0 0.0
    %267 = vmatpush2.msra.mxu0 0.0
    %268 = vmatprep.mubr.f32.mxu0 0.0
    %269 = vmatmul.mubr.f32.gmra.mxu0 %v202
    %v270 = vpop.f32.mrf.mxu0
    %v271 = vadd.f32 0.0, %v270
    %v272 = vpop.f32.mrf.mxu0
    %v273 = vadd.f32 0.0, %v272
    %274 = vdwg.mxu0
    %v277 = vrot.slane %v271, 1
    %v278 = vrot.slane %v273, 1
    %v283 = vadd.f32 %v141, %v271
    %v284 = vadd.f32 %v143, %v273
    %v285 = vadd.f32 %v147, %v277
    %v286 = vadd.f32 %v149, %v278
    %v287 = vxor.u32 %v283, 2147483648
    %v288 = vxor.u32 %v284, 2147483648
    %v289 = vxor.u32 %v285, 2147483648
    %v290 = vxor.u32 %v286, 2147483648
    %v291 = vmul.f32 %v287, 1.442695
    %v292 = vpow.pop %v291
    %v293 = vmul.f32 %v288, 1.442695
    %v294 = vpow.pop %v293
    %v295 = vmul.f32 %v289, 1.442695
    %v296 = vpow.pop %v295
    %v297 = vmul.f32 %v290, 1.442695
    %v298 = vpow.pop %v297
    %v299 = vadd.f32 %v292, 1.0
    %v300 = vadd.f32 %v294, 1.0
    %v301 = vadd.f32 %v296, 1.0
    %v302 = vadd.f32 %v298, 1.0
    %v303 = vrcp.pop %v299
    %v304 = vmul.f32 1.0, %v303
    %v305 = vrcp.pop %v300
    %v306 = vmul.f32 1.0, %v305
    %v307 = vrcp.pop %v301
    %v308 = vmul.f32 1.0, %v307
    %v309 = vrcp.pop %v302
    %v310 = vmul.f32 1.0, %v309
    %v311 = vtanh.pop %v284
    %v312 = vtanh.pop %v286
    %v313 = vmul.f32 %v304, 0.0
    %v314 = vmul.f32 %v308, 0.0
    %317 = vrot.lane.b32.xlu0 %v311, 64
    %v318 = vpop.permute.xlu0 %317
    %319 = vrot.lane.b32.xlu0 %v312, 64
    %v320 = vpop.permute.xlu0 %319
    %v323 = vmul.f32 %v304, %v318
    %v324 = vmul.f32 %v308, %v320
    %327 = vrot.lane.b32.xlu0 %v323, 64
    %v328 = vpop.permute.xlu0 %327
    %329 = vrot.lane.b32.xlu0 %v324, 64
    %v330 = vpop.permute.xlu0 %329
    %v333 = vadd.f32 %v313, %v328
    %v334 = vadd.f32 %v314, %v330
    %v335 = vtanh.pop %v333
    %v336 = vtanh.pop %v334
    %339 = vrot.lane.b32.xlu0 %v335, 64
    %v340 = vpop.permute.xlu0 %339
    %341 = vrot.lane.b32.xlu0 %v336, 64
    %v342 = vpop.permute.xlu0 %341
    %v345 = vmul.f32 %v306, %v340
    %v346 = vmul.f32 %v310, %v342
    %v349 = vrot.slane %v346, 7
    %vm350 = vcmask 1041409
    %v351 = vsel %vm350, %v349, %v345
    %v353 = vsel %vm200, %v351, 0.0
    %v355 = vlaneseq
    %v356 = vshrl.u32 %v355, 7
    %v357 = vsub.s32 0, %v356
    %v358 = vrot.slane %v199, %v357
    %v359 = vlaneseq
    %v360 = vshrl.u32 %v359, 7
    %v361 = vsub.s32 1, %v360
    %v362 = vrot.slane %v199, %v361
    %365 = vmatprep.subr.mxu0 %v198
    %366 = vmatpush1.msra.mxu0 %v197
    %367 = vmatprep.subr.mxu0 %v196
    %368 = vmatpush1.msra.mxu0 %v195
    %369 = vmatprep.subr.mxu0 %v194
    %370 = vmatpush1.msra.mxu0 %v193
    %371 = vmatprep.subr.mxu0 %v192
    %372 = vmatpush1.msra.mxu0 %v191
    %373 = vmatprep.subr.mxu0 %v190
    %374 = vmatpush1.msra.mxu0 %v189
    %375 = vmatprep.subr.mxu0 %v188
    %376 = vmatpush1.msra.mxu0 %v187
    %377 = vmatprep.subr.mxu0 %v186
    %378 = vmatpush1.msra.mxu0 %v185
    %379 = vmatprep.subr.mxu0 %v184
    %380 = vmatpush1.msra.mxu0 %v183
    %381 = vmatprep.subr.mxu0 %v182
    %382 = vmatpush1.msra.mxu0 %v181
    %383 = vmatprep.subr.mxu0 %v180
    %384 = vmatpush1.msra.mxu0 %v179
    %385 = vmatprep.subr.mxu0 %v178
    %386 = vmatpush1.msra.mxu0 %v177
    %387 = vmatprep.subr.mxu0 %v176
    %388 = vmatpush1.msra.mxu0 %v175
    %389 = vmatprep.subr.mxu0 %v174
    %390 = vmatpush1.msra.mxu0 %v173
    %391 = vmatprep.subr.mxu0 %v172
    %392 = vmatpush1.msra.mxu0 %v171
    %393 = vmatprep.subr.mxu0 %v170
    %394 = vmatpush1.msra.mxu0 %v169
    %395 = vmatprep.subr.mxu0 %v168
    %396 = vmatpush1.msra.mxu0 %v167
    %397 = vmatprep.subr.mxu0 0.0
    %398 = vmatpush2.msra.mxu0 0.0
    %399 = vmatprep.subr.mxu0 0.0
    %400 = vmatpush2.msra.mxu0 0.0
    %401 = vmatprep.subr.mxu0 0.0
    %402 = vmatpush2.msra.mxu0 0.0
    %403 = vmatprep.subr.mxu0 0.0
    %404 = vmatpush2.msra.mxu0 0.0
    %405 = vmatprep.subr.mxu0 0.0
    %406 = vmatpush2.msra.mxu0 0.0
    %407 = vmatprep.subr.mxu0 0.0
    %408 = vmatpush2.msra.mxu0 0.0
    %409 = vmatprep.subr.mxu0 0.0
    %410 = vmatpush2.msra.mxu0 0.0
    %411 = vmatprep.subr.mxu0 0.0
    %412 = vmatpush2.msra.mxu0 0.0
    %413 = vmatprep.subr.mxu0 0.0
    %414 = vmatpush2.msra.mxu0 0.0
    %415 = vmatprep.subr.mxu0 0.0
    %416 = vmatpush2.msra.mxu0 0.0
    %417 = vmatprep.subr.mxu0 0.0
    %418 = vmatpush2.msra.mxu0 0.0
    %419 = vmatprep.subr.mxu0 0.0
    %420 = vmatpush2.msra.mxu0 0.0
    %421 = vmatprep.subr.mxu0 0.0
    %422 = vmatpush2.msra.mxu0 0.0
    %423 = vmatprep.subr.mxu0 0.0
    %424 = vmatpush2.msra.mxu0 0.0
    %425 = vmatprep.subr.mxu0 0.0
    %426 = vmatpush2.msra.mxu0 0.0
    %427 = vmatprep.subr.mxu0 0.0
    %428 = vmatpush2.msra.mxu0 0.0
    %429 = vmatprep.mubr.f32.mxu0 0.0
    %430 = vmatmul.mubr.f32.gmra.mxu0 %v353
    %v431 = vpop.f32.mrf.mxu0
    %v432 = vadd.f32 %v358, %v431
    %v433 = vpop.f32.mrf.mxu0
    %v434 = vadd.f32 %v362, %v433
    %435 = vdwg.mxu0
    %v436 = vxor.u32 %v432, 2147483648
    %v437 = vxor.u32 %v434, 2147483648
    %v438 = vmul.f32 %v436, 1.442695
    %v439 = vpow.pop %v438
    %v440 = vmul.f32 %v437, 1.442695
    %v441 = vpow.pop %v440
    %v442 = vadd.f32 %v439, 1.0
    %v443 = vadd.f32 %v441, 1.0
    %v444 = vrcp.pop %v442
    %v445 = vmul.f32 1.0, %v444
    %v446 = vrcp.pop %v443
    %v447 = vmul.f32 1.0, %v446
    %v448 = vtanh.pop %v434
    %v449 = vmul.f32 %v445, 0.0
    %451 = vrot.lane.b32.xlu0 %v448, 64
    %v452 = vpop.permute.xlu0 %451
    %v454 = vmul.f32 %v445, %v452
    %456 = vrot.lane.b32.xlu0 %v454, 64
    %v457 = vpop.permute.xlu0 %456
    %v459 = vadd.f32 %v449, %v457
    %v460 = vtanh.pop %v459
    %462 = vrot.lane.b32.xlu0 %v460, 64
    %v463 = vpop.permute.xlu0 %462
    %v465 = vmul.f32 %v447, %v463
    %v468 = vunpack.c.l.s4 1966171168
    %v469 = vunpack.c.0.s8 %v468
    %v470 = vlaneseq
    %v471 = vshrl.u32 %v470, 7
    %v472 = vsub.s32 %v469, %v471
    %v473 = vrot.slane %v465, %v472
    %v474 = vcombine.high %v473, %v473
    %v476 = vunpack.c.l.s4 1966171168
    %v477 = vunpack.c.0.s8 %v476
    %v478 = vlaneseq
    %v479 = vshrl.u32 %v478, 7
    %v480 = vsub.s32 %v477, %v479
    %v481 = vrot.slane %v473, %v480
    %v483 = vunpack.c.l.s4 1966171168
    %v484 = vunpack.c.0.s8 %v483
    %v485 = vlaneseq
    %v486 = vshrl.u32 %v485, 7
    %v487 = vsub.s32 %v484, %v486
    %v488 = vrot.slane %v474, %v487
    %vm491 = vcmask 516096
    %492 = vst.msk [vmem:[#allocation2] sm:$0x1] %vm491, %v481
    %493 = vst.msk [vmem:[#allocation2 + $0x8] sm:$0x1] %vm491, %v488
    %v494 = vsel %vm200, %v351, 0
    %496 = vmatprep.subr.mxu0 0.0
    %497 = vmatpush1.msra.mxu0 0.0
    %498 = vmatprep.subr.mxu0 0.0
    %499 = vmatpush1.msra.mxu0 0.0
    %500 = vmatprep.subr.mxu0 0.0
    %501 = vmatpush1.msra.mxu0 0.0
    %502 = vmatprep.subr.mxu0 0.0
    %503 = vmatpush1.msra.mxu0 0.0
    %504 = vmatprep.subr.mxu0 0.0
    %505 = vmatpush1.msra.mxu0 0.0
    %506 = vmatprep.subr.mxu0 0.0
    %507 = vmatpush1.msra.mxu0 0.0
    %508 = vmatprep.subr.mxu0 0.0
    %509 = vmatpush1.msra.mxu0 0.0
    %510 = vmatprep.subr.mxu0 0.0
    %511 = vmatpush1.msra.mxu0 0.0
    %512 = vmatprep.subr.mxu0 %v166
    %513 = vmatpush1.msra.mxu0 %v165
    %514 = vmatprep.subr.mxu0 %v164
    %515 = vmatpush1.msra.mxu0 %v163
    %516 = vmatprep.subr.mxu0 %v162
    %517 = vmatpush1.msra.mxu0 %v161
    %518 = vmatprep.subr.mxu0 %v160
    %519 = vmatpush1.msra.mxu0 %v159
    %520 = vmatprep.subr.mxu0 %v158
    %521 = vmatpush1.msra.mxu0 %v157
    %522 = vmatprep.subr.mxu0 %v156
    %523 = vmatpush1.msra.mxu0 %v155
    %524 = vmatprep.subr.mxu0 %v154
    %525 = vmatpush1.msra.mxu0 %v153
    %526 = vmatprep.subr.mxu0 %v152
    %527 = vmatpush1.msra.mxu0 %v151
    %528 = vmatprep.subr.mxu0 0.0
    %529 = vmatpush2.msra.mxu0 0.0
    %530 = vmatprep.subr.mxu0 0.0
    %531 = vmatpush2.msra.mxu0 0.0
    %532 = vmatprep.subr.mxu0 0.0
    %533 = vmatpush2.msra.mxu0 0.0
    %534 = vmatprep.subr.mxu0 0.0
    %535 = vmatpush2.msra.mxu0 0.0
    %536 = vmatprep.subr.mxu0 0.0
    %537 = vmatpush2.msra.mxu0 0.0
    %538 = vmatprep.subr.mxu0 0.0
    %539 = vmatpush2.msra.mxu0 0.0
    %540 = vmatprep.subr.mxu0 0.0
    %541 = vmatpush2.msra.mxu0 0.0
    %542 = vmatprep.subr.mxu0 0.0
    %543 = vmatpush2.msra.mxu0 0.0
    %544 = vmatprep.subr.mxu0 0.0
    %545 = vmatpush2.msra.mxu0 0.0
    %546 = vmatprep.subr.mxu0 0.0
    %547 = vmatpush2.msra.mxu0 0.0
    %548 = vmatprep.subr.mxu0 0.0
    %549 = vmatpush2.msra.mxu0 0.0
    %550 = vmatprep.subr.mxu0 0.0
    %551 = vmatpush2.msra.mxu0 0.0
    %552 = vmatprep.subr.mxu0 0.0
    %553 = vmatpush2.msra.mxu0 0.0
    %554 = vmatprep.subr.mxu0 0.0
    %555 = vmatpush2.msra.mxu0 0.0
    %556 = vmatprep.subr.mxu0 0.0
    %557 = vmatpush2.msra.mxu0 0.0
    %558 = vmatprep.subr.mxu0 0.0
    %559 = vmatpush2.msra.mxu0 0.0
    %560 = vmatprep.mubr.f32.mxu0 0.0
    %561 = vmatmul.mubr.f32.gmra.mxu0 %v494
    %v562 = vpop.f32.mrf.mxu0
    %v563 = vadd.f32 0.0, %v562
    %v564 = vpop.f32.mrf.mxu0
    %v565 = vadd.f32 0.0, %v564
    %566 = vdwg.mxu0
    %v569 = vrot.slane %v563, 7
    %v570 = vrot.slane %v565, 7
    %v575 = vadd.f32 %v141, %v569
    %v576 = vadd.f32 %v143, %v570
    %v577 = vadd.f32 %v147, %v563
    %v578 = vadd.f32 %v149, %v565
    %v579 = vxor.u32 %v575, 2147483648
    %v580 = vxor.u32 %v576, 2147483648
    %v581 = vxor.u32 %v577, 2147483648
    %v582 = vxor.u32 %v578, 2147483648
    %v583 = vmul.f32 %v579, 1.442695
    %v584 = vpow.pop %v583
    %v585 = vmul.f32 %v580, 1.442695
    %v586 = vpow.pop %v585
    %v587 = vmul.f32 %v581, 1.442695
    %v588 = vpow.pop %v587
    %v589 = vmul.f32 %v582, 1.442695
    %v590 = vpow.pop %v589
    %v591 = vadd.f32 %v584, 1.0
    %v592 = vadd.f32 %v586, 1.0
    %v593 = vadd.f32 %v588, 1.0
    %v594 = vadd.f32 %v590, 1.0
    %v595 = vrcp.pop %v591
    %v596 = vmul.f32 1.0, %v595
    %v597 = vrcp.pop %v592
    %v598 = vmul.f32 1.0, %v597
    %v599 = vrcp.pop %v593
    %v600 = vmul.f32 1.0, %v599
    %v601 = vrcp.pop %v594
    %v602 = vmul.f32 1.0, %v601
    %v603 = vtanh.pop %v576
    %v604 = vtanh.pop %v578
    %v607 = vrot.slane %v333, 7
    %v608 = vrot.slane %v334, 7
    %v611 = vmul.f32 %v596, %v607
    %v612 = vmul.f32 %v600, %v608
    %615 = vrot.lane.b32.xlu0 %v603, 64
    %v616 = vpop.permute.xlu0 %615
    %617 = vrot.lane.b32.xlu0 %v604, 64
    %v618 = vpop.permute.xlu0 %617
    %v621 = vmul.f32 %v596, %v616
    %v622 = vmul.f32 %v600, %v618
    %625 = vrot.lane.b32.xlu0 %v621, 64
    %v626 = vpop.permute.xlu0 %625
    %627 = vrot.lane.b32.xlu0 %v622, 64
    %v628 = vpop.permute.xlu0 %627
    %v631 = vadd.f32 %v611, %v626
    %v632 = vadd.f32 %v612, %v628
    %v633 = vtanh.pop %v631
    %v634 = vtanh.pop %v632
    %637 = vrot.lane.b32.xlu0 %v633, 64
    %v638 = vpop.permute.xlu0 %637
    %639 = vrot.lane.b32.xlu0 %v634, 64
    %v640 = vpop.permute.xlu0 %639
    %v643 = vmul.f32 %v598, %v638
    %v644 = vmul.f32 %v602, %v640
    %v647 = vrot.slane %v644, 7
    %vm648 = vcmask 1042434
    %v649 = vsel %vm648, %v647, %v643
    %v651 = vrot.slane %v465, 7
    %652 = vrot.lane.b32.xlu0 %v651, 64
    %v653 = vpop.permute.xlu0 %652
    %v655 = vsel %vm200, %v649, %v653
    %v657 = vrot.slane %v655, 1
    %659 = vmatprep.subr.mxu0 %v198
    %660 = vmatpush1.msra.mxu0 %v197
    %661 = vmatprep.subr.mxu0 %v196
    %662 = vmatpush1.msra.mxu0 %v195
    %663 = vmatprep.subr.mxu0 %v194
    %664 = vmatpush1.msra.mxu0 %v193
    %665 = vmatprep.subr.mxu0 %v192
    %666 = vmatpush1.msra.mxu0 %v191
    %667 = vmatprep.subr.mxu0 %v190
    %668 = vmatpush1.msra.mxu0 %v189
    %669 = vmatprep.subr.mxu0 %v188
    %670 = vmatpush1.msra.mxu0 %v187
    %671 = vmatprep.subr.mxu0 %v186
    %672 = vmatpush1.msra.mxu0 %v185
    %673 = vmatprep.subr.mxu0 %v184
    %674 = vmatpush1.msra.mxu0 %v183
    %675 = vmatprep.subr.mxu0 %v182
    %676 = vmatpush1.msra.mxu0 %v181
    %677 = vmatprep.subr.mxu0 %v180
    %678 = vmatpush1.msra.mxu0 %v179
    %679 = vmatprep.subr.mxu0 %v178
    %680 = vmatpush1.msra.mxu0 %v177
    %681 = vmatprep.subr.mxu0 %v176
    %682 = vmatpush1.msra.mxu0 %v175
    %683 = vmatprep.subr.mxu0 %v174
    %684 = vmatpush1.msra.mxu0 %v173
    %685 = vmatprep.subr.mxu0 %v172
    %686 = vmatpush1.msra.mxu0 %v171
    %687 = vmatprep.subr.mxu0 %v170
    %688 = vmatpush1.msra.mxu0 %v169
    %689 = vmatprep.subr.mxu0 %v168
    %690 = vmatpush1.msra.mxu0 %v167
    %691 = vmatprep.subr.mxu0 0.0
    %692 = vmatpush2.msra.mxu0 0.0
    %693 = vmatprep.subr.mxu0 0.0
    %694 = vmatpush2.msra.mxu0 0.0
    %695 = vmatprep.subr.mxu0 0.0
    %696 = vmatpush2.msra.mxu0 0.0
    %697 = vmatprep.subr.mxu0 0.0
    %698 = vmatpush2.msra.mxu0 0.0
    %699 = vmatprep.subr.mxu0 0.0
    %700 = vmatpush2.msra.mxu0 0.0
    %701 = vmatprep.subr.mxu0 0.0
    %702 = vmatpush2.msra.mxu0 0.0
    %703 = vmatprep.subr.mxu0 0.0
    %704 = vmatpush2.msra.mxu0 0.0
    %705 = vmatprep.subr.mxu0 0.0
    %706 = vmatpush2.msra.mxu0 0.0
    %707 = vmatprep.subr.mxu0 0.0
    %708 = vmatpush2.msra.mxu0 0.0
    %709 = vmatprep.subr.mxu0 0.0
    %710 = vmatpush2.msra.mxu0 0.0
    %711 = vmatprep.subr.mxu0 0.0
    %712 = vmatpush2.msra.mxu0 0.0
    %713 = vmatprep.subr.mxu0 0.0
    %714 = vmatpush2.msra.mxu0 0.0
    %715 = vmatprep.subr.mxu0 0.0
    %716 = vmatpush2.msra.mxu0 0.0
    %717 = vmatprep.subr.mxu0 0.0
    %718 = vmatpush2.msra.mxu0 0.0
    %719 = vmatprep.subr.mxu0 0.0
    %720 = vmatpush2.msra.mxu0 0.0
    %721 = vmatprep.subr.mxu0 0.0
    %722 = vmatpush2.msra.mxu0 0.0
    %723 = vmatprep.mubr.f32.mxu0 0.0
    %724 = vmatmul.mubr.f32.gmra.mxu0 %v657
    %v725 = vpop.f32.mrf.mxu0
    %v726 = vadd.f32 %v358, %v725
    %v727 = vpop.f32.mrf.mxu0
    %v728 = vadd.f32 %v362, %v727
    %729 = vdwg.mxu0
    %v730 = vxor.u32 %v726, 2147483648
    %v731 = vxor.u32 %v728, 2147483648
    %v732 = vmul.f32 %v730, 1.442695
    %v733 = vpow.pop %v732
    %v734 = vmul.f32 %v731, 1.442695
    %v735 = vpow.pop %v734
    %v736 = vadd.f32 %v733, 1.0
    %v737 = vadd.f32 %v735, 1.0
    %v738 = vrcp.pop %v736
    %v739 = vmul.f32 1.0, %v738
    %v740 = vrcp.pop %v737
    %v741 = vmul.f32 1.0, %v740
    %v742 = vtanh.pop %v728
    %v743 = vmul.f32 %v739, %v459
    %745 = vrot.lane.b32.xlu0 %v742, 64
    %v746 = vpop.permute.xlu0 %745
    %v748 = vmul.f32 %v739, %v746
    %750 = vrot.lane.b32.xlu0 %v748, 64
    %v751 = vpop.permute.xlu0 %750
    %v753 = vadd.f32 %v743, %v751
    %v754 = vtanh.pop %v753
    %756 = vrot.lane.b32.xlu0 %v754, 64
    %v757 = vpop.permute.xlu0 %756
    %v759 = vmul.f32 %v741, %v757
    %v762 = vunpack.c.l.s4 1966171168
    %v763 = vunpack.c.0.s8 %v762
    %v764 = vlaneseq
    %v765 = vshrl.u32 %v764, 7
    %v766 = vsub.s32 %v763, %v765
    %v767 = vrot.slane %v759, %v766
    %v768 = vcombine.high %v767, %v767
    %v770 = vunpack.c.l.s4 1966171168
    %v771 = vunpack.c.0.s8 %v770
    %v772 = vlaneseq
    %v773 = vshrl.u32 %v772, 7
    %v774 = vsub.s32 %v771, %v773
    %v775 = vrot.slane %v767, %v774
    %v777 = vunpack.c.l.s4 1966171168
    %v778 = vunpack.c.0.s8 %v777
    %v779 = vlaneseq
    %v780 = vshrl.u32 %v779, 7
    %v781 = vsub.s32 %v778, %v780
    %v782 = vrot.slane %v768, %v781
    %785 = vst.msk [vmem:[#allocation2 + $0x1] sm:$0x1] %vm491, %v775
    %786 = vst.msk [vmem:[#allocation2 + $0x9] sm:$0x1] %vm491, %v782
    %v787 = vrot.slane %v643, 1
    %v788 = vsel %vm350, %v644, %v787
    %v789 = vsel %vm200, %v788, 0
    %791 = vmatprep.subr.mxu0 0.0
    %792 = vmatpush1.msra.mxu0 0.0
    %793 = vmatprep.subr.mxu0 0.0
    %794 = vmatpush1.msra.mxu0 0.0
    %795 = vmatprep.subr.mxu0 0.0
    %796 = vmatpush1.msra.mxu0 0.0
    %797 = vmatprep.subr.mxu0 0.0
    %798 = vmatpush1.msra.mxu0 0.0
    %799 = vmatprep.subr.mxu0 0.0
    %800 = vmatpush1.msra.mxu0 0.0
    %801 = vmatprep.subr.mxu0 0.0
    %802 = vmatpush1.msra.mxu0 0.0
    %803 = vmatprep.subr.mxu0 0.0
    %804 = vmatpush1.msra.mxu0 0.0
    %805 = vmatprep.subr.mxu0 0.0
    %806 = vmatpush1.msra.mxu0 0.0
    %807 = vmatprep.subr.mxu0 %v166
    %808 = vmatpush1.msra.mxu0 %v165
    %809 = vmatprep.subr.mxu0 %v164
    %810 = vmatpush1.msra.mxu0 %v163
    %811 = vmatprep.subr.mxu0 %v162
    %812 = vmatpush1.msra.mxu0 %v161
    %813 = vmatprep.subr.mxu0 %v160
    %814 = vmatpush1.msra.mxu0 %v159
    %815 = vmatprep.subr.mxu0 %v158
    %816 = vmatpush1.msra.mxu0 %v157
    %817 = vmatprep.subr.mxu0 %v156
    %818 = vmatpush1.msra.mxu0 %v155
    %819 = vmatprep.subr.mxu0 %v154
    %820 = vmatpush1.msra.mxu0 %v153
    %821 = vmatprep.subr.mxu0 %v152
    %822 = vmatpush1.msra.mxu0 %v151
    %823 = vmatprep.subr.mxu0 0.0
    %824 = vmatpush2.msra.mxu0 0.0
    %825 = vmatprep.subr.mxu0 0.0
    %826 = vmatpush2.msra.mxu0 0.0
    %827 = vmatprep.subr.mxu0 0.0
    %828 = vmatpush2.msra.mxu0 0.0
    %829 = vmatprep.subr.mxu0 0.0
    %830 = vmatpush2.msra.mxu0 0.0
    %831 = vmatprep.subr.mxu0 0.0
    %832 = vmatpush2.msra.mxu0 0.0
    %833 = vmatprep.subr.mxu0 0.0
    %834 = vmatpush2.msra.mxu0 0.0
    %835 = vmatprep.subr.mxu0 0.0
    %836 = vmatpush2.msra.mxu0 0.0
    %837 = vmatprep.subr.mxu0 0.0
    %838 = vmatpush2.msra.mxu0 0.0
    %839 = vmatprep.subr.mxu0 0.0
    %840 = vmatpush2.msra.mxu0 0.0
    %841 = vmatprep.subr.mxu0 0.0
    %842 = vmatpush2.msra.mxu0 0.0
    %843 = vmatprep.subr.mxu0 0.0
    %844 = vmatpush2.msra.mxu0 0.0
    %845 = vmatprep.subr.mxu0 0.0
    %846 = vmatpush2.msra.mxu0 0.0
    %847 = vmatprep.subr.mxu0 0.0
    %848 = vmatpush2.msra.mxu0 0.0
    %849 = vmatprep.subr.mxu0 0.0
    %850 = vmatpush2.msra.mxu0 0.0
    %851 = vmatprep.subr.mxu0 0.0
    %852 = vmatpush2.msra.mxu0 0.0
    %853 = vmatprep.subr.mxu0 0.0
    %854 = vmatpush2.msra.mxu0 0.0
    %855 = vmatprep.mubr.f32.mxu0 0.0
    %856 = vmatmul.mubr.f32.gmra.mxu0 %v789
    %v857 = vpop.f32.mrf.mxu0
    %v858 = vadd.f32 0.0, %v857
    %v859 = vpop.f32.mrf.mxu0
    %v860 = vadd.f32 0.0, %v859
    %861 = vdwg.mxu0
    %v864 = vrot.slane %v858, 6
    %v865 = vrot.slane %v860, 6
    %v866 = vrot.slane %v858, 7
    %v867 = vrot.slane %v860, 7
    %v872 = vadd.f32 %v141, %v864
    %v873 = vadd.f32 %v143, %v865
    %v874 = vadd.f32 %v147, %v866
    %v875 = vadd.f32 %v149, %v867
    %v876 = vxor.u32 %v872, 2147483648
    %v877 = vxor.u32 %v873, 2147483648
    %v878 = vxor.u32 %v874, 2147483648
    %v879 = vxor.u32 %v875, 2147483648
    %v880 = vmul.f32 %v876, 1.442695
    %v881 = vpow.pop %v880
    %v882 = vmul.f32 %v877, 1.442695
    %v883 = vpow.pop %v882
    %v884 = vmul.f32 %v878, 1.442695
    %v885 = vpow.pop %v884
    %v886 = vmul.f32 %v879, 1.442695
    %v887 = vpow.pop %v886
    %v888 = vadd.f32 %v881, 1.0
    %v889 = vadd.f32 %v883, 1.0
    %v890 = vadd.f32 %v885, 1.0
    %v891 = vadd.f32 %v887, 1.0
    %v892 = vrcp.pop %v888
    %v893 = vmul.f32 1.0, %v892
    %v894 = vrcp.pop %v889
    %v895 = vmul.f32 1.0, %v894
    %v896 = vrcp.pop %v890
    %v897 = vmul.f32 1.0, %v896
    %v898 = vrcp.pop %v891
    %v899 = vmul.f32 1.0, %v898
    %v900 = vtanh.pop %v873
    %v901 = vtanh.pop %v875
    %v904 = vrot.slane %v631, 7
    %v905 = vrot.slane %v632, 7
    %v908 = vmul.f32 %v893, %v904
    %v909 = vmul.f32 %v897, %v905
    %912 = vrot.lane.b32.xlu0 %v900, 64
    %v913 = vpop.permute.xlu0 %912
    %914 = vrot.lane.b32.xlu0 %v901, 64
    %v915 = vpop.permute.xlu0 %914
    %v918 = vmul.f32 %v893, %v913
    %v919 = vmul.f32 %v897, %v915
    %922 = vrot.lane.b32.xlu0 %v918, 64
    %v923 = vpop.permute.xlu0 %922
    %924 = vrot.lane.b32.xlu0 %v919, 64
    %v925 = vpop.permute.xlu0 %924
    %v928 = vadd.f32 %v908, %v923
    %v929 = vadd.f32 %v909, %v925
    %v930 = vtanh.pop %v928
    %v931 = vtanh.pop %v929
    %934 = vrot.lane.b32.xlu0 %v930, 64
    %v935 = vpop.permute.xlu0 %934
    %936 = vrot.lane.b32.xlu0 %v931, 64
    %v937 = vpop.permute.xlu0 %936
    %v940 = vmul.f32 %v895, %v935
    %v941 = vmul.f32 %v899, %v937
    %v944 = vrot.slane %v941, 7
    %vm945 = vcmask 1043459
    %v946 = vsel %vm945, %v944, %v940
    %v948 = vrot.slane %v759, 6
    %949 = vrot.lane.b32.xlu0 %v948, 64
    %v950 = vpop.permute.xlu0 %949
    %v952 = vsel %vm200, %v946, %v950
    %v954 = vrot.slane %v952, 2
    %956 = vmatprep.subr.mxu0 %v198
    %957 = vmatpush1.msra.mxu0 %v197
    %958 = vmatprep.subr.mxu0 %v196
    %959 = vmatpush1.msra.mxu0 %v195
    %960 = vmatprep.subr.mxu0 %v194
    %961 = vmatpush1.msra.mxu0 %v193
    %962 = vmatprep.subr.mxu0 %v192
    %963 = vmatpush1.msra.mxu0 %v191
    %964 = vmatprep.subr.mxu0 %v190
    %965 = vmatpush1.msra.mxu0 %v189
    %966 = vmatprep.subr.mxu0 %v188
    %967 = vmatpush1.msra.mxu0 %v187
    %968 = vmatprep.subr.mxu0 %v186
    %969 = vmatpush1.msra.mxu0 %v185
    %970 = vmatprep.subr.mxu0 %v184
    %971 = vmatpush1.msra.mxu0 %v183
    %972 = vmatprep.subr.mxu0 %v182
    %973 = vmatpush1.msra.mxu0 %v181
    %974 = vmatprep.subr.mxu0 %v180
    %975 = vmatpush1.msra.mxu0 %v179
    %976 = vmatprep.subr.mxu0 %v178
    %977 = vmatpush1.msra.mxu0 %v177
    %978 = vmatprep.subr.mxu0 %v176
    %979 = vmatpush1.msra.mxu0 %v175
    %980 = vmatprep.subr.mxu0 %v174
    %981 = vmatpush1.msra.mxu0 %v173
    %982 = vmatprep.subr.mxu0 %v172
    %983 = vmatpush1.msra.mxu0 %v171
    %984 = vmatprep.subr.mxu0 %v170
    %985 = vmatpush1.msra.mxu0 %v169
    %986 = vmatprep.subr.mxu0 %v168
    %987 = vmatpush1.msra.mxu0 %v167
    %988 = vmatprep.subr.mxu0 0.0
    %989 = vmatpush2.msra.mxu0 0.0
    %990 = vmatprep.subr.mxu0 0.0
    %991 = vmatpush2.msra.mxu0 0.0
    %992 = vmatprep.subr.mxu0 0.0
    %993 = vmatpush2.msra.mxu0 0.0
    %994 = vmatprep.subr.mxu0 0.0
    %995 = vmatpush2.msra.mxu0 0.0
    %996 = vmatprep.subr.mxu0 0.0
    %997 = vmatpush2.msra.mxu0 0.0
    %998 = vmatprep.subr.mxu0 0.0
    %999 = vmatpush2.msra.mxu0 0.0
    %1000 = vmatprep.subr.mxu0 0.0
    %1001 = vmatpush2.msra.mxu0 0.0
    %1002 = vmatprep.subr.mxu0 0.0
    %1003 = vmatpush2.msra.mxu0 0.0
    %1004 = vmatprep.subr.mxu0 0.0
    %1005 = vmatpush2.msra.mxu0 0.0
    %1006 = vmatprep.subr.mxu0 0.0
    %1007 = vmatpush2.msra.mxu0 0.0
    %1008 = vmatprep.subr.mxu0 0.0
    %1009 = vmatpush2.msra.mxu0 0.0
    %1010 = vmatprep.subr.mxu0 0.0
    %1011 = vmatpush2.msra.mxu0 0.0
    %1012 = vmatprep.subr.mxu0 0.0
    %1013 = vmatpush2.msra.mxu0 0.0
    %1014 = vmatprep.subr.mxu0 0.0
    %1015 = vmatpush2.msra.mxu0 0.0
    %1016 = vmatprep.subr.mxu0 0.0
    %1017 = vmatpush2.msra.mxu0 0.0
    %1018 = vmatprep.subr.mxu0 0.0
    %1019 = vmatpush2.msra.mxu0 0.0
    %1020 = vmatprep.mubr.f32.mxu0 0.0
    %1021 = vmatmul.mubr.f32.gmra.mxu0 %v954
    %v1022 = vpop.f32.mrf.mxu0
    %v1023 = vadd.f32 %v358, %v1022
    %v1024 = vpop.f32.mrf.mxu0
    %v1025 = vadd.f32 %v362, %v1024
    %1026 = vdwg.mxu0
    %v1027 = vxor.u32 %v1023, 2147483648
    %v1028 = vxor.u32 %v1025, 2147483648
    %v1029 = vmul.f32 %v1027, 1.442695
    %v1030 = vpow.pop %v1029
    %v1031 = vmul.f32 %v1028, 1.442695
    %v1032 = vpow.pop %v1031
    %v1033 = vadd.f32 %v1030, 1.0
    %v1034 = vadd.f32 %v1032, 1.0
    %v1035 = vrcp.pop %v1033
    %v1036 = vmul.f32 1.0, %v1035
    %v1037 = vrcp.pop %v1034
    %v1038 = vmul.f32 1.0, %v1037
    %v1039 = vtanh.pop %v1025
    %v1040 = vmul.f32 %v1036, %v753
    %1042 = vrot.lane.b32.xlu0 %v1039, 64
    %v1043 = vpop.permute.xlu0 %1042
    %v1045 = vmul.f32 %v1036, %v1043
    %1047 = vrot.lane.b32.xlu0 %v1045, 64
    %v1048 = vpop.permute.xlu0 %1047
    %v1050 = vadd.f32 %v1040, %v1048
    %v1051 = vtanh.pop %v1050
    %1053 = vrot.lane.b32.xlu0 %v1051, 64
    %v1054 = vpop.permute.xlu0 %1053
    %v1056 = vmul.f32 %v1038, %v1054
    %v1059 = vunpack.c.l.s4 1966171168
    %v1060 = vunpack.c.0.s8 %v1059
    %v1061 = vlaneseq
    %v1062 = vshrl.u32 %v1061, 7
    %v1063 = vsub.s32 %v1060, %v1062
    %v1064 = vrot.slane %v1056, %v1063
    %v1065 = vcombine.high %v1064, %v1064
    %v1067 = vunpack.c.l.s4 1966171168
    %v1068 = vunpack.c.0.s8 %v1067
    %v1069 = vlaneseq
    %v1070 = vshrl.u32 %v1069, 7
    %v1071 = vsub.s32 %v1068, %v1070
    %v1072 = vrot.slane %v1064, %v1071
    %v1074 = vunpack.c.l.s4 1966171168
    %v1075 = vunpack.c.0.s8 %v1074
    %v1076 = vlaneseq
    %v1077 = vshrl.u32 %v1076, 7
    %v1078 = vsub.s32 %v1075, %v1077
    %v1079 = vrot.slane %v1065, %v1078
    %1082 = vst.msk [vmem:[#allocation2 + $0x2] sm:$0x1] %vm491, %v1072
    %1083 = vst.msk [vmem:[#allocation2 + $0xa] sm:$0x1] %vm491, %v1079
    %v1084 = vrot.slane %v940, 2
    %v1085 = vrot.slane %v941, 1
    %v1086 = vsel %vm350, %v1085, %v1084
    %v1087 = vsel %vm200, %v1086, 0
    %1089 = vmatprep.subr.mxu0 0.0
    %1090 = vmatpush1.msra.mxu0 0.0
    %1091 = vmatprep.subr.mxu0 0.0
    %1092 = vmatpush1.msra.mxu0 0.0
    %1093 = vmatprep.subr.mxu0 0.0
    %1094 = vmatpush1.msra.mxu0 0.0
    %1095 = vmatprep.subr.mxu0 0.0
    %1096 = vmatpush1.msra.mxu0 0.0
    %1097 = vmatprep.subr.mxu0 0.0
    %1098 = vmatpush1.msra.mxu0 0.0
    %1099 = vmatprep.subr.mxu0 0.0
    %1100 = vmatpush1.msra.mxu0 0.0
    %1101 = vmatprep.subr.mxu0 0.0
    %1102 = vmatpush1.msra.mxu0 0.0
    %1103 = vmatprep.subr.mxu0 0.0
    %1104 = vmatpush1.msra.mxu0 0.0
    %1105 = vmatprep.subr.mxu0 %v166
    %1106 = vmatpush1.msra.mxu0 %v165
    %1107 = vmatprep.subr.mxu0 %v164
    %1108 = vmatpush1.msra.mxu0 %v163
    %1109 = vmatprep.subr.mxu0 %v162
    %1110 = vmatpush1.msra.mxu0 %v161
    %1111 = vmatprep.subr.mxu0 %v160
    %1112 = vmatpush1.msra.mxu0 %v159
    %1113 = vmatprep.subr.mxu0 %v158
    %1114 = vmatpush1.msra.mxu0 %v157
    %1115 = vmatprep.subr.mxu0 %v156
    %1116 = vmatpush1.msra.mxu0 %v155
    %1117 = vmatprep.subr.mxu0 %v154
    %1118 = vmatpush1.msra.mxu0 %v153
    %1119 = vmatprep.subr.mxu0 %v152
    %1120 = vmatpush1.msra.mxu0 %v151
    %1121 = vmatprep.subr.mxu0 0.0
    %1122 = vmatpush2.msra.mxu0 0.0
    %1123 = vmatprep.subr.mxu0 0.0
    %1124 = vmatpush2.msra.mxu0 0.0
    %1125 = vmatprep.subr.mxu0 0.0
    %1126 = vmatpush2.msra.mxu0 0.0
    %1127 = vmatprep.subr.mxu0 0.0
    %1128 = vmatpush2.msra.mxu0 0.0
    %1129 = vmatprep.subr.mxu0 0.0
    %1130 = vmatpush2.msra.mxu0 0.0
    %1131 = vmatprep.subr.mxu0 0.0
    %1132 = vmatpush2.msra.mxu0 0.0
    %1133 = vmatprep.subr.mxu0 0.0
    %1134 = vmatpush2.msra.mxu0 0.0
    %1135 = vmatprep.subr.mxu0 0.0
    %1136 = vmatpush2.msra.mxu0 0.0
    %1137 = vmatprep.subr.mxu0 0.0
    %1138 = vmatpush2.msra.mxu0 0.0
    %1139 = vmatprep.subr.mxu0 0.0
    %1140 = vmatpush2.msra.mxu0 0.0
    %1141 = vmatprep.subr.mxu0 0.0
    %1142 = vmatpush2.msra.mxu0 0.0
    %1143 = vmatprep.subr.mxu0 0.0
    %1144 = vmatpush2.msra.mxu0 0.0
    %1145 = vmatprep.subr.mxu0 0.0
    %1146 = vmatpush2.msra.mxu0 0.0
    %1147 = vmatprep.subr.mxu0 0.0
    %1148 = vmatpush2.msra.mxu0 0.0
    %1149 = vmatprep.subr.mxu0 0.0
    %1150 = vmatpush2.msra.mxu0 0.0
    %1151 = vmatprep.subr.mxu0 0.0
    %1152 = vmatpush2.msra.mxu0 0.0
    %1153 = vmatprep.mubr.f32.mxu0 0.0
    %1154 = vmatmul.mubr.f32.gmra.mxu0 %v1087
    %v1155 = vpop.f32.mrf.mxu0
    %v1156 = vadd.f32 0.0, %v1155
    %v1157 = vpop.f32.mrf.mxu0
    %v1158 = vadd.f32 0.0, %v1157
    %1159 = vdwg.mxu0
    %v1162 = vrot.slane %v1156, 5
    %v1163 = vrot.slane %v1158, 5
    %v1164 = vrot.slane %v1156, 6
    %v1165 = vrot.slane %v1158, 6
    %v1170 = vadd.f32 %v141, %v1162
    %v1171 = vadd.f32 %v143, %v1163
    %v1172 = vadd.f32 %v147, %v1164
    %v1173 = vadd.f32 %v149, %v1165
    %v1174 = vxor.u32 %v1170, 2147483648
    %v1175 = vxor.u32 %v1171, 2147483648
    %v1176 = vxor.u32 %v1172, 2147483648
    %v1177 = vxor.u32 %v1173, 2147483648
    %v1178 = vmul.f32 %v1174, 1.442695
    %v1179 = vpow.pop %v1178
    %v1180 = vmul.f32 %v1175, 1.442695
    %v1181 = vpow.pop %v1180
    %v1182 = vmul.f32 %v1176, 1.442695
    %v1183 = vpow.pop %v1182
    %v1184 = vmul.f32 %v1177, 1.442695
    %v1185 = vpow.pop %v1184
    %v1186 = vadd.f32 %v1179, 1.0
    %v1187 = vadd.f32 %v1181, 1.0
    %v1188 = vadd.f32 %v1183, 1.0
    %v1189 = vadd.f32 %v1185, 1.0
    %v1190 = vrcp.pop %v1186
    %v1191 = vmul.f32 1.0, %v1190
    %v1192 = vrcp.pop %v1187
    %v1193 = vmul.f32 1.0, %v1192
    %v1194 = vrcp.pop %v1188
    %v1195 = vmul.f32 1.0, %v1194
    %v1196 = vrcp.pop %v1189
    %v1197 = vmul.f32 1.0, %v1196
    %v1198 = vtanh.pop %v1171
    %v1199 = vtanh.pop %v1173
    %v1202 = vrot.slane %v928, 7
    %v1203 = vrot.slane %v929, 7
    %v1206 = vmul.f32 %v1191, %v1202
    %v1207 = vmul.f32 %v1195, %v1203
    %1210 = vrot.lane.b32.xlu0 %v1198, 64
    %v1211 = vpop.permute.xlu0 %1210
    %1212 = vrot.lane.b32.xlu0 %v1199, 64
    %v1213 = vpop.permute.xlu0 %1212
    %v1216 = vmul.f32 %v1191, %v1211
    %v1217 = vmul.f32 %v1195, %v1213
    %1220 = vrot.lane.b32.xlu0 %v1216, 64
    %v1221 = vpop.permute.xlu0 %1220
    %1222 = vrot.lane.b32.xlu0 %v1217, 64
    %v1223 = vpop.permute.xlu0 %1222
    %v1226 = vadd.f32 %v1206, %v1221
    %v1227 = vadd.f32 %v1207, %v1223
    %v1228 = vtanh.pop %v1226
    %v1229 = vtanh.pop %v1227
    %1232 = vrot.lane.b32.xlu0 %v1228, 64
    %v1233 = vpop.permute.xlu0 %1232
    %1234 = vrot.lane.b32.xlu0 %v1229, 64
    %v1235 = vpop.permute.xlu0 %1234
    %v1238 = vmul.f32 %v1193, %v1233
    %v1239 = vmul.f32 %v1197, %v1235
    %v1242 = vrot.slane %v1239, 7
    %vm1243 = vcmask 1044484
    %v1244 = vsel %vm1243, %v1242, %v1238
    %v1246 = vrot.slane %v1056, 5
    %1247 = vrot.lane.b32.xlu0 %v1246, 64
    %v1248 = vpop.permute.xlu0 %1247
    %v1250 = vsel %vm200, %v1244, %v1248
    %v1252 = vrot.slane %v1250, 3
    %1254 = vmatprep.subr.mxu0 %v198
    %1255 = vmatpush1.msra.mxu0 %v197
    %1256 = vmatprep.subr.mxu0 %v196
    %1257 = vmatpush1.msra.mxu0 %v195
    %1258 = vmatprep.subr.mxu0 %v194
    %1259 = vmatpush1.msra.mxu0 %v193
    %1260 = vmatprep.subr.mxu0 %v192
    %1261 = vmatpush1.msra.mxu0 %v191
    %1262 = vmatprep.subr.mxu0 %v190
    %1263 = vmatpush1.msra.mxu0 %v189
    %1264 = vmatprep.subr.mxu0 %v188
    %1265 = vmatpush1.msra.mxu0 %v187
    %1266 = vmatprep.subr.mxu0 %v186
    %1267 = vmatpush1.msra.mxu0 %v185
    %1268 = vmatprep.subr.mxu0 %v184
    %1269 = vmatpush1.msra.mxu0 %v183
    %1270 = vmatprep.subr.mxu0 %v182
    %1271 = vmatpush1.msra.mxu0 %v181
    %1272 = vmatprep.subr.mxu0 %v180
    %1273 = vmatpush1.msra.mxu0 %v179
    %1274 = vmatprep.subr.mxu0 %v178
    %1275 = vmatpush1.msra.mxu0 %v177
    %1276 = vmatprep.subr.mxu0 %v176
    %1277 = vmatpush1.msra.mxu0 %v175
    %1278 = vmatprep.subr.mxu0 %v174
    %1279 = vmatpush1.msra.mxu0 %v173
    %1280 = vmatprep.subr.mxu0 %v172
    %1281 = vmatpush1.msra.mxu0 %v171
    %1282 = vmatprep.subr.mxu0 %v170
    %1283 = vmatpush1.msra.mxu0 %v169
    %1284 = vmatprep.subr.mxu0 %v168
    %1285 = vmatpush1.msra.mxu0 %v167
    %1286 = vmatprep.subr.mxu0 0.0
    %1287 = vmatpush2.msra.mxu0 0.0
    %1288 = vmatprep.subr.mxu0 0.0
    %1289 = vmatpush2.msra.mxu0 0.0
    %1290 = vmatprep.subr.mxu0 0.0
    %1291 = vmatpush2.msra.mxu0 0.0
    %1292 = vmatprep.subr.mxu0 0.0
    %1293 = vmatpush2.msra.mxu0 0.0
    %1294 = vmatprep.subr.mxu0 0.0
    %1295 = vmatpush2.msra.mxu0 0.0
    %1296 = vmatprep.subr.mxu0 0.0
    %1297 = vmatpush2.msra.mxu0 0.0
    %1298 = vmatprep.subr.mxu0 0.0
    %1299 = vmatpush2.msra.mxu0 0.0
    %1300 = vmatprep.subr.mxu0 0.0
    %1301 = vmatpush2.msra.mxu0 0.0
    %1302 = vmatprep.subr.mxu0 0.0
    %1303 = vmatpush2.msra.mxu0 0.0
    %1304 = vmatprep.subr.mxu0 0.0
    %1305 = vmatpush2.msra.mxu0 0.0
    %1306 = vmatprep.subr.mxu0 0.0
    %1307 = vmatpush2.msra.mxu0 0.0
    %1308 = vmatprep.subr.mxu0 0.0
    %1309 = vmatpush2.msra.mxu0 0.0
    %1310 = vmatprep.subr.mxu0 0.0
    %1311 = vmatpush2.msra.mxu0 0.0
    %1312 = vmatprep.subr.mxu0 0.0
    %1313 = vmatpush2.msra.mxu0 0.0
    %1314 = vmatprep.subr.mxu0 0.0
    %1315 = vmatpush2.msra.mxu0 0.0
    %1316 = vmatprep.subr.mxu0 0.0
    %1317 = vmatpush2.msra.mxu0 0.0
    %1318 = vmatprep.mubr.f32.mxu0 0.0
    %1319 = vmatmul.mubr.f32.gmra.mxu0 %v1252
    %v1320 = vpop.f32.mrf.mxu0
    %v1321 = vadd.f32 %v358, %v1320
    %v1322 = vpop.f32.mrf.mxu0
    %v1323 = vadd.f32 %v362, %v1322
    %1324 = vdwg.mxu0
    %v1325 = vxor.u32 %v1321, 2147483648
    %v1326 = vxor.u32 %v1323, 2147483648
    %v1327 = vmul.f32 %v1325, 1.442695
    %v1328 = vpow.pop %v1327
    %v1329 = vmul.f32 %v1326, 1.442695
    %v1330 = vpow.pop %v1329
    %v1331 = vadd.f32 %v1328, 1.0
    %v1332 = vadd.f32 %v1330, 1.0
    %v1333 = vrcp.pop %v1331
    %v1334 = vmul.f32 1.0, %v1333
    %v1335 = vrcp.pop %v1332
    %v1336 = vmul.f32 1.0, %v1335
    %v1337 = vtanh.pop %v1323
    %v1338 = vmul.f32 %v1334, %v1050
    %1340 = vrot.lane.b32.xlu0 %v1337, 64
    %v1341 = vpop.permute.xlu0 %1340
    %v1343 = vmul.f32 %v1334, %v1341
    %1345 = vrot.lane.b32.xlu0 %v1343, 64
    %v1346 = vpop.permute.xlu0 %1345
    %v1348 = vadd.f32 %v1338, %v1346
    %v1349 = vtanh.pop %v1348
    %1351 = vrot.lane.b32.xlu0 %v1349, 64
    %v1352 = vpop.permute.xlu0 %1351
    %v1354 = vmul.f32 %v1336, %v1352
    %v1357 = vunpack.c.l.s4 1966171168
    %v1358 = vunpack.c.0.s8 %v1357
    %v1359 = vlaneseq
    %v1360 = vshrl.u32 %v1359, 7
    %v1361 = vsub.s32 %v1358, %v1360
    %v1362 = vrot.slane %v1354, %v1361
    %v1363 = vcombine.high %v1362, %v1362
    %v1365 = vunpack.c.l.s4 1966171168
    %v1366 = vunpack.c.0.s8 %v1365
    %v1367 = vlaneseq
    %v1368 = vshrl.u32 %v1367, 7
    %v1369 = vsub.s32 %v1366, %v1368
    %v1370 = vrot.slane %v1362, %v1369
    %v1372 = vunpack.c.l.s4 1966171168
    %v1373 = vunpack.c.0.s8 %v1372
    %v1374 = vlaneseq
    %v1375 = vshrl.u32 %v1374, 7
    %v1376 = vsub.s32 %v1373, %v1375
    %v1377 = vrot.slane %v1363, %v1376
    %1380 = vst.msk [vmem:[#allocation2 + $0x3] sm:$0x1] %vm491, %v1370
    %1381 = vst.msk [vmem:[#allocation2 + $0xb] sm:$0x1] %vm491, %v1377
    %v1382 = vrot.slane %v1238, 3
    %v1383 = vrot.slane %v1239, 2
    %v1384 = vsel %vm350, %v1383, %v1382
    %v1385 = vsel %vm200, %v1384, 0
    %1387 = vmatprep.subr.mxu0 0.0
    %1388 = vmatpush1.msra.mxu0 0.0
    %1389 = vmatprep.subr.mxu0 0.0
    %1390 = vmatpush1.msra.mxu0 0.0
    %1391 = vmatprep.subr.mxu0 0.0
    %1392 = vmatpush1.msra.mxu0 0.0
    %1393 = vmatprep.subr.mxu0 0.0
    %1394 = vmatpush1.msra.mxu0 0.0
    %1395 = vmatprep.subr.mxu0 0.0
    %1396 = vmatpush1.msra.mxu0 0.0
    %1397 = vmatprep.subr.mxu0 0.0
    %1398 = vmatpush1.msra.mxu0 0.0
    %1399 = vmatprep.subr.mxu0 0.0
    %1400 = vmatpush1.msra.mxu0 0.0
    %1401 = vmatprep.subr.mxu0 0.0
    %1402 = vmatpush1.msra.mxu0 0.0
    %1403 = vmatprep.subr.mxu0 %v166
    %1404 = vmatpush1.msra.mxu0 %v165
    %1405 = vmatprep.subr.mxu0 %v164
    %1406 = vmatpush1.msra.mxu0 %v163
    %1407 = vmatprep.subr.mxu0 %v162
    %1408 = vmatpush1.msra.mxu0 %v161
    %1409 = vmatprep.subr.mxu0 %v160
    %1410 = vmatpush1.msra.mxu0 %v159
    %1411 = vmatprep.subr.mxu0 %v158
    %1412 = vmatpush1.msra.mxu0 %v157
    %1413 = vmatprep.subr.mxu0 %v156
    %1414 = vmatpush1.msra.mxu0 %v155
    %1415 = vmatprep.subr.mxu0 %v154
    %1416 = vmatpush1.msra.mxu0 %v153
    %1417 = vmatprep.subr.mxu0 %v152
    %1418 = vmatpush1.msra.mxu0 %v151
    %1419 = vmatprep.subr.mxu0 0.0
    %1420 = vmatpush2.msra.mxu0 0.0
    %1421 = vmatprep.subr.mxu0 0.0
    %1422 = vmatpush2.msra.mxu0 0.0
    %1423 = vmatprep.subr.mxu0 0.0
    %1424 = vmatpush2.msra.mxu0 0.0
    %1425 = vmatprep.subr.mxu0 0.0
    %1426 = vmatpush2.msra.mxu0 0.0
    %1427 = vmatprep.subr.mxu0 0.0
    %1428 = vmatpush2.msra.mxu0 0.0
    %1429 = vmatprep.subr.mxu0 0.0
    %1430 = vmatpush2.msra.mxu0 0.0
    %1431 = vmatprep.subr.mxu0 0.0
    %1432 = vmatpush2.msra.mxu0 0.0
    %1433 = vmatprep.subr.mxu0 0.0
    %1434 = vmatpush2.msra.mxu0 0.0
    %1435 = vmatprep.subr.mxu0 0.0
    %1436 = vmatpush2.msra.mxu0 0.0
    %1437 = vmatprep.subr.mxu0 0.0
    %1438 = vmatpush2.msra.mxu0 0.0
    %1439 = vmatprep.subr.mxu0 0.0
    %1440 = vmatpush2.msra.mxu0 0.0
    %1441 = vmatprep.subr.mxu0 0.0
    %1442 = vmatpush2.msra.mxu0 0.0
    %1443 = vmatprep.subr.mxu0 0.0
    %1444 = vmatpush2.msra.mxu0 0.0
    %1445 = vmatprep.subr.mxu0 0.0
    %1446 = vmatpush2.msra.mxu0 0.0
    %1447 = vmatprep.subr.mxu0 0.0
    %1448 = vmatpush2.msra.mxu0 0.0
    %1449 = vmatprep.subr.mxu0 0.0
    %1450 = vmatpush2.msra.mxu0 0.0
    %1451 = vmatprep.mubr.f32.mxu0 0.0
    %1452 = vmatmul.mubr.f32.gmra.mxu0 %v1385
    %v1453 = vpop.f32.mrf.mxu0
    %v1454 = vadd.f32 0.0, %v1453
    %v1455 = vpop.f32.mrf.mxu0
    %v1456 = vadd.f32 0.0, %v1455
    %1457 = vdwg.mxu0
    %v1460 = vrot.slane %v1454, 4
    %v1461 = vrot.slane %v1456, 4
    %v1462 = vrot.slane %v1454, 5
    %v1463 = vrot.slane %v1456, 5
    %v1468 = vadd.f32 %v141, %v1460
    %v1469 = vadd.f32 %v143, %v1461
    %v1470 = vadd.f32 %v147, %v1462
    %v1471 = vadd.f32 %v149, %v1463
    %v1472 = vxor.u32 %v1468, 2147483648
    %v1473 = vxor.u32 %v1469, 2147483648
    %v1474 = vxor.u32 %v1470, 2147483648
    %v1475 = vxor.u32 %v1471, 2147483648
    %v1476 = vmul.f32 %v1472, 1.442695
    %v1477 = vpow.pop %v1476
    %v1478 = vmul.f32 %v1473, 1.442695
    %v1479 = vpow.pop %v1478
    %v1480 = vmul.f32 %v1474, 1.442695
    %v1481 = vpow.pop %v1480
    %v1482 = vmul.f32 %v1475, 1.442695
    %v1483 = vpow.pop %v1482
    %v1484 = vadd.f32 %v1477, 1.0
    %v1485 = vadd.f32 %v1479, 1.0
    %v1486 = vadd.f32 %v1481, 1.0
    %v1487 = vadd.f32 %v1483, 1.0
    %v1488 = vrcp.pop %v1484
    %v1489 = vmul.f32 1.0, %v1488
    %v1490 = vrcp.pop %v1485
    %v1491 = vmul.f32 1.0, %v1490
    %v1492 = vrcp.pop %v1486
    %v1493 = vmul.f32 1.0, %v1492
    %v1494 = vrcp.pop %v1487
    %v1495 = vmul.f32 1.0, %v1494
    %v1496 = vtanh.pop %v1469
    %v1497 = vtanh.pop %v1471
    %v1500 = vrot.slane %v1226, 7
    %v1501 = vrot.slane %v1227, 7
    %v1504 = vmul.f32 %v1489, %v1500
    %v1505 = vmul.f32 %v1493, %v1501
    %1508 = vrot.lane.b32.xlu0 %v1496, 64
    %v1509 = vpop.permute.xlu0 %1508
    %1510 = vrot.lane.b32.xlu0 %v1497, 64
    %v1511 = vpop.permute.xlu0 %1510
    %v1514 = vmul.f32 %v1489, %v1509
    %v1515 = vmul.f32 %v1493, %v1511
    %1518 = vrot.lane.b32.xlu0 %v1514, 64
    %v1519 = vpop.permute.xlu0 %1518
    %1520 = vrot.lane.b32.xlu0 %v1515, 64
    %v1521 = vpop.permute.xlu0 %1520
    %v1524 = vadd.f32 %v1504, %v1519
    %v1525 = vadd.f32 %v1505, %v1521
    %v1526 = vtanh.pop %v1524
    %v1527 = vtanh.pop %v1525
    %1530 = vrot.lane.b32.xlu0 %v1526, 64
    %v1531 = vpop.permute.xlu0 %1530
    %1532 = vrot.lane.b32.xlu0 %v1527, 64
    %v1533 = vpop.permute.xlu0 %1532
    %v1536 = vmul.f32 %v1491, %v1531
    %v1537 = vmul.f32 %v1495, %v1533
    %v1540 = vrot.slane %v1537, 7
    %vm1541 = vcmask 1045509
    %v1542 = vsel %vm1541, %v1540, %v1536
    %v1544 = vrot.slane %v1354, 4
    %1545 = vrot.lane.b32.xlu0 %v1544, 64
    %v1546 = vpop.permute.xlu0 %1545
    %v1548 = vsel %vm200, %v1542, %v1546
    %v1550 = vrot.slane %v1548, 4
    %1552 = vmatprep.subr.mxu0 %v198
    %1553 = vmatpush1.msra.mxu0 %v197
    %1554 = vmatprep.subr.mxu0 %v196
    %1555 = vmatpush1.msra.mxu0 %v195
    %1556 = vmatprep.subr.mxu0 %v194
    %1557 = vmatpush1.msra.mxu0 %v193
    %1558 = vmatprep.subr.mxu0 %v192
    %1559 = vmatpush1.msra.mxu0 %v191
    %1560 = vmatprep.subr.mxu0 %v190
    %1561 = vmatpush1.msra.mxu0 %v189
    %1562 = vmatprep.subr.mxu0 %v188
    %1563 = vmatpush1.msra.mxu0 %v187
    %1564 = vmatprep.subr.mxu0 %v186
    %1565 = vmatpush1.msra.mxu0 %v185
    %1566 = vmatprep.subr.mxu0 %v184
    %1567 = vmatpush1.msra.mxu0 %v183
    %1568 = vmatprep.subr.mxu0 %v182
    %1569 = vmatpush1.msra.mxu0 %v181
    %1570 = vmatprep.subr.mxu0 %v180
    %1571 = vmatpush1.msra.mxu0 %v179
    %1572 = vmatprep.subr.mxu0 %v178
    %1573 = vmatpush1.msra.mxu0 %v177
    %1574 = vmatprep.subr.mxu0 %v176
    %1575 = vmatpush1.msra.mxu0 %v175
    %1576 = vmatprep.subr.mxu0 %v174
    %1577 = vmatpush1.msra.mxu0 %v173
    %1578 = vmatprep.subr.mxu0 %v172
    %1579 = vmatpush1.msra.mxu0 %v171
    %1580 = vmatprep.subr.mxu0 %v170
    %1581 = vmatpush1.msra.mxu0 %v169
    %1582 = vmatprep.subr.mxu0 %v168
    %1583 = vmatpush1.msra.mxu0 %v167
    %1584 = vmatprep.subr.mxu0 0.0
    %1585 = vmatpush2.msra.mxu0 0.0
    %1586 = vmatprep.subr.mxu0 0.0
    %1587 = vmatpush2.msra.mxu0 0.0
    %1588 = vmatprep.subr.mxu0 0.0
    %1589 = vmatpush2.msra.mxu0 0.0
    %1590 = vmatprep.subr.mxu0 0.0
    %1591 = vmatpush2.msra.mxu0 0.0
    %1592 = vmatprep.subr.mxu0 0.0
    %1593 = vmatpush2.msra.mxu0 0.0
    %1594 = vmatprep.subr.mxu0 0.0
    %1595 = vmatpush2.msra.mxu0 0.0
    %1596 = vmatprep.subr.mxu0 0.0
    %1597 = vmatpush2.msra.mxu0 0.0
    %1598 = vmatprep.subr.mxu0 0.0
    %1599 = vmatpush2.msra.mxu0 0.0
    %1600 = vmatprep.subr.mxu0 0.0
    %1601 = vmatpush2.msra.mxu0 0.0
    %1602 = vmatprep.subr.mxu0 0.0
    %1603 = vmatpush2.msra.mxu0 0.0
    %1604 = vmatprep.subr.mxu0 0.0
    %1605 = vmatpush2.msra.mxu0 0.0
    %1606 = vmatprep.subr.mxu0 0.0
    %1607 = vmatpush2.msra.mxu0 0.0
    %1608 = vmatprep.subr.mxu0 0.0
    %1609 = vmatpush2.msra.mxu0 0.0
    %1610 = vmatprep.subr.mxu0 0.0
    %1611 = vmatpush2.msra.mxu0 0.0
    %1612 = vmatprep.subr.mxu0 0.0
    %1613 = vmatpush2.msra.mxu0 0.0
    %1614 = vmatprep.subr.mxu0 0.0
    %1615 = vmatpush2.msra.mxu0 0.0
    %1616 = vmatprep.mubr.f32.mxu0 0.0
    %1617 = vmatmul.mubr.f32.gmra.mxu0 %v1550
    %v1618 = vpop.f32.mrf.mxu0
    %v1619 = vadd.f32 %v358, %v1618
    %v1620 = vpop.f32.mrf.mxu0
    %v1621 = vadd.f32 %v362, %v1620
    %1622 = vdwg.mxu0
    %v1623 = vxor.u32 %v1619, 2147483648
    %v1624 = vxor.u32 %v1621, 2147483648
    %v1625 = vmul.f32 %v1623, 1.442695
    %v1626 = vpow.pop %v1625
    %v1627 = vmul.f32 %v1624, 1.442695
    %v1628 = vpow.pop %v1627
    %v1629 = vadd.f32 %v1626, 1.0
    %v1630 = vadd.f32 %v1628, 1.0
    %v1631 = vrcp.pop %v1629
    %v1632 = vmul.f32 1.0, %v1631
    %v1633 = vrcp.pop %v1630
    %v1634 = vmul.f32 1.0, %v1633
    %v1635 = vtanh.pop %v1621
    %v1636 = vmul.f32 %v1632, %v1348
    %1638 = vrot.lane.b32.xlu0 %v1635, 64
    %v1639 = vpop.permute.xlu0 %1638
    %v1641 = vmul.f32 %v1632, %v1639
    %1643 = vrot.lane.b32.xlu0 %v1641, 64
    %v1644 = vpop.permute.xlu0 %1643
    %v1646 = vadd.f32 %v1636, %v1644
    %v1647 = vtanh.pop %v1646
    %1649 = vrot.lane.b32.xlu0 %v1647, 64
    %v1650 = vpop.permute.xlu0 %1649
    %v1652 = vmul.f32 %v1634, %v1650
    %v1655 = vunpack.c.l.s4 1966171168
    %v1656 = vunpack.c.0.s8 %v1655
    %v1657 = vlaneseq
    %v1658 = vshrl.u32 %v1657, 7
    %v1659 = vsub.s32 %v1656, %v1658
    %v1660 = vrot.slane %v1652, %v1659
    %v1661 = vcombine.high %v1660, %v1660
    %v1663 = vunpack.c.l.s4 1966171168
    %v1664 = vunpack.c.0.s8 %v1663
    %v1665 = vlaneseq
    %v1666 = vshrl.u32 %v1665, 7
    %v1667 = vsub.s32 %v1664, %v1666
    %v1668 = vrot.slane %v1660, %v1667
    %v1670 = vunpack.c.l.s4 1966171168
    %v1671 = vunpack.c.0.s8 %v1670
    %v1672 = vlaneseq
    %v1673 = vshrl.u32 %v1672, 7
    %v1674 = vsub.s32 %v1671, %v1673
    %v1675 = vrot.slane %v1661, %v1674
    %1678 = vst.msk [vmem:[#allocation2 + $0x4] sm:$0x1] %vm491, %v1668
    %1679 = vst.msk [vmem:[#allocation2 + $0xc] sm:$0x1] %vm491, %v1675
    %v1680 = vrot.slane %v1536, 4
    %v1681 = vrot.slane %v1537, 3
    %v1682 = vsel %vm350, %v1681, %v1680
    %v1683 = vsel %vm200, %v1682, 0
    %1685 = vmatprep.subr.mxu0 0.0
    %1686 = vmatpush1.msra.mxu0 0.0
    %1687 = vmatprep.subr.mxu0 0.0
    %1688 = vmatpush1.msra.mxu0 0.0
    %1689 = vmatprep.subr.mxu0 0.0
    %1690 = vmatpush1.msra.mxu0 0.0
    %1691 = vmatprep.subr.mxu0 0.0
    %1692 = vmatpush1.msra.mxu0 0.0
    %1693 = vmatprep.subr.mxu0 0.0
    %1694 = vmatpush1.msra.mxu0 0.0
    %1695 = vmatprep.subr.mxu0 0.0
    %1696 = vmatpush1.msra.mxu0 0.0
    %1697 = vmatprep.subr.mxu0 0.0
    %1698 = vmatpush1.msra.mxu0 0.0
    %1699 = vmatprep.subr.mxu0 0.0
    %1700 = vmatpush1.msra.mxu0 0.0
    %1701 = vmatprep.subr.mxu0 %v166
    %1702 = vmatpush1.msra.mxu0 %v165
    %1703 = vmatprep.subr.mxu0 %v164
    %1704 = vmatpush1.msra.mxu0 %v163
    %1705 = vmatprep.subr.mxu0 %v162
    %1706 = vmatpush1.msra.mxu0 %v161
    %1707 = vmatprep.subr.mxu0 %v160
    %1708 = vmatpush1.msra.mxu0 %v159
    %1709 = vmatprep.subr.mxu0 %v158
    %1710 = vmatpush1.msra.mxu0 %v157
    %1711 = vmatprep.subr.mxu0 %v156
    %1712 = vmatpush1.msra.mxu0 %v155
    %1713 = vmatprep.subr.mxu0 %v154
    %1714 = vmatpush1.msra.mxu0 %v153
    %1715 = vmatprep.subr.mxu0 %v152
    %1716 = vmatpush1.msra.mxu0 %v151
    %1717 = vmatprep.subr.mxu0 0.0
    %1718 = vmatpush2.msra.mxu0 0.0
    %1719 = vmatprep.subr.mxu0 0.0
    %1720 = vmatpush2.msra.mxu0 0.0
    %1721 = vmatprep.subr.mxu0 0.0
    %1722 = vmatpush2.msra.mxu0 0.0
    %1723 = vmatprep.subr.mxu0 0.0
    %1724 = vmatpush2.msra.mxu0 0.0
    %1725 = vmatprep.subr.mxu0 0.0
    %1726 = vmatpush2.msra.mxu0 0.0
    %1727 = vmatprep.subr.mxu0 0.0
    %1728 = vmatpush2.msra.mxu0 0.0
    %1729 = vmatprep.subr.mxu0 0.0
    %1730 = vmatpush2.msra.mxu0 0.0
    %1731 = vmatprep.subr.mxu0 0.0
    %1732 = vmatpush2.msra.mxu0 0.0
    %1733 = vmatprep.subr.mxu0 0.0
    %1734 = vmatpush2.msra.mxu0 0.0
    %1735 = vmatprep.subr.mxu0 0.0
    %1736 = vmatpush2.msra.mxu0 0.0
    %1737 = vmatprep.subr.mxu0 0.0
    %1738 = vmatpush2.msra.mxu0 0.0
    %1739 = vmatprep.subr.mxu0 0.0
    %1740 = vmatpush2.msra.mxu0 0.0
    %1741 = vmatprep.subr.mxu0 0.0
    %1742 = vmatpush2.msra.mxu0 0.0
    %1743 = vmatprep.subr.mxu0 0.0
    %1744 = vmatpush2.msra.mxu0 0.0
    %1745 = vmatprep.subr.mxu0 0.0
    %1746 = vmatpush2.msra.mxu0 0.0
    %1747 = vmatprep.subr.mxu0 0.0
    %1748 = vmatpush2.msra.mxu0 0.0
    %1749 = vmatprep.mubr.f32.mxu0 0.0
    %1750 = vmatmul.mubr.f32.gmra.mxu0 %v1683
    %v1751 = vpop.f32.mrf.mxu0
    %v1752 = vadd.f32 0.0, %v1751
    %v1753 = vpop.f32.mrf.mxu0
    %v1754 = vadd.f32 0.0, %v1753
    %1755 = vdwg.mxu0
    %v1758 = vrot.slane %v1752, 3
    %v1759 = vrot.slane %v1754, 3
    %v1760 = vrot.slane %v1752, 4
    %v1761 = vrot.slane %v1754, 4
    %v1766 = vadd.f32 %v141, %v1758
    %v1767 = vadd.f32 %v143, %v1759
    %v1768 = vadd.f32 %v147, %v1760
    %v1769 = vadd.f32 %v149, %v1761
    %v1770 = vxor.u32 %v1766, 2147483648
    %v1771 = vxor.u32 %v1767, 2147483648
    %v1772 = vxor.u32 %v1768, 2147483648
    %v1773 = vxor.u32 %v1769, 2147483648
    %v1774 = vmul.f32 %v1770, 1.442695
    %v1775 = vpow.pop %v1774
    %v1776 = vmul.f32 %v1771, 1.442695
    %v1777 = vpow.pop %v1776
    %v1778 = vmul.f32 %v1772, 1.442695
    %v1779 = vpow.pop %v1778
    %v1780 = vmul.f32 %v1773, 1.442695
    %v1781 = vpow.pop %v1780
    %v1782 = vadd.f32 %v1775, 1.0
    %v1783 = vadd.f32 %v1777, 1.0
    %v1784 = vadd.f32 %v1779, 1.0
    %v1785 = vadd.f32 %v1781, 1.0
    %v1786 = vrcp.pop %v1782
    %v1787 = vmul.f32 1.0, %v1786
    %v1788 = vrcp.pop %v1783
    %v1789 = vmul.f32 1.0, %v1788
    %v1790 = vrcp.pop %v1784
    %v1791 = vmul.f32 1.0, %v1790
    %v1792 = vrcp.pop %v1785
    %v1793 = vmul.f32 1.0, %v1792
    %v1794 = vtanh.pop %v1767
    %v1795 = vtanh.pop %v1769
    %v1798 = vrot.slane %v1524, 7
    %v1799 = vrot.slane %v1525, 7
    %v1802 = vmul.f32 %v1787, %v1798
    %v1803 = vmul.f32 %v1791, %v1799
    %1806 = vrot.lane.b32.xlu0 %v1794, 64
    %v1807 = vpop.permute.xlu0 %1806
    %1808 = vrot.lane.b32.xlu0 %v1795, 64
    %v1809 = vpop.permute.xlu0 %1808
    %v1812 = vmul.f32 %v1787, %v1807
    %v1813 = vmul.f32 %v1791, %v1809
    %1816 = vrot.lane.b32.xlu0 %v1812, 64
    %v1817 = vpop.permute.xlu0 %1816
    %1818 = vrot.lane.b32.xlu0 %v1813, 64
    %v1819 = vpop.permute.xlu0 %1818
    %v1822 = vadd.f32 %v1802, %v1817
    %v1823 = vadd.f32 %v1803, %v1819
    %v1824 = vtanh.pop %v1822
    %v1825 = vtanh.pop %v1823
    %1828 = vrot.lane.b32.xlu0 %v1824, 64
    %v1829 = vpop.permute.xlu0 %1828
    %1830 = vrot.lane.b32.xlu0 %v1825, 64
    %v1831 = vpop.permute.xlu0 %1830
    %v1834 = vmul.f32 %v1789, %v1829
    %v1835 = vmul.f32 %v1793, %v1831
    %v1838 = vrot.slane %v1835, 7
    %vm1839 = vcmask 1046534
    %v1840 = vsel %vm1839, %v1838, %v1834
    %v1842 = vrot.slane %v1652, 3
    %1843 = vrot.lane.b32.xlu0 %v1842, 64
    %v1844 = vpop.permute.xlu0 %1843
    %v1846 = vsel %vm200, %v1840, %v1844
    %v1848 = vrot.slane %v1846, 5
    %1850 = vmatprep.subr.mxu0 %v198
    %1851 = vmatpush1.msra.mxu0 %v197
    %1852 = vmatprep.subr.mxu0 %v196
    %1853 = vmatpush1.msra.mxu0 %v195
    %1854 = vmatprep.subr.mxu0 %v194
    %1855 = vmatpush1.msra.mxu0 %v193
    %1856 = vmatprep.subr.mxu0 %v192
    %1857 = vmatpush1.msra.mxu0 %v191
    %1858 = vmatprep.subr.mxu0 %v190
    %1859 = vmatpush1.msra.mxu0 %v189
    %1860 = vmatprep.subr.mxu0 %v188
    %1861 = vmatpush1.msra.mxu0 %v187
    %1862 = vmatprep.subr.mxu0 %v186
    %1863 = vmatpush1.msra.mxu0 %v185
    %1864 = vmatprep.subr.mxu0 %v184
    %1865 = vmatpush1.msra.mxu0 %v183
    %1866 = vmatprep.subr.mxu0 %v182
    %1867 = vmatpush1.msra.mxu0 %v181
    %1868 = vmatprep.subr.mxu0 %v180
    %1869 = vmatpush1.msra.mxu0 %v179
    %1870 = vmatprep.subr.mxu0 %v178
    %1871 = vmatpush1.msra.mxu0 %v177
    %1872 = vmatprep.subr.mxu0 %v176
    %1873 = vmatpush1.msra.mxu0 %v175
    %1874 = vmatprep.subr.mxu0 %v174
    %1875 = vmatpush1.msra.mxu0 %v173
    %1876 = vmatprep.subr.mxu0 %v172
    %1877 = vmatpush1.msra.mxu0 %v171
    %1878 = vmatprep.subr.mxu0 %v170
    %1879 = vmatpush1.msra.mxu0 %v169
    %1880 = vmatprep.subr.mxu0 %v168
    %1881 = vmatpush1.msra.mxu0 %v167
    %1882 = vmatprep.subr.mxu0 0.0
    %1883 = vmatpush2.msra.mxu0 0.0
    %1884 = vmatprep.subr.mxu0 0.0
    %1885 = vmatpush2.msra.mxu0 0.0
    %1886 = vmatprep.subr.mxu0 0.0
    %1887 = vmatpush2.msra.mxu0 0.0
    %1888 = vmatprep.subr.mxu0 0.0
    %1889 = vmatpush2.msra.mxu0 0.0
    %1890 = vmatprep.subr.mxu0 0.0
    %1891 = vmatpush2.msra.mxu0 0.0
    %1892 = vmatprep.subr.mxu0 0.0
    %1893 = vmatpush2.msra.mxu0 0.0
    %1894 = vmatprep.subr.mxu0 0.0
    %1895 = vmatpush2.msra.mxu0 0.0
    %1896 = vmatprep.subr.mxu0 0.0
    %1897 = vmatpush2.msra.mxu0 0.0
    %1898 = vmatprep.subr.mxu0 0.0
    %1899 = vmatpush2.msra.mxu0 0.0
    %1900 = vmatprep.subr.mxu0 0.0
    %1901 = vmatpush2.msra.mxu0 0.0
    %1902 = vmatprep.subr.mxu0 0.0
    %1903 = vmatpush2.msra.mxu0 0.0
    %1904 = vmatprep.subr.mxu0 0.0
    %1905 = vmatpush2.msra.mxu0 0.0
    %1906 = vmatprep.subr.mxu0 0.0
    %1907 = vmatpush2.msra.mxu0 0.0
    %1908 = vmatprep.subr.mxu0 0.0
    %1909 = vmatpush2.msra.mxu0 0.0
    %1910 = vmatprep.subr.mxu0 0.0
    %1911 = vmatpush2.msra.mxu0 0.0
    %1912 = vmatprep.subr.mxu0 0.0
    %1913 = vmatpush2.msra.mxu0 0.0
    %1914 = vmatprep.mubr.f32.mxu0 0.0
    %1915 = vmatmul.mubr.f32.gmra.mxu0 %v1848
    %v1916 = vpop.f32.mrf.mxu0
    %v1917 = vadd.f32 %v358, %v1916
    %v1918 = vpop.f32.mrf.mxu0
    %v1919 = vadd.f32 %v362, %v1918
    %1920 = vdwg.mxu0
    %v1921 = vxor.u32 %v1917, 2147483648
    %v1922 = vxor.u32 %v1919, 2147483648
    %v1923 = vmul.f32 %v1921, 1.442695
    %v1924 = vpow.pop %v1923
    %v1925 = vmul.f32 %v1922, 1.442695
    %v1926 = vpow.pop %v1925
    %v1927 = vadd.f32 %v1924, 1.0
    %v1928 = vadd.f32 %v1926, 1.0
    %v1929 = vrcp.pop %v1927
    %v1930 = vmul.f32 1.0, %v1929
    %v1931 = vrcp.pop %v1928
    %v1932 = vmul.f32 1.0, %v1931
    %v1933 = vtanh.pop %v1919
    %v1934 = vmul.f32 %v1930, %v1646
    %1936 = vrot.lane.b32.xlu0 %v1933, 64
    %v1937 = vpop.permute.xlu0 %1936
    %v1939 = vmul.f32 %v1930, %v1937
    %1941 = vrot.lane.b32.xlu0 %v1939, 64
    %v1942 = vpop.permute.xlu0 %1941
    %v1944 = vadd.f32 %v1934, %v1942
    %v1945 = vtanh.pop %v1944
    %1947 = vrot.lane.b32.xlu0 %v1945, 64
    %v1948 = vpop.permute.xlu0 %1947
    %v1950 = vmul.f32 %v1932, %v1948
    %v1953 = vunpack.c.l.s4 1966171168
    %v1954 = vunpack.c.0.s8 %v1953
    %v1955 = vlaneseq
    %v1956 = vshrl.u32 %v1955, 7
    %v1957 = vsub.s32 %v1954, %v1956
    %v1958 = vrot.slane %v1950, %v1957
    %v1959 = vcombine.high %v1958, %v1958
    %v1961 = vunpack.c.l.s4 1966171168
    %v1962 = vunpack.c.0.s8 %v1961
    %v1963 = vlaneseq
    %v1964 = vshrl.u32 %v1963, 7
    %v1965 = vsub.s32 %v1962, %v1964
    %v1966 = vrot.slane %v1958, %v1965
    %v1968 = vunpack.c.l.s4 1966171168
    %v1969 = vunpack.c.0.s8 %v1968
    %v1970 = vlaneseq
    %v1971 = vshrl.u32 %v1970, 7
    %v1972 = vsub.s32 %v1969, %v1971
    %v1973 = vrot.slane %v1959, %v1972
    %1976 = vst.msk [vmem:[#allocation2 + $0x5] sm:$0x1] %vm491, %v1966
    %1977 = vst.msk [vmem:[#allocation2 + $0xd] sm:$0x1] %vm491, %v1973
    %v1978 = vrot.slane %v1834, 5
    %v1979 = vrot.slane %v1835, 4
    %v1980 = vsel %vm350, %v1979, %v1978
    %v1981 = vsel %vm200, %v1980, 0
    %1983 = vmatprep.subr.mxu0 0.0
    %1984 = vmatpush1.msra.mxu0 0.0
    %1985 = vmatprep.subr.mxu0 0.0
    %1986 = vmatpush1.msra.mxu0 0.0
    %1987 = vmatprep.subr.mxu0 0.0
    %1988 = vmatpush1.msra.mxu0 0.0
    %1989 = vmatprep.subr.mxu0 0.0
    %1990 = vmatpush1.msra.mxu0 0.0
    %1991 = vmatprep.subr.mxu0 0.0
    %1992 = vmatpush1.msra.mxu0 0.0
    %1993 = vmatprep.subr.mxu0 0.0
    %1994 = vmatpush1.msra.mxu0 0.0
    %1995 = vmatprep.subr.mxu0 0.0
    %1996 = vmatpush1.msra.mxu0 0.0
    %1997 = vmatprep.subr.mxu0 0.0
    %1998 = vmatpush1.msra.mxu0 0.0
    %1999 = vmatprep.subr.mxu0 %v166
    %2000 = vmatpush1.msra.mxu0 %v165
    %2001 = vmatprep.subr.mxu0 %v164
    %2002 = vmatpush1.msra.mxu0 %v163
    %2003 = vmatprep.subr.mxu0 %v162
    %2004 = vmatpush1.msra.mxu0 %v161
    %2005 = vmatprep.subr.mxu0 %v160
    %2006 = vmatpush1.msra.mxu0 %v159
    %2007 = vmatprep.subr.mxu0 %v158
    %2008 = vmatpush1.msra.mxu0 %v157
    %2009 = vmatprep.subr.mxu0 %v156
    %2010 = vmatpush1.msra.mxu0 %v155
    %2011 = vmatprep.subr.mxu0 %v154
    %2012 = vmatpush1.msra.mxu0 %v153
    %2013 = vmatprep.subr.mxu0 %v152
    %2014 = vmatpush1.msra.mxu0 %v151
    %2015 = vmatprep.subr.mxu0 0.0
    %2016 = vmatpush2.msra.mxu0 0.0
    %2017 = vmatprep.subr.mxu0 0.0
    %2018 = vmatpush2.msra.mxu0 0.0
    %2019 = vmatprep.subr.mxu0 0.0
    %2020 = vmatpush2.msra.mxu0 0.0
    %2021 = vmatprep.subr.mxu0 0.0
    %2022 = vmatpush2.msra.mxu0 0.0
    %2023 = vmatprep.subr.mxu0 0.0
    %2024 = vmatpush2.msra.mxu0 0.0
    %2025 = vmatprep.subr.mxu0 0.0
    %2026 = vmatpush2.msra.mxu0 0.0
    %2027 = vmatprep.subr.mxu0 0.0
    %2028 = vmatpush2.msra.mxu0 0.0
    %2029 = vmatprep.subr.mxu0 0.0
    %2030 = vmatpush2.msra.mxu0 0.0
    %2031 = vmatprep.subr.mxu0 0.0
    %2032 = vmatpush2.msra.mxu0 0.0
    %2033 = vmatprep.subr.mxu0 0.0
    %2034 = vmatpush2.msra.mxu0 0.0
    %2035 = vmatprep.subr.mxu0 0.0
    %2036 = vmatpush2.msra.mxu0 0.0
    %2037 = vmatprep.subr.mxu0 0.0
    %2038 = vmatpush2.msra.mxu0 0.0
    %2039 = vmatprep.subr.mxu0 0.0
    %2040 = vmatpush2.msra.mxu0 0.0
    %2041 = vmatprep.subr.mxu0 0.0
    %2042 = vmatpush2.msra.mxu0 0.0
    %2043 = vmatprep.subr.mxu0 0.0
    %2044 = vmatpush2.msra.mxu0 0.0
    %2045 = vmatprep.subr.mxu0 0.0
    %2046 = vmatpush2.msra.mxu0 0.0
    %2047 = vmatprep.mubr.f32.mxu0 0.0
    %2048 = vmatmul.mubr.f32.gmra.mxu0 %v1981
    %v2049 = vpop.f32.mrf.mxu0
    %v2050 = vadd.f32 0.0, %v2049
    %v2051 = vpop.f32.mrf.mxu0
    %v2052 = vadd.f32 0.0, %v2051
    %2053 = vdwg.mxu0
    %v2056 = vrot.slane %v2050, 2
    %v2057 = vrot.slane %v2052, 2
    %v2058 = vrot.slane %v2050, 3
    %v2059 = vrot.slane %v2052, 3
    %v2064 = vadd.f32 %v141, %v2056
    %v2065 = vadd.f32 %v143, %v2057
    %v2066 = vadd.f32 %v147, %v2058
    %v2067 = vadd.f32 %v149, %v2059
    %v2068 = vxor.u32 %v2064, 2147483648
    %v2069 = vxor.u32 %v2065, 2147483648
    %v2070 = vxor.u32 %v2066, 2147483648
    %v2071 = vxor.u32 %v2067, 2147483648
    %v2072 = vmul.f32 %v2068, 1.442695
    %v2073 = vpow.pop %v2072
    %v2074 = vmul.f32 %v2069, 1.442695
    %v2075 = vpow.pop %v2074
    %v2076 = vmul.f32 %v2070, 1.442695
    %v2077 = vpow.pop %v2076
    %v2078 = vmul.f32 %v2071, 1.442695
    %v2079 = vpow.pop %v2078
    %v2080 = vadd.f32 %v2073, 1.0
    %v2081 = vadd.f32 %v2075, 1.0
    %v2082 = vadd.f32 %v2077, 1.0
    %v2083 = vadd.f32 %v2079, 1.0
    %v2084 = vrcp.pop %v2080
    %v2085 = vmul.f32 1.0, %v2084
    %v2086 = vrcp.pop %v2081
    %v2087 = vmul.f32 1.0, %v2086
    %v2088 = vrcp.pop %v2082
    %v2089 = vmul.f32 1.0, %v2088
    %v2090 = vrcp.pop %v2083
    %v2091 = vmul.f32 1.0, %v2090
    %v2092 = vtanh.pop %v2065
    %v2093 = vtanh.pop %v2067
    %v2096 = vrot.slane %v1822, 7
    %v2097 = vrot.slane %v1823, 7
    %v2100 = vmul.f32 %v2085, %v2096
    %v2101 = vmul.f32 %v2089, %v2097
    %2104 = vrot.lane.b32.xlu0 %v2092, 64
    %v2105 = vpop.permute.xlu0 %2104
    %2106 = vrot.lane.b32.xlu0 %v2093, 64
    %v2107 = vpop.permute.xlu0 %2106
    %v2110 = vmul.f32 %v2085, %v2105
    %v2111 = vmul.f32 %v2089, %v2107
    %2114 = vrot.lane.b32.xlu0 %v2110, 64
    %v2115 = vpop.permute.xlu0 %2114
    %2116 = vrot.lane.b32.xlu0 %v2111, 64
    %v2117 = vpop.permute.xlu0 %2116
    %v2120 = vadd.f32 %v2100, %v2115
    %v2121 = vadd.f32 %v2101, %v2117
    %v2122 = vtanh.pop %v2120
    %v2123 = vtanh.pop %v2121
    %2126 = vrot.lane.b32.xlu0 %v2122, 64
    %v2127 = vpop.permute.xlu0 %2126
    %2128 = vrot.lane.b32.xlu0 %v2123, 64
    %v2129 = vpop.permute.xlu0 %2128
    %v2132 = vmul.f32 %v2087, %v2127
    %v2133 = vmul.f32 %v2091, %v2129
    %v2136 = vrot.slane %v2133, 7
    %vm2137 = vcmask 1047559
    %v2138 = vsel %vm2137, %v2136, %v2132
    %v2140 = vrot.slane %v1950, 2
    %2141 = vrot.lane.b32.xlu0 %v2140, 64
    %v2142 = vpop.permute.xlu0 %2141
    %v2144 = vsel %vm200, %v2138, %v2142
    %v2146 = vrot.slane %v2144, 6
    %2148 = vmatprep.subr.mxu0 %v198
    %2149 = vmatpush1.msra.mxu0 %v197
    %2150 = vmatprep.subr.mxu0 %v196
    %2151 = vmatpush1.msra.mxu0 %v195
    %2152 = vmatprep.subr.mxu0 %v194
    %2153 = vmatpush1.msra.mxu0 %v193
    %2154 = vmatprep.subr.mxu0 %v192
    %2155 = vmatpush1.msra.mxu0 %v191
    %2156 = vmatprep.subr.mxu0 %v190
    %2157 = vmatpush1.msra.mxu0 %v189
    %2158 = vmatprep.subr.mxu0 %v188
    %2159 = vmatpush1.msra.mxu0 %v187
    %2160 = vmatprep.subr.mxu0 %v186
    %2161 = vmatpush1.msra.mxu0 %v185
    %2162 = vmatprep.subr.mxu0 %v184
    %2163 = vmatpush1.msra.mxu0 %v183
    %2164 = vmatprep.subr.mxu0 %v182
    %2165 = vmatpush1.msra.mxu0 %v181
    %2166 = vmatprep.subr.mxu0 %v180
    %2167 = vmatpush1.msra.mxu0 %v179
    %2168 = vmatprep.subr.mxu0 %v178
    %2169 = vmatpush1.msra.mxu0 %v177
    %2170 = vmatprep.subr.mxu0 %v176
    %2171 = vmatpush1.msra.mxu0 %v175
    %2172 = vmatprep.subr.mxu0 %v174
    %2173 = vmatpush1.msra.mxu0 %v173
    %2174 = vmatprep.subr.mxu0 %v172
    %2175 = vmatpush1.msra.mxu0 %v171
    %2176 = vmatprep.subr.mxu0 %v170
    %2177 = vmatpush1.msra.mxu0 %v169
    %2178 = vmatprep.subr.mxu0 %v168
    %2179 = vmatpush1.msra.mxu0 %v167
    %2180 = vmatprep.subr.mxu0 0.0
    %2181 = vmatpush2.msra.mxu0 0.0
    %2182 = vmatprep.subr.mxu0 0.0
    %2183 = vmatpush2.msra.mxu0 0.0
    %2184 = vmatprep.subr.mxu0 0.0
    %2185 = vmatpush2.msra.mxu0 0.0
    %2186 = vmatprep.subr.mxu0 0.0
    %2187 = vmatpush2.msra.mxu0 0.0
    %2188 = vmatprep.subr.mxu0 0.0
    %2189 = vmatpush2.msra.mxu0 0.0
    %2190 = vmatprep.subr.mxu0 0.0
    %2191 = vmatpush2.msra.mxu0 0.0
    %2192 = vmatprep.subr.mxu0 0.0
    %2193 = vmatpush2.msra.mxu0 0.0
    %2194 = vmatprep.subr.mxu0 0.0
    %2195 = vmatpush2.msra.mxu0 0.0
    %2196 = vmatprep.subr.mxu0 0.0
    %2197 = vmatpush2.msra.mxu0 0.0
    %2198 = vmatprep.subr.mxu0 0.0
    %2199 = vmatpush2.msra.mxu0 0.0
    %2200 = vmatprep.subr.mxu0 0.0
    %2201 = vmatpush2.msra.mxu0 0.0
    %2202 = vmatprep.subr.mxu0 0.0
    %2203 = vmatpush2.msra.mxu0 0.0
    %2204 = vmatprep.subr.mxu0 0.0
    %2205 = vmatpush2.msra.mxu0 0.0
    %2206 = vmatprep.subr.mxu0 0.0
    %2207 = vmatpush2.msra.mxu0 0.0
    %2208 = vmatprep.subr.mxu0 0.0
    %2209 = vmatpush2.msra.mxu0 0.0
    %2210 = vmatprep.subr.mxu0 0.0
    %2211 = vmatpush2.msra.mxu0 0.0
    %2212 = vmatprep.mubr.f32.mxu0 0.0
    %2213 = vmatmul.mubr.f32.gmra.mxu0 %v2146
    %v2214 = vpop.f32.mrf.mxu0
    %v2215 = vadd.f32 %v358, %v2214
    %v2216 = vpop.f32.mrf.mxu0
    %v2217 = vadd.f32 %v362, %v2216
    %2218 = vdwg.mxu0
    %v2219 = vxor.u32 %v2215, 2147483648
    %v2220 = vxor.u32 %v2217, 2147483648
    %v2221 = vmul.f32 %v2219, 1.442695
    %v2222 = vpow.pop %v2221
    %v2223 = vmul.f32 %v2220, 1.442695
    %v2224 = vpow.pop %v2223
    %v2225 = vadd.f32 %v2222, 1.0
    %v2226 = vadd.f32 %v2224, 1.0
    %v2227 = vrcp.pop %v2225
    %v2228 = vmul.f32 1.0, %v2227
    %v2229 = vrcp.pop %v2226
    %v2230 = vmul.f32 1.0, %v2229
    %v2231 = vtanh.pop %v2217
    %v2232 = vmul.f32 %v2228, %v1944
    %2234 = vrot.lane.b32.xlu0 %v2231, 64
    %v2235 = vpop.permute.xlu0 %2234
    %v2237 = vmul.f32 %v2228, %v2235
    %2239 = vrot.lane.b32.xlu0 %v2237, 64
    %v2240 = vpop.permute.xlu0 %2239
    %v2242 = vadd.f32 %v2232, %v2240
    %v2243 = vtanh.pop %v2242
    %2245 = vrot.lane.b32.xlu0 %v2243, 64
    %v2246 = vpop.permute.xlu0 %2245
    %v2248 = vmul.f32 %v2230, %v2246
    %v2251 = vunpack.c.l.s4 1966171168
    %v2252 = vunpack.c.0.s8 %v2251
    %v2253 = vlaneseq
    %v2254 = vshrl.u32 %v2253, 7
    %v2255 = vsub.s32 %v2252, %v2254
    %v2256 = vrot.slane %v2248, %v2255
    %v2257 = vcombine.high %v2256, %v2256
    %v2259 = vunpack.c.l.s4 1966171168
    %v2260 = vunpack.c.0.s8 %v2259
    %v2261 = vlaneseq
    %v2262 = vshrl.u32 %v2261, 7
    %v2263 = vsub.s32 %v2260, %v2262
    %v2264 = vrot.slane %v2256, %v2263
    %v2266 = vunpack.c.l.s4 1966171168
    %v2267 = vunpack.c.0.s8 %v2266
    %v2268 = vlaneseq
    %v2269 = vshrl.u32 %v2268, 7
    %v2270 = vsub.s32 %v2267, %v2269
    %v2271 = vrot.slane %v2257, %v2270
    %2274 = vst.msk [vmem:[#allocation2 + $0x6] sm:$0x1] %vm491, %v2264
    %2275 = vst.msk [vmem:[#allocation2 + $0xe] sm:$0x1] %vm491, %v2271
    %v2276 = vrot.slane %v2132, 6
    %v2277 = vrot.slane %v2133, 5
    %v2278 = vsel %vm350, %v2277, %v2276
    %v2279 = vsel %vm200, %v2278, 0
    %2281 = vmatprep.subr.mxu0 0.0
    %2282 = vmatpush1.msra.mxu0 0.0
    %2283 = vmatprep.subr.mxu0 0.0
    %2284 = vmatpush1.msra.mxu0 0.0
    %2285 = vmatprep.subr.mxu0 0.0
    %2286 = vmatpush1.msra.mxu0 0.0
    %2287 = vmatprep.subr.mxu0 0.0
    %2288 = vmatpush1.msra.mxu0 0.0
    %2289 = vmatprep.subr.mxu0 0.0
    %2290 = vmatpush1.msra.mxu0 0.0
    %2291 = vmatprep.subr.mxu0 0.0
    %2292 = vmatpush1.msra.mxu0 0.0
    %2293 = vmatprep.subr.mxu0 0.0
    %2294 = vmatpush1.msra.mxu0 0.0
    %2295 = vmatprep.subr.mxu0 0.0
    %2296 = vmatpush1.msra.mxu0 0.0
    %2297 = vmatprep.subr.mxu0 %v166
    %2298 = vmatpush1.msra.mxu0 %v165
    %2299 = vmatprep.subr.mxu0 %v164
    %2300 = vmatpush1.msra.mxu0 %v163
    %2301 = vmatprep.subr.mxu0 %v162
    %2302 = vmatpush1.msra.mxu0 %v161
    %2303 = vmatprep.subr.mxu0 %v160
    %2304 = vmatpush1.msra.mxu0 %v159
    %2305 = vmatprep.subr.mxu0 %v158
    %2306 = vmatpush1.msra.mxu0 %v157
    %2307 = vmatprep.subr.mxu0 %v156
    %2308 = vmatpush1.msra.mxu0 %v155
    %2309 = vmatprep.subr.mxu0 %v154
    %2310 = vmatpush1.msra.mxu0 %v153
    %2311 = vmatprep.subr.mxu0 %v152
    %2312 = vmatpush1.msra.mxu0 %v151
    %2313 = vmatprep.subr.mxu0 0.0
    %2314 = vmatpush2.msra.mxu0 0.0
    %2315 = vmatprep.subr.mxu0 0.0
    %2316 = vmatpush2.msra.mxu0 0.0
    %2317 = vmatprep.subr.mxu0 0.0
    %2318 = vmatpush2.msra.mxu0 0.0
    %2319 = vmatprep.subr.mxu0 0.0
    %2320 = vmatpush2.msra.mxu0 0.0
    %2321 = vmatprep.subr.mxu0 0.0
    %2322 = vmatpush2.msra.mxu0 0.0
    %2323 = vmatprep.subr.mxu0 0.0
    %2324 = vmatpush2.msra.mxu0 0.0
    %2325 = vmatprep.subr.mxu0 0.0
    %2326 = vmatpush2.msra.mxu0 0.0
    %2327 = vmatprep.subr.mxu0 0.0
    %2328 = vmatpush2.msra.mxu0 0.0
    %2329 = vmatprep.subr.mxu0 0.0
    %2330 = vmatpush2.msra.mxu0 0.0
    %2331 = vmatprep.subr.mxu0 0.0
    %2332 = vmatpush2.msra.mxu0 0.0
    %2333 = vmatprep.subr.mxu0 0.0
    %2334 = vmatpush2.msra.mxu0 0.0
    %2335 = vmatprep.subr.mxu0 0.0
    %2336 = vmatpush2.msra.mxu0 0.0
    %2337 = vmatprep.subr.mxu0 0.0
    %2338 = vmatpush2.msra.mxu0 0.0
    %2339 = vmatprep.subr.mxu0 0.0
    %2340 = vmatpush2.msra.mxu0 0.0
    %2341 = vmatprep.subr.mxu0 0.0
    %2342 = vmatpush2.msra.mxu0 0.0
    %2343 = vmatprep.subr.mxu0 0.0
    %2344 = vmatpush2.msra.mxu0 0.0
    %2345 = vmatprep.mubr.f32.mxu0 0.0
    %2346 = vmatmul.mubr.f32.gmra.mxu0 %v2279
    %v2347 = vpop.f32.mrf.mxu0
    %v2348 = vadd.f32 0.0, %v2347
    %v2349 = vpop.f32.mrf.mxu0
    %v2350 = vadd.f32 0.0, %v2349
    %2351 = vdwg.mxu0
    %v2354 = vrot.slane %v2348, 1
    %v2355 = vrot.slane %v2350, 1
    %v2356 = vrot.slane %v2348, 2
    %v2357 = vrot.slane %v2350, 2
    %v2362 = vadd.f32 %v141, %v2354
    %v2363 = vadd.f32 %v143, %v2355
    %v2364 = vadd.f32 %v147, %v2356
    %v2365 = vadd.f32 %v149, %v2357
    %v2366 = vxor.u32 %v2362, 2147483648
    %v2367 = vxor.u32 %v2363, 2147483648
    %v2368 = vxor.u32 %v2364, 2147483648
    %v2369 = vxor.u32 %v2365, 2147483648
    %v2370 = vmul.f32 %v2366, 1.442695
    %v2371 = vpow.pop %v2370
    %v2372 = vmul.f32 %v2367, 1.442695
    %v2373 = vpow.pop %v2372
    %v2374 = vmul.f32 %v2368, 1.442695
    %v2375 = vpow.pop %v2374
    %v2376 = vmul.f32 %v2369, 1.442695
    %v2377 = vpow.pop %v2376
    %v2378 = vadd.f32 %v2371, 1.0
    %v2379 = vadd.f32 %v2373, 1.0
    %v2380 = vadd.f32 %v2375, 1.0
    %v2381 = vadd.f32 %v2377, 1.0
    %v2382 = vrcp.pop %v2378
    %v2383 = vmul.f32 1.0, %v2382
    %v2384 = vrcp.pop %v2379
    %v2385 = vmul.f32 1.0, %v2384
    %v2386 = vrcp.pop %v2380
    %v2387 = vmul.f32 1.0, %v2386
    %v2388 = vrcp.pop %v2381
    %v2389 = vmul.f32 1.0, %v2388
    %v2390 = vtanh.pop %v2363
    %v2391 = vtanh.pop %v2365
    %v2394 = vrot.slane %v2120, 7
    %v2395 = vrot.slane %v2121, 7
    %v2398 = vmul.f32 %v2383, %v2394
    %v2399 = vmul.f32 %v2387, %v2395
    %2402 = vrot.lane.b32.xlu0 %v2390, 64
    %v2403 = vpop.permute.xlu0 %2402
    %2404 = vrot.lane.b32.xlu0 %v2391, 64
    %v2405 = vpop.permute.xlu0 %2404
    %v2408 = vmul.f32 %v2383, %v2403
    %v2409 = vmul.f32 %v2387, %v2405
    %2412 = vrot.lane.b32.xlu0 %v2408, 64
    %v2413 = vpop.permute.xlu0 %2412
    %2414 = vrot.lane.b32.xlu0 %v2409, 64
    %v2415 = vpop.permute.xlu0 %2414
    %v2418 = vadd.f32 %v2398, %v2413
    %v2419 = vadd.f32 %v2399, %v2415
    %v2420 = vtanh.pop %v2418
    %v2421 = vtanh.pop %v2419
    %2424 = vrot.lane.b32.xlu0 %v2420, 64
    %v2425 = vpop.permute.xlu0 %2424
    %2426 = vrot.lane.b32.xlu0 %v2421, 64
    %v2427 = vpop.permute.xlu0 %2426
    %v2430 = vmul.f32 %v2385, %v2425
    %v2431 = vmul.f32 %v2389, %v2427
    %v2434 = vrot.slane %v2431, 7
    %v2437 = vrot.slane %v2248, 1
    %2438 = vrot.lane.b32.xlu0 %v2437, 64
    %v2439 = vpop.permute.xlu0 %2438
    %v2441 = vsel %vm200, %v2430, %v2439
    %v2442 = vsel %vm200, %v2434, %v2439
    %vm2445 = vcmask 1040384
    %v2446 = vrot.slane %v2441, 7
    %v2447 = vrot.slane %v2442, 7
    %v2448 = vsel %vm2445, %v2446, %v2447
    %2450 = vmatprep.subr.mxu0 %v198
    %2451 = vmatpush1.msra.mxu0 %v197
    %2452 = vmatprep.subr.mxu0 %v196
    %2453 = vmatpush1.msra.mxu0 %v195
    %2454 = vmatprep.subr.mxu0 %v194
    %2455 = vmatpush1.msra.mxu0 %v193
    %2456 = vmatprep.subr.mxu0 %v192
    %2457 = vmatpush1.msra.mxu0 %v191
    %2458 = vmatprep.subr.mxu0 %v190
    %2459 = vmatpush1.msra.mxu0 %v189
    %2460 = vmatprep.subr.mxu0 %v188
    %2461 = vmatpush1.msra.mxu0 %v187
    %2462 = vmatprep.subr.mxu0 %v186
    %2463 = vmatpush1.msra.mxu0 %v185
    %2464 = vmatprep.subr.mxu0 %v184
    %2465 = vmatpush1.msra.mxu0 %v183
    %2466 = vmatprep.subr.mxu0 %v182
    %2467 = vmatpush1.msra.mxu0 %v181
    %2468 = vmatprep.subr.mxu0 %v180
    %2469 = vmatpush1.msra.mxu0 %v179
    %2470 = vmatprep.subr.mxu0 %v178
    %2471 = vmatpush1.msra.mxu0 %v177
    %2472 = vmatprep.subr.mxu0 %v176
    %2473 = vmatpush1.msra.mxu0 %v175
    %2474 = vmatprep.subr.mxu0 %v174
    %2475 = vmatpush1.msra.mxu0 %v173
    %2476 = vmatprep.subr.mxu0 %v172
    %2477 = vmatpush1.msra.mxu0 %v171
    %2478 = vmatprep.subr.mxu0 %v170
    %2479 = vmatpush1.msra.mxu0 %v169
    %2480 = vmatprep.subr.mxu0 %v168
    %2481 = vmatpush1.msra.mxu0 %v167
    %2482 = vmatprep.subr.mxu0 0.0
    %2483 = vmatpush2.msra.mxu0 0.0
    %2484 = vmatprep.subr.mxu0 0.0
    %2485 = vmatpush2.msra.mxu0 0.0
    %2486 = vmatprep.subr.mxu0 0.0
    %2487 = vmatpush2.msra.mxu0 0.0
    %2488 = vmatprep.subr.mxu0 0.0
    %2489 = vmatpush2.msra.mxu0 0.0
    %2490 = vmatprep.subr.mxu0 0.0
    %2491 = vmatpush2.msra.mxu0 0.0
    %2492 = vmatprep.subr.mxu0 0.0
    %2493 = vmatpush2.msra.mxu0 0.0
    %2494 = vmatprep.subr.mxu0 0.0
    %2495 = vmatpush2.msra.mxu0 0.0
    %2496 = vmatprep.subr.mxu0 0.0
    %2497 = vmatpush2.msra.mxu0 0.0
    %2498 = vmatprep.subr.mxu0 0.0
    %2499 = vmatpush2.msra.mxu0 0.0
    %2500 = vmatprep.subr.mxu0 0.0
    %2501 = vmatpush2.msra.mxu0 0.0
    %2502 = vmatprep.subr.mxu0 0.0
    %2503 = vmatpush2.msra.mxu0 0.0
    %2504 = vmatprep.subr.mxu0 0.0
    %2505 = vmatpush2.msra.mxu0 0.0
    %2506 = vmatprep.subr.mxu0 0.0
    %2507 = vmatpush2.msra.mxu0 0.0
    %2508 = vmatprep.subr.mxu0 0.0
    %2509 = vmatpush2.msra.mxu0 0.0
    %2510 = vmatprep.subr.mxu0 0.0
    %2511 = vmatpush2.msra.mxu0 0.0
    %2512 = vmatprep.subr.mxu0 0.0
    %2513 = vmatpush2.msra.mxu0 0.0
    %2514 = vmatprep.mubr.f32.mxu0 0.0
    %2515 = vmatmul.mubr.f32.gmra.mxu0 %v2448
    %v2516 = vpop.f32.mrf.mxu0
    %v2517 = vadd.f32 %v358, %v2516
    %v2518 = vpop.f32.mrf.mxu0
    %v2519 = vadd.f32 %v362, %v2518
    %2520 = vdwg.mxu0
    %v2521 = vxor.u32 %v2517, 2147483648
    %v2522 = vxor.u32 %v2519, 2147483648
    %v2523 = vmul.f32 %v2521, 1.442695
    %v2524 = vpow.pop %v2523
    %v2525 = vmul.f32 %v2522, 1.442695
    %v2526 = vpow.pop %v2525
    %v2527 = vadd.f32 %v2524, 1.0
    %v2528 = vadd.f32 %v2526, 1.0
    %v2529 = vrcp.pop %v2527
    %v2530 = vmul.f32 1.0, %v2529
    %v2531 = vrcp.pop %v2528
    %v2532 = vmul.f32 1.0, %v2531
    %v2533 = vtanh.pop %v2519
    %v2534 = vmul.f32 %v2530, %v2242
    %2536 = vrot.lane.b32.xlu0 %v2533, 64
    %v2537 = vpop.permute.xlu0 %2536
    %v2539 = vmul.f32 %v2530, %v2537
    %2541 = vrot.lane.b32.xlu0 %v2539, 64
    %v2542 = vpop.permute.xlu0 %2541
    %v2544 = vadd.f32 %v2534, %v2542
    %v2545 = vtanh.pop %v2544
    %2547 = vrot.lane.b32.xlu0 %v2545, 64
    %v2548 = vpop.permute.xlu0 %2547
    %v2550 = vmul.f32 %v2532, %v2548
    %v2553 = vunpack.c.l.s4 1966171168
    %v2554 = vunpack.c.0.s8 %v2553
    %v2555 = vlaneseq
    %v2556 = vshrl.u32 %v2555, 7
    %v2557 = vsub.s32 %v2554, %v2556
    %v2558 = vrot.slane %v2550, %v2557
    %v2559 = vcombine.high %v2558, %v2558
    %v2561 = vunpack.c.l.s4 1966171168
    %v2562 = vunpack.c.0.s8 %v2561
    %v2563 = vlaneseq
    %v2564 = vshrl.u32 %v2563, 7
    %v2565 = vsub.s32 %v2562, %v2564
    %v2566 = vrot.slane %v2558, %v2565
    %v2568 = vunpack.c.l.s4 1966171168
    %v2569 = vunpack.c.0.s8 %v2568
    %v2570 = vlaneseq
    %v2571 = vshrl.u32 %v2570, 7
    %v2572 = vsub.s32 %v2569, %v2571
    %v2573 = vrot.slane %v2559, %v2572
    %2576 = vst.msk [vmem:[#allocation2 + $0x7] sm:$0x1] %vm491, %v2566
    %2577 = vst.msk [vmem:[#allocation2 + $0xf] sm:$0x1] %vm491, %v2573
    %v2578 = vld [vmem:[#allocation2] sm:$0xff]
    %v2579 = vld [vmem:[#allocation2 + $0x8] sm:$0xff]
    %v2580 = vld [vmem:[%s6] sm:$0xff]
    %v2581 = vld [vmem:[%s6 + $0x8] sm:$0xff]
    %v2582 = vld [vmem:[%s6 + $0x10] sm:$0xff]
    %v2583 = vld [vmem:[%s6 + $0x18] sm:$0xff]
    %v2584 = vld [vmem:[%s6 + $0x20] sm:$0xff]
    %v2585 = vld [vmem:[%s6 + $0x28] sm:$0xff]
    %v2586 = vld [vmem:[%s6 + $0x30] sm:$0xff]
    %v2587 = vld [vmem:[%s6 + $0x38] sm:$0xff]
    %v2588 = vld [vmem:[%s6 + $0x40] sm:$0xff]
    %v2589 = vld [vmem:[%s6 + $0x48] sm:$0xff]
    %v2590 = vld [vmem:[%s6 + $0x50] sm:$0xff]
    %v2591 = vld [vmem:[%s6 + $0x58] sm:$0xff]
    %v2592 = vld [vmem:[%s6 + $0x60] sm:$0xff]
    %v2593 = vld [vmem:[%s6 + $0x68] sm:$0xff]
    %v2594 = vld [vmem:[%s6 + $0x70] sm:$0xff]
    %v2595 = vld [vmem:[%s6 + $0x78] sm:$0xff]
    %v2596 = vld [vmem:[%s6 + $0x80] sm:$0xff]
    %v2597 = vld [vmem:[%s6 + $0x88] sm:$0xff]
    %v2598 = vld [vmem:[%s6 + $0x90] sm:$0xff]
    %v2599 = vld [vmem:[%s6 + $0x98] sm:$0xff]
    %v2600 = vld [vmem:[%s6 + $0xa0] sm:$0xff]
    %v2601 = vld [vmem:[%s6 + $0xa8] sm:$0xff]
    %v2602 = vld [vmem:[%s6 + $0xb0] sm:$0xff]
    %v2603 = vld [vmem:[%s6 + $0xb8] sm:$0xff]
    %v2604 = vld [vmem:[%s6 + $0xc0] sm:$0xff]
    %v2605 = vld [vmem:[%s6 + $0xc8] sm:$0xff]
    %v2606 = vld [vmem:[%s6 + $0xd0] sm:$0xff]
    %v2607 = vld [vmem:[%s6 + $0xd8] sm:$0xff]
    %v2608 = vld [vmem:[%s6 + $0xe0] sm:$0xff]
    %v2609 = vld [vmem:[%s6 + $0xe8] sm:$0xff]
    %v2610 = vld [vmem:[%s6 + $0xf0] sm:$0xff]
    %v2611 = vld [vmem:[%s6 + $0xf8] sm:$0xff]
    %v2612 = vld [vmem:[%s6 + $0x100] sm:$0xff]
    %v2613 = vld [vmem:[%s6 + $0x108] sm:$0xff]
    %v2614 = vld [vmem:[%s6 + $0x110] sm:$0xff]
    %v2615 = vld [vmem:[%s6 + $0x118] sm:$0xff]
    %v2616 = vld [vmem:[%s6 + $0x120] sm:$0xff]
    %v2617 = vld [vmem:[%s6 + $0x128] sm:$0xff]
    %v2618 = vld [vmem:[%s6 + $0x130] sm:$0xff]
    %v2619 = vld [vmem:[%s6 + $0x138] sm:$0xff]
    %v2620 = vld [vmem:[%s6 + $0x140] sm:$0xff]
    %v2621 = vld [vmem:[%s6 + $0x148] sm:$0xff]
    %v2622 = vld [vmem:[%s6 + $0x150] sm:$0xff]
    %v2623 = vld [vmem:[%s6 + $0x158] sm:$0xff]
    %v2624 = vld [vmem:[%s6 + $0x160] sm:$0xff]
    %v2625 = vld [vmem:[%s6 + $0x168] sm:$0xff]
    %v2626 = vld [vmem:[%s6 + $0x170] sm:$0xff]
    %v2627 = vld [vmem:[%s6 + $0x178] sm:$0xff]
    %v2628 = vld [vmem:[%s6 + $0x180] sm:$0xff]
    %v2629 = vld [vmem:[%s6 + $0x188] sm:$0xff]
    %v2630 = vld [vmem:[%s6 + $0x190] sm:$0xff]
    %v2631 = vld [vmem:[%s6 + $0x198] sm:$0xff]
    %v2632 = vld [vmem:[%s6 + $0x1a0] sm:$0xff]
    %v2633 = vld [vmem:[%s6 + $0x1a8] sm:$0xff]
    %v2634 = vld [vmem:[%s6 + $0x1b0] sm:$0xff]
    %v2635 = vld [vmem:[%s6 + $0x1b8] sm:$0xff]
    %v2636 = vld [vmem:[%s6 + $0x1c0] sm:$0xff]
    %v2637 = vld [vmem:[%s6 + $0x1c8] sm:$0xff]
    %v2638 = vld [vmem:[%s6 + $0x1d0] sm:$0xff]
    %v2639 = vld [vmem:[%s6 + $0x1d8] sm:$0xff]
    %v2640 = vld [vmem:[%s6 + $0x1e0] sm:$0xff]
    %v2641 = vld [vmem:[%s6 + $0x1e8] sm:$0xff]
    %v2642 = vld [vmem:[%s6 + $0x1f0] sm:$0xff]
    %v2643 = vld [vmem:[%s6 + $0x1f8] sm:$0xff]
    %v2645 = vsel %vm200, %v2578, 0
    %v2648 = vsel %vm200, %v2579, 0
    %2650 = vmatprep.subr.mxu0 0.0
    %2651 = vmatpush1.msra.mxu0 0.0
    %2652 = vmatprep.subr.mxu0 0.0
    %2653 = vmatpush1.msra.mxu0 0.0
    %2654 = vmatprep.subr.mxu0 0.0
    %2655 = vmatpush1.msra.mxu0 0.0
    %2656 = vmatprep.subr.mxu0 0.0
    %2657 = vmatpush1.msra.mxu0 0.0
    %2658 = vmatprep.subr.mxu0 0.0
    %2659 = vmatpush1.msra.mxu0 0.0
    %2660 = vmatprep.subr.mxu0 0.0
    %2661 = vmatpush1.msra.mxu0 0.0
    %2662 = vmatprep.subr.mxu0 0.0
    %2663 = vmatpush1.msra.mxu0 0.0
    %2664 = vmatprep.subr.mxu0 0.0
    %2665 = vmatpush1.msra.mxu0 0.0
    %2666 = vmatprep.subr.mxu0 0.0
    %2667 = vmatpush1.msra.mxu0 %v2587
    %2668 = vmatprep.subr.mxu0 0.0
    %2669 = vmatpush1.msra.mxu0 %v2586
    %2670 = vmatprep.subr.mxu0 0.0
    %2671 = vmatpush1.msra.mxu0 %v2585
    %2672 = vmatprep.subr.mxu0 0.0
    %2673 = vmatpush1.msra.mxu0 %v2584
    %2674 = vmatprep.subr.mxu0 0.0
    %2675 = vmatpush1.msra.mxu0 %v2583
    %2676 = vmatprep.subr.mxu0 0.0
    %2677 = vmatpush1.msra.mxu0 %v2582
    %2678 = vmatprep.subr.mxu0 0.0
    %2679 = vmatpush1.msra.mxu0 %v2581
    %2680 = vmatprep.subr.mxu0 0.0
    %2681 = vmatpush1.msra.mxu0 %v2580
    %2682 = vmatprep.subr.mxu0 0.0
    %2683 = vmatpush2.msra.mxu0 0.0
    %2684 = vmatprep.subr.mxu0 0.0
    %2685 = vmatpush2.msra.mxu0 0.0
    %2686 = vmatprep.subr.mxu0 0.0
    %2687 = vmatpush2.msra.mxu0 0.0
    %2688 = vmatprep.subr.mxu0 0.0
    %2689 = vmatpush2.msra.mxu0 0.0
    %2690 = vmatprep.subr.mxu0 0.0
    %2691 = vmatpush2.msra.mxu0 0.0
    %2692 = vmatprep.subr.mxu0 0.0
    %2693 = vmatpush2.msra.mxu0 0.0
    %2694 = vmatprep.subr.mxu0 0.0
    %2695 = vmatpush2.msra.mxu0 0.0
    %2696 = vmatprep.subr.mxu0 0.0
    %2697 = vmatpush2.msra.mxu0 0.0
    %2698 = vmatprep.subr.mxu0 0.0
    %2699 = vmatpush2.msra.mxu0 0.0
    %2700 = vmatprep.subr.mxu0 0.0
    %2701 = vmatpush2.msra.mxu0 0.0
    %2702 = vmatprep.subr.mxu0 0.0
    %2703 = vmatpush2.msra.mxu0 0.0
    %2704 = vmatprep.subr.mxu0 0.0
    %2705 = vmatpush2.msra.mxu0 0.0
    %2706 = vmatprep.subr.mxu0 0.0
    %2707 = vmatpush2.msra.mxu0 0.0
    %2708 = vmatprep.subr.mxu0 0.0
    %2709 = vmatpush2.msra.mxu0 0.0
    %2710 = vmatprep.subr.mxu0 0.0
    %2711 = vmatpush2.msra.mxu0 0.0
    %2712 = vmatprep.subr.mxu0 0.0
    %2713 = vmatpush2.msra.mxu0 0.0
    %2714 = vmatprep.mubr.f32.mxu0 0.0
    %2715 = vmatmul.mubr.f32.gmra.mxu0 %v2645
    %v2716 = vpop.f32.mrf.mxu0
    %v2717 = vadd.f32 0.0, %v2716
    %v2718 = vpop.f32.mrf.mxu0
    %2719 = vmatprep.mubr.f32.mxu0 0.0
    %2720 = vmatmul.mubr.f32.gmra.mxu0 %v2648
    %v2721 = vpop.f32.mrf.mxu0
    %v2722 = vadd.f32 0.0, %v2721
    %v2723 = vpop.f32.mrf.mxu0
    %2724 = vdwg.mxu0
    %2725 = vmatprep.subr.mxu0 0.0
    %2726 = vmatpush1.msra.mxu0 0.0
    %2727 = vmatprep.subr.mxu0 0.0
    %2728 = vmatpush1.msra.mxu0 0.0
    %2729 = vmatprep.subr.mxu0 0.0
    %2730 = vmatpush1.msra.mxu0 0.0
    %2731 = vmatprep.subr.mxu0 0.0
    %2732 = vmatpush1.msra.mxu0 0.0
    %2733 = vmatprep.subr.mxu0 0.0
    %2734 = vmatpush1.msra.mxu0 0.0
    %2735 = vmatprep.subr.mxu0 0.0
    %2736 = vmatpush1.msra.mxu0 0.0
    %2737 = vmatprep.subr.mxu0 0.0
    %2738 = vmatpush1.msra.mxu0 0.0
    %2739 = vmatprep.subr.mxu0 0.0
    %2740 = vmatpush1.msra.mxu0 0.0
    %2741 = vmatprep.subr.mxu0 0.0
    %2742 = vmatpush1.msra.mxu0 %v2595
    %2743 = vmatprep.subr.mxu0 0.0
    %2744 = vmatpush1.msra.mxu0 %v2594
    %2745 = vmatprep.subr.mxu0 0.0
    %2746 = vmatpush1.msra.mxu0 %v2593
    %2747 = vmatprep.subr.mxu0 0.0
    %2748 = vmatpush1.msra.mxu0 %v2592
    %2749 = vmatprep.subr.mxu0 0.0
    %2750 = vmatpush1.msra.mxu0 %v2591
    %2751 = vmatprep.subr.mxu0 0.0
    %2752 = vmatpush1.msra.mxu0 %v2590
    %2753 = vmatprep.subr.mxu0 0.0
    %2754 = vmatpush1.msra.mxu0 %v2589
    %2755 = vmatprep.subr.mxu0 0.0
    %2756 = vmatpush1.msra.mxu0 %v2588
    %2757 = vmatprep.subr.mxu0 0.0
    %2758 = vmatpush2.msra.mxu0 0.0
    %2759 = vmatprep.subr.mxu0 0.0
    %2760 = vmatpush2.msra.mxu0 0.0
    %2761 = vmatprep.subr.mxu0 0.0
    %2762 = vmatpush2.msra.mxu0 0.0
    %2763 = vmatprep.subr.mxu0 0.0
    %2764 = vmatpush2.msra.mxu0 0.0
    %2765 = vmatprep.subr.mxu0 0.0
    %2766 = vmatpush2.msra.mxu0 0.0
    %2767 = vmatprep.subr.mxu0 0.0
    %2768 = vmatpush2.msra.mxu0 0.0
    %2769 = vmatprep.subr.mxu0 0.0
    %2770 = vmatpush2.msra.mxu0 0.0
    %2771 = vmatprep.subr.mxu0 0.0
    %2772 = vmatpush2.msra.mxu0 0.0
    %2773 = vmatprep.subr.mxu0 0.0
    %2774 = vmatpush2.msra.mxu0 0.0
    %2775 = vmatprep.subr.mxu0 0.0
    %2776 = vmatpush2.msra.mxu0 0.0
    %2777 = vmatprep.subr.mxu0 0.0
    %2778 = vmatpush2.msra.mxu0 0.0
    %2779 = vmatprep.subr.mxu0 0.0
    %2780 = vmatpush2.msra.mxu0 0.0
    %2781 = vmatprep.subr.mxu0 0.0
    %2782 = vmatpush2.msra.mxu0 0.0
    %2783 = vmatprep.subr.mxu0 0.0
    %2784 = vmatpush2.msra.mxu0 0.0
    %2785 = vmatprep.subr.mxu0 0.0
    %2786 = vmatpush2.msra.mxu0 0.0
    %2787 = vmatprep.subr.mxu0 0.0
    %2788 = vmatpush2.msra.mxu0 0.0
    %2789 = vmatprep.mubr.f32.mxu0 0.0
    %2790 = vmatmul.mubr.f32.gmra.mxu0 %v2645
    %v2791 = vpop.f32.mrf.mxu0
    %v2792 = vadd.f32 0.0, %v2791
    %v2793 = vpop.f32.mrf.mxu0
    %2794 = vmatprep.mubr.f32.mxu0 0.0
    %2795 = vmatmul.mubr.f32.gmra.mxu0 %v2648
    %v2796 = vpop.f32.mrf.mxu0
    %v2797 = vadd.f32 0.0, %v2796
    %v2798 = vpop.f32.mrf.mxu0
    %2799 = vdwg.mxu0
    %2800 = vmatprep.subr.mxu0 0.0
    %2801 = vmatpush1.msra.mxu0 0.0
    %2802 = vmatprep.subr.mxu0 0.0
    %2803 = vmatpush1.msra.mxu0 0.0
    %2804 = vmatprep.subr.mxu0 0.0
    %2805 = vmatpush1.msra.mxu0 0.0
    %2806 = vmatprep.subr.mxu0 0.0
    %2807 = vmatpush1.msra.mxu0 0.0
    %2808 = vmatprep.subr.mxu0 0.0
    %2809 = vmatpush1.msra.mxu0 0.0
    %2810 = vmatprep.subr.mxu0 0.0
    %2811 = vmatpush1.msra.mxu0 0.0
    %2812 = vmatprep.subr.mxu0 0.0
    %2813 = vmatpush1.msra.mxu0 0.0
    %2814 = vmatprep.subr.mxu0 0.0
    %2815 = vmatpush1.msra.mxu0 0.0
    %2816 = vmatprep.subr.mxu0 0.0
    %2817 = vmatpush1.msra.mxu0 %v2603
    %2818 = vmatprep.subr.mxu0 0.0
    %2819 = vmatpush1.msra.mxu0 %v2602
    %2820 = vmatprep.subr.mxu0 0.0
    %2821 = vmatpush1.msra.mxu0 %v2601
    %2822 = vmatprep.subr.mxu0 0.0
    %2823 = vmatpush1.msra.mxu0 %v2600
    %2824 = vmatprep.subr.mxu0 0.0
    %2825 = vmatpush1.msra.mxu0 %v2599
    %2826 = vmatprep.subr.mxu0 0.0
    %2827 = vmatpush1.msra.mxu0 %v2598
    %2828 = vmatprep.subr.mxu0 0.0
    %2829 = vmatpush1.msra.mxu0 %v2597
    %2830 = vmatprep.subr.mxu0 0.0
    %2831 = vmatpush1.msra.mxu0 %v2596
    %2832 = vmatprep.subr.mxu0 0.0
    %2833 = vmatpush2.msra.mxu0 0.0
    %2834 = vmatprep.subr.mxu0 0.0
    %2835 = vmatpush2.msra.mxu0 0.0
    %2836 = vmatprep.subr.mxu0 0.0
    %2837 = vmatpush2.msra.mxu0 0.0
    %2838 = vmatprep.subr.mxu0 0.0
    %2839 = vmatpush2.msra.mxu0 0.0
    %2840 = vmatprep.subr.mxu0 0.0
    %2841 = vmatpush2.msra.mxu0 0.0
    %2842 = vmatprep.subr.mxu0 0.0
    %2843 = vmatpush2.msra.mxu0 0.0
    %2844 = vmatprep.subr.mxu0 0.0
    %2845 = vmatpush2.msra.mxu0 0.0
    %2846 = vmatprep.subr.mxu0 0.0
    %2847 = vmatpush2.msra.mxu0 0.0
    %2848 = vmatprep.subr.mxu0 0.0
    %2849 = vmatpush2.msra.mxu0 0.0
    %2850 = vmatprep.subr.mxu0 0.0
    %2851 = vmatpush2.msra.mxu0 0.0
    %2852 = vmatprep.subr.mxu0 0.0
    %2853 = vmatpush2.msra.mxu0 0.0
    %2854 = vmatprep.subr.mxu0 0.0
    %2855 = vmatpush2.msra.mxu0 0.0
    %2856 = vmatprep.subr.mxu0 0.0
    %2857 = vmatpush2.msra.mxu0 0.0
    %2858 = vmatprep.subr.mxu0 0.0
    %2859 = vmatpush2.msra.mxu0 0.0
    %2860 = vmatprep.subr.mxu0 0.0
    %2861 = vmatpush2.msra.mxu0 0.0
    %2862 = vmatprep.subr.mxu0 0.0
    %2863 = vmatpush2.msra.mxu0 0.0
    %2864 = vmatprep.mubr.f32.mxu0 0.0
    %2865 = vmatmul.mubr.f32.gmra.mxu0 %v2645
    %v2866 = vpop.f32.mrf.mxu0
    %v2867 = vadd.f32 0.0, %v2866
    %v2868 = vpop.f32.mrf.mxu0
    %2869 = vmatprep.mubr.f32.mxu0 0.0
    %2870 = vmatmul.mubr.f32.gmra.mxu0 %v2648
    %v2871 = vpop.f32.mrf.mxu0
    %v2872 = vadd.f32 0.0, %v2871
    %v2873 = vpop.f32.mrf.mxu0
    %2874 = vdwg.mxu0
    %2875 = vmatprep.subr.mxu0 0.0
    %2876 = vmatpush1.msra.mxu0 0.0
    %2877 = vmatprep.subr.mxu0 0.0
    %2878 = vmatpush1.msra.mxu0 0.0
    %2879 = vmatprep.subr.mxu0 0.0
    %2880 = vmatpush1.msra.mxu0 0.0
    %2881 = vmatprep.subr.mxu0 0.0
    %2882 = vmatpush1.msra.mxu0 0.0
    %2883 = vmatprep.subr.mxu0 0.0
    %2884 = vmatpush1.msra.mxu0 0.0
    %2885 = vmatprep.subr.mxu0 0.0
    %2886 = vmatpush1.msra.mxu0 0.0
    %2887 = vmatprep.subr.mxu0 0.0
    %2888 = vmatpush1.msra.mxu0 0.0
    %2889 = vmatprep.subr.mxu0 0.0
    %2890 = vmatpush1.msra.mxu0 0.0
    %2891 = vmatprep.subr.mxu0 0.0
    %2892 = vmatpush1.msra.mxu0 %v2611
    %2893 = vmatprep.subr.mxu0 0.0
    %2894 = vmatpush1.msra.mxu0 %v2610
    %2895 = vmatprep.subr.mxu0 0.0
    %2896 = vmatpush1.msra.mxu0 %v2609
    %2897 = vmatprep.subr.mxu0 0.0
    %2898 = vmatpush1.msra.mxu0 %v2608
    %2899 = vmatprep.subr.mxu0 0.0
    %2900 = vmatpush1.msra.mxu0 %v2607
    %2901 = vmatprep.subr.mxu0 0.0
    %2902 = vmatpush1.msra.mxu0 %v2606
    %2903 = vmatprep.subr.mxu0 0.0
    %2904 = vmatpush1.msra.mxu0 %v2605
    %2905 = vmatprep.subr.mxu0 0.0
    %2906 = vmatpush1.msra.mxu0 %v2604
    %2907 = vmatprep.subr.mxu0 0.0
    %2908 = vmatpush2.msra.mxu0 0.0
    %2909 = vmatprep.subr.mxu0 0.0
    %2910 = vmatpush2.msra.mxu0 0.0
    %2911 = vmatprep.subr.mxu0 0.0
    %2912 = vmatpush2.msra.mxu0 0.0
    %2913 = vmatprep.subr.mxu0 0.0
    %2914 = vmatpush2.msra.mxu0 0.0
    %2915 = vmatprep.subr.mxu0 0.0
    %2916 = vmatpush2.msra.mxu0 0.0
    %2917 = vmatprep.subr.mxu0 0.0
    %2918 = vmatpush2.msra.mxu0 0.0
    %2919 = vmatprep.subr.mxu0 0.0
    %2920 = vmatpush2.msra.mxu0 0.0
    %2921 = vmatprep.subr.mxu0 0.0
    %2922 = vmatpush2.msra.mxu0 0.0
    %2923 = vmatprep.subr.mxu0 0.0
    %2924 = vmatpush2.msra.mxu0 0.0
    %2925 = vmatprep.subr.mxu0 0.0
    %2926 = vmatpush2.msra.mxu0 0.0
    %2927 = vmatprep.subr.mxu0 0.0
    %2928 = vmatpush2.msra.mxu0 0.0
    %2929 = vmatprep.subr.mxu0 0.0
    %2930 = vmatpush2.msra.mxu0 0.0
    %2931 = vmatprep.subr.mxu0 0.0
    %2932 = vmatpush2.msra.mxu0 0.0
    %2933 = vmatprep.subr.mxu0 0.0
    %2934 = vmatpush2.msra.mxu0 0.0
    %2935 = vmatprep.subr.mxu0 0.0
    %2936 = vmatpush2.msra.mxu0 0.0
    %2937 = vmatprep.subr.mxu0 0.0
    %2938 = vmatpush2.msra.mxu0 0.0
    %2939 = vmatprep.mubr.f32.mxu0 0.0
    %2940 = vmatmul.mubr.f32.gmra.mxu0 %v2645
    %v2941 = vpop.f32.mrf.mxu0
    %v2942 = vadd.f32 0.0, %v2941
    %v2943 = vpop.f32.mrf.mxu0
    %2944 = vmatprep.mubr.f32.mxu0 0.0
    %2945 = vmatmul.mubr.f32.gmra.mxu0 %v2648
    %v2946 = vpop.f32.mrf.mxu0
    %v2947 = vadd.f32 0.0, %v2946
    %v2948 = vpop.f32.mrf.mxu0
    %2949 = vdwg.mxu0
    %2950 = vmatprep.subr.mxu0 0.0
    %2951 = vmatpush1.msra.mxu0 0.0
    %2952 = vmatprep.subr.mxu0 0.0
    %2953 = vmatpush1.msra.mxu0 0.0
    %2954 = vmatprep.subr.mxu0 0.0
    %2955 = vmatpush1.msra.mxu0 0.0
    %2956 = vmatprep.subr.mxu0 0.0
    %2957 = vmatpush1.msra.mxu0 0.0
    %2958 = vmatprep.subr.mxu0 0.0
    %2959 = vmatpush1.msra.mxu0 0.0
    %2960 = vmatprep.subr.mxu0 0.0
    %2961 = vmatpush1.msra.mxu0 0.0
    %2962 = vmatprep.subr.mxu0 0.0
    %2963 = vmatpush1.msra.mxu0 0.0
    %2964 = vmatprep.subr.mxu0 0.0
    %2965 = vmatpush1.msra.mxu0 0.0
    %2966 = vmatprep.subr.mxu0 0.0
    %2967 = vmatpush1.msra.mxu0 %v2619
    %2968 = vmatprep.subr.mxu0 0.0
    %2969 = vmatpush1.msra.mxu0 %v2618
    %2970 = vmatprep.subr.mxu0 0.0
    %2971 = vmatpush1.msra.mxu0 %v2617
    %2972 = vmatprep.subr.mxu0 0.0
    %2973 = vmatpush1.msra.mxu0 %v2616
    %2974 = vmatprep.subr.mxu0 0.0
    %2975 = vmatpush1.msra.mxu0 %v2615
    %2976 = vmatprep.subr.mxu0 0.0
    %2977 = vmatpush1.msra.mxu0 %v2614
    %2978 = vmatprep.subr.mxu0 0.0
    %2979 = vmatpush1.msra.mxu0 %v2613
    %2980 = vmatprep.subr.mxu0 0.0
    %2981 = vmatpush1.msra.mxu0 %v2612
    %2982 = vmatprep.subr.mxu0 0.0
    %2983 = vmatpush2.msra.mxu0 0.0
    %2984 = vmatprep.subr.mxu0 0.0
    %2985 = vmatpush2.msra.mxu0 0.0
    %2986 = vmatprep.subr.mxu0 0.0
    %2987 = vmatpush2.msra.mxu0 0.0
    %2988 = vmatprep.subr.mxu0 0.0
    %2989 = vmatpush2.msra.mxu0 0.0
    %2990 = vmatprep.subr.mxu0 0.0
    %2991 = vmatpush2.msra.mxu0 0.0
    %2992 = vmatprep.subr.mxu0 0.0
    %2993 = vmatpush2.msra.mxu0 0.0
    %2994 = vmatprep.subr.mxu0 0.0
    %2995 = vmatpush2.msra.mxu0 0.0
    %2996 = vmatprep.subr.mxu0 0.0
    %2997 = vmatpush2.msra.mxu0 0.0
    %2998 = vmatprep.subr.mxu0 0.0
    %2999 = vmatpush2.msra.mxu0 0.0
    %3000 = vmatprep.subr.mxu0 0.0
    %3001 = vmatpush2.msra.mxu0 0.0
    %3002 = vmatprep.subr.mxu0 0.0
    %3003 = vmatpush2.msra.mxu0 0.0
    %3004 = vmatprep.subr.mxu0 0.0
    %3005 = vmatpush2.msra.mxu0 0.0
    %3006 = vmatprep.subr.mxu0 0.0
    %3007 = vmatpush2.msra.mxu0 0.0
    %3008 = vmatprep.subr.mxu0 0.0
    %3009 = vmatpush2.msra.mxu0 0.0
    %3010 = vmatprep.subr.mxu0 0.0
    %3011 = vmatpush2.msra.mxu0 0.0
    %3012 = vmatprep.subr.mxu0 0.0
    %3013 = vmatpush2.msra.mxu0 0.0
    %3014 = vmatprep.mubr.f32.mxu0 0.0
    %3015 = vmatmul.mubr.f32.gmra.mxu0 %v2645
    %v3016 = vpop.f32.mrf.mxu0
    %v3017 = vadd.f32 0.0, %v3016
    %v3018 = vpop.f32.mrf.mxu0
    %3019 = vmatprep.mubr.f32.mxu0 0.0
    %3020 = vmatmul.mubr.f32.gmra.mxu0 %v2648
    %v3021 = vpop.f32.mrf.mxu0
    %v3022 = vadd.f32 0.0, %v3021
    %v3023 = vpop.f32.mrf.mxu0
    %3024 = vdwg.mxu0
    %3025 = vmatprep.subr.mxu0 0.0
    %3026 = vmatpush1.msra.mxu0 0.0
    %3027 = vmatprep.subr.mxu0 0.0
    %3028 = vmatpush1.msra.mxu0 0.0
    %3029 = vmatprep.subr.mxu0 0.0
    %3030 = vmatpush1.msra.mxu0 0.0
    %3031 = vmatprep.subr.mxu0 0.0
    %3032 = vmatpush1.msra.mxu0 0.0
    %3033 = vmatprep.subr.mxu0 0.0
    %3034 = vmatpush1.msra.mxu0 0.0
    %3035 = vmatprep.subr.mxu0 0.0
    %3036 = vmatpush1.msra.mxu0 0.0
    %3037 = vmatprep.subr.mxu0 0.0
    %3038 = vmatpush1.msra.mxu0 0.0
    %3039 = vmatprep.subr.mxu0 0.0
    %3040 = vmatpush1.msra.mxu0 0.0
    %3041 = vmatprep.subr.mxu0 0.0
    %3042 = vmatpush1.msra.mxu0 %v2627
    %3043 = vmatprep.subr.mxu0 0.0
    %3044 = vmatpush1.msra.mxu0 %v2626
    %3045 = vmatprep.subr.mxu0 0.0
    %3046 = vmatpush1.msra.mxu0 %v2625
    %3047 = vmatprep.subr.mxu0 0.0
    %3048 = vmatpush1.msra.mxu0 %v2624
    %3049 = vmatprep.subr.mxu0 0.0
    %3050 = vmatpush1.msra.mxu0 %v2623
    %3051 = vmatprep.subr.mxu0 0.0
    %3052 = vmatpush1.msra.mxu0 %v2622
    %3053 = vmatprep.subr.mxu0 0.0
    %3054 = vmatpush1.msra.mxu0 %v2621
    %3055 = vmatprep.subr.mxu0 0.0
    %3056 = vmatpush1.msra.mxu0 %v2620
    %3057 = vmatprep.subr.mxu0 0.0
    %3058 = vmatpush2.msra.mxu0 0.0
    %3059 = vmatprep.subr.mxu0 0.0
    %3060 = vmatpush2.msra.mxu0 0.0
    %3061 = vmatprep.subr.mxu0 0.0
    %3062 = vmatpush2.msra.mxu0 0.0
    %3063 = vmatprep.subr.mxu0 0.0
    %3064 = vmatpush2.msra.mxu0 0.0
    %3065 = vmatprep.subr.mxu0 0.0
    %3066 = vmatpush2.msra.mxu0 0.0
    %3067 = vmatprep.subr.mxu0 0.0
    %3068 = vmatpush2.msra.mxu0 0.0
    %3069 = vmatprep.subr.mxu0 0.0
    %3070 = vmatpush2.msra.mxu0 0.0
    %3071 = vmatprep.subr.mxu0 0.0
    %3072 = vmatpush2.msra.mxu0 0.0
    %3073 = vmatprep.subr.mxu0 0.0
    %3074 = vmatpush2.msra.mxu0 0.0
    %3075 = vmatprep.subr.mxu0 0.0
    %3076 = vmatpush2.msra.mxu0 0.0
    %3077 = vmatprep.subr.mxu0 0.0
    %3078 = vmatpush2.msra.mxu0 0.0
    %3079 = vmatprep.subr.mxu0 0.0
    %3080 = vmatpush2.msra.mxu0 0.0
    %3081 = vmatprep.subr.mxu0 0.0
    %3082 = vmatpush2.msra.mxu0 0.0
    %3083 = vmatprep.subr.mxu0 0.0
    %3084 = vmatpush2.msra.mxu0 0.0
    %3085 = vmatprep.subr.mxu0 0.0
    %3086 = vmatpush2.msra.mxu0 0.0
    %3087 = vmatprep.subr.mxu0 0.0
    %3088 = vmatpush2.msra.mxu0 0.0
    %3089 = vmatprep.mubr.f32.mxu0 0.0
    %3090 = vmatmul.mubr.f32.gmra.mxu0 %v2645
    %v3091 = vpop.f32.mrf.mxu0
    %v3092 = vadd.f32 0.0, %v3091
    %v3093 = vpop.f32.mrf.mxu0
    %3094 = vmatprep.mubr.f32.mxu0 0.0
    %3095 = vmatmul.mubr.f32.gmra.mxu0 %v2648
    %v3096 = vpop.f32.mrf.mxu0
    %v3097 = vadd.f32 0.0, %v3096
    %v3098 = vpop.f32.mrf.mxu0
    %3099 = vdwg.mxu0
    %3100 = vmatprep.subr.mxu0 0.0
    %3101 = vmatpush1.msra.mxu0 0.0
    %3102 = vmatprep.subr.mxu0 0.0
    %3103 = vmatpush1.msra.mxu0 0.0
    %3104 = vmatprep.subr.mxu0 0.0
    %3105 = vmatpush1.msra.mxu0 0.0
    %3106 = vmatprep.subr.mxu0 0.0
    %3107 = vmatpush1.msra.mxu0 0.0
    %3108 = vmatprep.subr.mxu0 0.0
    %3109 = vmatpush1.msra.mxu0 0.0
    %3110 = vmatprep.subr.mxu0 0.0
    %3111 = vmatpush1.msra.mxu0 0.0
    %3112 = vmatprep.subr.mxu0 0.0
    %3113 = vmatpush1.msra.mxu0 0.0
    %3114 = vmatprep.subr.mxu0 0.0
    %3115 = vmatpush1.msra.mxu0 0.0
    %3116 = vmatprep.subr.mxu0 0.0
    %3117 = vmatpush1.msra.mxu0 %v2635
    %3118 = vmatprep.subr.mxu0 0.0
    %3119 = vmatpush1.msra.mxu0 %v2634
    %3120 = vmatprep.subr.mxu0 0.0
    %3121 = vmatpush1.msra.mxu0 %v2633
    %3122 = vmatprep.subr.mxu0 0.0
    %3123 = vmatpush1.msra.mxu0 %v2632
    %3124 = vmatprep.subr.mxu0 0.0
    %3125 = vmatpush1.msra.mxu0 %v2631
    %3126 = vmatprep.subr.mxu0 0.0
    %3127 = vmatpush1.msra.mxu0 %v2630
    %3128 = vmatprep.subr.mxu0 0.0
    %3129 = vmatpush1.msra.mxu0 %v2629
    %3130 = vmatprep.subr.mxu0 0.0
    %3131 = vmatpush1.msra.mxu0 %v2628
    %3132 = vmatprep.subr.mxu0 0.0
    %3133 = vmatpush2.msra.mxu0 0.0
    %3134 = vmatprep.subr.mxu0 0.0
    %3135 = vmatpush2.msra.mxu0 0.0
    %3136 = vmatprep.subr.mxu0 0.0
    %3137 = vmatpush2.msra.mxu0 0.0
    %3138 = vmatprep.subr.mxu0 0.0
    %3139 = vmatpush2.msra.mxu0 0.0
    %3140 = vmatprep.subr.mxu0 0.0
    %3141 = vmatpush2.msra.mxu0 0.0
    %3142 = vmatprep.subr.mxu0 0.0
    %3143 = vmatpush2.msra.mxu0 0.0
    %3144 = vmatprep.subr.mxu0 0.0
    %3145 = vmatpush2.msra.mxu0 0.0
    %3146 = vmatprep.subr.mxu0 0.0
    %3147 = vmatpush2.msra.mxu0 0.0
    %3148 = vmatprep.subr.mxu0 0.0
    %3149 = vmatpush2.msra.mxu0 0.0
    %3150 = vmatprep.subr.mxu0 0.0
    %3151 = vmatpush2.msra.mxu0 0.0
    %3152 = vmatprep.subr.mxu0 0.0
    %3153 = vmatpush2.msra.mxu0 0.0
    %3154 = vmatprep.subr.mxu0 0.0
    %3155 = vmatpush2.msra.mxu0 0.0
    %3156 = vmatprep.subr.mxu0 0.0
    %3157 = vmatpush2.msra.mxu0 0.0
    %3158 = vmatprep.subr.mxu0 0.0
    %3159 = vmatpush2.msra.mxu0 0.0
    %3160 = vmatprep.subr.mxu0 0.0
    %3161 = vmatpush2.msra.mxu0 0.0
    %3162 = vmatprep.subr.mxu0 0.0
    %3163 = vmatpush2.msra.mxu0 0.0
    %3164 = vmatprep.mubr.f32.mxu0 0.0
    %3165 = vmatmul.mubr.f32.gmra.mxu0 %v2645
    %v3166 = vpop.f32.mrf.mxu0
    %v3167 = vadd.f32 0.0, %v3166
    %v3168 = vpop.f32.mrf.mxu0
    %3169 = vmatprep.mubr.f32.mxu0 0.0
    %3170 = vmatmul.mubr.f32.gmra.mxu0 %v2648
    %v3171 = vpop.f32.mrf.mxu0
    %v3172 = vadd.f32 0.0, %v3171
    %v3173 = vpop.f32.mrf.mxu0
    %3174 = vdwg.mxu0
    %3175 = vmatprep.subr.mxu0 0.0
    %3176 = vmatpush1.msra.mxu0 0.0
    %3177 = vmatprep.subr.mxu0 0.0
    %3178 = vmatpush1.msra.mxu0 0.0
    %3179 = vmatprep.subr.mxu0 0.0
    %3180 = vmatpush1.msra.mxu0 0.0
    %3181 = vmatprep.subr.mxu0 0.0
    %3182 = vmatpush1.msra.mxu0 0.0
    %3183 = vmatprep.subr.mxu0 0.0
    %3184 = vmatpush1.msra.mxu0 0.0
    %3185 = vmatprep.subr.mxu0 0.0
    %3186 = vmatpush1.msra.mxu0 0.0
    %3187 = vmatprep.subr.mxu0 0.0
    %3188 = vmatpush1.msra.mxu0 0.0
    %3189 = vmatprep.subr.mxu0 0.0
    %3190 = vmatpush1.msra.mxu0 0.0
    %3191 = vmatprep.subr.mxu0 0.0
    %3192 = vmatpush1.msra.mxu0 %v2643
    %3193 = vmatprep.subr.mxu0 0.0
    %3194 = vmatpush1.msra.mxu0 %v2642
    %3195 = vmatprep.subr.mxu0 0.0
    %3196 = vmatpush1.msra.mxu0 %v2641
    %3197 = vmatprep.subr.mxu0 0.0
    %3198 = vmatpush1.msra.mxu0 %v2640
    %3199 = vmatprep.subr.mxu0 0.0
    %3200 = vmatpush1.msra.mxu0 %v2639
    %3201 = vmatprep.subr.mxu0 0.0
    %3202 = vmatpush1.msra.mxu0 %v2638
    %3203 = vmatprep.subr.mxu0 0.0
    %3204 = vmatpush1.msra.mxu0 %v2637
    %3205 = vmatprep.subr.mxu0 0.0
    %3206 = vmatpush1.msra.mxu0 %v2636
    %3207 = vmatprep.subr.mxu0 0.0
    %3208 = vmatpush2.msra.mxu0 0.0
    %3209 = vmatprep.subr.mxu0 0.0
    %3210 = vmatpush2.msra.mxu0 0.0
    %3211 = vmatprep.subr.mxu0 0.0
    %3212 = vmatpush2.msra.mxu0 0.0
    %3213 = vmatprep.subr.mxu0 0.0
    %3214 = vmatpush2.msra.mxu0 0.0
    %3215 = vmatprep.subr.mxu0 0.0
    %3216 = vmatpush2.msra.mxu0 0.0
    %3217 = vmatprep.subr.mxu0 0.0
    %3218 = vmatpush2.msra.mxu0 0.0
    %3219 = vmatprep.subr.mxu0 0.0
    %3220 = vmatpush2.msra.mxu0 0.0
    %3221 = vmatprep.subr.mxu0 0.0
    %3222 = vmatpush2.msra.mxu0 0.0
    %3223 = vmatprep.subr.mxu0 0.0
    %3224 = vmatpush2.msra.mxu0 0.0
    %3225 = vmatprep.subr.mxu0 0.0
    %3226 = vmatpush2.msra.mxu0 0.0
    %3227 = vmatprep.subr.mxu0 0.0
    %3228 = vmatpush2.msra.mxu0 0.0
    %3229 = vmatprep.subr.mxu0 0.0
    %3230 = vmatpush2.msra.mxu0 0.0
    %3231 = vmatprep.subr.mxu0 0.0
    %3232 = vmatpush2.msra.mxu0 0.0
    %3233 = vmatprep.subr.mxu0 0.0
    %3234 = vmatpush2.msra.mxu0 0.0
    %3235 = vmatprep.subr.mxu0 0.0
    %3236 = vmatpush2.msra.mxu0 0.0
    %3237 = vmatprep.subr.mxu0 0.0
    %3238 = vmatpush2.msra.mxu0 0.0
    %3239 = vmatprep.mubr.f32.mxu0 0.0
    %3240 = vmatmul.mubr.f32.gmra.mxu0 %v2645
    %v3241 = vpop.f32.mrf.mxu0
    %v3242 = vadd.f32 0.0, %v3241
    %v3243 = vpop.f32.mrf.mxu0
    %3244 = vmatprep.mubr.f32.mxu0 0.0
    %3245 = vmatmul.mubr.f32.gmra.mxu0 %v2648
    %v3246 = vpop.f32.mrf.mxu0
    %v3247 = vadd.f32 0.0, %v3246
    %v3248 = vpop.f32.mrf.mxu0
    %3249 = vdwg.mxu0
    %v3250 = vld [vmem:[%s7] sm:$0xff]
    %v3251 = vld [vmem:[%s7 + $0x8] sm:$0xff]
    %v3252 = vld [vmem:[%s7 + $0x10] sm:$0xff]
    %v3253 = vld [vmem:[%s7 + $0x18] sm:$0xff]
    %v3254 = vld [vmem:[%s7 + $0x20] sm:$0xff]
    %v3255 = vld [vmem:[%s7 + $0x28] sm:$0xff]
    %v3256 = vld [vmem:[%s7 + $0x30] sm:$0xff]
    %v3257 = vld [vmem:[%s7 + $0x38] sm:$0xff]
    %v3258 = vld [vmem:[%s7 + $0x40] sm:$0xff]
    %v3259 = vld [vmem:[%s7 + $0x48] sm:$0xff]
    %v3260 = vld [vmem:[%s7 + $0x50] sm:$0xff]
    %v3261 = vld [vmem:[%s7 + $0x58] sm:$0xff]
    %v3262 = vld [vmem:[%s7 + $0x60] sm:$0xff]
    %v3263 = vld [vmem:[%s7 + $0x68] sm:$0xff]
    %v3264 = vld [vmem:[%s7 + $0x70] sm:$0xff]
    %v3265 = vld [vmem:[%s7 + $0x78] sm:$0xff]
    %v3266 = vld [vmem:[%s7 + $0x80] sm:$0xff]
    %v3267 = vld [vmem:[%s7 + $0x88] sm:$0xff]
    %v3268 = vld [vmem:[%s7 + $0x90] sm:$0xff]
    %v3269 = vld [vmem:[%s7 + $0x98] sm:$0xff]
    %v3270 = vld [vmem:[%s7 + $0xa0] sm:$0xff]
    %v3271 = vld [vmem:[%s7 + $0xa8] sm:$0xff]
    %v3272 = vld [vmem:[%s7 + $0xb0] sm:$0xff]
    %v3273 = vld [vmem:[%s7 + $0xb8] sm:$0xff]
    %v3274 = vld [vmem:[%s7 + $0xc0] sm:$0xff]
    %v3275 = vld [vmem:[%s7 + $0xc8] sm:$0xff]
    %v3276 = vld [vmem:[%s7 + $0xd0] sm:$0xff]
    %v3277 = vld [vmem:[%s7 + $0xd8] sm:$0xff]
    %v3278 = vld [vmem:[%s7 + $0xe0] sm:$0xff]
    %v3279 = vld [vmem:[%s7 + $0xe8] sm:$0xff]
    %v3280 = vld [vmem:[%s7 + $0xf0] sm:$0xff]
    %v3281 = vld [vmem:[%s7 + $0xf8] sm:$0xff]
    %v3282 = vld [vmem:[%s7 + $0x100] sm:$0xff]
    %v3283 = vld [vmem:[%s7 + $0x108] sm:$0xff]
    %v3284 = vld [vmem:[%s7 + $0x110] sm:$0xff]
    %v3285 = vld [vmem:[%s7 + $0x118] sm:$0xff]
    %v3286 = vld [vmem:[%s7 + $0x120] sm:$0xff]
    %v3287 = vld [vmem:[%s7 + $0x128] sm:$0xff]
    %v3288 = vld [vmem:[%s7 + $0x130] sm:$0xff]
    %v3289 = vld [vmem:[%s7 + $0x138] sm:$0xff]
    %v3290 = vld [vmem:[%s7 + $0x140] sm:$0xff]
    %v3291 = vld [vmem:[%s7 + $0x148] sm:$0xff]
    %v3292 = vld [vmem:[%s7 + $0x150] sm:$0xff]
    %v3293 = vld [vmem:[%s7 + $0x158] sm:$0xff]
    %v3294 = vld [vmem:[%s7 + $0x160] sm:$0xff]
    %v3295 = vld [vmem:[%s7 + $0x168] sm:$0xff]
    %v3296 = vld [vmem:[%s7 + $0x170] sm:$0xff]
    %v3297 = vld [vmem:[%s7 + $0x178] sm:$0xff]
    %v3298 = vld [vmem:[%s7 + $0x180] sm:$0xff]
    %v3299 = vld [vmem:[%s7 + $0x188] sm:$0xff]
    %v3300 = vld [vmem:[%s7 + $0x190] sm:$0xff]
    %v3301 = vld [vmem:[%s7 + $0x198] sm:$0xff]
    %v3302 = vld [vmem:[%s7 + $0x1a0] sm:$0xff]
    %v3303 = vld [vmem:[%s7 + $0x1a8] sm:$0xff]
    %v3304 = vld [vmem:[%s7 + $0x1b0] sm:$0xff]
    %v3305 = vld [vmem:[%s7 + $0x1b8] sm:$0xff]
    %v3306 = vld [vmem:[%s7 + $0x1c0] sm:$0xff]
    %v3307 = vld [vmem:[%s7 + $0x1c8] sm:$0xff]
    %v3308 = vld [vmem:[%s7 + $0x1d0] sm:$0xff]
    %v3309 = vld [vmem:[%s7 + $0x1d8] sm:$0xff]
    %v3310 = vld [vmem:[%s7 + $0x1e0] sm:$0xff]
    %v3311 = vld [vmem:[%s7 + $0x1e8] sm:$0xff]
    %v3312 = vld [vmem:[%s7 + $0x1f0] sm:$0xff]
    %v3313 = vld [vmem:[%s7 + $0x1f8] sm:$0xff]
    %3314 = vmatprep.subr.mxu0 0.0
    %3315 = vmatpush1.msra.mxu0 0.0
    %3316 = vmatprep.subr.mxu0 0.0
    %3317 = vmatpush1.msra.mxu0 0.0
    %3318 = vmatprep.subr.mxu0 0.0
    %3319 = vmatpush1.msra.mxu0 0.0
    %3320 = vmatprep.subr.mxu0 0.0
    %3321 = vmatpush1.msra.mxu0 0.0
    %3322 = vmatprep.subr.mxu0 0.0
    %3323 = vmatpush1.msra.mxu0 0.0
    %3324 = vmatprep.subr.mxu0 0.0
    %3325 = vmatpush1.msra.mxu0 0.0
    %3326 = vmatprep.subr.mxu0 0.0
    %3327 = vmatpush1.msra.mxu0 0.0
    %3328 = vmatprep.subr.mxu0 0.0
    %3329 = vmatpush1.msra.mxu0 0.0
    %3330 = vmatprep.subr.mxu0 0.0
    %3331 = vmatpush1.msra.mxu0 %v3257
    %3332 = vmatprep.subr.mxu0 0.0
    %3333 = vmatpush1.msra.mxu0 %v3256
    %3334 = vmatprep.subr.mxu0 0.0
    %3335 = vmatpush1.msra.mxu0 %v3255
    %3336 = vmatprep.subr.mxu0 0.0
    %3337 = vmatpush1.msra.mxu0 %v3254
    %3338 = vmatprep.subr.mxu0 0.0
    %3339 = vmatpush1.msra.mxu0 %v3253
    %3340 = vmatprep.subr.mxu0 0.0
    %3341 = vmatpush1.msra.mxu0 %v3252
    %3342 = vmatprep.subr.mxu0 0.0
    %3343 = vmatpush1.msra.mxu0 %v3251
    %3344 = vmatprep.subr.mxu0 0.0
    %3345 = vmatpush1.msra.mxu0 %v3250
    %3346 = vmatprep.subr.mxu0 0.0
    %3347 = vmatpush2.msra.mxu0 0.0
    %3348 = vmatprep.subr.mxu0 0.0
    %3349 = vmatpush2.msra.mxu0 0.0
    %3350 = vmatprep.subr.mxu0 0.0
    %3351 = vmatpush2.msra.mxu0 0.0
    %3352 = vmatprep.subr.mxu0 0.0
    %3353 = vmatpush2.msra.mxu0 0.0
    %3354 = vmatprep.subr.mxu0 0.0
    %3355 = vmatpush2.msra.mxu0 0.0
    %3356 = vmatprep.subr.mxu0 0.0
    %3357 = vmatpush2.msra.mxu0 0.0
    %3358 = vmatprep.subr.mxu0 0.0
    %3359 = vmatpush2.msra.mxu0 0.0
    %3360 = vmatprep.subr.mxu0 0.0
    %3361 = vmatpush2.msra.mxu0 0.0
    %3362 = vmatprep.subr.mxu0 0.0
    %3363 = vmatpush2.msra.mxu0 0.0
    %3364 = vmatprep.subr.mxu0 0.0
    %3365 = vmatpush2.msra.mxu0 0.0
    %3366 = vmatprep.subr.mxu0 0.0
    %3367 = vmatpush2.msra.mxu0 0.0
    %3368 = vmatprep.subr.mxu0 0.0
    %3369 = vmatpush2.msra.mxu0 0.0
    %3370 = vmatprep.subr.mxu0 0.0
    %3371 = vmatpush2.msra.mxu0 0.0
    %3372 = vmatprep.subr.mxu0 0.0
    %3373 = vmatpush2.msra.mxu0 0.0
    %3374 = vmatprep.subr.mxu0 0.0
    %3375 = vmatpush2.msra.mxu0 0.0
    %3376 = vmatprep.subr.mxu0 0.0
    %3377 = vmatpush2.msra.mxu0 0.0
    %3378 = vmatprep.mubr.f32.mxu0 0.0
    %3379 = vmatmul.mubr.f32.gmra.mxu0 %v2645
    %v3380 = vpop.f32.mrf.mxu0
    %v3381 = vadd.f32 0.0, %v3380
    %v3382 = vpop.f32.mrf.mxu0
    %3383 = vmatprep.mubr.f32.mxu0 0.0
    %3384 = vmatmul.mubr.f32.gmra.mxu0 %v2648
    %v3385 = vpop.f32.mrf.mxu0
    %v3386 = vadd.f32 0.0, %v3385
    %v3387 = vpop.f32.mrf.mxu0
    %3388 = vdwg.mxu0
    %3389 = vmatprep.subr.mxu0 0.0
    %3390 = vmatpush1.msra.mxu0 0.0
    %3391 = vmatprep.subr.mxu0 0.0
    %3392 = vmatpush1.msra.mxu0 0.0
    %3393 = vmatprep.subr.mxu0 0.0
    %3394 = vmatpush1.msra.mxu0 0.0
    %3395 = vmatprep.subr.mxu0 0.0
    %3396 = vmatpush1.msra.mxu0 0.0
    %3397 = vmatprep.subr.mxu0 0.0
    %3398 = vmatpush1.msra.mxu0 0.0
    %3399 = vmatprep.subr.mxu0 0.0
    %3400 = vmatpush1.msra.mxu0 0.0
    %3401 = vmatprep.subr.mxu0 0.0
    %3402 = vmatpush1.msra.mxu0 0.0
    %3403 = vmatprep.subr.mxu0 0.0
    %3404 = vmatpush1.msra.mxu0 0.0
    %3405 = vmatprep.subr.mxu0 0.0
    %3406 = vmatpush1.msra.mxu0 %v3265
    %3407 = vmatprep.subr.mxu0 0.0
    %3408 = vmatpush1.msra.mxu0 %v3264
    %3409 = vmatprep.subr.mxu0 0.0
    %3410 = vmatpush1.msra.mxu0 %v3263
    %3411 = vmatprep.subr.mxu0 0.0
    %3412 = vmatpush1.msra.mxu0 %v3262
    %3413 = vmatprep.subr.mxu0 0.0
    %3414 = vmatpush1.msra.mxu0 %v3261
    %3415 = vmatprep.subr.mxu0 0.0
    %3416 = vmatpush1.msra.mxu0 %v3260
    %3417 = vmatprep.subr.mxu0 0.0
    %3418 = vmatpush1.msra.mxu0 %v3259
    %3419 = vmatprep.subr.mxu0 0.0
    %3420 = vmatpush1.msra.mxu0 %v3258
    %3421 = vmatprep.subr.mxu0 0.0
    %3422 = vmatpush2.msra.mxu0 0.0
    %3423 = vmatprep.subr.mxu0 0.0
    %3424 = vmatpush2.msra.mxu0 0.0
    %3425 = vmatprep.subr.mxu0 0.0
    %3426 = vmatpush2.msra.mxu0 0.0
    %3427 = vmatprep.subr.mxu0 0.0
    %3428 = vmatpush2.msra.mxu0 0.0
    %3429 = vmatprep.subr.mxu0 0.0
    %3430 = vmatpush2.msra.mxu0 0.0
    %3431 = vmatprep.subr.mxu0 0.0
    %3432 = vmatpush2.msra.mxu0 0.0
    %3433 = vmatprep.subr.mxu0 0.0
    %3434 = vmatpush2.msra.mxu0 0.0
    %3435 = vmatprep.subr.mxu0 0.0
    %3436 = vmatpush2.msra.mxu0 0.0
    %3437 = vmatprep.subr.mxu0 0.0
    %3438 = vmatpush2.msra.mxu0 0.0
    %3439 = vmatprep.subr.mxu0 0.0
    %3440 = vmatpush2.msra.mxu0 0.0
    %3441 = vmatprep.subr.mxu0 0.0
    %3442 = vmatpush2.msra.mxu0 0.0
    %3443 = vmatprep.subr.mxu0 0.0
    %3444 = vmatpush2.msra.mxu0 0.0
    %3445 = vmatprep.subr.mxu0 0.0
    %3446 = vmatpush2.msra.mxu0 0.0
    %3447 = vmatprep.subr.mxu0 0.0
    %3448 = vmatpush2.msra.mxu0 0.0
    %3449 = vmatprep.subr.mxu0 0.0
    %3450 = vmatpush2.msra.mxu0 0.0
    %3451 = vmatprep.subr.mxu0 0.0
    %3452 = vmatpush2.msra.mxu0 0.0
    %3453 = vmatprep.mubr.f32.mxu0 0.0
    %3454 = vmatmul.mubr.f32.gmra.mxu0 %v2645
    %v3455 = vpop.f32.mrf.mxu0
    %v3456 = vadd.f32 0.0, %v3455
    %v3457 = vpop.f32.mrf.mxu0
    %3458 = vmatprep.mubr.f32.mxu0 0.0
    %3459 = vmatmul.mubr.f32.gmra.mxu0 %v2648
    %v3460 = vpop.f32.mrf.mxu0
    %v3461 = vadd.f32 0.0, %v3460
    %v3462 = vpop.f32.mrf.mxu0
    %3463 = vdwg.mxu0
    %3464 = vmatprep.subr.mxu0 0.0
    %3465 = vmatpush1.msra.mxu0 0.0
    %3466 = vmatprep.subr.mxu0 0.0
    %3467 = vmatpush1.msra.mxu0 0.0
    %3468 = vmatprep.subr.mxu0 0.0
    %3469 = vmatpush1.msra.mxu0 0.0
    %3470 = vmatprep.subr.mxu0 0.0
    %3471 = vmatpush1.msra.mxu0 0.0
    %3472 = vmatprep.subr.mxu0 0.0
    %3473 = vmatpush1.msra.mxu0 0.0
    %3474 = vmatprep.subr.mxu0 0.0
    %3475 = vmatpush1.msra.mxu0 0.0
    %3476 = vmatprep.subr.mxu0 0.0
    %3477 = vmatpush1.msra.mxu0 0.0
    %3478 = vmatprep.subr.mxu0 0.0
    %3479 = vmatpush1.msra.mxu0 0.0
    %3480 = vmatprep.subr.mxu0 0.0
    %3481 = vmatpush1.msra.mxu0 %v3273
    %3482 = vmatprep.subr.mxu0 0.0
    %3483 = vmatpush1.msra.mxu0 %v3272
    %3484 = vmatprep.subr.mxu0 0.0
    %3485 = vmatpush1.msra.mxu0 %v3271
    %3486 = vmatprep.subr.mxu0 0.0
    %3487 = vmatpush1.msra.mxu0 %v3270
    %3488 = vmatprep.subr.mxu0 0.0
    %3489 = vmatpush1.msra.mxu0 %v3269
    %3490 = vmatprep.subr.mxu0 0.0
    %3491 = vmatpush1.msra.mxu0 %v3268
    %3492 = vmatprep.subr.mxu0 0.0
    %3493 = vmatpush1.msra.mxu0 %v3267
    %3494 = vmatprep.subr.mxu0 0.0
    %3495 = vmatpush1.msra.mxu0 %v3266
    %3496 = vmatprep.subr.mxu0 0.0
    %3497 = vmatpush2.msra.mxu0 0.0
    %3498 = vmatprep.subr.mxu0 0.0
    %3499 = vmatpush2.msra.mxu0 0.0
    %3500 = vmatprep.subr.mxu0 0.0
    %3501 = vmatpush2.msra.mxu0 0.0
    %3502 = vmatprep.subr.mxu0 0.0
    %3503 = vmatpush2.msra.mxu0 0.0
    %3504 = vmatprep.subr.mxu0 0.0
    %3505 = vmatpush2.msra.mxu0 0.0
    %3506 = vmatprep.subr.mxu0 0.0
    %3507 = vmatpush2.msra.mxu0 0.0
    %3508 = vmatprep.subr.mxu0 0.0
    %3509 = vmatpush2.msra.mxu0 0.0
    %3510 = vmatprep.subr.mxu0 0.0
    %3511 = vmatpush2.msra.mxu0 0.0
    %3512 = vmatprep.subr.mxu0 0.0
    %3513 = vmatpush2.msra.mxu0 0.0
    %3514 = vmatprep.subr.mxu0 0.0
    %3515 = vmatpush2.msra.mxu0 0.0
    %3516 = vmatprep.subr.mxu0 0.0
    %3517 = vmatpush2.msra.mxu0 0.0
    %3518 = vmatprep.subr.mxu0 0.0
    %3519 = vmatpush2.msra.mxu0 0.0
    %3520 = vmatprep.subr.mxu0 0.0
    %3521 = vmatpush2.msra.mxu0 0.0
    %3522 = vmatprep.subr.mxu0 0.0
    %3523 = vmatpush2.msra.mxu0 0.0
    %3524 = vmatprep.subr.mxu0 0.0
    %3525 = vmatpush2.msra.mxu0 0.0
    %3526 = vmatprep.subr.mxu0 0.0
    %3527 = vmatpush2.msra.mxu0 0.0
    %3528 = vmatprep.mubr.f32.mxu0 0.0
    %3529 = vmatmul.mubr.f32.gmra.mxu0 %v2645
    %v3530 = vpop.f32.mrf.mxu0
    %v3531 = vadd.f32 0.0, %v3530
    %v3532 = vpop.f32.mrf.mxu0
    %3533 = vmatprep.mubr.f32.mxu0 0.0
    %3534 = vmatmul.mubr.f32.gmra.mxu0 %v2648
    %v3535 = vpop.f32.mrf.mxu0
    %v3536 = vadd.f32 0.0, %v3535
    %v3537 = vpop.f32.mrf.mxu0
    %3538 = vdwg.mxu0
    %3539 = vmatprep.subr.mxu0 0.0
    %3540 = vmatpush1.msra.mxu0 0.0
    %3541 = vmatprep.subr.mxu0 0.0
    %3542 = vmatpush1.msra.mxu0 0.0
    %3543 = vmatprep.subr.mxu0 0.0
    %3544 = vmatpush1.msra.mxu0 0.0
    %3545 = vmatprep.subr.mxu0 0.0
    %3546 = vmatpush1.msra.mxu0 0.0
    %3547 = vmatprep.subr.mxu0 0.0
    %3548 = vmatpush1.msra.mxu0 0.0
    %3549 = vmatprep.subr.mxu0 0.0
    %3550 = vmatpush1.msra.mxu0 0.0
    %3551 = vmatprep.subr.mxu0 0.0
    %3552 = vmatpush1.msra.mxu0 0.0
    %3553 = vmatprep.subr.mxu0 0.0
    %3554 = vmatpush1.msra.mxu0 0.0
    %3555 = vmatprep.subr.mxu0 0.0
    %3556 = vmatpush1.msra.mxu0 %v3281
    %3557 = vmatprep.subr.mxu0 0.0
    %3558 = vmatpush1.msra.mxu0 %v3280
    %3559 = vmatprep.subr.mxu0 0.0
    %3560 = vmatpush1.msra.mxu0 %v3279
    %3561 = vmatprep.subr.mxu0 0.0
    %3562 = vmatpush1.msra.mxu0 %v3278
    %3563 = vmatprep.subr.mxu0 0.0
    %3564 = vmatpush1.msra.mxu0 %v3277
    %3565 = vmatprep.subr.mxu0 0.0
    %3566 = vmatpush1.msra.mxu0 %v3276
    %3567 = vmatprep.subr.mxu0 0.0
    %3568 = vmatpush1.msra.mxu0 %v3275
    %3569 = vmatprep.subr.mxu0 0.0
    %3570 = vmatpush1.msra.mxu0 %v3274
    %3571 = vmatprep.subr.mxu0 0.0
    %3572 = vmatpush2.msra.mxu0 0.0
    %3573 = vmatprep.subr.mxu0 0.0
    %3574 = vmatpush2.msra.mxu0 0.0
    %3575 = vmatprep.subr.mxu0 0.0
    %3576 = vmatpush2.msra.mxu0 0.0
    %3577 = vmatprep.subr.mxu0 0.0
    %3578 = vmatpush2.msra.mxu0 0.0
    %3579 = vmatprep.subr.mxu0 0.0
    %3580 = vmatpush2.msra.mxu0 0.0
    %3581 = vmatprep.subr.mxu0 0.0
    %3582 = vmatpush2.msra.mxu0 0.0
    %3583 = vmatprep.subr.mxu0 0.0
    %3584 = vmatpush2.msra.mxu0 0.0
    %3585 = vmatprep.subr.mxu0 0.0
    %3586 = vmatpush2.msra.mxu0 0.0
    %3587 = vmatprep.subr.mxu0 0.0
    %3588 = vmatpush2.msra.mxu0 0.0
    %3589 = vmatprep.subr.mxu0 0.0
    %3590 = vmatpush2.msra.mxu0 0.0
    %3591 = vmatprep.subr.mxu0 0.0
    %3592 = vmatpush2.msra.mxu0 0.0
    %3593 = vmatprep.subr.mxu0 0.0
    %3594 = vmatpush2.msra.mxu0 0.0
    %3595 = vmatprep.subr.mxu0 0.0
    %3596 = vmatpush2.msra.mxu0 0.0
    %3597 = vmatprep.subr.mxu0 0.0
    %3598 = vmatpush2.msra.mxu0 0.0
    %3599 = vmatprep.subr.mxu0 0.0
    %3600 = vmatpush2.msra.mxu0 0.0
    %3601 = vmatprep.subr.mxu0 0.0
    %3602 = vmatpush2.msra.mxu0 0.0
    %3603 = vmatprep.mubr.f32.mxu0 0.0
    %3604 = vmatmul.mubr.f32.gmra.mxu0 %v2645
    %v3605 = vpop.f32.mrf.mxu0
    %v3606 = vadd.f32 0.0, %v3605
    %v3607 = vpop.f32.mrf.mxu0
    %3608 = vmatprep.mubr.f32.mxu0 0.0
    %3609 = vmatmul.mubr.f32.gmra.mxu0 %v2648
    %v3610 = vpop.f32.mrf.mxu0
    %v3611 = vadd.f32 0.0, %v3610
    %v3612 = vpop.f32.mrf.mxu0
    %3613 = vdwg.mxu0
    %3614 = vmatprep.subr.mxu0 0.0
    %3615 = vmatpush1.msra.mxu0 0.0
    %3616 = vmatprep.subr.mxu0 0.0
    %3617 = vmatpush1.msra.mxu0 0.0
    %3618 = vmatprep.subr.mxu0 0.0
    %3619 = vmatpush1.msra.mxu0 0.0
    %3620 = vmatprep.subr.mxu0 0.0
    %3621 = vmatpush1.msra.mxu0 0.0
    %3622 = vmatprep.subr.mxu0 0.0
    %3623 = vmatpush1.msra.mxu0 0.0
    %3624 = vmatprep.subr.mxu0 0.0
    %3625 = vmatpush1.msra.mxu0 0.0
    %3626 = vmatprep.subr.mxu0 0.0
    %3627 = vmatpush1.msra.mxu0 0.0
    %3628 = vmatprep.subr.mxu0 0.0
    %3629 = vmatpush1.msra.mxu0 0.0
    %3630 = vmatprep.subr.mxu0 0.0
    %3631 = vmatpush1.msra.mxu0 %v3289
    %3632 = vmatprep.subr.mxu0 0.0
    %3633 = vmatpush1.msra.mxu0 %v3288
    %3634 = vmatprep.subr.mxu0 0.0
    %3635 = vmatpush1.msra.mxu0 %v3287
    %3636 = vmatprep.subr.mxu0 0.0
    %3637 = vmatpush1.msra.mxu0 %v3286
    %3638 = vmatprep.subr.mxu0 0.0
    %3639 = vmatpush1.msra.mxu0 %v3285
    %3640 = vmatprep.subr.mxu0 0.0
    %3641 = vmatpush1.msra.mxu0 %v3284
    %3642 = vmatprep.subr.mxu0 0.0
    %3643 = vmatpush1.msra.mxu0 %v3283
    %3644 = vmatprep.subr.mxu0 0.0
    %3645 = vmatpush1.msra.mxu0 %v3282
    %3646 = vmatprep.subr.mxu0 0.0
    %3647 = vmatpush2.msra.mxu0 0.0
    %3648 = vmatprep.subr.mxu0 0.0
    %3649 = vmatpush2.msra.mxu0 0.0
    %3650 = vmatprep.subr.mxu0 0.0
    %3651 = vmatpush2.msra.mxu0 0.0
    %3652 = vmatprep.subr.mxu0 0.0
    %3653 = vmatpush2.msra.mxu0 0.0
    %3654 = vmatprep.subr.mxu0 0.0
    %3655 = vmatpush2.msra.mxu0 0.0
    %3656 = vmatprep.subr.mxu0 0.0
    %3657 = vmatpush2.msra.mxu0 0.0
    %3658 = vmatprep.subr.mxu0 0.0
    %3659 = vmatpush2.msra.mxu0 0.0
    %3660 = vmatprep.subr.mxu0 0.0
    %3661 = vmatpush2.msra.mxu0 0.0
    %3662 = vmatprep.subr.mxu0 0.0
    %3663 = vmatpush2.msra.mxu0 0.0
    %3664 = vmatprep.subr.mxu0 0.0
    %3665 = vmatpush2.msra.mxu0 0.0
    %3666 = vmatprep.subr.mxu0 0.0
    %3667 = vmatpush2.msra.mxu0 0.0
    %3668 = vmatprep.subr.mxu0 0.0
    %3669 = vmatpush2.msra.mxu0 0.0
    %3670 = vmatprep.subr.mxu0 0.0
    %3671 = vmatpush2.msra.mxu0 0.0
    %3672 = vmatprep.subr.mxu0 0.0
    %3673 = vmatpush2.msra.mxu0 0.0
    %3674 = vmatprep.subr.mxu0 0.0
    %3675 = vmatpush2.msra.mxu0 0.0
    %3676 = vmatprep.subr.mxu0 0.0
    %3677 = vmatpush2.msra.mxu0 0.0
    %3678 = vmatprep.mubr.f32.mxu0 0.0
    %3679 = vmatmul.mubr.f32.gmra.mxu0 %v2645
    %v3680 = vpop.f32.mrf.mxu0
    %v3681 = vadd.f32 0.0, %v3680
    %v3682 = vpop.f32.mrf.mxu0
    %3683 = vmatprep.mubr.f32.mxu0 0.0
    %3684 = vmatmul.mubr.f32.gmra.mxu0 %v2648
    %v3685 = vpop.f32.mrf.mxu0
    %v3686 = vadd.f32 0.0, %v3685
    %v3687 = vpop.f32.mrf.mxu0
    %3688 = vdwg.mxu0
    %3689 = vmatprep.subr.mxu0 0.0
    %3690 = vmatpush1.msra.mxu0 0.0
    %3691 = vmatprep.subr.mxu0 0.0
    %3692 = vmatpush1.msra.mxu0 0.0
    %3693 = vmatprep.subr.mxu0 0.0
    %3694 = vmatpush1.msra.mxu0 0.0
    %3695 = vmatprep.subr.mxu0 0.0
    %3696 = vmatpush1.msra.mxu0 0.0
    %3697 = vmatprep.subr.mxu0 0.0
    %3698 = vmatpush1.msra.mxu0 0.0
    %3699 = vmatprep.subr.mxu0 0.0
    %3700 = vmatpush1.msra.mxu0 0.0
    %3701 = vmatprep.subr.mxu0 0.0
    %3702 = vmatpush1.msra.mxu0 0.0
    %3703 = vmatprep.subr.mxu0 0.0
    %3704 = vmatpush1.msra.mxu0 0.0
    %3705 = vmatprep.subr.mxu0 0.0
    %3706 = vmatpush1.msra.mxu0 %v3297
    %3707 = vmatprep.subr.mxu0 0.0
    %3708 = vmatpush1.msra.mxu0 %v3296
    %3709 = vmatprep.subr.mxu0 0.0
    %3710 = vmatpush1.msra.mxu0 %v3295
    %3711 = vmatprep.subr.mxu0 0.0
    %3712 = vmatpush1.msra.mxu0 %v3294
    %3713 = vmatprep.subr.mxu0 0.0
    %3714 = vmatpush1.msra.mxu0 %v3293
    %3715 = vmatprep.subr.mxu0 0.0
    %3716 = vmatpush1.msra.mxu0 %v3292
    %3717 = vmatprep.subr.mxu0 0.0
    %3718 = vmatpush1.msra.mxu0 %v3291
    %3719 = vmatprep.subr.mxu0 0.0
    %3720 = vmatpush1.msra.mxu0 %v3290
    %3721 = vmatprep.subr.mxu0 0.0
    %3722 = vmatpush2.msra.mxu0 0.0
    %3723 = vmatprep.subr.mxu0 0.0
    %3724 = vmatpush2.msra.mxu0 0.0
    %3725 = vmatprep.subr.mxu0 0.0
    %3726 = vmatpush2.msra.mxu0 0.0
    %3727 = vmatprep.subr.mxu0 0.0
    %3728 = vmatpush2.msra.mxu0 0.0
    %3729 = vmatprep.subr.mxu0 0.0
    %3730 = vmatpush2.msra.mxu0 0.0
    %3731 = vmatprep.subr.mxu0 0.0
    %3732 = vmatpush2.msra.mxu0 0.0
    %3733 = vmatprep.subr.mxu0 0.0
    %3734 = vmatpush2.msra.mxu0 0.0
    %3735 = vmatprep.subr.mxu0 0.0
    %3736 = vmatpush2.msra.mxu0 0.0
    %3737 = vmatprep.subr.mxu0 0.0
    %3738 = vmatpush2.msra.mxu0 0.0
    %3739 = vmatprep.subr.mxu0 0.0
    %3740 = vmatpush2.msra.mxu0 0.0
    %3741 = vmatprep.subr.mxu0 0.0
    %3742 = vmatpush2.msra.mxu0 0.0
    %3743 = vmatprep.subr.mxu0 0.0
    %3744 = vmatpush2.msra.mxu0 0.0
    %3745 = vmatprep.subr.mxu0 0.0
    %3746 = vmatpush2.msra.mxu0 0.0
    %3747 = vmatprep.subr.mxu0 0.0
    %3748 = vmatpush2.msra.mxu0 0.0
    %3749 = vmatprep.subr.mxu0 0.0
    %3750 = vmatpush2.msra.mxu0 0.0
    %3751 = vmatprep.subr.mxu0 0.0
    %3752 = vmatpush2.msra.mxu0 0.0
    %3753 = vmatprep.mubr.f32.mxu0 0.0
    %3754 = vmatmul.mubr.f32.gmra.mxu0 %v2645
    %v3755 = vpop.f32.mrf.mxu0
    %v3756 = vadd.f32 0.0, %v3755
    %v3757 = vpop.f32.mrf.mxu0
    %3758 = vmatprep.mubr.f32.mxu0 0.0
    %3759 = vmatmul.mubr.f32.gmra.mxu0 %v2648
    %v3760 = vpop.f32.mrf.mxu0
    %v3761 = vadd.f32 0.0, %v3760
    %v3762 = vpop.f32.mrf.mxu0
    %3763 = vdwg.mxu0
    %3764 = vmatprep.subr.mxu0 0.0
    %3765 = vmatpush1.msra.mxu0 0.0
    %3766 = vmatprep.subr.mxu0 0.0
    %3767 = vmatpush1.msra.mxu0 0.0
    %3768 = vmatprep.subr.mxu0 0.0
    %3769 = vmatpush1.msra.mxu0 0.0
    %3770 = vmatprep.subr.mxu0 0.0
    %3771 = vmatpush1.msra.mxu0 0.0
    %3772 = vmatprep.subr.mxu0 0.0
    %3773 = vmatpush1.msra.mxu0 0.0
    %3774 = vmatprep.subr.mxu0 0.0
    %3775 = vmatpush1.msra.mxu0 0.0
    %3776 = vmatprep.subr.mxu0 0.0
    %3777 = vmatpush1.msra.mxu0 0.0
    %3778 = vmatprep.subr.mxu0 0.0
    %3779 = vmatpush1.msra.mxu0 0.0
    %3780 = vmatprep.subr.mxu0 0.0
    %3781 = vmatpush1.msra.mxu0 %v3305
    %3782 = vmatprep.subr.mxu0 0.0
    %3783 = vmatpush1.msra.mxu0 %v3304
    %3784 = vmatprep.subr.mxu0 0.0
    %3785 = vmatpush1.msra.mxu0 %v3303
    %3786 = vmatprep.subr.mxu0 0.0
    %3787 = vmatpush1.msra.mxu0 %v3302
    %3788 = vmatprep.subr.mxu0 0.0
    %3789 = vmatpush1.msra.mxu0 %v3301
    %3790 = vmatprep.subr.mxu0 0.0
    %3791 = vmatpush1.msra.mxu0 %v3300
    %3792 = vmatprep.subr.mxu0 0.0
    %3793 = vmatpush1.msra.mxu0 %v3299
    %3794 = vmatprep.subr.mxu0 0.0
    %3795 = vmatpush1.msra.mxu0 %v3298
    %3796 = vmatprep.subr.mxu0 0.0
    %3797 = vmatpush2.msra.mxu0 0.0
    %3798 = vmatprep.subr.mxu0 0.0
    %3799 = vmatpush2.msra.mxu0 0.0
    %3800 = vmatprep.subr.mxu0 0.0
    %3801 = vmatpush2.msra.mxu0 0.0
    %3802 = vmatprep.subr.mxu0 0.0
    %3803 = vmatpush2.msra.mxu0 0.0
    %3804 = vmatprep.subr.mxu0 0.0
    %3805 = vmatpush2.msra.mxu0 0.0
    %3806 = vmatprep.subr.mxu0 0.0
    %3807 = vmatpush2.msra.mxu0 0.0
    %3808 = vmatprep.subr.mxu0 0.0
    %3809 = vmatpush2.msra.mxu0 0.0
    %3810 = vmatprep.subr.mxu0 0.0
    %3811 = vmatpush2.msra.mxu0 0.0
    %3812 = vmatprep.subr.mxu0 0.0
    %3813 = vmatpush2.msra.mxu0 0.0
    %3814 = vmatprep.subr.mxu0 0.0
    %3815 = vmatpush2.msra.mxu0 0.0
    %3816 = vmatprep.subr.mxu0 0.0
    %3817 = vmatpush2.msra.mxu0 0.0
    %3818 = vmatprep.subr.mxu0 0.0
    %3819 = vmatpush2.msra.mxu0 0.0
    %3820 = vmatprep.subr.mxu0 0.0
    %3821 = vmatpush2.msra.mxu0 0.0
    %3822 = vmatprep.subr.mxu0 0.0
    %3823 = vmatpush2.msra.mxu0 0.0
    %3824 = vmatprep.subr.mxu0 0.0
    %3825 = vmatpush2.msra.mxu0 0.0
    %3826 = vmatprep.subr.mxu0 0.0
    %3827 = vmatpush2.msra.mxu0 0.0
    %3828 = vmatprep.mubr.f32.mxu0 0.0
    %3829 = vmatmul.mubr.f32.gmra.mxu0 %v2645
    %v3830 = vpop.f32.mrf.mxu0
    %v3831 = vadd.f32 0.0, %v3830
    %v3832 = vpop.f32.mrf.mxu0
    %3833 = vmatprep.mubr.f32.mxu0 0.0
    %3834 = vmatmul.mubr.f32.gmra.mxu0 %v2648
    %v3835 = vpop.f32.mrf.mxu0
    %v3836 = vadd.f32 0.0, %v3835
    %v3837 = vpop.f32.mrf.mxu0
    %3838 = vdwg.mxu0
    %3839 = vmatprep.subr.mxu0 0.0
    %3840 = vmatpush1.msra.mxu0 0.0
    %3841 = vmatprep.subr.mxu0 0.0
    %3842 = vmatpush1.msra.mxu0 0.0
    %3843 = vmatprep.subr.mxu0 0.0
    %3844 = vmatpush1.msra.mxu0 0.0
    %3845 = vmatprep.subr.mxu0 0.0
    %3846 = vmatpush1.msra.mxu0 0.0
    %3847 = vmatprep.subr.mxu0 0.0
    %3848 = vmatpush1.msra.mxu0 0.0
    %3849 = vmatprep.subr.mxu0 0.0
    %3850 = vmatpush1.msra.mxu0 0.0
    %3851 = vmatprep.subr.mxu0 0.0
    %3852 = vmatpush1.msra.mxu0 0.0
    %3853 = vmatprep.subr.mxu0 0.0
    %3854 = vmatpush1.msra.mxu0 0.0
    %3855 = vmatprep.subr.mxu0 0.0
    %3856 = vmatpush1.msra.mxu0 %v3313
    %3857 = vmatprep.subr.mxu0 0.0
    %3858 = vmatpush1.msra.mxu0 %v3312
    %3859 = vmatprep.subr.mxu0 0.0
    %3860 = vmatpush1.msra.mxu0 %v3311
    %3861 = vmatprep.subr.mxu0 0.0
    %3862 = vmatpush1.msra.mxu0 %v3310
    %3863 = vmatprep.subr.mxu0 0.0
    %3864 = vmatpush1.msra.mxu0 %v3309
    %3865 = vmatprep.subr.mxu0 0.0
    %3866 = vmatpush1.msra.mxu0 %v3308
    %3867 = vmatprep.subr.mxu0 0.0
    %3868 = vmatpush1.msra.mxu0 %v3307
    %3869 = vmatprep.subr.mxu0 0.0
    %3870 = vmatpush1.msra.mxu0 %v3306
    %3871 = vmatprep.subr.mxu0 0.0
    %3872 = vmatpush2.msra.mxu0 0.0
    %3873 = vmatprep.subr.mxu0 0.0
    %3874 = vmatpush2.msra.mxu0 0.0
    %3875 = vmatprep.subr.mxu0 0.0
    %3876 = vmatpush2.msra.mxu0 0.0
    %3877 = vmatprep.subr.mxu0 0.0
    %3878 = vmatpush2.msra.mxu0 0.0
    %3879 = vmatprep.subr.mxu0 0.0
    %3880 = vmatpush2.msra.mxu0 0.0
    %3881 = vmatprep.subr.mxu0 0.0
    %3882 = vmatpush2.msra.mxu0 0.0
    %3883 = vmatprep.subr.mxu0 0.0
    %3884 = vmatpush2.msra.mxu0 0.0
    %3885 = vmatprep.subr.mxu0 0.0
    %3886 = vmatpush2.msra.mxu0 0.0
    %3887 = vmatprep.subr.mxu0 0.0
    %3888 = vmatpush2.msra.mxu0 0.0
    %3889 = vmatprep.subr.mxu0 0.0
    %3890 = vmatpush2.msra.mxu0 0.0
    %3891 = vmatprep.subr.mxu0 0.0
    %3892 = vmatpush2.msra.mxu0 0.0
    %3893 = vmatprep.subr.mxu0 0.0
    %3894 = vmatpush2.msra.mxu0 0.0
    %3895 = vmatprep.subr.mxu0 0.0
    %3896 = vmatpush2.msra.mxu0 0.0
    %3897 = vmatprep.subr.mxu0 0.0
    %3898 = vmatpush2.msra.mxu0 0.0
    %3899 = vmatprep.subr.mxu0 0.0
    %3900 = vmatpush2.msra.mxu0 0.0
    %3901 = vmatprep.subr.mxu0 0.0
    %3902 = vmatpush2.msra.mxu0 0.0
    %3903 = vmatprep.mubr.f32.mxu0 0.0
    %3904 = vmatmul.mubr.f32.gmra.mxu0 %v2645
    %v3905 = vpop.f32.mrf.mxu0
    %v3906 = vadd.f32 0.0, %v3905
    %v3907 = vpop.f32.mrf.mxu0
    %3908 = vmatprep.mubr.f32.mxu0 0.0
    %3909 = vmatmul.mubr.f32.gmra.mxu0 %v2648
    %v3910 = vpop.f32.mrf.mxu0
    %v3911 = vadd.f32 0.0, %v3910
    %v3912 = vpop.f32.mrf.mxu0
    %3913 = vdwg.mxu0
    %v3914 = vld [vmem:[%s8] sm:$0xff]
    %v3915 = vld [vmem:[%s8 + $0x8] sm:$0xff]
    %v3916 = vld [vmem:[%s8 + $0x10] sm:$0xff]
    %v3917 = vld [vmem:[%s8 + $0x18] sm:$0xff]
    %v3918 = vld [vmem:[%s8 + $0x20] sm:$0xff]
    %v3919 = vld [vmem:[%s8 + $0x28] sm:$0xff]
    %v3920 = vld [vmem:[%s8 + $0x30] sm:$0xff]
    %v3921 = vld [vmem:[%s8 + $0x38] sm:$0xff]
    %v3922 = vld [vmem:[%s8 + $0x40] sm:$0xff]
    %v3923 = vld [vmem:[%s8 + $0x48] sm:$0xff]
    %v3924 = vld [vmem:[%s8 + $0x50] sm:$0xff]
    %v3925 = vld [vmem:[%s8 + $0x58] sm:$0xff]
    %v3926 = vld [vmem:[%s8 + $0x60] sm:$0xff]
    %v3927 = vld [vmem:[%s8 + $0x68] sm:$0xff]
    %v3928 = vld [vmem:[%s8 + $0x70] sm:$0xff]
    %v3929 = vld [vmem:[%s8 + $0x78] sm:$0xff]
    %v3930 = vld [vmem:[%s8 + $0x80] sm:$0xff]
    %v3931 = vld [vmem:[%s8 + $0x88] sm:$0xff]
    %v3932 = vld [vmem:[%s8 + $0x90] sm:$0xff]
    %v3933 = vld [vmem:[%s8 + $0x98] sm:$0xff]
    %v3934 = vld [vmem:[%s8 + $0xa0] sm:$0xff]
    %v3935 = vld [vmem:[%s8 + $0xa8] sm:$0xff]
    %v3936 = vld [vmem:[%s8 + $0xb0] sm:$0xff]
    %v3937 = vld [vmem:[%s8 + $0xb8] sm:$0xff]
    %v3938 = vld [vmem:[%s8 + $0xc0] sm:$0xff]
    %v3939 = vld [vmem:[%s8 + $0xc8] sm:$0xff]
    %v3940 = vld [vmem:[%s8 + $0xd0] sm:$0xff]
    %v3941 = vld [vmem:[%s8 + $0xd8] sm:$0xff]
    %v3942 = vld [vmem:[%s8 + $0xe0] sm:$0xff]
    %v3943 = vld [vmem:[%s8 + $0xe8] sm:$0xff]
    %v3944 = vld [vmem:[%s8 + $0xf0] sm:$0xff]
    %v3945 = vld [vmem:[%s8 + $0xf8] sm:$0xff]
    %v3946 = vld [vmem:[%s8 + $0x100] sm:$0xff]
    %v3947 = vld [vmem:[%s8 + $0x108] sm:$0xff]
    %v3948 = vld [vmem:[%s8 + $0x110] sm:$0xff]
    %v3949 = vld [vmem:[%s8 + $0x118] sm:$0xff]
    %v3950 = vld [vmem:[%s8 + $0x120] sm:$0xff]
    %v3951 = vld [vmem:[%s8 + $0x128] sm:$0xff]
    %v3952 = vld [vmem:[%s8 + $0x130] sm:$0xff]
    %v3953 = vld [vmem:[%s8 + $0x138] sm:$0xff]
    %v3954 = vld [vmem:[%s8 + $0x140] sm:$0xff]
    %v3955 = vld [vmem:[%s8 + $0x148] sm:$0xff]
    %v3956 = vld [vmem:[%s8 + $0x150] sm:$0xff]
    %v3957 = vld [vmem:[%s8 + $0x158] sm:$0xff]
    %v3958 = vld [vmem:[%s8 + $0x160] sm:$0xff]
    %v3959 = vld [vmem:[%s8 + $0x168] sm:$0xff]
    %v3960 = vld [vmem:[%s8 + $0x170] sm:$0xff]
    %v3961 = vld [vmem:[%s8 + $0x178] sm:$0xff]
    %v3962 = vld [vmem:[%s8 + $0x180] sm:$0xff]
    %v3963 = vld [vmem:[%s8 + $0x188] sm:$0xff]
    %v3964 = vld [vmem:[%s8 + $0x190] sm:$0xff]
    %v3965 = vld [vmem:[%s8 + $0x198] sm:$0xff]
    %v3966 = vld [vmem:[%s8 + $0x1a0] sm:$0xff]
    %v3967 = vld [vmem:[%s8 + $0x1a8] sm:$0xff]
    %v3968 = vld [vmem:[%s8 + $0x1b0] sm:$0xff]
    %v3969 = vld [vmem:[%s8 + $0x1b8] sm:$0xff]
    %v3970 = vld [vmem:[%s8 + $0x1c0] sm:$0xff]
    %v3971 = vld [vmem:[%s8 + $0x1c8] sm:$0xff]
    %v3972 = vld [vmem:[%s8 + $0x1d0] sm:$0xff]
    %v3973 = vld [vmem:[%s8 + $0x1d8] sm:$0xff]
    %v3974 = vld [vmem:[%s8 + $0x1e0] sm:$0xff]
    %v3975 = vld [vmem:[%s8 + $0x1e8] sm:$0xff]
    %v3976 = vld [vmem:[%s8 + $0x1f0] sm:$0xff]
    %v3977 = vld [vmem:[%s8 + $0x1f8] sm:$0xff]
    %3978 = vmatprep.subr.mxu0 0.0
    %3979 = vmatpush1.msra.mxu0 0.0
    %3980 = vmatprep.subr.mxu0 0.0
    %3981 = vmatpush1.msra.mxu0 0.0
    %3982 = vmatprep.subr.mxu0 0.0
    %3983 = vmatpush1.msra.mxu0 0.0
    %3984 = vmatprep.subr.mxu0 0.0
    %3985 = vmatpush1.msra.mxu0 0.0
    %3986 = vmatprep.subr.mxu0 0.0
    %3987 = vmatpush1.msra.mxu0 0.0
    %3988 = vmatprep.subr.mxu0 0.0
    %3989 = vmatpush1.msra.mxu0 0.0
    %3990 = vmatprep.subr.mxu0 0.0
    %3991 = vmatpush1.msra.mxu0 0.0
    %3992 = vmatprep.subr.mxu0 0.0
    %3993 = vmatpush1.msra.mxu0 0.0
    %3994 = vmatprep.subr.mxu0 0.0
    %3995 = vmatpush1.msra.mxu0 %v3921
    %3996 = vmatprep.subr.mxu0 0.0
    %3997 = vmatpush1.msra.mxu0 %v3920
    %3998 = vmatprep.subr.mxu0 0.0
    %3999 = vmatpush1.msra.mxu0 %v3919
    %4000 = vmatprep.subr.mxu0 0.0
    %4001 = vmatpush1.msra.mxu0 %v3918
    %4002 = vmatprep.subr.mxu0 0.0
    %4003 = vmatpush1.msra.mxu0 %v3917
    %4004 = vmatprep.subr.mxu0 0.0
    %4005 = vmatpush1.msra.mxu0 %v3916
    %4006 = vmatprep.subr.mxu0 0.0
    %4007 = vmatpush1.msra.mxu0 %v3915
    %4008 = vmatprep.subr.mxu0 0.0
    %4009 = vmatpush1.msra.mxu0 %v3914
    %4010 = vmatprep.subr.mxu0 0.0
    %4011 = vmatpush2.msra.mxu0 0.0
    %4012 = vmatprep.subr.mxu0 0.0
    %4013 = vmatpush2.msra.mxu0 0.0
    %4014 = vmatprep.subr.mxu0 0.0
    %4015 = vmatpush2.msra.mxu0 0.0
    %4016 = vmatprep.subr.mxu0 0.0
    %4017 = vmatpush2.msra.mxu0 0.0
    %4018 = vmatprep.subr.mxu0 0.0
    %4019 = vmatpush2.msra.mxu0 0.0
    %4020 = vmatprep.subr.mxu0 0.0
    %4021 = vmatpush2.msra.mxu0 0.0
    %4022 = vmatprep.subr.mxu0 0.0
    %4023 = vmatpush2.msra.mxu0 0.0
    %4024 = vmatprep.subr.mxu0 0.0
    %4025 = vmatpush2.msra.mxu0 0.0
    %4026 = vmatprep.subr.mxu0 0.0
    %4027 = vmatpush2.msra.mxu0 0.0
    %4028 = vmatprep.subr.mxu0 0.0
    %4029 = vmatpush2.msra.mxu0 0.0
    %4030 = vmatprep.subr.mxu0 0.0
    %4031 = vmatpush2.msra.mxu0 0.0
    %4032 = vmatprep.subr.mxu0 0.0
    %4033 = vmatpush2.msra.mxu0 0.0
    %4034 = vmatprep.subr.mxu0 0.0
    %4035 = vmatpush2.msra.mxu0 0.0
    %4036 = vmatprep.subr.mxu0 0.0
    %4037 = vmatpush2.msra.mxu0 0.0
    %4038 = vmatprep.subr.mxu0 0.0
    %4039 = vmatpush2.msra.mxu0 0.0
    %4040 = vmatprep.subr.mxu0 0.0
    %4041 = vmatpush2.msra.mxu0 0.0
    %4042 = vmatprep.mubr.f32.mxu0 0.0
    %4043 = vmatmul.mubr.f32.gmra.mxu0 %v2645
    %v4044 = vpop.f32.mrf.mxu0
    %v4045 = vadd.f32 0.0, %v4044
    %v4046 = vpop.f32.mrf.mxu0
    %4047 = vmatprep.mubr.f32.mxu0 0.0
    %4048 = vmatmul.mubr.f32.gmra.mxu0 %v2648
    %v4049 = vpop.f32.mrf.mxu0
    %v4050 = vadd.f32 0.0, %v4049
    %v4051 = vpop.f32.mrf.mxu0
    %4052 = vdwg.mxu0
    %4053 = vmatprep.subr.mxu0 0.0
    %4054 = vmatpush1.msra.mxu0 0.0
    %4055 = vmatprep.subr.mxu0 0.0
    %4056 = vmatpush1.msra.mxu0 0.0
    %4057 = vmatprep.subr.mxu0 0.0
    %4058 = vmatpush1.msra.mxu0 0.0
    %4059 = vmatprep.subr.mxu0 0.0
    %4060 = vmatpush1.msra.mxu0 0.0
    %4061 = vmatprep.subr.mxu0 0.0
    %4062 = vmatpush1.msra.mxu0 0.0
    %4063 = vmatprep.subr.mxu0 0.0
    %4064 = vmatpush1.msra.mxu0 0.0
    %4065 = vmatprep.subr.mxu0 0.0
    %4066 = vmatpush1.msra.mxu0 0.0
    %4067 = vmatprep.subr.mxu0 0.0
    %4068 = vmatpush1.msra.mxu0 0.0
    %4069 = vmatprep.subr.mxu0 0.0
    %4070 = vmatpush1.msra.mxu0 %v3929
    %4071 = vmatprep.subr.mxu0 0.0
    %4072 = vmatpush1.msra.mxu0 %v3928
    %4073 = vmatprep.subr.mxu0 0.0
    %4074 = vmatpush1.msra.mxu0 %v3927
    %4075 = vmatprep.subr.mxu0 0.0
    %4076 = vmatpush1.msra.mxu0 %v3926
    %4077 = vmatprep.subr.mxu0 0.0
    %4078 = vmatpush1.msra.mxu0 %v3925
    %4079 = vmatprep.subr.mxu0 0.0
    %4080 = vmatpush1.msra.mxu0 %v3924
    %4081 = vmatprep.subr.mxu0 0.0
    %4082 = vmatpush1.msra.mxu0 %v3923
    %4083 = vmatprep.subr.mxu0 0.0
    %4084 = vmatpush1.msra.mxu0 %v3922
    %4085 = vmatprep.subr.mxu0 0.0
    %4086 = vmatpush2.msra.mxu0 0.0
    %4087 = vmatprep.subr.mxu0 0.0
    %4088 = vmatpush2.msra.mxu0 0.0
    %4089 = vmatprep.subr.mxu0 0.0
    %4090 = vmatpush2.msra.mxu0 0.0
    %4091 = vmatprep.subr.mxu0 0.0
    %4092 = vmatpush2.msra.mxu0 0.0
    %4093 = vmatprep.subr.mxu0 0.0
    %4094 = vmatpush2.msra.mxu0 0.0
    %4095 = vmatprep.subr.mxu0 0.0
    %4096 = vmatpush2.msra.mxu0 0.0
    %4097 = vmatprep.subr.mxu0 0.0
    %4098 = vmatpush2.msra.mxu0 0.0
    %4099 = vmatprep.subr.mxu0 0.0
    %4100 = vmatpush2.msra.mxu0 0.0
    %4101 = vmatprep.subr.mxu0 0.0
    %4102 = vmatpush2.msra.mxu0 0.0
    %4103 = vmatprep.subr.mxu0 0.0
    %4104 = vmatpush2.msra.mxu0 0.0
    %4105 = vmatprep.subr.mxu0 0.0
    %4106 = vmatpush2.msra.mxu0 0.0
    %4107 = vmatprep.subr.mxu0 0.0
    %4108 = vmatpush2.msra.mxu0 0.0
    %4109 = vmatprep.subr.mxu0 0.0
    %4110 = vmatpush2.msra.mxu0 0.0
    %4111 = vmatprep.subr.mxu0 0.0
    %4112 = vmatpush2.msra.mxu0 0.0
    %4113 = vmatprep.subr.mxu0 0.0
    %4114 = vmatpush2.msra.mxu0 0.0
    %4115 = vmatprep.subr.mxu0 0.0
    %4116 = vmatpush2.msra.mxu0 0.0
    %4117 = vmatprep.mubr.f32.mxu0 0.0
    %4118 = vmatmul.mubr.f32.gmra.mxu0 %v2645
    %v4119 = vpop.f32.mrf.mxu0
    %v4120 = vadd.f32 0.0, %v4119
    %v4121 = vpop.f32.mrf.mxu0
    %4122 = vmatprep.mubr.f32.mxu0 0.0
    %4123 = vmatmul.mubr.f32.gmra.mxu0 %v2648
    %v4124 = vpop.f32.mrf.mxu0
    %v4125 = vadd.f32 0.0, %v4124
    %v4126 = vpop.f32.mrf.mxu0
    %4127 = vdwg.mxu0
    %4128 = vmatprep.subr.mxu0 0.0
    %4129 = vmatpush1.msra.mxu0 0.0
    %4130 = vmatprep.subr.mxu0 0.0
    %4131 = vmatpush1.msra.mxu0 0.0
    %4132 = vmatprep.subr.mxu0 0.0
    %4133 = vmatpush1.msra.mxu0 0.0
    %4134 = vmatprep.subr.mxu0 0.0
    %4135 = vmatpush1.msra.mxu0 0.0
    %4136 = vmatprep.subr.mxu0 0.0
    %4137 = vmatpush1.msra.mxu0 0.0
    %4138 = vmatprep.subr.mxu0 0.0
    %4139 = vmatpush1.msra.mxu0 0.0
    %4140 = vmatprep.subr.mxu0 0.0
    %4141 = vmatpush1.msra.mxu0 0.0
    %4142 = vmatprep.subr.mxu0 0.0
    %4143 = vmatpush1.msra.mxu0 0.0
    %4144 = vmatprep.subr.mxu0 0.0
    %4145 = vmatpush1.msra.mxu0 %v3937
    %4146 = vmatprep.subr.mxu0 0.0
    %4147 = vmatpush1.msra.mxu0 %v3936
    %4148 = vmatprep.subr.mxu0 0.0
    %4149 = vmatpush1.msra.mxu0 %v3935
    %4150 = vmatprep.subr.mxu0 0.0
    %4151 = vmatpush1.msra.mxu0 %v3934
    %4152 = vmatprep.subr.mxu0 0.0
    %4153 = vmatpush1.msra.mxu0 %v3933
    %4154 = vmatprep.subr.mxu0 0.0
    %4155 = vmatpush1.msra.mxu0 %v3932
    %4156 = vmatprep.subr.mxu0 0.0
    %4157 = vmatpush1.msra.mxu0 %v3931
    %4158 = vmatprep.subr.mxu0 0.0
    %4159 = vmatpush1.msra.mxu0 %v3930
    %4160 = vmatprep.subr.mxu0 0.0
    %4161 = vmatpush2.msra.mxu0 0.0
    %4162 = vmatprep.subr.mxu0 0.0
    %4163 = vmatpush2.msra.mxu0 0.0
    %4164 = vmatprep.subr.mxu0 0.0
    %4165 = vmatpush2.msra.mxu0 0.0
    %4166 = vmatprep.subr.mxu0 0.0
    %4167 = vmatpush2.msra.mxu0 0.0
    %4168 = vmatprep.subr.mxu0 0.0
    %4169 = vmatpush2.msra.mxu0 0.0
    %4170 = vmatprep.subr.mxu0 0.0
    %4171 = vmatpush2.msra.mxu0 0.0
    %4172 = vmatprep.subr.mxu0 0.0
    %4173 = vmatpush2.msra.mxu0 0.0
    %4174 = vmatprep.subr.mxu0 0.0
    %4175 = vmatpush2.msra.mxu0 0.0
    %4176 = vmatprep.subr.mxu0 0.0
    %4177 = vmatpush2.msra.mxu0 0.0
    %4178 = vmatprep.subr.mxu0 0.0
    %4179 = vmatpush2.msra.mxu0 0.0
    %4180 = vmatprep.subr.mxu0 0.0
    %4181 = vmatpush2.msra.mxu0 0.0
    %4182 = vmatprep.subr.mxu0 0.0
    %4183 = vmatpush2.msra.mxu0 0.0
    %4184 = vmatprep.subr.mxu0 0.0
    %4185 = vmatpush2.msra.mxu0 0.0
    %4186 = vmatprep.subr.mxu0 0.0
    %4187 = vmatpush2.msra.mxu0 0.0
    %4188 = vmatprep.subr.mxu0 0.0
    %4189 = vmatpush2.msra.mxu0 0.0
    %4190 = vmatprep.subr.mxu0 0.0
    %4191 = vmatpush2.msra.mxu0 0.0
    %4192 = vmatprep.mubr.f32.mxu0 0.0
    %4193 = vmatmul.mubr.f32.gmra.mxu0 %v2645
    %v4194 = vpop.f32.mrf.mxu0
    %v4195 = vadd.f32 0.0, %v4194
    %v4196 = vpop.f32.mrf.mxu0
    %4197 = vmatprep.mubr.f32.mxu0 0.0
    %4198 = vmatmul.mubr.f32.gmra.mxu0 %v2648
    %v4199 = vpop.f32.mrf.mxu0
    %v4200 = vadd.f32 0.0, %v4199
    %v4201 = vpop.f32.mrf.mxu0
    %4202 = vdwg.mxu0
    %4203 = vmatprep.subr.mxu0 0.0
    %4204 = vmatpush1.msra.mxu0 0.0
    %4205 = vmatprep.subr.mxu0 0.0
    %4206 = vmatpush1.msra.mxu0 0.0
    %4207 = vmatprep.subr.mxu0 0.0
    %4208 = vmatpush1.msra.mxu0 0.0
    %4209 = vmatprep.subr.mxu0 0.0
    %4210 = vmatpush1.msra.mxu0 0.0
    %4211 = vmatprep.subr.mxu0 0.0
    %4212 = vmatpush1.msra.mxu0 0.0
    %4213 = vmatprep.subr.mxu0 0.0
    %4214 = vmatpush1.msra.mxu0 0.0
    %4215 = vmatprep.subr.mxu0 0.0
    %4216 = vmatpush1.msra.mxu0 0.0
    %4217 = vmatprep.subr.mxu0 0.0
    %4218 = vmatpush1.msra.mxu0 0.0
    %4219 = vmatprep.subr.mxu0 0.0
    %4220 = vmatpush1.msra.mxu0 %v3945
    %4221 = vmatprep.subr.mxu0 0.0
    %4222 = vmatpush1.msra.mxu0 %v3944
    %4223 = vmatprep.subr.mxu0 0.0
    %4224 = vmatpush1.msra.mxu0 %v3943
    %4225 = vmatprep.subr.mxu0 0.0
    %4226 = vmatpush1.msra.mxu0 %v3942
    %4227 = vmatprep.subr.mxu0 0.0
    %4228 = vmatpush1.msra.mxu0 %v3941
    %4229 = vmatprep.subr.mxu0 0.0
    %4230 = vmatpush1.msra.mxu0 %v3940
    %4231 = vmatprep.subr.mxu0 0.0
    %4232 = vmatpush1.msra.mxu0 %v3939
    %4233 = vmatprep.subr.mxu0 0.0
    %4234 = vmatpush1.msra.mxu0 %v3938
    %4235 = vmatprep.subr.mxu0 0.0
    %4236 = vmatpush2.msra.mxu0 0.0
    %4237 = vmatprep.subr.mxu0 0.0
    %4238 = vmatpush2.msra.mxu0 0.0
    %4239 = vmatprep.subr.mxu0 0.0
    %4240 = vmatpush2.msra.mxu0 0.0
    %4241 = vmatprep.subr.mxu0 0.0
    %4242 = vmatpush2.msra.mxu0 0.0
    %4243 = vmatprep.subr.mxu0 0.0
    %4244 = vmatpush2.msra.mxu0 0.0
    %4245 = vmatprep.subr.mxu0 0.0
    %4246 = vmatpush2.msra.mxu0 0.0
    %4247 = vmatprep.subr.mxu0 0.0
    %4248 = vmatpush2.msra.mxu0 0.0
    %4249 = vmatprep.subr.mxu0 0.0
    %4250 = vmatpush2.msra.mxu0 0.0
    %4251 = vmatprep.subr.mxu0 0.0
    %4252 = vmatpush2.msra.mxu0 0.0
    %4253 = vmatprep.subr.mxu0 0.0
    %4254 = vmatpush2.msra.mxu0 0.0
    %4255 = vmatprep.subr.mxu0 0.0
    %4256 = vmatpush2.msra.mxu0 0.0
    %4257 = vmatprep.subr.mxu0 0.0
    %4258 = vmatpush2.msra.mxu0 0.0
    %4259 = vmatprep.subr.mxu0 0.0
    %4260 = vmatpush2.msra.mxu0 0.0
    %4261 = vmatprep.subr.mxu0 0.0
    %4262 = vmatpush2.msra.mxu0 0.0
    %4263 = vmatprep.subr.mxu0 0.0
    %4264 = vmatpush2.msra.mxu0 0.0
    %4265 = vmatprep.subr.mxu0 0.0
    %4266 = vmatpush2.msra.mxu0 0.0
    %4267 = vmatprep.mubr.f32.mxu0 0.0
    %4268 = vmatmul.mubr.f32.gmra.mxu0 %v2645
    %v4269 = vpop.f32.mrf.mxu0
    %v4270 = vadd.f32 0.0, %v4269
    %v4271 = vpop.f32.mrf.mxu0
    %4272 = vmatprep.mubr.f32.mxu0 0.0
    %4273 = vmatmul.mubr.f32.gmra.mxu0 %v2648
    %v4274 = vpop.f32.mrf.mxu0
    %v4275 = vadd.f32 0.0, %v4274
    %v4276 = vpop.f32.mrf.mxu0
    %4277 = vdwg.mxu0
    %4278 = vmatprep.subr.mxu0 0.0
    %4279 = vmatpush1.msra.mxu0 0.0
    %4280 = vmatprep.subr.mxu0 0.0
    %4281 = vmatpush1.msra.mxu0 0.0
    %4282 = vmatprep.subr.mxu0 0.0
    %4283 = vmatpush1.msra.mxu0 0.0
    %4284 = vmatprep.subr.mxu0 0.0
    %4285 = vmatpush1.msra.mxu0 0.0
    %4286 = vmatprep.subr.mxu0 0.0
    %4287 = vmatpush1.msra.mxu0 0.0
    %4288 = vmatprep.subr.mxu0 0.0
    %4289 = vmatpush1.msra.mxu0 0.0
    %4290 = vmatprep.subr.mxu0 0.0
    %4291 = vmatpush1.msra.mxu0 0.0
    %4292 = vmatprep.subr.mxu0 0.0
    %4293 = vmatpush1.msra.mxu0 0.0
    %4294 = vmatprep.subr.mxu0 0.0
    %4295 = vmatpush1.msra.mxu0 %v3953
    %4296 = vmatprep.subr.mxu0 0.0
    %4297 = vmatpush1.msra.mxu0 %v3952
    %4298 = vmatprep.subr.mxu0 0.0
    %4299 = vmatpush1.msra.mxu0 %v3951
    %4300 = vmatprep.subr.mxu0 0.0
    %4301 = vmatpush1.msra.mxu0 %v3950
    %4302 = vmatprep.subr.mxu0 0.0
    %4303 = vmatpush1.msra.mxu0 %v3949
    %4304 = vmatprep.subr.mxu0 0.0
    %4305 = vmatpush1.msra.mxu0 %v3948
    %4306 = vmatprep.subr.mxu0 0.0
    %4307 = vmatpush1.msra.mxu0 %v3947
    %4308 = vmatprep.subr.mxu0 0.0
    %4309 = vmatpush1.msra.mxu0 %v3946
    %4310 = vmatprep.subr.mxu0 0.0
    %4311 = vmatpush2.msra.mxu0 0.0
    %4312 = vmatprep.subr.mxu0 0.0
    %4313 = vmatpush2.msra.mxu0 0.0
    %4314 = vmatprep.subr.mxu0 0.0
    %4315 = vmatpush2.msra.mxu0 0.0
    %4316 = vmatprep.subr.mxu0 0.0
    %4317 = vmatpush2.msra.mxu0 0.0
    %4318 = vmatprep.subr.mxu0 0.0
    %4319 = vmatpush2.msra.mxu0 0.0
    %4320 = vmatprep.subr.mxu0 0.0
    %4321 = vmatpush2.msra.mxu0 0.0
    %4322 = vmatprep.subr.mxu0 0.0
    %4323 = vmatpush2.msra.mxu0 0.0
    %4324 = vmatprep.subr.mxu0 0.0
    %4325 = vmatpush2.msra.mxu0 0.0
    %4326 = vmatprep.subr.mxu0 0.0
    %4327 = vmatpush2.msra.mxu0 0.0
    %4328 = vmatprep.subr.mxu0 0.0
    %4329 = vmatpush2.msra.mxu0 0.0
    %4330 = vmatprep.subr.mxu0 0.0
    %4331 = vmatpush2.msra.mxu0 0.0
    %4332 = vmatprep.subr.mxu0 0.0
    %4333 = vmatpush2.msra.mxu0 0.0
    %4334 = vmatprep.subr.mxu0 0.0
    %4335 = vmatpush2.msra.mxu0 0.0
    %4336 = vmatprep.subr.mxu0 0.0
    %4337 = vmatpush2.msra.mxu0 0.0
    %4338 = vmatprep.subr.mxu0 0.0
    %4339 = vmatpush2.msra.mxu0 0.0
    %4340 = vmatprep.subr.mxu0 0.0
    %4341 = vmatpush2.msra.mxu0 0.0
    %4342 = vmatprep.mubr.f32.mxu0 0.0
    %4343 = vmatmul.mubr.f32.gmra.mxu0 %v2645
    %v4344 = vpop.f32.mrf.mxu0
    %v4345 = vadd.f32 0.0, %v4344
    %v4346 = vpop.f32.mrf.mxu0
    %4347 = vmatprep.mubr.f32.mxu0 0.0
    %4348 = vmatmul.mubr.f32.gmra.mxu0 %v2648
    %v4349 = vpop.f32.mrf.mxu0
    %v4350 = vadd.f32 0.0, %v4349
    %v4351 = vpop.f32.mrf.mxu0
    %4352 = vdwg.mxu0
    %4353 = vmatprep.subr.mxu0 0.0
    %4354 = vmatpush1.msra.mxu0 0.0
    %4355 = vmatprep.subr.mxu0 0.0
    %4356 = vmatpush1.msra.mxu0 0.0
    %4357 = vmatprep.subr.mxu0 0.0
    %4358 = vmatpush1.msra.mxu0 0.0
    %4359 = vmatprep.subr.mxu0 0.0
    %4360 = vmatpush1.msra.mxu0 0.0
    %4361 = vmatprep.subr.mxu0 0.0
    %4362 = vmatpush1.msra.mxu0 0.0
    %4363 = vmatprep.subr.mxu0 0.0
    %4364 = vmatpush1.msra.mxu0 0.0
    %4365 = vmatprep.subr.mxu0 0.0
    %4366 = vmatpush1.msra.mxu0 0.0
    %4367 = vmatprep.subr.mxu0 0.0
    %4368 = vmatpush1.msra.mxu0 0.0
    %4369 = vmatprep.subr.mxu0 0.0
    %4370 = vmatpush1.msra.mxu0 %v3961
    %4371 = vmatprep.subr.mxu0 0.0
    %4372 = vmatpush1.msra.mxu0 %v3960
    %4373 = vmatprep.subr.mxu0 0.0
    %4374 = vmatpush1.msra.mxu0 %v3959
    %4375 = vmatprep.subr.mxu0 0.0
    %4376 = vmatpush1.msra.mxu0 %v3958
    %4377 = vmatprep.subr.mxu0 0.0
    %4378 = vmatpush1.msra.mxu0 %v3957
    %4379 = vmatprep.subr.mxu0 0.0
    %4380 = vmatpush1.msra.mxu0 %v3956
    %4381 = vmatprep.subr.mxu0 0.0
    %4382 = vmatpush1.msra.mxu0 %v3955
    %4383 = vmatprep.subr.mxu0 0.0
    %4384 = vmatpush1.msra.mxu0 %v3954
    %4385 = vmatprep.subr.mxu0 0.0
    %4386 = vmatpush2.msra.mxu0 0.0
    %4387 = vmatprep.subr.mxu0 0.0
    %4388 = vmatpush2.msra.mxu0 0.0
    %4389 = vmatprep.subr.mxu0 0.0
    %4390 = vmatpush2.msra.mxu0 0.0
    %4391 = vmatprep.subr.mxu0 0.0
    %4392 = vmatpush2.msra.mxu0 0.0
    %4393 = vmatprep.subr.mxu0 0.0
    %4394 = vmatpush2.msra.mxu0 0.0
    %4395 = vmatprep.subr.mxu0 0.0
    %4396 = vmatpush2.msra.mxu0 0.0
    %4397 = vmatprep.subr.mxu0 0.0
    %4398 = vmatpush2.msra.mxu0 0.0
    %4399 = vmatprep.subr.mxu0 0.0
    %4400 = vmatpush2.msra.mxu0 0.0
    %4401 = vmatprep.subr.mxu0 0.0
    %4402 = vmatpush2.msra.mxu0 0.0
    %4403 = vmatprep.subr.mxu0 0.0
    %4404 = vmatpush2.msra.mxu0 0.0
    %4405 = vmatprep.subr.mxu0 0.0
    %4406 = vmatpush2.msra.mxu0 0.0
    %4407 = vmatprep.subr.mxu0 0.0
    %4408 = vmatpush2.msra.mxu0 0.0
    %4409 = vmatprep.subr.mxu0 0.0
    %4410 = vmatpush2.msra.mxu0 0.0
    %4411 = vmatprep.subr.mxu0 0.0
    %4412 = vmatpush2.msra.mxu0 0.0
    %4413 = vmatprep.subr.mxu0 0.0
    %4414 = vmatpush2.msra.mxu0 0.0
    %4415 = vmatprep.subr.mxu0 0.0
    %4416 = vmatpush2.msra.mxu0 0.0
    %4417 = vmatprep.mubr.f32.mxu0 0.0
    %4418 = vmatmul.mubr.f32.gmra.mxu0 %v2645
    %v4419 = vpop.f32.mrf.mxu0
    %v4420 = vadd.f32 0.0, %v4419
    %v4421 = vpop.f32.mrf.mxu0
    %4422 = vmatprep.mubr.f32.mxu0 0.0
    %4423 = vmatmul.mubr.f32.gmra.mxu0 %v2648
    %v4424 = vpop.f32.mrf.mxu0
    %v4425 = vadd.f32 0.0, %v4424
    %v4426 = vpop.f32.mrf.mxu0
    %4427 = vdwg.mxu0
    %4428 = vmatprep.subr.mxu0 0.0
    %4429 = vmatpush1.msra.mxu0 0.0
    %4430 = vmatprep.subr.mxu0 0.0
    %4431 = vmatpush1.msra.mxu0 0.0
    %4432 = vmatprep.subr.mxu0 0.0
    %4433 = vmatpush1.msra.mxu0 0.0
    %4434 = vmatprep.subr.mxu0 0.0
    %4435 = vmatpush1.msra.mxu0 0.0
    %4436 = vmatprep.subr.mxu0 0.0
    %4437 = vmatpush1.msra.mxu0 0.0
    %4438 = vmatprep.subr.mxu0 0.0
    %4439 = vmatpush1.msra.mxu0 0.0
    %4440 = vmatprep.subr.mxu0 0.0
    %4441 = vmatpush1.msra.mxu0 0.0
    %4442 = vmatprep.subr.mxu0 0.0
    %4443 = vmatpush1.msra.mxu0 0.0
    %4444 = vmatprep.subr.mxu0 0.0
    %4445 = vmatpush1.msra.mxu0 %v3969
    %4446 = vmatprep.subr.mxu0 0.0
    %4447 = vmatpush1.msra.mxu0 %v3968
    %4448 = vmatprep.subr.mxu0 0.0
    %4449 = vmatpush1.msra.mxu0 %v3967
    %4450 = vmatprep.subr.mxu0 0.0
    %4451 = vmatpush1.msra.mxu0 %v3966
    %4452 = vmatprep.subr.mxu0 0.0
    %4453 = vmatpush1.msra.mxu0 %v3965
    %4454 = vmatprep.subr.mxu0 0.0
    %4455 = vmatpush1.msra.mxu0 %v3964
    %4456 = vmatprep.subr.mxu0 0.0
    %4457 = vmatpush1.msra.mxu0 %v3963
    %4458 = vmatprep.subr.mxu0 0.0
    %4459 = vmatpush1.msra.mxu0 %v3962
    %4460 = vmatprep.subr.mxu0 0.0
    %4461 = vmatpush2.msra.mxu0 0.0
    %4462 = vmatprep.subr.mxu0 0.0
    %4463 = vmatpush2.msra.mxu0 0.0
    %4464 = vmatprep.subr.mxu0 0.0
    %4465 = vmatpush2.msra.mxu0 0.0
    %4466 = vmatprep.subr.mxu0 0.0
    %4467 = vmatpush2.msra.mxu0 0.0
    %4468 = vmatprep.subr.mxu0 0.0
    %4469 = vmatpush2.msra.mxu0 0.0
    %4470 = vmatprep.subr.mxu0 0.0
    %4471 = vmatpush2.msra.mxu0 0.0
    %4472 = vmatprep.subr.mxu0 0.0
    %4473 = vmatpush2.msra.mxu0 0.0
    %4474 = vmatprep.subr.mxu0 0.0
    %4475 = vmatpush2.msra.mxu0 0.0
    %4476 = vmatprep.subr.mxu0 0.0
    %4477 = vmatpush2.msra.mxu0 0.0
    %4478 = vmatprep.subr.mxu0 0.0
    %4479 = vmatpush2.msra.mxu0 0.0
    %4480 = vmatprep.subr.mxu0 0.0
    %4481 = vmatpush2.msra.mxu0 0.0
    %4482 = vmatprep.subr.mxu0 0.0
    %4483 = vmatpush2.msra.mxu0 0.0
    %4484 = vmatprep.subr.mxu0 0.0
    %4485 = vmatpush2.msra.mxu0 0.0
    %4486 = vmatprep.subr.mxu0 0.0
    %4487 = vmatpush2.msra.mxu0 0.0
    %4488 = vmatprep.subr.mxu0 0.0
    %4489 = vmatpush2.msra.mxu0 0.0
    %4490 = vmatprep.subr.mxu0 0.0
    %4491 = vmatpush2.msra.mxu0 0.0
    %4492 = vmatprep.mubr.f32.mxu0 0.0
    %4493 = vmatmul.mubr.f32.gmra.mxu0 %v2645
    %v4494 = vpop.f32.mrf.mxu0
    %v4495 = vadd.f32 0.0, %v4494
    %v4496 = vpop.f32.mrf.mxu0
    %4497 = vmatprep.mubr.f32.mxu0 0.0
    %4498 = vmatmul.mubr.f32.gmra.mxu0 %v2648
    %v4499 = vpop.f32.mrf.mxu0
    %v4500 = vadd.f32 0.0, %v4499
    %v4501 = vpop.f32.mrf.mxu0
    %4502 = vdwg.mxu0
    %4503 = vmatprep.subr.mxu0 0.0
    %4504 = vmatpush1.msra.mxu0 0.0
    %4505 = vmatprep.subr.mxu0 0.0
    %4506 = vmatpush1.msra.mxu0 0.0
    %4507 = vmatprep.subr.mxu0 0.0
    %4508 = vmatpush1.msra.mxu0 0.0
    %4509 = vmatprep.subr.mxu0 0.0
    %4510 = vmatpush1.msra.mxu0 0.0
    %4511 = vmatprep.subr.mxu0 0.0
    %4512 = vmatpush1.msra.mxu0 0.0
    %4513 = vmatprep.subr.mxu0 0.0
    %4514 = vmatpush1.msra.mxu0 0.0
    %4515 = vmatprep.subr.mxu0 0.0
    %4516 = vmatpush1.msra.mxu0 0.0
    %4517 = vmatprep.subr.mxu0 0.0
    %4518 = vmatpush1.msra.mxu0 0.0
    %4519 = vmatprep.subr.mxu0 0.0
    %4520 = vmatpush1.msra.mxu0 %v3977
    %4521 = vmatprep.subr.mxu0 0.0
    %4522 = vmatpush1.msra.mxu0 %v3976
    %4523 = vmatprep.subr.mxu0 0.0
    %4524 = vmatpush1.msra.mxu0 %v3975
    %4525 = vmatprep.subr.mxu0 0.0
    %4526 = vmatpush1.msra.mxu0 %v3974
    %4527 = vmatprep.subr.mxu0 0.0
    %4528 = vmatpush1.msra.mxu0 %v3973
    %4529 = vmatprep.subr.mxu0 0.0
    %4530 = vmatpush1.msra.mxu0 %v3972
    %4531 = vmatprep.subr.mxu0 0.0
    %4532 = vmatpush1.msra.mxu0 %v3971
    %4533 = vmatprep.subr.mxu0 0.0
    %4534 = vmatpush1.msra.mxu0 %v3970
    %4535 = vmatprep.subr.mxu0 0.0
    %4536 = vmatpush2.msra.mxu0 0.0
    %4537 = vmatprep.subr.mxu0 0.0
    %4538 = vmatpush2.msra.mxu0 0.0
    %4539 = vmatprep.subr.mxu0 0.0
    %4540 = vmatpush2.msra.mxu0 0.0
    %4541 = vmatprep.subr.mxu0 0.0
    %4542 = vmatpush2.msra.mxu0 0.0
    %4543 = vmatprep.subr.mxu0 0.0
    %4544 = vmatpush2.msra.mxu0 0.0
    %4545 = vmatprep.subr.mxu0 0.0
    %4546 = vmatpush2.msra.mxu0 0.0
    %4547 = vmatprep.subr.mxu0 0.0
    %4548 = vmatpush2.msra.mxu0 0.0
    %4549 = vmatprep.subr.mxu0 0.0
    %4550 = vmatpush2.msra.mxu0 0.0
    %4551 = vmatprep.subr.mxu0 0.0
    %4552 = vmatpush2.msra.mxu0 0.0
    %4553 = vmatprep.subr.mxu0 0.0
    %4554 = vmatpush2.msra.mxu0 0.0
    %4555 = vmatprep.subr.mxu0 0.0
    %4556 = vmatpush2.msra.mxu0 0.0
    %4557 = vmatprep.subr.mxu0 0.0
    %4558 = vmatpush2.msra.mxu0 0.0
    %4559 = vmatprep.subr.mxu0 0.0
    %4560 = vmatpush2.msra.mxu0 0.0
    %4561 = vmatprep.subr.mxu0 0.0
    %4562 = vmatpush2.msra.mxu0 0.0
    %4563 = vmatprep.subr.mxu0 0.0
    %4564 = vmatpush2.msra.mxu0 0.0
    %4565 = vmatprep.subr.mxu0 0.0
    %4566 = vmatpush2.msra.mxu0 0.0
    %4567 = vmatprep.mubr.f32.mxu0 0.0
    %4568 = vmatmul.mubr.f32.gmra.mxu0 %v2645
    %v4569 = vpop.f32.mrf.mxu0
    %v4570 = vadd.f32 0.0, %v4569
    %v4571 = vpop.f32.mrf.mxu0
    %4572 = vmatprep.mubr.f32.mxu0 0.0
    %4573 = vmatmul.mubr.f32.gmra.mxu0 %v2648
    %v4574 = vpop.f32.mrf.mxu0
    %v4575 = vadd.f32 0.0, %v4574
    %v4576 = vpop.f32.mrf.mxu0
    %4577 = vdwg.mxu0
    %vm4578 = vcmask 64512
    %v4580 = vsel %vm4578, %v2717, 0
    %v4583 = vsel %vm4578, %v3381, 0
    %4585 = vmatprep.subr.mxu0 0.0
    %4586 = vmatpush1.xpose.msra.mxu0 0.0
    %4587 = vmatprep.subr.mxu0 0.0
    %4588 = vmatpush1.xpose.msra.mxu0 0.0
    %4589 = vmatprep.subr.mxu0 0.0
    %4590 = vmatpush1.xpose.msra.mxu0 0.0
    %4591 = vmatprep.subr.mxu0 0.0
    %4592 = vmatpush1.xpose.msra.mxu0 0.0
    %4593 = vmatprep.subr.mxu0 0.0
    %4594 = vmatpush1.xpose.msra.mxu0 0.0
    %4595 = vmatprep.subr.mxu0 0.0
    %4596 = vmatpush1.xpose.msra.mxu0 0.0
    %4597 = vmatprep.subr.mxu0 0.0
    %4598 = vmatpush1.xpose.msra.mxu0 0.0
    %4599 = vmatprep.subr.mxu0 0.0
    %4600 = vmatpush1.xpose.msra.mxu0 0.0
    %4601 = vmatprep.subr.mxu0 0.0
    %4602 = vmatpush1.xpose.msra.mxu0 0.0
    %4603 = vmatprep.subr.mxu0 0.0
    %4604 = vmatpush1.xpose.msra.mxu0 0.0
    %4605 = vmatprep.subr.mxu0 0.0
    %4606 = vmatpush1.xpose.msra.mxu0 0.0
    %4607 = vmatprep.subr.mxu0 0.0
    %4608 = vmatpush1.xpose.msra.mxu0 0.0
    %4609 = vmatprep.subr.mxu0 0.0
    %4610 = vmatpush1.xpose.msra.mxu0 0.0
    %4611 = vmatprep.subr.mxu0 0.0
    %4612 = vmatpush1.xpose.msra.mxu0 0.0
    %4613 = vmatprep.subr.mxu0 0.0
    %4614 = vmatpush1.xpose.msra.mxu0 0.0
    %4615 = vmatprep.subr.mxu0 0.0
    %4616 = vmatpush1.xpose.msra.mxu0 %v4583
    %4617 = vmatprep.subr.mxu0 0.0
    %4618 = vmatpush2.xpose.msra.mxu0 0.0
    %4619 = vmatprep.subr.mxu0 0.0
    %4620 = vmatpush2.xpose.msra.mxu0 0.0
    %4621 = vmatprep.subr.mxu0 0.0
    %4622 = vmatpush2.xpose.msra.mxu0 0.0
    %4623 = vmatprep.subr.mxu0 0.0
    %4624 = vmatpush2.xpose.msra.mxu0 0.0
    %4625 = vmatprep.subr.mxu0 0.0
    %4626 = vmatpush2.xpose.msra.mxu0 0.0
    %4627 = vmatprep.subr.mxu0 0.0
    %4628 = vmatpush2.xpose.msra.mxu0 0.0
    %4629 = vmatprep.subr.mxu0 0.0
    %4630 = vmatpush2.xpose.msra.mxu0 0.0
    %4631 = vmatprep.subr.mxu0 0.0
    %4632 = vmatpush2.xpose.msra.mxu0 0.0
    %4633 = vmatprep.subr.mxu0 0.0
    %4634 = vmatpush2.xpose.msra.mxu0 0.0
    %4635 = vmatprep.subr.mxu0 0.0
    %4636 = vmatpush2.xpose.msra.mxu0 0.0
    %4637 = vmatprep.subr.mxu0 0.0
    %4638 = vmatpush2.xpose.msra.mxu0 0.0
    %4639 = vmatprep.subr.mxu0 0.0
    %4640 = vmatpush2.xpose.msra.mxu0 0.0
    %4641 = vmatprep.subr.mxu0 0.0
    %4642 = vmatpush2.xpose.msra.mxu0 0.0
    %4643 = vmatprep.subr.mxu0 0.0
    %4644 = vmatpush2.xpose.msra.mxu0 0.0
    %4645 = vmatprep.subr.mxu0 0.0
    %4646 = vmatpush2.xpose.msra.mxu0 0.0
    %4647 = vmatprep.subr.mxu0 0.0
    %4648 = vmatpush2.xpose.msra.mxu0 0.0
    %4649 = vmatprep.mubr.f32.mxu0 0.0
    %4650 = vmatmul.mubr.f32.gmra.mxu0 %v4580
    %v4651 = vpop.f32.mrf.mxu0
    %v4652 = vadd.f32 0.0, %v4651
    %v4653 = vpop.f32.mrf.mxu0
    %4654 = vdwg.mxu0
    %v4656 = vsel %vm4578, %v2722, 0
    %v4659 = vsel %vm4578, %v3386, 0
    %4661 = vmatprep.subr.mxu0 0.0
    %4662 = vmatpush1.xpose.msra.mxu0 0.0
    %4663 = vmatprep.subr.mxu0 0.0
    %4664 = vmatpush1.xpose.msra.mxu0 0.0
    %4665 = vmatprep.subr.mxu0 0.0
    %4666 = vmatpush1.xpose.msra.mxu0 0.0
    %4667 = vmatprep.subr.mxu0 0.0
    %4668 = vmatpush1.xpose.msra.mxu0 0.0
    %4669 = vmatprep.subr.mxu0 0.0
    %4670 = vmatpush1.xpose.msra.mxu0 0.0
    %4671 = vmatprep.subr.mxu0 0.0
    %4672 = vmatpush1.xpose.msra.mxu0 0.0
    %4673 = vmatprep.subr.mxu0 0.0
    %4674 = vmatpush1.xpose.msra.mxu0 0.0
    %4675 = vmatprep.subr.mxu0 0.0
    %4676 = vmatpush1.xpose.msra.mxu0 0.0
    %4677 = vmatprep.subr.mxu0 0.0
    %4678 = vmatpush1.xpose.msra.mxu0 0.0
    %4679 = vmatprep.subr.mxu0 0.0
    %4680 = vmatpush1.xpose.msra.mxu0 0.0
    %4681 = vmatprep.subr.mxu0 0.0
    %4682 = vmatpush1.xpose.msra.mxu0 0.0
    %4683 = vmatprep.subr.mxu0 0.0
    %4684 = vmatpush1.xpose.msra.mxu0 0.0
    %4685 = vmatprep.subr.mxu0 0.0
    %4686 = vmatpush1.xpose.msra.mxu0 0.0
    %4687 = vmatprep.subr.mxu0 0.0
    %4688 = vmatpush1.xpose.msra.mxu0 0.0
    %4689 = vmatprep.subr.mxu0 0.0
    %4690 = vmatpush1.xpose.msra.mxu0 0.0
    %4691 = vmatprep.subr.mxu0 0.0
    %4692 = vmatpush1.xpose.msra.mxu0 %v4659
    %4693 = vmatprep.subr.mxu0 0.0
    %4694 = vmatpush2.xpose.msra.mxu0 0.0
    %4695 = vmatprep.subr.mxu0 0.0
    %4696 = vmatpush2.xpose.msra.mxu0 0.0
    %4697 = vmatprep.subr.mxu0 0.0
    %4698 = vmatpush2.xpose.msra.mxu0 0.0
    %4699 = vmatprep.subr.mxu0 0.0
    %4700 = vmatpush2.xpose.msra.mxu0 0.0
    %4701 = vmatprep.subr.mxu0 0.0
    %4702 = vmatpush2.xpose.msra.mxu0 0.0
    %4703 = vmatprep.subr.mxu0 0.0
    %4704 = vmatpush2.xpose.msra.mxu0 0.0
    %4705 = vmatprep.subr.mxu0 0.0
    %4706 = vmatpush2.xpose.msra.mxu0 0.0
    %4707 = vmatprep.subr.mxu0 0.0
    %4708 = vmatpush2.xpose.msra.mxu0 0.0
    %4709 = vmatprep.subr.mxu0 0.0
    %4710 = vmatpush2.xpose.msra.mxu0 0.0
    %4711 = vmatprep.subr.mxu0 0.0
    %4712 = vmatpush2.xpose.msra.mxu0 0.0
    %4713 = vmatprep.subr.mxu0 0.0
    %4714 = vmatpush2.xpose.msra.mxu0 0.0
    %4715 = vmatprep.subr.mxu0 0.0
    %4716 = vmatpush2.xpose.msra.mxu0 0.0
    %4717 = vmatprep.subr.mxu0 0.0
    %4718 = vmatpush2.xpose.msra.mxu0 0.0
    %4719 = vmatprep.subr.mxu0 0.0
    %4720 = vmatpush2.xpose.msra.mxu0 0.0
    %4721 = vmatprep.subr.mxu0 0.0
    %4722 = vmatpush2.xpose.msra.mxu0 0.0
    %4723 = vmatprep.subr.mxu0 0.0
    %4724 = vmatpush2.xpose.msra.mxu0 0.0
    %4725 = vmatprep.mubr.f32.mxu0 0.0
    %4726 = vmatmul.mubr.f32.gmra.mxu0 %v4656
    %v4727 = vpop.f32.mrf.mxu0
    %v4728 = vadd.f32 0.0, %v4727
    %v4729 = vpop.f32.mrf.mxu0
    %4730 = vdwg.mxu0
    %v4732 = vsel %vm4578, %v2792, 0
    %v4735 = vsel %vm4578, %v3456, 0
    %4737 = vmatprep.subr.mxu0 0.0
    %4738 = vmatpush1.xpose.msra.mxu0 0.0
    %4739 = vmatprep.subr.mxu0 0.0
    %4740 = vmatpush1.xpose.msra.mxu0 0.0
    %4741 = vmatprep.subr.mxu0 0.0
    %4742 = vmatpush1.xpose.msra.mxu0 0.0
    %4743 = vmatprep.subr.mxu0 0.0
    %4744 = vmatpush1.xpose.msra.mxu0 0.0
    %4745 = vmatprep.subr.mxu0 0.0
    %4746 = vmatpush1.xpose.msra.mxu0 0.0
    %4747 = vmatprep.subr.mxu0 0.0
    %4748 = vmatpush1.xpose.msra.mxu0 0.0
    %4749 = vmatprep.subr.mxu0 0.0
    %4750 = vmatpush1.xpose.msra.mxu0 0.0
    %4751 = vmatprep.subr.mxu0 0.0
    %4752 = vmatpush1.xpose.msra.mxu0 0.0
    %4753 = vmatprep.subr.mxu0 0.0
    %4754 = vmatpush1.xpose.msra.mxu0 0.0
    %4755 = vmatprep.subr.mxu0 0.0
    %4756 = vmatpush1.xpose.msra.mxu0 0.0
    %4757 = vmatprep.subr.mxu0 0.0
    %4758 = vmatpush1.xpose.msra.mxu0 0.0
    %4759 = vmatprep.subr.mxu0 0.0
    %4760 = vmatpush1.xpose.msra.mxu0 0.0
    %4761 = vmatprep.subr.mxu0 0.0
    %4762 = vmatpush1.xpose.msra.mxu0 0.0
    %4763 = vmatprep.subr.mxu0 0.0
    %4764 = vmatpush1.xpose.msra.mxu0 0.0
    %4765 = vmatprep.subr.mxu0 0.0
    %4766 = vmatpush1.xpose.msra.mxu0 0.0
    %4767 = vmatprep.subr.mxu0 0.0
    %4768 = vmatpush1.xpose.msra.mxu0 %v4735
    %4769 = vmatprep.subr.mxu0 0.0
    %4770 = vmatpush2.xpose.msra.mxu0 0.0
    %4771 = vmatprep.subr.mxu0 0.0
    %4772 = vmatpush2.xpose.msra.mxu0 0.0
    %4773 = vmatprep.subr.mxu0 0.0
    %4774 = vmatpush2.xpose.msra.mxu0 0.0
    %4775 = vmatprep.subr.mxu0 0.0
    %4776 = vmatpush2.xpose.msra.mxu0 0.0
    %4777 = vmatprep.subr.mxu0 0.0
    %4778 = vmatpush2.xpose.msra.mxu0 0.0
    %4779 = vmatprep.subr.mxu0 0.0
    %4780 = vmatpush2.xpose.msra.mxu0 0.0
    %4781 = vmatprep.subr.mxu0 0.0
    %4782 = vmatpush2.xpose.msra.mxu0 0.0
    %4783 = vmatprep.subr.mxu0 0.0
    %4784 = vmatpush2.xpose.msra.mxu0 0.0
    %4785 = vmatprep.subr.mxu0 0.0
    %4786 = vmatpush2.xpose.msra.mxu0 0.0
    %4787 = vmatprep.subr.mxu0 0.0
    %4788 = vmatpush2.xpose.msra.mxu0 0.0
    %4789 = vmatprep.subr.mxu0 0.0
    %4790 = vmatpush2.xpose.msra.mxu0 0.0
    %4791 = vmatprep.subr.mxu0 0.0
    %4792 = vmatpush2.xpose.msra.mxu0 0.0
    %4793 = vmatprep.subr.mxu0 0.0
    %4794 = vmatpush2.xpose.msra.mxu0 0.0
    %4795 = vmatprep.subr.mxu0 0.0
    %4796 = vmatpush2.xpose.msra.mxu0 0.0
    %4797 = vmatprep.subr.mxu0 0.0
    %4798 = vmatpush2.xpose.msra.mxu0 0.0
    %4799 = vmatprep.subr.mxu0 0.0
    %4800 = vmatpush2.xpose.msra.mxu0 0.0
    %4801 = vmatprep.mubr.f32.mxu0 0.0
    %4802 = vmatmul.mubr.f32.gmra.mxu0 %v4732
    %v4803 = vpop.f32.mrf.mxu0
    %v4804 = vadd.f32 0.0, %v4803
    %v4805 = vpop.f32.mrf.mxu0
    %4806 = vdwg.mxu0
    %v4808 = vsel %vm4578, %v2797, 0
    %v4811 = vsel %vm4578, %v3461, 0
    %4813 = vmatprep.subr.mxu0 0.0
    %4814 = vmatpush1.xpose.msra.mxu0 0.0
    %4815 = vmatprep.subr.mxu0 0.0
    %4816 = vmatpush1.xpose.msra.mxu0 0.0
    %4817 = vmatprep.subr.mxu0 0.0
    %4818 = vmatpush1.xpose.msra.mxu0 0.0
    %4819 = vmatprep.subr.mxu0 0.0
    %4820 = vmatpush1.xpose.msra.mxu0 0.0
    %4821 = vmatprep.subr.mxu0 0.0
    %4822 = vmatpush1.xpose.msra.mxu0 0.0
    %4823 = vmatprep.subr.mxu0 0.0
    %4824 = vmatpush1.xpose.msra.mxu0 0.0
    %4825 = vmatprep.subr.mxu0 0.0
    %4826 = vmatpush1.xpose.msra.mxu0 0.0
    %4827 = vmatprep.subr.mxu0 0.0
    %4828 = vmatpush1.xpose.msra.mxu0 0.0
    %4829 = vmatprep.subr.mxu0 0.0
    %4830 = vmatpush1.xpose.msra.mxu0 0.0
    %4831 = vmatprep.subr.mxu0 0.0
    %4832 = vmatpush1.xpose.msra.mxu0 0.0
    %4833 = vmatprep.subr.mxu0 0.0
    %4834 = vmatpush1.xpose.msra.mxu0 0.0
    %4835 = vmatprep.subr.mxu0 0.0
    %4836 = vmatpush1.xpose.msra.mxu0 0.0
    %4837 = vmatprep.subr.mxu0 0.0
    %4838 = vmatpush1.xpose.msra.mxu0 0.0
    %4839 = vmatprep.subr.mxu0 0.0
    %4840 = vmatpush1.xpose.msra.mxu0 0.0
    %4841 = vmatprep.subr.mxu0 0.0
    %4842 = vmatpush1.xpose.msra.mxu0 0.0
    %4843 = vmatprep.subr.mxu0 0.0
    %4844 = vmatpush1.xpose.msra.mxu0 %v4811
    %4845 = vmatprep.subr.mxu0 0.0
    %4846 = vmatpush2.xpose.msra.mxu0 0.0
    %4847 = vmatprep.subr.mxu0 0.0
    %4848 = vmatpush2.xpose.msra.mxu0 0.0
    %4849 = vmatprep.subr.mxu0 0.0
    %4850 = vmatpush2.xpose.msra.mxu0 0.0
    %4851 = vmatprep.subr.mxu0 0.0
    %4852 = vmatpush2.xpose.msra.mxu0 0.0
    %4853 = vmatprep.subr.mxu0 0.0
    %4854 = vmatpush2.xpose.msra.mxu0 0.0
    %4855 = vmatprep.subr.mxu0 0.0
    %4856 = vmatpush2.xpose.msra.mxu0 0.0
    %4857 = vmatprep.subr.mxu0 0.0
    %4858 = vmatpush2.xpose.msra.mxu0 0.0
    %4859 = vmatprep.subr.mxu0 0.0
    %4860 = vmatpush2.xpose.msra.mxu0 0.0
    %4861 = vmatprep.subr.mxu0 0.0
    %4862 = vmatpush2.xpose.msra.mxu0 0.0
    %4863 = vmatprep.subr.mxu0 0.0
    %4864 = vmatpush2.xpose.msra.mxu0 0.0
    %4865 = vmatprep.subr.mxu0 0.0
    %4866 = vmatpush2.xpose.msra.mxu0 0.0
    %4867 = vmatprep.subr.mxu0 0.0
    %4868 = vmatpush2.xpose.msra.mxu0 0.0
    %4869 = vmatprep.subr.mxu0 0.0
    %4870 = vmatpush2.xpose.msra.mxu0 0.0
    %4871 = vmatprep.subr.mxu0 0.0
    %4872 = vmatpush2.xpose.msra.mxu0 0.0
    %4873 = vmatprep.subr.mxu0 0.0
    %4874 = vmatpush2.xpose.msra.mxu0 0.0
    %4875 = vmatprep.subr.mxu0 0.0
    %4876 = vmatpush2.xpose.msra.mxu0 0.0
    %4877 = vmatprep.mubr.f32.mxu0 0.0
    %4878 = vmatmul.mubr.f32.gmra.mxu0 %v4808
    %v4879 = vpop.f32.mrf.mxu0
    %v4880 = vadd.f32 0.0, %v4879
    %v4881 = vpop.f32.mrf.mxu0
    %4882 = vdwg.mxu0
    %v4884 = vsel %vm4578, %v2867, 0
    %v4887 = vsel %vm4578, %v3531, 0
    %4889 = vmatprep.subr.mxu0 0.0
    %4890 = vmatpush1.xpose.msra.mxu0 0.0
    %4891 = vmatprep.subr.mxu0 0.0
    %4892 = vmatpush1.xpose.msra.mxu0 0.0
    %4893 = vmatprep.subr.mxu0 0.0
    %4894 = vmatpush1.xpose.msra.mxu0 0.0
    %4895 = vmatprep.subr.mxu0 0.0
    %4896 = vmatpush1.xpose.msra.mxu0 0.0
    %4897 = vmatprep.subr.mxu0 0.0
    %4898 = vmatpush1.xpose.msra.mxu0 0.0
    %4899 = vmatprep.subr.mxu0 0.0
    %4900 = vmatpush1.xpose.msra.mxu0 0.0
    %4901 = vmatprep.subr.mxu0 0.0
    %4902 = vmatpush1.xpose.msra.mxu0 0.0
    %4903 = vmatprep.subr.mxu0 0.0
    %4904 = vmatpush1.xpose.msra.mxu0 0.0
    %4905 = vmatprep.subr.mxu0 0.0
    %4906 = vmatpush1.xpose.msra.mxu0 0.0
    %4907 = vmatprep.subr.mxu0 0.0
    %4908 = vmatpush1.xpose.msra.mxu0 0.0
    %4909 = vmatprep.subr.mxu0 0.0
    %4910 = vmatpush1.xpose.msra.mxu0 0.0
    %4911 = vmatprep.subr.mxu0 0.0
    %4912 = vmatpush1.xpose.msra.mxu0 0.0
    %4913 = vmatprep.subr.mxu0 0.0
    %4914 = vmatpush1.xpose.msra.mxu0 0.0
    %4915 = vmatprep.subr.mxu0 0.0
    %4916 = vmatpush1.xpose.msra.mxu0 0.0
    %4917 = vmatprep.subr.mxu0 0.0
    %4918 = vmatpush1.xpose.msra.mxu0 0.0
    %4919 = vmatprep.subr.mxu0 0.0
    %4920 = vmatpush1.xpose.msra.mxu0 %v4887
    %4921 = vmatprep.subr.mxu0 0.0
    %4922 = vmatpush2.xpose.msra.mxu0 0.0
    %4923 = vmatprep.subr.mxu0 0.0
    %4924 = vmatpush2.xpose.msra.mxu0 0.0
    %4925 = vmatprep.subr.mxu0 0.0
    %4926 = vmatpush2.xpose.msra.mxu0 0.0
    %4927 = vmatprep.subr.mxu0 0.0
    %4928 = vmatpush2.xpose.msra.mxu0 0.0
    %4929 = vmatprep.subr.mxu0 0.0
    %4930 = vmatpush2.xpose.msra.mxu0 0.0
    %4931 = vmatprep.subr.mxu0 0.0
    %4932 = vmatpush2.xpose.msra.mxu0 0.0
    %4933 = vmatprep.subr.mxu0 0.0
    %4934 = vmatpush2.xpose.msra.mxu0 0.0
    %4935 = vmatprep.subr.mxu0 0.0
    %4936 = vmatpush2.xpose.msra.mxu0 0.0
    %4937 = vmatprep.subr.mxu0 0.0
    %4938 = vmatpush2.xpose.msra.mxu0 0.0
    %4939 = vmatprep.subr.mxu0 0.0
    %4940 = vmatpush2.xpose.msra.mxu0 0.0
    %4941 = vmatprep.subr.mxu0 0.0
    %4942 = vmatpush2.xpose.msra.mxu0 0.0
    %4943 = vmatprep.subr.mxu0 0.0
    %4944 = vmatpush2.xpose.msra.mxu0 0.0
    %4945 = vmatprep.subr.mxu0 0.0
    %4946 = vmatpush2.xpose.msra.mxu0 0.0
    %4947 = vmatprep.subr.mxu0 0.0
    %4948 = vmatpush2.xpose.msra.mxu0 0.0
    %4949 = vmatprep.subr.mxu0 0.0
    %4950 = vmatpush2.xpose.msra.mxu0 0.0
    %4951 = vmatprep.subr.mxu0 0.0
    %4952 = vmatpush2.xpose.msra.mxu0 0.0
    %4953 = vmatprep.mubr.f32.mxu0 0.0
    %4954 = vmatmul.mubr.f32.gmra.mxu0 %v4884
    %v4955 = vpop.f32.mrf.mxu0
    %v4956 = vadd.f32 0.0, %v4955
    %v4957 = vpop.f32.mrf.mxu0
    %4958 = vdwg.mxu0
    %v4960 = vsel %vm4578, %v2872, 0
    %v4963 = vsel %vm4578, %v3536, 0
    %4965 = vmatprep.subr.mxu0 0.0
    %4966 = vmatpush1.xpose.msra.mxu0 0.0
    %4967 = vmatprep.subr.mxu0 0.0
    %4968 = vmatpush1.xpose.msra.mxu0 0.0
    %4969 = vmatprep.subr.mxu0 0.0
    %4970 = vmatpush1.xpose.msra.mxu0 0.0
    %4971 = vmatprep.subr.mxu0 0.0
    %4972 = vmatpush1.xpose.msra.mxu0 0.0
    %4973 = vmatprep.subr.mxu0 0.0
    %4974 = vmatpush1.xpose.msra.mxu0 0.0
    %4975 = vmatprep.subr.mxu0 0.0
    %4976 = vmatpush1.xpose.msra.mxu0 0.0
    %4977 = vmatprep.subr.mxu0 0.0
    %4978 = vmatpush1.xpose.msra.mxu0 0.0
    %4979 = vmatprep.subr.mxu0 0.0
    %4980 = vmatpush1.xpose.msra.mxu0 0.0
    %4981 = vmatprep.subr.mxu0 0.0
    %4982 = vmatpush1.xpose.msra.mxu0 0.0
    %4983 = vmatprep.subr.mxu0 0.0
    %4984 = vmatpush1.xpose.msra.mxu0 0.0
    %4985 = vmatprep.subr.mxu0 0.0
    %4986 = vmatpush1.xpose.msra.mxu0 0.0
    %4987 = vmatprep.subr.mxu0 0.0
    %4988 = vmatpush1.xpose.msra.mxu0 0.0
    %4989 = vmatprep.subr.mxu0 0.0
    %4990 = vmatpush1.xpose.msra.mxu0 0.0
    %4991 = vmatprep.subr.mxu0 0.0
    %4992 = vmatpush1.xpose.msra.mxu0 0.0
    %4993 = vmatprep.subr.mxu0 0.0
    %4994 = vmatpush1.xpose.msra.mxu0 0.0
    %4995 = vmatprep.subr.mxu0 0.0
    %4996 = vmatpush1.xpose.msra.mxu0 %v4963
    %4997 = vmatprep.subr.mxu0 0.0
    %4998 = vmatpush2.xpose.msra.mxu0 0.0
    %4999 = vmatprep.subr.mxu0 0.0
    %5000 = vmatpush2.xpose.msra.mxu0 0.0
    %5001 = vmatprep.subr.mxu0 0.0
    %5002 = vmatpush2.xpose.msra.mxu0 0.0
    %5003 = vmatprep.subr.mxu0 0.0
    %5004 = vmatpush2.xpose.msra.mxu0 0.0
    %5005 = vmatprep.subr.mxu0 0.0
    %5006 = vmatpush2.xpose.msra.mxu0 0.0
    %5007 = vmatprep.subr.mxu0 0.0
    %5008 = vmatpush2.xpose.msra.mxu0 0.0
    %5009 = vmatprep.subr.mxu0 0.0
    %5010 = vmatpush2.xpose.msra.mxu0 0.0
    %5011 = vmatprep.subr.mxu0 0.0
    %5012 = vmatpush2.xpose.msra.mxu0 0.0
    %5013 = vmatprep.subr.mxu0 0.0
    %5014 = vmatpush2.xpose.msra.mxu0 0.0
    %5015 = vmatprep.subr.mxu0 0.0
    %5016 = vmatpush2.xpose.msra.mxu0 0.0
    %5017 = vmatprep.subr.mxu0 0.0
    %5018 = vmatpush2.xpose.msra.mxu0 0.0
    %5019 = vmatprep.subr.mxu0 0.0
    %5020 = vmatpush2.xpose.msra.mxu0 0.0
    %5021 = vmatprep.subr.mxu0 0.0
    %5022 = vmatpush2.xpose.msra.mxu0 0.0
    %5023 = vmatprep.subr.mxu0 0.0
    %5024 = vmatpush2.xpose.msra.mxu0 0.0
    %5025 = vmatprep.subr.mxu0 0.0
    %5026 = vmatpush2.xpose.msra.mxu0 0.0
    %5027 = vmatprep.subr.mxu0 0.0
    %5028 = vmatpush2.xpose.msra.mxu0 0.0
    %5029 = vmatprep.mubr.f32.mxu0 0.0
    %5030 = vmatmul.mubr.f32.gmra.mxu0 %v4960
    %v5031 = vpop.f32.mrf.mxu0
    %v5032 = vadd.f32 0.0, %v5031
    %v5033 = vpop.f32.mrf.mxu0
    %5034 = vdwg.mxu0
    %v5036 = vsel %vm4578, %v2942, 0
    %v5039 = vsel %vm4578, %v3606, 0
    %5041 = vmatprep.subr.mxu0 0.0
    %5042 = vmatpush1.xpose.msra.mxu0 0.0
    %5043 = vmatprep.subr.mxu0 0.0
    %5044 = vmatpush1.xpose.msra.mxu0 0.0
    %5045 = vmatprep.subr.mxu0 0.0
    %5046 = vmatpush1.xpose.msra.mxu0 0.0
    %5047 = vmatprep.subr.mxu0 0.0
    %5048 = vmatpush1.xpose.msra.mxu0 0.0
    %5049 = vmatprep.subr.mxu0 0.0
    %5050 = vmatpush1.xpose.msra.mxu0 0.0
    %5051 = vmatprep.subr.mxu0 0.0
    %5052 = vmatpush1.xpose.msra.mxu0 0.0
    %5053 = vmatprep.subr.mxu0 0.0
    %5054 = vmatpush1.xpose.msra.mxu0 0.0
    %5055 = vmatprep.subr.mxu0 0.0
    %5056 = vmatpush1.xpose.msra.mxu0 0.0
    %5057 = vmatprep.subr.mxu0 0.0
    %5058 = vmatpush1.xpose.msra.mxu0 0.0
    %5059 = vmatprep.subr.mxu0 0.0
    %5060 = vmatpush1.xpose.msra.mxu0 0.0
    %5061 = vmatprep.subr.mxu0 0.0
    %5062 = vmatpush1.xpose.msra.mxu0 0.0
    %5063 = vmatprep.subr.mxu0 0.0
    %5064 = vmatpush1.xpose.msra.mxu0 0.0
    %5065 = vmatprep.subr.mxu0 0.0
    %5066 = vmatpush1.xpose.msra.mxu0 0.0
    %5067 = vmatprep.subr.mxu0 0.0
    %5068 = vmatpush1.xpose.msra.mxu0 0.0
    %5069 = vmatprep.subr.mxu0 0.0
    %5070 = vmatpush1.xpose.msra.mxu0 0.0
    %5071 = vmatprep.subr.mxu0 0.0
    %5072 = vmatpush1.xpose.msra.mxu0 %v5039
    %5073 = vmatprep.subr.mxu0 0.0
    %5074 = vmatpush2.xpose.msra.mxu0 0.0
    %5075 = vmatprep.subr.mxu0 0.0
    %5076 = vmatpush2.xpose.msra.mxu0 0.0
    %5077 = vmatprep.subr.mxu0 0.0
    %5078 = vmatpush2.xpose.msra.mxu0 0.0
    %5079 = vmatprep.subr.mxu0 0.0
    %5080 = vmatpush2.xpose.msra.mxu0 0.0
    %5081 = vmatprep.subr.mxu0 0.0
    %5082 = vmatpush2.xpose.msra.mxu0 0.0
    %5083 = vmatprep.subr.mxu0 0.0
    %5084 = vmatpush2.xpose.msra.mxu0 0.0
    %5085 = vmatprep.subr.mxu0 0.0
    %5086 = vmatpush2.xpose.msra.mxu0 0.0
    %5087 = vmatprep.subr.mxu0 0.0
    %5088 = vmatpush2.xpose.msra.mxu0 0.0
    %5089 = vmatprep.subr.mxu0 0.0
    %5090 = vmatpush2.xpose.msra.mxu0 0.0
    %5091 = vmatprep.subr.mxu0 0.0
    %5092 = vmatpush2.xpose.msra.mxu0 0.0
    %5093 = vmatprep.subr.mxu0 0.0
    %5094 = vmatpush2.xpose.msra.mxu0 0.0
    %5095 = vmatprep.subr.mxu0 0.0
    %5096 = vmatpush2.xpose.msra.mxu0 0.0
    %5097 = vmatprep.subr.mxu0 0.0
    %5098 = vmatpush2.xpose.msra.mxu0 0.0
    %5099 = vmatprep.subr.mxu0 0.0
    %5100 = vmatpush2.xpose.msra.mxu0 0.0
    %5101 = vmatprep.subr.mxu0 0.0
    %5102 = vmatpush2.xpose.msra.mxu0 0.0
    %5103 = vmatprep.subr.mxu0 0.0
    %5104 = vmatpush2.xpose.msra.mxu0 0.0
    %5105 = vmatprep.mubr.f32.mxu0 0.0
    %5106 = vmatmul.mubr.f32.gmra.mxu0 %v5036
    %v5107 = vpop.f32.mrf.mxu0
    %v5108 = vadd.f32 0.0, %v5107
    %v5109 = vpop.f32.mrf.mxu0
    %5110 = vdwg.mxu0
    %v5112 = vsel %vm4578, %v2947, 0
    %v5115 = vsel %vm4578, %v3611, 0
    %5117 = vmatprep.subr.mxu0 0.0
    %5118 = vmatpush1.xpose.msra.mxu0 0.0
    %5119 = vmatprep.subr.mxu0 0.0
    %5120 = vmatpush1.xpose.msra.mxu0 0.0
    %5121 = vmatprep.subr.mxu0 0.0
    %5122 = vmatpush1.xpose.msra.mxu0 0.0
    %5123 = vmatprep.subr.mxu0 0.0
    %5124 = vmatpush1.xpose.msra.mxu0 0.0
    %5125 = vmatprep.subr.mxu0 0.0
    %5126 = vmatpush1.xpose.msra.mxu0 0.0
    %5127 = vmatprep.subr.mxu0 0.0
    %5128 = vmatpush1.xpose.msra.mxu0 0.0
    %5129 = vmatprep.subr.mxu0 0.0
    %5130 = vmatpush1.xpose.msra.mxu0 0.0
    %5131 = vmatprep.subr.mxu0 0.0
    %5132 = vmatpush1.xpose.msra.mxu0 0.0
    %5133 = vmatprep.subr.mxu0 0.0
    %5134 = vmatpush1.xpose.msra.mxu0 0.0
    %5135 = vmatprep.subr.mxu0 0.0
    %5136 = vmatpush1.xpose.msra.mxu0 0.0
    %5137 = vmatprep.subr.mxu0 0.0
    %5138 = vmatpush1.xpose.msra.mxu0 0.0
    %5139 = vmatprep.subr.mxu0 0.0
    %5140 = vmatpush1.xpose.msra.mxu0 0.0
    %5141 = vmatprep.subr.mxu0 0.0
    %5142 = vmatpush1.xpose.msra.mxu0 0.0
    %5143 = vmatprep.subr.mxu0 0.0
    %5144 = vmatpush1.xpose.msra.mxu0 0.0
    %5145 = vmatprep.subr.mxu0 0.0
    %5146 = vmatpush1.xpose.msra.mxu0 0.0
    %5147 = vmatprep.subr.mxu0 0.0
    %5148 = vmatpush1.xpose.msra.mxu0 %v5115
    %5149 = vmatprep.subr.mxu0 0.0
    %5150 = vmatpush2.xpose.msra.mxu0 0.0
    %5151 = vmatprep.subr.mxu0 0.0
    %5152 = vmatpush2.xpose.msra.mxu0 0.0
    %5153 = vmatprep.subr.mxu0 0.0
    %5154 = vmatpush2.xpose.msra.mxu0 0.0
    %5155 = vmatprep.subr.mxu0 0.0
    %5156 = vmatpush2.xpose.msra.mxu0 0.0
    %5157 = vmatprep.subr.mxu0 0.0
    %5158 = vmatpush2.xpose.msra.mxu0 0.0
    %5159 = vmatprep.subr.mxu0 0.0
    %5160 = vmatpush2.xpose.msra.mxu0 0.0
    %5161 = vmatprep.subr.mxu0 0.0
    %5162 = vmatpush2.xpose.msra.mxu0 0.0
    %5163 = vmatprep.subr.mxu0 0.0
    %5164 = vmatpush2.xpose.msra.mxu0 0.0
    %5165 = vmatprep.subr.mxu0 0.0
    %5166 = vmatpush2.xpose.msra.mxu0 0.0
    %5167 = vmatprep.subr.mxu0 0.0
    %5168 = vmatpush2.xpose.msra.mxu0 0.0
    %5169 = vmatprep.subr.mxu0 0.0
    %5170 = vmatpush2.xpose.msra.mxu0 0.0
    %5171 = vmatprep.subr.mxu0 0.0
    %5172 = vmatpush2.xpose.msra.mxu0 0.0
    %5173 = vmatprep.subr.mxu0 0.0
    %5174 = vmatpush2.xpose.msra.mxu0 0.0
    %5175 = vmatprep.subr.mxu0 0.0
    %5176 = vmatpush2.xpose.msra.mxu0 0.0
    %5177 = vmatprep.subr.mxu0 0.0
    %5178 = vmatpush2.xpose.msra.mxu0 0.0
    %5179 = vmatprep.subr.mxu0 0.0
    %5180 = vmatpush2.xpose.msra.mxu0 0.0
    %5181 = vmatprep.mubr.f32.mxu0 0.0
    %5182 = vmatmul.mubr.f32.gmra.mxu0 %v5112
    %v5183 = vpop.f32.mrf.mxu0
    %v5184 = vadd.f32 0.0, %v5183
    %v5185 = vpop.f32.mrf.mxu0
    %5186 = vdwg.mxu0
    %v5188 = vsel %vm4578, %v3017, 0
    %v5191 = vsel %vm4578, %v3681, 0
    %5193 = vmatprep.subr.mxu0 0.0
    %5194 = vmatpush1.xpose.msra.mxu0 0.0
    %5195 = vmatprep.subr.mxu0 0.0
    %5196 = vmatpush1.xpose.msra.mxu0 0.0
    %5197 = vmatprep.subr.mxu0 0.0
    %5198 = vmatpush1.xpose.msra.mxu0 0.0
    %5199 = vmatprep.subr.mxu0 0.0
    %5200 = vmatpush1.xpose.msra.mxu0 0.0
    %5201 = vmatprep.subr.mxu0 0.0
    %5202 = vmatpush1.xpose.msra.mxu0 0.0
    %5203 = vmatprep.subr.mxu0 0.0
    %5204 = vmatpush1.xpose.msra.mxu0 0.0
    %5205 = vmatprep.subr.mxu0 0.0
    %5206 = vmatpush1.xpose.msra.mxu0 0.0
    %5207 = vmatprep.subr.mxu0 0.0
    %5208 = vmatpush1.xpose.msra.mxu0 0.0
    %5209 = vmatprep.subr.mxu0 0.0
    %5210 = vmatpush1.xpose.msra.mxu0 0.0
    %5211 = vmatprep.subr.mxu0 0.0
    %5212 = vmatpush1.xpose.msra.mxu0 0.0
    %5213 = vmatprep.subr.mxu0 0.0
    %5214 = vmatpush1.xpose.msra.mxu0 0.0
    %5215 = vmatprep.subr.mxu0 0.0
    %5216 = vmatpush1.xpose.msra.mxu0 0.0
    %5217 = vmatprep.subr.mxu0 0.0
    %5218 = vmatpush1.xpose.msra.mxu0 0.0
    %5219 = vmatprep.subr.mxu0 0.0
    %5220 = vmatpush1.xpose.msra.mxu0 0.0
    %5221 = vmatprep.subr.mxu0 0.0
    %5222 = vmatpush1.xpose.msra.mxu0 0.0
    %5223 = vmatprep.subr.mxu0 0.0
    %5224 = vmatpush1.xpose.msra.mxu0 %v5191
    %5225 = vmatprep.subr.mxu0 0.0
    %5226 = vmatpush2.xpose.msra.mxu0 0.0
    %5227 = vmatprep.subr.mxu0 0.0
    %5228 = vmatpush2.xpose.msra.mxu0 0.0
    %5229 = vmatprep.subr.mxu0 0.0
    %5230 = vmatpush2.xpose.msra.mxu0 0.0
    %5231 = vmatprep.subr.mxu0 0.0
    %5232 = vmatpush2.xpose.msra.mxu0 0.0
    %5233 = vmatprep.subr.mxu0 0.0
    %5234 = vmatpush2.xpose.msra.mxu0 0.0
    %5235 = vmatprep.subr.mxu0 0.0
    %5236 = vmatpush2.xpose.msra.mxu0 0.0
    %5237 = vmatprep.subr.mxu0 0.0
    %5238 = vmatpush2.xpose.msra.mxu0 0.0
    %5239 = vmatprep.subr.mxu0 0.0
    %5240 = vmatpush2.xpose.msra.mxu0 0.0
    %5241 = vmatprep.subr.mxu0 0.0
    %5242 = vmatpush2.xpose.msra.mxu0 0.0
    %5243 = vmatprep.subr.mxu0 0.0
    %5244 = vmatpush2.xpose.msra.mxu0 0.0
    %5245 = vmatprep.subr.mxu0 0.0
    %5246 = vmatpush2.xpose.msra.mxu0 0.0
    %5247 = vmatprep.subr.mxu0 0.0
    %5248 = vmatpush2.xpose.msra.mxu0 0.0
    %5249 = vmatprep.subr.mxu0 0.0
    %5250 = vmatpush2.xpose.msra.mxu0 0.0
    %5251 = vmatprep.subr.mxu0 0.0
    %5252 = vmatpush2.xpose.msra.mxu0 0.0
    %5253 = vmatprep.subr.mxu0 0.0
    %5254 = vmatpush2.xpose.msra.mxu0 0.0
    %5255 = vmatprep.subr.mxu0 0.0
    %5256 = vmatpush2.xpose.msra.mxu0 0.0
    %5257 = vmatprep.mubr.f32.mxu0 0.0
    %5258 = vmatmul.mubr.f32.gmra.mxu0 %v5188
    %v5259 = vpop.f32.mrf.mxu0
    %v5260 = vadd.f32 0.0, %v5259
    %v5261 = vpop.f32.mrf.mxu0
    %5262 = vdwg.mxu0
    %v5264 = vsel %vm4578, %v3022, 0
    %v5267 = vsel %vm4578, %v3686, 0
    %5269 = vmatprep.subr.mxu0 0.0
    %5270 = vmatpush1.xpose.msra.mxu0 0.0
    %5271 = vmatprep.subr.mxu0 0.0
    %5272 = vmatpush1.xpose.msra.mxu0 0.0
    %5273 = vmatprep.subr.mxu0 0.0
    %5274 = vmatpush1.xpose.msra.mxu0 0.0
    %5275 = vmatprep.subr.mxu0 0.0
    %5276 = vmatpush1.xpose.msra.mxu0 0.0
    %5277 = vmatprep.subr.mxu0 0.0
    %5278 = vmatpush1.xpose.msra.mxu0 0.0
    %5279 = vmatprep.subr.mxu0 0.0
    %5280 = vmatpush1.xpose.msra.mxu0 0.0
    %5281 = vmatprep.subr.mxu0 0.0
    %5282 = vmatpush1.xpose.msra.mxu0 0.0
    %5283 = vmatprep.subr.mxu0 0.0
    %5284 = vmatpush1.xpose.msra.mxu0 0.0
    %5285 = vmatprep.subr.mxu0 0.0
    %5286 = vmatpush1.xpose.msra.mxu0 0.0
    %5287 = vmatprep.subr.mxu0 0.0
    %5288 = vmatpush1.xpose.msra.mxu0 0.0
    %5289 = vmatprep.subr.mxu0 0.0
    %5290 = vmatpush1.xpose.msra.mxu0 0.0
    %5291 = vmatprep.subr.mxu0 0.0
    %5292 = vmatpush1.xpose.msra.mxu0 0.0
    %5293 = vmatprep.subr.mxu0 0.0
    %5294 = vmatpush1.xpose.msra.mxu0 0.0
    %5295 = vmatprep.subr.mxu0 0.0
    %5296 = vmatpush1.xpose.msra.mxu0 0.0
    %5297 = vmatprep.subr.mxu0 0.0
    %5298 = vmatpush1.xpose.msra.mxu0 0.0
    %5299 = vmatprep.subr.mxu0 0.0
    %5300 = vmatpush1.xpose.msra.mxu0 %v5267
    %5301 = vmatprep.subr.mxu0 0.0
    %5302 = vmatpush2.xpose.msra.mxu0 0.0
    %5303 = vmatprep.subr.mxu0 0.0
    %5304 = vmatpush2.xpose.msra.mxu0 0.0
    %5305 = vmatprep.subr.mxu0 0.0
    %5306 = vmatpush2.xpose.msra.mxu0 0.0
    %5307 = vmatprep.subr.mxu0 0.0
    %5308 = vmatpush2.xpose.msra.mxu0 0.0
    %5309 = vmatprep.subr.mxu0 0.0
    %5310 = vmatpush2.xpose.msra.mxu0 0.0
    %5311 = vmatprep.subr.mxu0 0.0
    %5312 = vmatpush2.xpose.msra.mxu0 0.0
    %5313 = vmatprep.subr.mxu0 0.0
    %5314 = vmatpush2.xpose.msra.mxu0 0.0
    %5315 = vmatprep.subr.mxu0 0.0
    %5316 = vmatpush2.xpose.msra.mxu0 0.0
    %5317 = vmatprep.subr.mxu0 0.0
    %5318 = vmatpush2.xpose.msra.mxu0 0.0
    %5319 = vmatprep.subr.mxu0 0.0
    %5320 = vmatpush2.xpose.msra.mxu0 0.0
    %5321 = vmatprep.subr.mxu0 0.0
    %5322 = vmatpush2.xpose.msra.mxu0 0.0
    %5323 = vmatprep.subr.mxu0 0.0
    %5324 = vmatpush2.xpose.msra.mxu0 0.0
    %5325 = vmatprep.subr.mxu0 0.0
    %5326 = vmatpush2.xpose.msra.mxu0 0.0
    %5327 = vmatprep.subr.mxu0 0.0
    %5328 = vmatpush2.xpose.msra.mxu0 0.0
    %5329 = vmatprep.subr.mxu0 0.0
    %5330 = vmatpush2.xpose.msra.mxu0 0.0
    %5331 = vmatprep.subr.mxu0 0.0
    %5332 = vmatpush2.xpose.msra.mxu0 0.0
    %5333 = vmatprep.mubr.f32.mxu0 0.0
    %5334 = vmatmul.mubr.f32.gmra.mxu0 %v5264
    %v5335 = vpop.f32.mrf.mxu0
    %v5336 = vadd.f32 0.0, %v5335
    %v5337 = vpop.f32.mrf.mxu0
    %5338 = vdwg.mxu0
    %v5340 = vsel %vm4578, %v3092, 0
    %v5343 = vsel %vm4578, %v3756, 0
    %5345 = vmatprep.subr.mxu0 0.0
    %5346 = vmatpush1.xpose.msra.mxu0 0.0
    %5347 = vmatprep.subr.mxu0 0.0
    %5348 = vmatpush1.xpose.msra.mxu0 0.0
    %5349 = vmatprep.subr.mxu0 0.0
    %5350 = vmatpush1.xpose.msra.mxu0 0.0
    %5351 = vmatprep.subr.mxu0 0.0
    %5352 = vmatpush1.xpose.msra.mxu0 0.0
    %5353 = vmatprep.subr.mxu0 0.0
    %5354 = vmatpush1.xpose.msra.mxu0 0.0
    %5355 = vmatprep.subr.mxu0 0.0
    %5356 = vmatpush1.xpose.msra.mxu0 0.0
    %5357 = vmatprep.subr.mxu0 0.0
    %5358 = vmatpush1.xpose.msra.mxu0 0.0
    %5359 = vmatprep.subr.mxu0 0.0
    %5360 = vmatpush1.xpose.msra.mxu0 0.0
    %5361 = vmatprep.subr.mxu0 0.0
    %5362 = vmatpush1.xpose.msra.mxu0 0.0
    %5363 = vmatprep.subr.mxu0 0.0
    %5364 = vmatpush1.xpose.msra.mxu0 0.0
    %5365 = vmatprep.subr.mxu0 0.0
    %5366 = vmatpush1.xpose.msra.mxu0 0.0
    %5367 = vmatprep.subr.mxu0 0.0
    %5368 = vmatpush1.xpose.msra.mxu0 0.0
    %5369 = vmatprep.subr.mxu0 0.0
    %5370 = vmatpush1.xpose.msra.mxu0 0.0
    %5371 = vmatprep.subr.mxu0 0.0
    %5372 = vmatpush1.xpose.msra.mxu0 0.0
    %5373 = vmatprep.subr.mxu0 0.0
    %5374 = vmatpush1.xpose.msra.mxu0 0.0
    %5375 = vmatprep.subr.mxu0 0.0
    %5376 = vmatpush1.xpose.msra.mxu0 %v5343
    %5377 = vmatprep.subr.mxu0 0.0
    %5378 = vmatpush2.xpose.msra.mxu0 0.0
    %5379 = vmatprep.subr.mxu0 0.0
    %5380 = vmatpush2.xpose.msra.mxu0 0.0
    %5381 = vmatprep.subr.mxu0 0.0
    %5382 = vmatpush2.xpose.msra.mxu0 0.0
    %5383 = vmatprep.subr.mxu0 0.0
    %5384 = vmatpush2.xpose.msra.mxu0 0.0
    %5385 = vmatprep.subr.mxu0 0.0
    %5386 = vmatpush2.xpose.msra.mxu0 0.0
    %5387 = vmatprep.subr.mxu0 0.0
    %5388 = vmatpush2.xpose.msra.mxu0 0.0
    %5389 = vmatprep.subr.mxu0 0.0
    %5390 = vmatpush2.xpose.msra.mxu0 0.0
    %5391 = vmatprep.subr.mxu0 0.0
    %5392 = vmatpush2.xpose.msra.mxu0 0.0
    %5393 = vmatprep.subr.mxu0 0.0
    %5394 = vmatpush2.xpose.msra.mxu0 0.0
    %5395 = vmatprep.subr.mxu0 0.0
    %5396 = vmatpush2.xpose.msra.mxu0 0.0
    %5397 = vmatprep.subr.mxu0 0.0
    %5398 = vmatpush2.xpose.msra.mxu0 0.0
    %5399 = vmatprep.subr.mxu0 0.0
    %5400 = vmatpush2.xpose.msra.mxu0 0.0
    %5401 = vmatprep.subr.mxu0 0.0
    %5402 = vmatpush2.xpose.msra.mxu0 0.0
    %5403 = vmatprep.subr.mxu0 0.0
    %5404 = vmatpush2.xpose.msra.mxu0 0.0
    %5405 = vmatprep.subr.mxu0 0.0
    %5406 = vmatpush2.xpose.msra.mxu0 0.0
    %5407 = vmatprep.subr.mxu0 0.0
    %5408 = vmatpush2.xpose.msra.mxu0 0.0
    %5409 = vmatprep.mubr.f32.mxu0 0.0
    %5410 = vmatmul.mubr.f32.gmra.mxu0 %v5340
    %v5411 = vpop.f32.mrf.mxu0
    %v5412 = vadd.f32 0.0, %v5411
    %v5413 = vpop.f32.mrf.mxu0
    %5414 = vdwg.mxu0
    %v5416 = vsel %vm4578, %v3097, 0
    %v5419 = vsel %vm4578, %v3761, 0
    %5421 = vmatprep.subr.mxu0 0.0
    %5422 = vmatpush1.xpose.msra.mxu0 0.0
    %5423 = vmatprep.subr.mxu0 0.0
    %5424 = vmatpush1.xpose.msra.mxu0 0.0
    %5425 = vmatprep.subr.mxu0 0.0
    %5426 = vmatpush1.xpose.msra.mxu0 0.0
    %5427 = vmatprep.subr.mxu0 0.0
    %5428 = vmatpush1.xpose.msra.mxu0 0.0
    %5429 = vmatprep.subr.mxu0 0.0
    %5430 = vmatpush1.xpose.msra.mxu0 0.0
    %5431 = vmatprep.subr.mxu0 0.0
    %5432 = vmatpush1.xpose.msra.mxu0 0.0
    %5433 = vmatprep.subr.mxu0 0.0
    %5434 = vmatpush1.xpose.msra.mxu0 0.0
    %5435 = vmatprep.subr.mxu0 0.0
    %5436 = vmatpush1.xpose.msra.mxu0 0.0
    %5437 = vmatprep.subr.mxu0 0.0
    %5438 = vmatpush1.xpose.msra.mxu0 0.0
    %5439 = vmatprep.subr.mxu0 0.0
    %5440 = vmatpush1.xpose.msra.mxu0 0.0
    %5441 = vmatprep.subr.mxu0 0.0
    %5442 = vmatpush1.xpose.msra.mxu0 0.0
    %5443 = vmatprep.subr.mxu0 0.0
    %5444 = vmatpush1.xpose.msra.mxu0 0.0
    %5445 = vmatprep.subr.mxu0 0.0
    %5446 = vmatpush1.xpose.msra.mxu0 0.0
    %5447 = vmatprep.subr.mxu0 0.0
    %5448 = vmatpush1.xpose.msra.mxu0 0.0
    %5449 = vmatprep.subr.mxu0 0.0
    %5450 = vmatpush1.xpose.msra.mxu0 0.0
    %5451 = vmatprep.subr.mxu0 0.0
    %5452 = vmatpush1.xpose.msra.mxu0 %v5419
    %5453 = vmatprep.subr.mxu0 0.0
    %5454 = vmatpush2.xpose.msra.mxu0 0.0
    %5455 = vmatprep.subr.mxu0 0.0
    %5456 = vmatpush2.xpose.msra.mxu0 0.0
    %5457 = vmatprep.subr.mxu0 0.0
    %5458 = vmatpush2.xpose.msra.mxu0 0.0
    %5459 = vmatprep.subr.mxu0 0.0
    %5460 = vmatpush2.xpose.msra.mxu0 0.0
    %5461 = vmatprep.subr.mxu0 0.0
    %5462 = vmatpush2.xpose.msra.mxu0 0.0
    %5463 = vmatprep.subr.mxu0 0.0
    %5464 = vmatpush2.xpose.msra.mxu0 0.0
    %5465 = vmatprep.subr.mxu0 0.0
    %5466 = vmatpush2.xpose.msra.mxu0 0.0
    %5467 = vmatprep.subr.mxu0 0.0
    %5468 = vmatpush2.xpose.msra.mxu0 0.0
    %5469 = vmatprep.subr.mxu0 0.0
    %5470 = vmatpush2.xpose.msra.mxu0 0.0
    %5471 = vmatprep.subr.mxu0 0.0
    %5472 = vmatpush2.xpose.msra.mxu0 0.0
    %5473 = vmatprep.subr.mxu0 0.0
    %5474 = vmatpush2.xpose.msra.mxu0 0.0
    %5475 = vmatprep.subr.mxu0 0.0
    %5476 = vmatpush2.xpose.msra.mxu0 0.0
    %5477 = vmatprep.subr.mxu0 0.0
    %5478 = vmatpush2.xpose.msra.mxu0 0.0
    %5479 = vmatprep.subr.mxu0 0.0
    %5480 = vmatpush2.xpose.msra.mxu0 0.0
    %5481 = vmatprep.subr.mxu0 0.0
    %5482 = vmatpush2.xpose.msra.mxu0 0.0
    %5483 = vmatprep.subr.mxu0 0.0
    %5484 = vmatpush2.xpose.msra.mxu0 0.0
    %5485 = vmatprep.mubr.f32.mxu0 0.0
    %5486 = vmatmul.mubr.f32.gmra.mxu0 %v5416
    %v5487 = vpop.f32.mrf.mxu0
    %v5488 = vadd.f32 0.0, %v5487
    %v5489 = vpop.f32.mrf.mxu0
    %5490 = vdwg.mxu0
    %v5492 = vsel %vm4578, %v3167, 0
    %v5495 = vsel %vm4578, %v3831, 0
    %5497 = vmatprep.subr.mxu0 0.0
    %5498 = vmatpush1.xpose.msra.mxu0 0.0
    %5499 = vmatprep.subr.mxu0 0.0
    %5500 = vmatpush1.xpose.msra.mxu0 0.0
    %5501 = vmatprep.subr.mxu0 0.0
    %5502 = vmatpush1.xpose.msra.mxu0 0.0
    %5503 = vmatprep.subr.mxu0 0.0
    %5504 = vmatpush1.xpose.msra.mxu0 0.0
    %5505 = vmatprep.subr.mxu0 0.0
    %5506 = vmatpush1.xpose.msra.mxu0 0.0
    %5507 = vmatprep.subr.mxu0 0.0
    %5508 = vmatpush1.xpose.msra.mxu0 0.0
    %5509 = vmatprep.subr.mxu0 0.0
    %5510 = vmatpush1.xpose.msra.mxu0 0.0
    %5511 = vmatprep.subr.mxu0 0.0
    %5512 = vmatpush1.xpose.msra.mxu0 0.0
    %5513 = vmatprep.subr.mxu0 0.0
    %5514 = vmatpush1.xpose.msra.mxu0 0.0
    %5515 = vmatprep.subr.mxu0 0.0
    %5516 = vmatpush1.xpose.msra.mxu0 0.0
    %5517 = vmatprep.subr.mxu0 0.0
    %5518 = vmatpush1.xpose.msra.mxu0 0.0
    %5519 = vmatprep.subr.mxu0 0.0
    %5520 = vmatpush1.xpose.msra.mxu0 0.0
    %5521 = vmatprep.subr.mxu0 0.0
    %5522 = vmatpush1.xpose.msra.mxu0 0.0
    %5523 = vmatprep.subr.mxu0 0.0
    %5524 = vmatpush1.xpose.msra.mxu0 0.0
    %5525 = vmatprep.subr.mxu0 0.0
    %5526 = vmatpush1.xpose.msra.mxu0 0.0
    %5527 = vmatprep.subr.mxu0 0.0
    %5528 = vmatpush1.xpose.msra.mxu0 %v5495
    %5529 = vmatprep.subr.mxu0 0.0
    %5530 = vmatpush2.xpose.msra.mxu0 0.0
    %5531 = vmatprep.subr.mxu0 0.0
    %5532 = vmatpush2.xpose.msra.mxu0 0.0
    %5533 = vmatprep.subr.mxu0 0.0
    %5534 = vmatpush2.xpose.msra.mxu0 0.0
    %5535 = vmatprep.subr.mxu0 0.0
    %5536 = vmatpush2.xpose.msra.mxu0 0.0
    %5537 = vmatprep.subr.mxu0 0.0
    %5538 = vmatpush2.xpose.msra.mxu0 0.0
    %5539 = vmatprep.subr.mxu0 0.0
    %5540 = vmatpush2.xpose.msra.mxu0 0.0
    %5541 = vmatprep.subr.mxu0 0.0
    %5542 = vmatpush2.xpose.msra.mxu0 0.0
    %5543 = vmatprep.subr.mxu0 0.0
    %5544 = vmatpush2.xpose.msra.mxu0 0.0
    %5545 = vmatprep.subr.mxu0 0.0
    %5546 = vmatpush2.xpose.msra.mxu0 0.0
    %5547 = vmatprep.subr.mxu0 0.0
    %5548 = vmatpush2.xpose.msra.mxu0 0.0
    %5549 = vmatprep.subr.mxu0 0.0
    %5550 = vmatpush2.xpose.msra.mxu0 0.0
    %5551 = vmatprep.subr.mxu0 0.0
    %5552 = vmatpush2.xpose.msra.mxu0 0.0
    %5553 = vmatprep.subr.mxu0 0.0
    %5554 = vmatpush2.xpose.msra.mxu0 0.0
    %5555 = vmatprep.subr.mxu0 0.0
    %5556 = vmatpush2.xpose.msra.mxu0 0.0
    %5557 = vmatprep.subr.mxu0 0.0
    %5558 = vmatpush2.xpose.msra.mxu0 0.0
    %5559 = vmatprep.subr.mxu0 0.0
    %5560 = vmatpush2.xpose.msra.mxu0 0.0
    %5561 = vmatprep.mubr.f32.mxu0 0.0
    %5562 = vmatmul.mubr.f32.gmra.mxu0 %v5492
    %v5563 = vpop.f32.mrf.mxu0
    %v5564 = vadd.f32 0.0, %v5563
    %v5565 = vpop.f32.mrf.mxu0
    %5566 = vdwg.mxu0
    %v5568 = vsel %vm4578, %v3172, 0
    %v5571 = vsel %vm4578, %v3836, 0
    %5573 = vmatprep.subr.mxu0 0.0
    %5574 = vmatpush1.xpose.msra.mxu0 0.0
    %5575 = vmatprep.subr.mxu0 0.0
    %5576 = vmatpush1.xpose.msra.mxu0 0.0
    %5577 = vmatprep.subr.mxu0 0.0
    %5578 = vmatpush1.xpose.msra.mxu0 0.0
    %5579 = vmatprep.subr.mxu0 0.0
    %5580 = vmatpush1.xpose.msra.mxu0 0.0
    %5581 = vmatprep.subr.mxu0 0.0
    %5582 = vmatpush1.xpose.msra.mxu0 0.0
    %5583 = vmatprep.subr.mxu0 0.0
    %5584 = vmatpush1.xpose.msra.mxu0 0.0
    %5585 = vmatprep.subr.mxu0 0.0
    %5586 = vmatpush1.xpose.msra.mxu0 0.0
    %5587 = vmatprep.subr.mxu0 0.0
    %5588 = vmatpush1.xpose.msra.mxu0 0.0
    %5589 = vmatprep.subr.mxu0 0.0
    %5590 = vmatpush1.xpose.msra.mxu0 0.0
    %5591 = vmatprep.subr.mxu0 0.0
    %5592 = vmatpush1.xpose.msra.mxu0 0.0
    %5593 = vmatprep.subr.mxu0 0.0
    %5594 = vmatpush1.xpose.msra.mxu0 0.0
    %5595 = vmatprep.subr.mxu0 0.0
    %5596 = vmatpush1.xpose.msra.mxu0 0.0
    %5597 = vmatprep.subr.mxu0 0.0
    %5598 = vmatpush1.xpose.msra.mxu0 0.0
    %5599 = vmatprep.subr.mxu0 0.0
    %5600 = vmatpush1.xpose.msra.mxu0 0.0
    %5601 = vmatprep.subr.mxu0 0.0
    %5602 = vmatpush1.xpose.msra.mxu0 0.0
    %5603 = vmatprep.subr.mxu0 0.0
    %5604 = vmatpush1.xpose.msra.mxu0 %v5571
    %5605 = vmatprep.subr.mxu0 0.0
    %5606 = vmatpush2.xpose.msra.mxu0 0.0
    %5607 = vmatprep.subr.mxu0 0.0
    %5608 = vmatpush2.xpose.msra.mxu0 0.0
    %5609 = vmatprep.subr.mxu0 0.0
    %5610 = vmatpush2.xpose.msra.mxu0 0.0
    %5611 = vmatprep.subr.mxu0 0.0
    %5612 = vmatpush2.xpose.msra.mxu0 0.0
    %5613 = vmatprep.subr.mxu0 0.0
    %5614 = vmatpush2.xpose.msra.mxu0 0.0
    %5615 = vmatprep.subr.mxu0 0.0
    %5616 = vmatpush2.xpose.msra.mxu0 0.0
    %5617 = vmatprep.subr.mxu0 0.0
    %5618 = vmatpush2.xpose.msra.mxu0 0.0
    %5619 = vmatprep.subr.mxu0 0.0
    %5620 = vmatpush2.xpose.msra.mxu0 0.0
    %5621 = vmatprep.subr.mxu0 0.0
    %5622 = vmatpush2.xpose.msra.mxu0 0.0
    %5623 = vmatprep.subr.mxu0 0.0
    %5624 = vmatpush2.xpose.msra.mxu0 0.0
    %5625 = vmatprep.subr.mxu0 0.0
    %5626 = vmatpush2.xpose.msra.mxu0 0.0
    %5627 = vmatprep.subr.mxu0 0.0
    %5628 = vmatpush2.xpose.msra.mxu0 0.0
    %5629 = vmatprep.subr.mxu0 0.0
    %5630 = vmatpush2.xpose.msra.mxu0 0.0
    %5631 = vmatprep.subr.mxu0 0.0
    %5632 = vmatpush2.xpose.msra.mxu0 0.0
    %5633 = vmatprep.subr.mxu0 0.0
    %5634 = vmatpush2.xpose.msra.mxu0 0.0
    %5635 = vmatprep.subr.mxu0 0.0
    %5636 = vmatpush2.xpose.msra.mxu0 0.0
    %5637 = vmatprep.mubr.f32.mxu0 0.0
    %5638 = vmatmul.mubr.f32.gmra.mxu0 %v5568
    %v5639 = vpop.f32.mrf.mxu0
    %v5640 = vadd.f32 0.0, %v5639
    %v5641 = vpop.f32.mrf.mxu0
    %5642 = vdwg.mxu0
    %v5644 = vsel %vm4578, %v3242, 0
    %v5647 = vsel %vm4578, %v3906, 0
    %5649 = vmatprep.subr.mxu0 0.0
    %5650 = vmatpush1.xpose.msra.mxu0 0.0
    %5651 = vmatprep.subr.mxu0 0.0
    %5652 = vmatpush1.xpose.msra.mxu0 0.0
    %5653 = vmatprep.subr.mxu0 0.0
    %5654 = vmatpush1.xpose.msra.mxu0 0.0
    %5655 = vmatprep.subr.mxu0 0.0
    %5656 = vmatpush1.xpose.msra.mxu0 0.0
    %5657 = vmatprep.subr.mxu0 0.0
    %5658 = vmatpush1.xpose.msra.mxu0 0.0
    %5659 = vmatprep.subr.mxu0 0.0
    %5660 = vmatpush1.xpose.msra.mxu0 0.0
    %5661 = vmatprep.subr.mxu0 0.0
    %5662 = vmatpush1.xpose.msra.mxu0 0.0
    %5663 = vmatprep.subr.mxu0 0.0
    %5664 = vmatpush1.xpose.msra.mxu0 0.0
    %5665 = vmatprep.subr.mxu0 0.0
    %5666 = vmatpush1.xpose.msra.mxu0 0.0
    %5667 = vmatprep.subr.mxu0 0.0
    %5668 = vmatpush1.xpose.msra.mxu0 0.0
    %5669 = vmatprep.subr.mxu0 0.0
    %5670 = vmatpush1.xpose.msra.mxu0 0.0
    %5671 = vmatprep.subr.mxu0 0.0
    %5672 = vmatpush1.xpose.msra.mxu0 0.0
    %5673 = vmatprep.subr.mxu0 0.0
    %5674 = vmatpush1.xpose.msra.mxu0 0.0
    %5675 = vmatprep.subr.mxu0 0.0
    %5676 = vmatpush1.xpose.msra.mxu0 0.0
    %5677 = vmatprep.subr.mxu0 0.0
    %5678 = vmatpush1.xpose.msra.mxu0 0.0
    %5679 = vmatprep.subr.mxu0 0.0
    %5680 = vmatpush1.xpose.msra.mxu0 %v5647
    %5681 = vmatprep.subr.mxu0 0.0
    %5682 = vmatpush2.xpose.msra.mxu0 0.0
    %5683 = vmatprep.subr.mxu0 0.0
    %5684 = vmatpush2.xpose.msra.mxu0 0.0
    %5685 = vmatprep.subr.mxu0 0.0
    %5686 = vmatpush2.xpose.msra.mxu0 0.0
    %5687 = vmatprep.subr.mxu0 0.0
    %5688 = vmatpush2.xpose.msra.mxu0 0.0
    %5689 = vmatprep.subr.mxu0 0.0
    %5690 = vmatpush2.xpose.msra.mxu0 0.0
    %5691 = vmatprep.subr.mxu0 0.0
    %5692 = vmatpush2.xpose.msra.mxu0 0.0
    %5693 = vmatprep.subr.mxu0 0.0
    %5694 = vmatpush2.xpose.msra.mxu0 0.0
    %5695 = vmatprep.subr.mxu0 0.0
    %5696 = vmatpush2.xpose.msra.mxu0 0.0
    %5697 = vmatprep.subr.mxu0 0.0
    %5698 = vmatpush2.xpose.msra.mxu0 0.0
    %5699 = vmatprep.subr.mxu0 0.0
    %5700 = vmatpush2.xpose.msra.mxu0 0.0
    %5701 = vmatprep.subr.mxu0 0.0
    %5702 = vmatpush2.xpose.msra.mxu0 0.0
    %5703 = vmatprep.subr.mxu0 0.0
    %5704 = vmatpush2.xpose.msra.mxu0 0.0
    %5705 = vmatprep.subr.mxu0 0.0
    %5706 = vmatpush2.xpose.msra.mxu0 0.0
    %5707 = vmatprep.subr.mxu0 0.0
    %5708 = vmatpush2.xpose.msra.mxu0 0.0
    %5709 = vmatprep.subr.mxu0 0.0
    %5710 = vmatpush2.xpose.msra.mxu0 0.0
    %5711 = vmatprep.subr.mxu0 0.0
    %5712 = vmatpush2.xpose.msra.mxu0 0.0
    %5713 = vmatprep.mubr.f32.mxu0 0.0
    %5714 = vmatmul.mubr.f32.gmra.mxu0 %v5644
    %v5715 = vpop.f32.mrf.mxu0
    %v5716 = vadd.f32 0.0, %v5715
    %v5717 = vpop.f32.mrf.mxu0
    %5718 = vdwg.mxu0
    %v5720 = vsel %vm4578, %v3247, 0
    %v5723 = vsel %vm4578, %v3911, 0
    %5725 = vmatprep.subr.mxu0 0.0
    %5726 = vmatpush1.xpose.msra.mxu0 0.0
    %5727 = vmatprep.subr.mxu0 0.0
    %5728 = vmatpush1.xpose.msra.mxu0 0.0
    %5729 = vmatprep.subr.mxu0 0.0
    %5730 = vmatpush1.xpose.msra.mxu0 0.0
    %5731 = vmatprep.subr.mxu0 0.0
    %5732 = vmatpush1.xpose.msra.mxu0 0.0
    %5733 = vmatprep.subr.mxu0 0.0
    %5734 = vmatpush1.xpose.msra.mxu0 0.0
    %5735 = vmatprep.subr.mxu0 0.0
    %5736 = vmatpush1.xpose.msra.mxu0 0.0
    %5737 = vmatprep.subr.mxu0 0.0
    %5738 = vmatpush1.xpose.msra.mxu0 0.0
    %5739 = vmatprep.subr.mxu0 0.0
    %5740 = vmatpush1.xpose.msra.mxu0 0.0
    %5741 = vmatprep.subr.mxu0 0.0
    %5742 = vmatpush1.xpose.msra.mxu0 0.0
    %5743 = vmatprep.subr.mxu0 0.0
    %5744 = vmatpush1.xpose.msra.mxu0 0.0
    %5745 = vmatprep.subr.mxu0 0.0
    %5746 = vmatpush1.xpose.msra.mxu0 0.0
    %5747 = vmatprep.subr.mxu0 0.0
    %5748 = vmatpush1.xpose.msra.mxu0 0.0
    %5749 = vmatprep.subr.mxu0 0.0
    %5750 = vmatpush1.xpose.msra.mxu0 0.0
    %5751 = vmatprep.subr.mxu0 0.0
    %5752 = vmatpush1.xpose.msra.mxu0 0.0
    %5753 = vmatprep.subr.mxu0 0.0
    %5754 = vmatpush1.xpose.msra.mxu0 0.0
    %5755 = vmatprep.subr.mxu0 0.0
    %5756 = vmatpush1.xpose.msra.mxu0 %v5723
    %5757 = vmatprep.subr.mxu0 0.0
    %5758 = vmatpush2.xpose.msra.mxu0 0.0
    %5759 = vmatprep.subr.mxu0 0.0
    %5760 = vmatpush2.xpose.msra.mxu0 0.0
    %5761 = vmatprep.subr.mxu0 0.0
    %5762 = vmatpush2.xpose.msra.mxu0 0.0
    %5763 = vmatprep.subr.mxu0 0.0
    %5764 = vmatpush2.xpose.msra.mxu0 0.0
    %5765 = vmatprep.subr.mxu0 0.0
    %5766 = vmatpush2.xpose.msra.mxu0 0.0
    %5767 = vmatprep.subr.mxu0 0.0
    %5768 = vmatpush2.xpose.msra.mxu0 0.0
    %5769 = vmatprep.subr.mxu0 0.0
    %5770 = vmatpush2.xpose.msra.mxu0 0.0
    %5771 = vmatprep.subr.mxu0 0.0
    %5772 = vmatpush2.xpose.msra.mxu0 0.0
    %5773 = vmatprep.subr.mxu0 0.0
    %5774 = vmatpush2.xpose.msra.mxu0 0.0
    %5775 = vmatprep.subr.mxu0 0.0
    %5776 = vmatpush2.xpose.msra.mxu0 0.0
    %5777 = vmatprep.subr.mxu0 0.0
    %5778 = vmatpush2.xpose.msra.mxu0 0.0
    %5779 = vmatprep.subr.mxu0 0.0
    %5780 = vmatpush2.xpose.msra.mxu0 0.0
    %5781 = vmatprep.subr.mxu0 0.0
    %5782 = vmatpush2.xpose.msra.mxu0 0.0
    %5783 = vmatprep.subr.mxu0 0.0
    %5784 = vmatpush2.xpose.msra.mxu0 0.0
    %5785 = vmatprep.subr.mxu0 0.0
    %5786 = vmatpush2.xpose.msra.mxu0 0.0
    %5787 = vmatprep.subr.mxu0 0.0
    %5788 = vmatpush2.xpose.msra.mxu0 0.0
    %5789 = vmatprep.mubr.f32.mxu0 0.0
    %5790 = vmatmul.mubr.f32.gmra.mxu0 %v5720
    %v5791 = vpop.f32.mrf.mxu0
    %v5792 = vadd.f32 0.0, %v5791
    %v5793 = vpop.f32.mrf.mxu0
    %5794 = vdwg.mxu0
    %v5795 = vmul.f32 %v4652, 0.35355338
    %v5796 = vmul.f32 %v4728, 0.35355338
    %v5797 = vmul.f32 %v4804, 0.35355338
    %v5798 = vmul.f32 %v4880, 0.35355338
    %v5799 = vmul.f32 %v4956, 0.35355338
    %v5800 = vmul.f32 %v5032, 0.35355338
    %v5801 = vmul.f32 %v5108, 0.35355338
    %v5802 = vmul.f32 %v5184, 0.35355338
    %v5803 = vmul.f32 %v5260, 0.35355338
    %v5804 = vmul.f32 %v5336, 0.35355338
    %v5805 = vmul.f32 %v5412, 0.35355338
    %v5806 = vmul.f32 %v5488, 0.35355338
    %v5807 = vmul.f32 %v5564, 0.35355338
    %v5808 = vmul.f32 %v5640, 0.35355338
    %v5809 = vmul.f32 %v5716, 0.35355338
    %v5810 = vmul.f32 %v5792, 0.35355338
    %v5811 = vsel %vm4578, %v5795, -inf
    %5812 = vmax.xlane.f32.xlu0 %v5811
    %v5813 = vpop.xlane.xlu0 %5812
    %v5814 = vsel %vm4578, %v5796, -inf
    %5815 = vmax.xlane.f32.xlu0 %v5814
    %v5816 = vpop.xlane.xlu0 %5815
    %v5817 = vsel %vm4578, %v5797, -inf
    %5818 = vmax.xlane.f32.xlu0 %v5817
    %v5819 = vpop.xlane.xlu0 %5818
    %v5820 = vsel %vm4578, %v5798, -inf
    %5821 = vmax.xlane.f32.xlu0 %v5820
    %v5822 = vpop.xlane.xlu0 %5821
    %v5823 = vsel %vm4578, %v5799, -inf
    %5824 = vmax.xlane.f32.xlu0 %v5823
    %v5825 = vpop.xlane.xlu0 %5824
    %v5826 = vsel %vm4578, %v5800, -inf
    %5827 = vmax.xlane.f32.xlu0 %v5826
    %v5828 = vpop.xlane.xlu0 %5827
    %v5829 = vsel %vm4578, %v5801, -inf
    %5830 = vmax.xlane.f32.xlu0 %v5829
    %v5831 = vpop.xlane.xlu0 %5830
    %v5832 = vsel %vm4578, %v5802, -inf
    %5833 = vmax.xlane.f32.xlu0 %v5832
    %v5834 = vpop.xlane.xlu0 %5833
    %v5835 = vsel %vm4578, %v5803, -inf
    %5836 = vmax.xlane.f32.xlu0 %v5835
    %v5837 = vpop.xlane.xlu0 %5836
    %v5838 = vsel %vm4578, %v5804, -inf
    %5839 = vmax.xlane.f32.xlu0 %v5838
    %v5840 = vpop.xlane.xlu0 %5839
    %v5841 = vsel %vm4578, %v5805, -inf
    %5842 = vmax.xlane.f32.xlu0 %v5841
    %v5843 = vpop.xlane.xlu0 %5842
    %v5844 = vsel %vm4578, %v5806, -inf
    %5845 = vmax.xlane.f32.xlu0 %v5844
    %v5846 = vpop.xlane.xlu0 %5845
    %v5847 = vsel %vm4578, %v5807, -inf
    %5848 = vmax.xlane.f32.xlu0 %v5847
    %v5849 = vpop.xlane.xlu0 %5848
    %v5850 = vsel %vm4578, %v5808, -inf
    %5851 = vmax.xlane.f32.xlu0 %v5850
    %v5852 = vpop.xlane.xlu0 %5851
    %v5853 = vsel %vm4578, %v5809, -inf
    %5854 = vmax.xlane.f32.xlu0 %v5853
    %v5855 = vpop.xlane.xlu0 %5854
    %v5856 = vsel %vm4578, %v5810, -inf
    %5857 = vmax.xlane.f32.xlu0 %v5856
    %v5858 = vpop.xlane.xlu0 %5857
    %v5859 = vsub.f32 %v5795, %v5813
    %v5860 = vsub.f32 %v5796, %v5816
    %v5861 = vsub.f32 %v5797, %v5819
    %v5862 = vsub.f32 %v5798, %v5822
    %v5863 = vsub.f32 %v5799, %v5825
    %v5864 = vsub.f32 %v5800, %v5828
    %v5865 = vsub.f32 %v5801, %v5831
    %v5866 = vsub.f32 %v5802, %v5834
    %v5867 = vsub.f32 %v5803, %v5837
    %v5868 = vsub.f32 %v5804, %v5840
    %v5869 = vsub.f32 %v5805, %v5843
    %v5870 = vsub.f32 %v5806, %v5846
    %v5871 = vsub.f32 %v5807, %v5849
    %v5872 = vsub.f32 %v5808, %v5852
    %v5873 = vsub.f32 %v5809, %v5855
    %v5874 = vsub.f32 %v5810, %v5858
    %v5875 = vmul.f32 %v5859, 1.442695
    %v5876 = vpow.pop %v5875
    %v5877 = vmul.f32 %v5860, 1.442695
    %v5878 = vpow.pop %v5877
    %v5879 = vmul.f32 %v5861, 1.442695
    %v5880 = vpow.pop %v5879
    %v5881 = vmul.f32 %v5862, 1.442695
    %v5882 = vpow.pop %v5881
    %v5883 = vmul.f32 %v5863, 1.442695
    %v5884 = vpow.pop %v5883
    %v5885 = vmul.f32 %v5864, 1.442695
    %v5886 = vpow.pop %v5885
    %v5887 = vmul.f32 %v5865, 1.442695
    %v5888 = vpow.pop %v5887
    %v5889 = vmul.f32 %v5866, 1.442695
    %v5890 = vpow.pop %v5889
    %v5891 = vmul.f32 %v5867, 1.442695
    %v5892 = vpow.pop %v5891
    %v5893 = vmul.f32 %v5868, 1.442695
    %v5894 = vpow.pop %v5893
    %v5895 = vmul.f32 %v5869, 1.442695
    %v5896 = vpow.pop %v5895
    %v5897 = vmul.f32 %v5870, 1.442695
    %v5898 = vpow.pop %v5897
    %v5899 = vmul.f32 %v5871, 1.442695
    %v5900 = vpow.pop %v5899
    %v5901 = vmul.f32 %v5872, 1.442695
    %v5902 = vpow.pop %v5901
    %v5903 = vmul.f32 %v5873, 1.442695
    %v5904 = vpow.pop %v5903
    %v5905 = vmul.f32 %v5874, 1.442695
    %v5906 = vpow.pop %v5905
    %v5907 = vsel %vm4578, %v5876, 0.0
    %5908 = vadd.xlane.f32.xlu0 %v5907
    %v5909 = vpop.xlane.xlu0 %5908
    %v5910 = vsel %vm4578, %v5878, 0.0
    %5911 = vadd.xlane.f32.xlu0 %v5910
    %v5912 = vpop.xlane.xlu0 %5911
    %v5913 = vsel %vm4578, %v5880, 0.0
    %5914 = vadd.xlane.f32.xlu0 %v5913
    %v5915 = vpop.xlane.xlu0 %5914
    %v5916 = vsel %vm4578, %v5882, 0.0
    %5917 = vadd.xlane.f32.xlu0 %v5916
    %v5918 = vpop.xlane.xlu0 %5917
    %v5919 = vsel %vm4578, %v5884, 0.0
    %5920 = vadd.xlane.f32.xlu0 %v5919
    %v5921 = vpop.xlane.xlu0 %5920
    %v5922 = vsel %vm4578, %v5886, 0.0
    %5923 = vadd.xlane.f32.xlu0 %v5922
    %v5924 = vpop.xlane.xlu0 %5923
    %v5925 = vsel %vm4578, %v5888, 0.0
    %5926 = vadd.xlane.f32.xlu0 %v5925
    %v5927 = vpop.xlane.xlu0 %5926
    %v5928 = vsel %vm4578, %v5890, 0.0
    %5929 = vadd.xlane.f32.xlu0 %v5928
    %v5930 = vpop.xlane.xlu0 %5929
    %v5931 = vsel %vm4578, %v5892, 0.0
    %5932 = vadd.xlane.f32.xlu0 %v5931
    %v5933 = vpop.xlane.xlu0 %5932
    %v5934 = vsel %vm4578, %v5894, 0.0
    %5935 = vadd.xlane.f32.xlu0 %v5934
    %v5936 = vpop.xlane.xlu0 %5935
    %v5937 = vsel %vm4578, %v5896, 0.0
    %5938 = vadd.xlane.f32.xlu0 %v5937
    %v5939 = vpop.xlane.xlu0 %5938
    %v5940 = vsel %vm4578, %v5898, 0.0
    %5941 = vadd.xlane.f32.xlu0 %v5940
    %v5942 = vpop.xlane.xlu0 %5941
    %v5943 = vsel %vm4578, %v5900, 0.0
    %5944 = vadd.xlane.f32.xlu0 %v5943
    %v5945 = vpop.xlane.xlu0 %5944
    %v5946 = vsel %vm4578, %v5902, 0.0
    %5947 = vadd.xlane.f32.xlu0 %v5946
    %v5948 = vpop.xlane.xlu0 %5947
    %v5949 = vsel %vm4578, %v5904, 0.0
    %5950 = vadd.xlane.f32.xlu0 %v5949
    %v5951 = vpop.xlane.xlu0 %5950
    %v5952 = vsel %vm4578, %v5906, 0.0
    %5953 = vadd.xlane.f32.xlu0 %v5952
    %v5954 = vpop.xlane.xlu0 %5953
    %v5955 = vrcp.pop %v5909
    %v5956 = vrcp.pop %v5912
    %v5957 = vrcp.pop %v5915
    %v5958 = vrcp.pop %v5918
    %v5959 = vrcp.pop %v5921
    %v5960 = vrcp.pop %v5924
    %v5961 = vrcp.pop %v5927
    %v5962 = vrcp.pop %v5930
    %v5963 = vrcp.pop %v5933
    %v5964 = vrcp.pop %v5936
    %v5965 = vrcp.pop %v5939
    %v5966 = vrcp.pop %v5942
    %v5967 = vrcp.pop %v5945
    %v5968 = vrcp.pop %v5948
    %v5969 = vrcp.pop %v5951
    %v5970 = vrcp.pop %v5954
    %v5971 = vmul.f32 %v5876, %v5955
    %v5972 = vmul.f32 %v5878, %v5956
    %v5973 = vmul.f32 %v5880, %v5957
    %v5974 = vmul.f32 %v5882, %v5958
    %v5975 = vmul.f32 %v5884, %v5959
    %v5976 = vmul.f32 %v5886, %v5960
    %v5977 = vmul.f32 %v5888, %v5961
    %v5978 = vmul.f32 %v5890, %v5962
    %v5979 = vmul.f32 %v5892, %v5963
    %v5980 = vmul.f32 %v5894, %v5964
    %v5981 = vmul.f32 %v5896, %v5965
    %v5982 = vmul.f32 %v5898, %v5966
    %v5983 = vmul.f32 %v5900, %v5967
    %v5984 = vmul.f32 %v5902, %v5968
    %v5985 = vmul.f32 %v5904, %v5969
    %v5986 = vmul.f32 %v5906, %v5970
    %v5988 = vsel %vm4578, %v5971, 0
    %5990 = vmatprep.subr.mxu0 0.0
    %5991 = vmatpush1.msra.mxu0 0.0
    %5992 = vmatprep.subr.mxu0 0.0
    %5993 = vmatpush1.msra.mxu0 0.0
    %5994 = vmatprep.subr.mxu0 0.0
    %5995 = vmatpush1.msra.mxu0 0.0
    %5996 = vmatprep.subr.mxu0 0.0
    %5997 = vmatpush1.msra.mxu0 0.0
    %5998 = vmatprep.subr.mxu0 0.0
    %5999 = vmatpush1.msra.mxu0 0.0
    %6000 = vmatprep.subr.mxu0 0.0
    %6001 = vmatpush1.msra.mxu0 0.0
    %6002 = vmatprep.subr.mxu0 0.0
    %6003 = vmatpush1.msra.mxu0 0.0
    %6004 = vmatprep.subr.mxu0 0.0
    %6005 = vmatpush1.msra.mxu0 0.0
    %6006 = vmatprep.subr.mxu0 0.0
    %6007 = vmatpush1.msra.mxu0 0.0
    %6008 = vmatprep.subr.mxu0 0.0
    %6009 = vmatpush1.msra.mxu0 0.0
    %6010 = vmatprep.subr.mxu0 0.0
    %6011 = vmatpush1.msra.mxu0 0.0
    %6012 = vmatprep.subr.mxu0 0.0
    %6013 = vmatpush1.msra.mxu0 0.0
    %6014 = vmatprep.subr.mxu0 0.0
    %6015 = vmatpush1.msra.mxu0 0.0
    %6016 = vmatprep.subr.mxu0 0.0
    %6017 = vmatpush1.msra.mxu0 0.0
    %6018 = vmatprep.subr.mxu0 0.0
    %6019 = vmatpush1.msra.mxu0 0.0
    %6020 = vmatprep.subr.mxu0 0.0
    %6021 = vmatpush1.msra.mxu0 %v4045
    %6022 = vmatprep.subr.mxu0 0.0
    %6023 = vmatpush2.msra.mxu0 0.0
    %6024 = vmatprep.subr.mxu0 0.0
    %6025 = vmatpush2.msra.mxu0 0.0
    %6026 = vmatprep.subr.mxu0 0.0
    %6027 = vmatpush2.msra.mxu0 0.0
    %6028 = vmatprep.subr.mxu0 0.0
    %6029 = vmatpush2.msra.mxu0 0.0
    %6030 = vmatprep.subr.mxu0 0.0
    %6031 = vmatpush2.msra.mxu0 0.0
    %6032 = vmatprep.subr.mxu0 0.0
    %6033 = vmatpush2.msra.mxu0 0.0
    %6034 = vmatprep.subr.mxu0 0.0
    %6035 = vmatpush2.msra.mxu0 0.0
    %6036 = vmatprep.subr.mxu0 0.0
    %6037 = vmatpush2.msra.mxu0 0.0
    %6038 = vmatprep.subr.mxu0 0.0
    %6039 = vmatpush2.msra.mxu0 0.0
    %6040 = vmatprep.subr.mxu0 0.0
    %6041 = vmatpush2.msra.mxu0 0.0
    %6042 = vmatprep.subr.mxu0 0.0
    %6043 = vmatpush2.msra.mxu0 0.0
    %6044 = vmatprep.subr.mxu0 0.0
    %6045 = vmatpush2.msra.mxu0 0.0
    %6046 = vmatprep.subr.mxu0 0.0
    %6047 = vmatpush2.msra.mxu0 0.0
    %6048 = vmatprep.subr.mxu0 0.0
    %6049 = vmatpush2.msra.mxu0 0.0
    %6050 = vmatprep.subr.mxu0 0.0
    %6051 = vmatpush2.msra.mxu0 0.0
    %6052 = vmatprep.subr.mxu0 0.0
    %6053 = vmatpush2.msra.mxu0 0.0
    %6054 = vmatprep.mubr.f32.mxu0 0.0
    %6055 = vmatmul.mubr.f32.gmra.mxu0 %v5988
    %v6056 = vpop.f32.mrf.mxu0
    %v6057 = vadd.f32 0.0, %v6056
    %v6058 = vpop.f32.mrf.mxu0
    %6059 = vdwg.mxu0
    %v6061 = vsel %vm4578, %v5972, 0
    %6063 = vmatprep.subr.mxu0 0.0
    %6064 = vmatpush1.msra.mxu0 0.0
    %6065 = vmatprep.subr.mxu0 0.0
    %6066 = vmatpush1.msra.mxu0 0.0
    %6067 = vmatprep.subr.mxu0 0.0
    %6068 = vmatpush1.msra.mxu0 0.0
    %6069 = vmatprep.subr.mxu0 0.0
    %6070 = vmatpush1.msra.mxu0 0.0
    %6071 = vmatprep.subr.mxu0 0.0
    %6072 = vmatpush1.msra.mxu0 0.0
    %6073 = vmatprep.subr.mxu0 0.0
    %6074 = vmatpush1.msra.mxu0 0.0
    %6075 = vmatprep.subr.mxu0 0.0
    %6076 = vmatpush1.msra.mxu0 0.0
    %6077 = vmatprep.subr.mxu0 0.0
    %6078 = vmatpush1.msra.mxu0 0.0
    %6079 = vmatprep.subr.mxu0 0.0
    %6080 = vmatpush1.msra.mxu0 0.0
    %6081 = vmatprep.subr.mxu0 0.0
    %6082 = vmatpush1.msra.mxu0 0.0
    %6083 = vmatprep.subr.mxu0 0.0
    %6084 = vmatpush1.msra.mxu0 0.0
    %6085 = vmatprep.subr.mxu0 0.0
    %6086 = vmatpush1.msra.mxu0 0.0
    %6087 = vmatprep.subr.mxu0 0.0
    %6088 = vmatpush1.msra.mxu0 0.0
    %6089 = vmatprep.subr.mxu0 0.0
    %6090 = vmatpush1.msra.mxu0 0.0
    %6091 = vmatprep.subr.mxu0 0.0
    %6092 = vmatpush1.msra.mxu0 0.0
    %6093 = vmatprep.subr.mxu0 0.0
    %6094 = vmatpush1.msra.mxu0 %v4050
    %6095 = vmatprep.subr.mxu0 0.0
    %6096 = vmatpush2.msra.mxu0 0.0
    %6097 = vmatprep.subr.mxu0 0.0
    %6098 = vmatpush2.msra.mxu0 0.0
    %6099 = vmatprep.subr.mxu0 0.0
    %6100 = vmatpush2.msra.mxu0 0.0
    %6101 = vmatprep.subr.mxu0 0.0
    %6102 = vmatpush2.msra.mxu0 0.0
    %6103 = vmatprep.subr.mxu0 0.0
    %6104 = vmatpush2.msra.mxu0 0.0
    %6105 = vmatprep.subr.mxu0 0.0
    %6106 = vmatpush2.msra.mxu0 0.0
    %6107 = vmatprep.subr.mxu0 0.0
    %6108 = vmatpush2.msra.mxu0 0.0
    %6109 = vmatprep.subr.mxu0 0.0
    %6110 = vmatpush2.msra.mxu0 0.0
    %6111 = vmatprep.subr.mxu0 0.0
    %6112 = vmatpush2.msra.mxu0 0.0
    %6113 = vmatprep.subr.mxu0 0.0
    %6114 = vmatpush2.msra.mxu0 0.0
    %6115 = vmatprep.subr.mxu0 0.0
    %6116 = vmatpush2.msra.mxu0 0.0
    %6117 = vmatprep.subr.mxu0 0.0
    %6118 = vmatpush2.msra.mxu0 0.0
    %6119 = vmatprep.subr.mxu0 0.0
    %6120 = vmatpush2.msra.mxu0 0.0
    %6121 = vmatprep.subr.mxu0 0.0
    %6122 = vmatpush2.msra.mxu0 0.0
    %6123 = vmatprep.subr.mxu0 0.0
    %6124 = vmatpush2.msra.mxu0 0.0
    %6125 = vmatprep.subr.mxu0 0.0
    %6126 = vmatpush2.msra.mxu0 0.0
    %6127 = vmatprep.mubr.f32.mxu0 0.0
    %6128 = vmatmul.mubr.f32.gmra.mxu0 %v6061
    %v6129 = vpop.f32.mrf.mxu0
    %v6130 = vadd.f32 0.0, %v6129
    %v6131 = vpop.f32.mrf.mxu0
    %6132 = vdwg.mxu0
    %v6134 = vsel %vm4578, %v5973, 0
    %6136 = vmatprep.subr.mxu0 0.0
    %6137 = vmatpush1.msra.mxu0 0.0
    %6138 = vmatprep.subr.mxu0 0.0
    %6139 = vmatpush1.msra.mxu0 0.0
    %6140 = vmatprep.subr.mxu0 0.0
    %6141 = vmatpush1.msra.mxu0 0.0
    %6142 = vmatprep.subr.mxu0 0.0
    %6143 = vmatpush1.msra.mxu0 0.0
    %6144 = vmatprep.subr.mxu0 0.0
    %6145 = vmatpush1.msra.mxu0 0.0
    %6146 = vmatprep.subr.mxu0 0.0
    %6147 = vmatpush1.msra.mxu0 0.0
    %6148 = vmatprep.subr.mxu0 0.0
    %6149 = vmatpush1.msra.mxu0 0.0
    %6150 = vmatprep.subr.mxu0 0.0
    %6151 = vmatpush1.msra.mxu0 0.0
    %6152 = vmatprep.subr.mxu0 0.0
    %6153 = vmatpush1.msra.mxu0 0.0
    %6154 = vmatprep.subr.mxu0 0.0
    %6155 = vmatpush1.msra.mxu0 0.0
    %6156 = vmatprep.subr.mxu0 0.0
    %6157 = vmatpush1.msra.mxu0 0.0
    %6158 = vmatprep.subr.mxu0 0.0
    %6159 = vmatpush1.msra.mxu0 0.0
    %6160 = vmatprep.subr.mxu0 0.0
    %6161 = vmatpush1.msra.mxu0 0.0
    %6162 = vmatprep.subr.mxu0 0.0
    %6163 = vmatpush1.msra.mxu0 0.0
    %6164 = vmatprep.subr.mxu0 0.0
    %6165 = vmatpush1.msra.mxu0 0.0
    %6166 = vmatprep.subr.mxu0 0.0
    %6167 = vmatpush1.msra.mxu0 %v4120
    %6168 = vmatprep.subr.mxu0 0.0
    %6169 = vmatpush2.msra.mxu0 0.0
    %6170 = vmatprep.subr.mxu0 0.0
    %6171 = vmatpush2.msra.mxu0 0.0
    %6172 = vmatprep.subr.mxu0 0.0
    %6173 = vmatpush2.msra.mxu0 0.0
    %6174 = vmatprep.subr.mxu0 0.0
    %6175 = vmatpush2.msra.mxu0 0.0
    %6176 = vmatprep.subr.mxu0 0.0
    %6177 = vmatpush2.msra.mxu0 0.0
    %6178 = vmatprep.subr.mxu0 0.0
    %6179 = vmatpush2.msra.mxu0 0.0
    %6180 = vmatprep.subr.mxu0 0.0
    %6181 = vmatpush2.msra.mxu0 0.0
    %6182 = vmatprep.subr.mxu0 0.0
    %6183 = vmatpush2.msra.mxu0 0.0
    %6184 = vmatprep.subr.mxu0 0.0
    %6185 = vmatpush2.msra.mxu0 0.0
    %6186 = vmatprep.subr.mxu0 0.0
    %6187 = vmatpush2.msra.mxu0 0.0
    %6188 = vmatprep.subr.mxu0 0.0
    %6189 = vmatpush2.msra.mxu0 0.0
    %6190 = vmatprep.subr.mxu0 0.0
    %6191 = vmatpush2.msra.mxu0 0.0
    %6192 = vmatprep.subr.mxu0 0.0
    %6193 = vmatpush2.msra.mxu0 0.0
    %6194 = vmatprep.subr.mxu0 0.0
    %6195 = vmatpush2.msra.mxu0 0.0
    %6196 = vmatprep.subr.mxu0 0.0
    %6197 = vmatpush2.msra.mxu0 0.0
    %6198 = vmatprep.subr.mxu0 0.0
    %6199 = vmatpush2.msra.mxu0 0.0
    %6200 = vmatprep.mubr.f32.mxu0 0.0
    %6201 = vmatmul.mubr.f32.gmra.mxu0 %v6134
    %v6202 = vpop.f32.mrf.mxu0
    %v6203 = vadd.f32 0.0, %v6202
    %v6204 = vpop.f32.mrf.mxu0
    %6205 = vdwg.mxu0
    %v6207 = vsel %vm4578, %v5974, 0
    %6209 = vmatprep.subr.mxu0 0.0
    %6210 = vmatpush1.msra.mxu0 0.0
    %6211 = vmatprep.subr.mxu0 0.0
    %6212 = vmatpush1.msra.mxu0 0.0
    %6213 = vmatprep.subr.mxu0 0.0
    %6214 = vmatpush1.msra.mxu0 0.0
    %6215 = vmatprep.subr.mxu0 0.0
    %6216 = vmatpush1.msra.mxu0 0.0
    %6217 = vmatprep.subr.mxu0 0.0
    %6218 = vmatpush1.msra.mxu0 0.0
    %6219 = vmatprep.subr.mxu0 0.0
    %6220 = vmatpush1.msra.mxu0 0.0
    %6221 = vmatprep.subr.mxu0 0.0
    %6222 = vmatpush1.msra.mxu0 0.0
    %6223 = vmatprep.subr.mxu0 0.0
    %6224 = vmatpush1.msra.mxu0 0.0
    %6225 = vmatprep.subr.mxu0 0.0
    %6226 = vmatpush1.msra.mxu0 0.0
    %6227 = vmatprep.subr.mxu0 0.0
    %6228 = vmatpush1.msra.mxu0 0.0
    %6229 = vmatprep.subr.mxu0 0.0
    %6230 = vmatpush1.msra.mxu0 0.0
    %6231 = vmatprep.subr.mxu0 0.0
    %6232 = vmatpush1.msra.mxu0 0.0
    %6233 = vmatprep.subr.mxu0 0.0
    %6234 = vmatpush1.msra.mxu0 0.0
    %6235 = vmatprep.subr.mxu0 0.0
    %6236 = vmatpush1.msra.mxu0 0.0
    %6237 = vmatprep.subr.mxu0 0.0
    %6238 = vmatpush1.msra.mxu0 0.0
    %6239 = vmatprep.subr.mxu0 0.0
    %6240 = vmatpush1.msra.mxu0 %v4125
    %6241 = vmatprep.subr.mxu0 0.0
    %6242 = vmatpush2.msra.mxu0 0.0
    %6243 = vmatprep.subr.mxu0 0.0
    %6244 = vmatpush2.msra.mxu0 0.0
    %6245 = vmatprep.subr.mxu0 0.0
    %6246 = vmatpush2.msra.mxu0 0.0
    %6247 = vmatprep.subr.mxu0 0.0
    %6248 = vmatpush2.msra.mxu0 0.0
    %6249 = vmatprep.subr.mxu0 0.0
    %6250 = vmatpush2.msra.mxu0 0.0
    %6251 = vmatprep.subr.mxu0 0.0
    %6252 = vmatpush2.msra.mxu0 0.0
    %6253 = vmatprep.subr.mxu0 0.0
    %6254 = vmatpush2.msra.mxu0 0.0
    %6255 = vmatprep.subr.mxu0 0.0
    %6256 = vmatpush2.msra.mxu0 0.0
    %6257 = vmatprep.subr.mxu0 0.0
    %6258 = vmatpush2.msra.mxu0 0.0
    %6259 = vmatprep.subr.mxu0 0.0
    %6260 = vmatpush2.msra.mxu0 0.0
    %6261 = vmatprep.subr.mxu0 0.0
    %6262 = vmatpush2.msra.mxu0 0.0
    %6263 = vmatprep.subr.mxu0 0.0
    %6264 = vmatpush2.msra.mxu0 0.0
    %6265 = vmatprep.subr.mxu0 0.0
    %6266 = vmatpush2.msra.mxu0 0.0
    %6267 = vmatprep.subr.mxu0 0.0
    %6268 = vmatpush2.msra.mxu0 0.0
    %6269 = vmatprep.subr.mxu0 0.0
    %6270 = vmatpush2.msra.mxu0 0.0
    %6271 = vmatprep.subr.mxu0 0.0
    %6272 = vmatpush2.msra.mxu0 0.0
    %6273 = vmatprep.mubr.f32.mxu0 0.0
    %6274 = vmatmul.mubr.f32.gmra.mxu0 %v6207
    %v6275 = vpop.f32.mrf.mxu0
    %v6276 = vadd.f32 0.0, %v6275
    %v6277 = vpop.f32.mrf.mxu0
    %6278 = vdwg.mxu0
    %v6280 = vsel %vm4578, %v5975, 0
    %6282 = vmatprep.subr.mxu0 0.0
    %6283 = vmatpush1.msra.mxu0 0.0
    %6284 = vmatprep.subr.mxu0 0.0
    %6285 = vmatpush1.msra.mxu0 0.0
    %6286 = vmatprep.subr.mxu0 0.0
    %6287 = vmatpush1.msra.mxu0 0.0
    %6288 = vmatprep.subr.mxu0 0.0
    %6289 = vmatpush1.msra.mxu0 0.0
    %6290 = vmatprep.subr.mxu0 0.0
    %6291 = vmatpush1.msra.mxu0 0.0
    %6292 = vmatprep.subr.mxu0 0.0
    %6293 = vmatpush1.msra.mxu0 0.0
    %6294 = vmatprep.subr.mxu0 0.0
    %6295 = vmatpush1.msra.mxu0 0.0
    %6296 = vmatprep.subr.mxu0 0.0
    %6297 = vmatpush1.msra.mxu0 0.0
    %6298 = vmatprep.subr.mxu0 0.0
    %6299 = vmatpush1.msra.mxu0 0.0
    %6300 = vmatprep.subr.mxu0 0.0
    %6301 = vmatpush1.msra.mxu0 0.0
    %6302 = vmatprep.subr.mxu0 0.0
    %6303 = vmatpush1.msra.mxu0 0.0
    %6304 = vmatprep.subr.mxu0 0.0
    %6305 = vmatpush1.msra.mxu0 0.0
    %6306 = vmatprep.subr.mxu0 0.0
    %6307 = vmatpush1.msra.mxu0 0.0
    %6308 = vmatprep.subr.mxu0 0.0
    %6309 = vmatpush1.msra.mxu0 0.0
    %6310 = vmatprep.subr.mxu0 0.0
    %6311 = vmatpush1.msra.mxu0 0.0
    %6312 = vmatprep.subr.mxu0 0.0
    %6313 = vmatpush1.msra.mxu0 %v4195
    %6314 = vmatprep.subr.mxu0 0.0
    %6315 = vmatpush2.msra.mxu0 0.0
    %6316 = vmatprep.subr.mxu0 0.0
    %6317 = vmatpush2.msra.mxu0 0.0
    %6318 = vmatprep.subr.mxu0 0.0
    %6319 = vmatpush2.msra.mxu0 0.0
    %6320 = vmatprep.subr.mxu0 0.0
    %6321 = vmatpush2.msra.mxu0 0.0
    %6322 = vmatprep.subr.mxu0 0.0
    %6323 = vmatpush2.msra.mxu0 0.0
    %6324 = vmatprep.subr.mxu0 0.0
    %6325 = vmatpush2.msra.mxu0 0.0
    %6326 = vmatprep.subr.mxu0 0.0
    %6327 = vmatpush2.msra.mxu0 0.0
    %6328 = vmatprep.subr.mxu0 0.0
    %6329 = vmatpush2.msra.mxu0 0.0
    %6330 = vmatprep.subr.mxu0 0.0
    %6331 = vmatpush2.msra.mxu0 0.0
    %6332 = vmatprep.subr.mxu0 0.0
    %6333 = vmatpush2.msra.mxu0 0.0
    %6334 = vmatprep.subr.mxu0 0.0
    %6335 = vmatpush2.msra.mxu0 0.0
    %6336 = vmatprep.subr.mxu0 0.0
    %6337 = vmatpush2.msra.mxu0 0.0
    %6338 = vmatprep.subr.mxu0 0.0
    %6339 = vmatpush2.msra.mxu0 0.0
    %6340 = vmatprep.subr.mxu0 0.0
    %6341 = vmatpush2.msra.mxu0 0.0
    %6342 = vmatprep.subr.mxu0 0.0
    %6343 = vmatpush2.msra.mxu0 0.0
    %6344 = vmatprep.subr.mxu0 0.0
    %6345 = vmatpush2.msra.mxu0 0.0
    %6346 = vmatprep.mubr.f32.mxu0 0.0
    %6347 = vmatmul.mubr.f32.gmra.mxu0 %v6280
    %v6348 = vpop.f32.mrf.mxu0
    %v6349 = vadd.f32 0.0, %v6348
    %v6350 = vpop.f32.mrf.mxu0
    %6351 = vdwg.mxu0
    %v6353 = vsel %vm4578, %v5976, 0
    %6355 = vmatprep.subr.mxu0 0.0
    %6356 = vmatpush1.msra.mxu0 0.0
    %6357 = vmatprep.subr.mxu0 0.0
    %6358 = vmatpush1.msra.mxu0 0.0
    %6359 = vmatprep.subr.mxu0 0.0
    %6360 = vmatpush1.msra.mxu0 0.0
    %6361 = vmatprep.subr.mxu0 0.0
    %6362 = vmatpush1.msra.mxu0 0.0
    %6363 = vmatprep.subr.mxu0 0.0
    %6364 = vmatpush1.msra.mxu0 0.0
    %6365 = vmatprep.subr.mxu0 0.0
    %6366 = vmatpush1.msra.mxu0 0.0
    %6367 = vmatprep.subr.mxu0 0.0
    %6368 = vmatpush1.msra.mxu0 0.0
    %6369 = vmatprep.subr.mxu0 0.0
    %6370 = vmatpush1.msra.mxu0 0.0
    %6371 = vmatprep.subr.mxu0 0.0
    %6372 = vmatpush1.msra.mxu0 0.0
    %6373 = vmatprep.subr.mxu0 0.0
    %6374 = vmatpush1.msra.mxu0 0.0
    %6375 = vmatprep.subr.mxu0 0.0
    %6376 = vmatpush1.msra.mxu0 0.0
    %6377 = vmatprep.subr.mxu0 0.0
    %6378 = vmatpush1.msra.mxu0 0.0
    %6379 = vmatprep.subr.mxu0 0.0
    %6380 = vmatpush1.msra.mxu0 0.0
    %6381 = vmatprep.subr.mxu0 0.0
    %6382 = vmatpush1.msra.mxu0 0.0
    %6383 = vmatprep.subr.mxu0 0.0
    %6384 = vmatpush1.msra.mxu0 0.0
    %6385 = vmatprep.subr.mxu0 0.0
    %6386 = vmatpush1.msra.mxu0 %v4200
    %6387 = vmatprep.subr.mxu0 0.0
    %6388 = vmatpush2.msra.mxu0 0.0
    %6389 = vmatprep.subr.mxu0 0.0
    %6390 = vmatpush2.msra.mxu0 0.0
    %6391 = vmatprep.subr.mxu0 0.0
    %6392 = vmatpush2.msra.mxu0 0.0
    %6393 = vmatprep.subr.mxu0 0.0
    %6394 = vmatpush2.msra.mxu0 0.0
    %6395 = vmatprep.subr.mxu0 0.0
    %6396 = vmatpush2.msra.mxu0 0.0
    %6397 = vmatprep.subr.mxu0 0.0
    %6398 = vmatpush2.msra.mxu0 0.0
    %6399 = vmatprep.subr.mxu0 0.0
    %6400 = vmatpush2.msra.mxu0 0.0
    %6401 = vmatprep.subr.mxu0 0.0
    %6402 = vmatpush2.msra.mxu0 0.0
    %6403 = vmatprep.subr.mxu0 0.0
    %6404 = vmatpush2.msra.mxu0 0.0
    %6405 = vmatprep.subr.mxu0 0.0
    %6406 = vmatpush2.msra.mxu0 0.0
    %6407 = vmatprep.subr.mxu0 0.0
    %6408 = vmatpush2.msra.mxu0 0.0
    %6409 = vmatprep.subr.mxu0 0.0
    %6410 = vmatpush2.msra.mxu0 0.0
    %6411 = vmatprep.subr.mxu0 0.0
    %6412 = vmatpush2.msra.mxu0 0.0
    %6413 = vmatprep.subr.mxu0 0.0
    %6414 = vmatpush2.msra.mxu0 0.0
    %6415 = vmatprep.subr.mxu0 0.0
    %6416 = vmatpush2.msra.mxu0 0.0
    %6417 = vmatprep.subr.mxu0 0.0
    %6418 = vmatpush2.msra.mxu0 0.0
    %6419 = vmatprep.mubr.f32.mxu0 0.0
    %6420 = vmatmul.mubr.f32.gmra.mxu0 %v6353
    %v6421 = vpop.f32.mrf.mxu0
    %v6422 = vadd.f32 0.0, %v6421
    %v6423 = vpop.f32.mrf.mxu0
    %6424 = vdwg.mxu0
    %v6426 = vsel %vm4578, %v5977, 0
    %6428 = vmatprep.subr.mxu0 0.0
    %6429 = vmatpush1.msra.mxu0 0.0
    %6430 = vmatprep.subr.mxu0 0.0
    %6431 = vmatpush1.msra.mxu0 0.0
    %6432 = vmatprep.subr.mxu0 0.0
    %6433 = vmatpush1.msra.mxu0 0.0
    %6434 = vmatprep.subr.mxu0 0.0
    %6435 = vmatpush1.msra.mxu0 0.0
    %6436 = vmatprep.subr.mxu0 0.0
    %6437 = vmatpush1.msra.mxu0 0.0
    %6438 = vmatprep.subr.mxu0 0.0
    %6439 = vmatpush1.msra.mxu0 0.0
    %6440 = vmatprep.subr.mxu0 0.0
    %6441 = vmatpush1.msra.mxu0 0.0
    %6442 = vmatprep.subr.mxu0 0.0
    %6443 = vmatpush1.msra.mxu0 0.0
    %6444 = vmatprep.subr.mxu0 0.0
    %6445 = vmatpush1.msra.mxu0 0.0
    %6446 = vmatprep.subr.mxu0 0.0
    %6447 = vmatpush1.msra.mxu0 0.0
    %6448 = vmatprep.subr.mxu0 0.0
    %6449 = vmatpush1.msra.mxu0 0.0
    %6450 = vmatprep.subr.mxu0 0.0
    %6451 = vmatpush1.msra.mxu0 0.0
    %6452 = vmatprep.subr.mxu0 0.0
    %6453 = vmatpush1.msra.mxu0 0.0
    %6454 = vmatprep.subr.mxu0 0.0
    %6455 = vmatpush1.msra.mxu0 0.0
    %6456 = vmatprep.subr.mxu0 0.0
    %6457 = vmatpush1.msra.mxu0 0.0
    %6458 = vmatprep.subr.mxu0 0.0
    %6459 = vmatpush1.msra.mxu0 %v4270
    %6460 = vmatprep.subr.mxu0 0.0
    %6461 = vmatpush2.msra.mxu0 0.0
    %6462 = vmatprep.subr.mxu0 0.0
    %6463 = vmatpush2.msra.mxu0 0.0
    %6464 = vmatprep.subr.mxu0 0.0
    %6465 = vmatpush2.msra.mxu0 0.0
    %6466 = vmatprep.subr.mxu0 0.0
    %6467 = vmatpush2.msra.mxu0 0.0
    %6468 = vmatprep.subr.mxu0 0.0
    %6469 = vmatpush2.msra.mxu0 0.0
    %6470 = vmatprep.subr.mxu0 0.0
    %6471 = vmatpush2.msra.mxu0 0.0
    %6472 = vmatprep.subr.mxu0 0.0
    %6473 = vmatpush2.msra.mxu0 0.0
    %6474 = vmatprep.subr.mxu0 0.0
    %6475 = vmatpush2.msra.mxu0 0.0
    %6476 = vmatprep.subr.mxu0 0.0
    %6477 = vmatpush2.msra.mxu0 0.0
    %6478 = vmatprep.subr.mxu0 0.0
    %6479 = vmatpush2.msra.mxu0 0.0
    %6480 = vmatprep.subr.mxu0 0.0
    %6481 = vmatpush2.msra.mxu0 0.0
    %6482 = vmatprep.subr.mxu0 0.0
    %6483 = vmatpush2.msra.mxu0 0.0
    %6484 = vmatprep.subr.mxu0 0.0
    %6485 = vmatpush2.msra.mxu0 0.0
    %6486 = vmatprep.subr.mxu0 0.0
    %6487 = vmatpush2.msra.mxu0 0.0
    %6488 = vmatprep.subr.mxu0 0.0
    %6489 = vmatpush2.msra.mxu0 0.0
    %6490 = vmatprep.subr.mxu0 0.0
    %6491 = vmatpush2.msra.mxu0 0.0
    %6492 = vmatprep.mubr.f32.mxu0 0.0
    %6493 = vmatmul.mubr.f32.gmra.mxu0 %v6426
    %v6494 = vpop.f32.mrf.mxu0
    %v6495 = vadd.f32 0.0, %v6494
    %v6496 = vpop.f32.mrf.mxu0
    %6497 = vdwg.mxu0
    %v6499 = vsel %vm4578, %v5978, 0
    %6501 = vmatprep.subr.mxu0 0.0
    %6502 = vmatpush1.msra.mxu0 0.0
    %6503 = vmatprep.subr.mxu0 0.0
    %6504 = vmatpush1.msra.mxu0 0.0
    %6505 = vmatprep.subr.mxu0 0.0
    %6506 = vmatpush1.msra.mxu0 0.0
    %6507 = vmatprep.subr.mxu0 0.0
    %6508 = vmatpush1.msra.mxu0 0.0
    %6509 = vmatprep.subr.mxu0 0.0
    %6510 = vmatpush1.msra.mxu0 0.0
    %6511 = vmatprep.subr.mxu0 0.0
    %6512 = vmatpush1.msra.mxu0 0.0
    %6513 = vmatprep.subr.mxu0 0.0
    %6514 = vmatpush1.msra.mxu0 0.0
    %6515 = vmatprep.subr.mxu0 0.0
    %6516 = vmatpush1.msra.mxu0 0.0
    %6517 = vmatprep.subr.mxu0 0.0
    %6518 = vmatpush1.msra.mxu0 0.0
    %6519 = vmatprep.subr.mxu0 0.0
    %6520 = vmatpush1.msra.mxu0 0.0
    %6521 = vmatprep.subr.mxu0 0.0
    %6522 = vmatpush1.msra.mxu0 0.0
    %6523 = vmatprep.subr.mxu0 0.0
    %6524 = vmatpush1.msra.mxu0 0.0
    %6525 = vmatprep.subr.mxu0 0.0
    %6526 = vmatpush1.msra.mxu0 0.0
    %6527 = vmatprep.subr.mxu0 0.0
    %6528 = vmatpush1.msra.mxu0 0.0
    %6529 = vmatprep.subr.mxu0 0.0
    %6530 = vmatpush1.msra.mxu0 0.0
    %6531 = vmatprep.subr.mxu0 0.0
    %6532 = vmatpush1.msra.mxu0 %v4275
    %6533 = vmatprep.subr.mxu0 0.0
    %6534 = vmatpush2.msra.mxu0 0.0
    %6535 = vmatprep.subr.mxu0 0.0
    %6536 = vmatpush2.msra.mxu0 0.0
    %6537 = vmatprep.subr.mxu0 0.0
    %6538 = vmatpush2.msra.mxu0 0.0
    %6539 = vmatprep.subr.mxu0 0.0
    %6540 = vmatpush2.msra.mxu0 0.0
    %6541 = vmatprep.subr.mxu0 0.0
    %6542 = vmatpush2.msra.mxu0 0.0
    %6543 = vmatprep.subr.mxu0 0.0
    %6544 = vmatpush2.msra.mxu0 0.0
    %6545 = vmatprep.subr.mxu0 0.0
    %6546 = vmatpush2.msra.mxu0 0.0
    %6547 = vmatprep.subr.mxu0 0.0
    %6548 = vmatpush2.msra.mxu0 0.0
    %6549 = vmatprep.subr.mxu0 0.0
    %6550 = vmatpush2.msra.mxu0 0.0
    %6551 = vmatprep.subr.mxu0 0.0
    %6552 = vmatpush2.msra.mxu0 0.0
    %6553 = vmatprep.subr.mxu0 0.0
    %6554 = vmatpush2.msra.mxu0 0.0
    %6555 = vmatprep.subr.mxu0 0.0
    %6556 = vmatpush2.msra.mxu0 0.0
    %6557 = vmatprep.subr.mxu0 0.0
    %6558 = vmatpush2.msra.mxu0 0.0
    %6559 = vmatprep.subr.mxu0 0.0
    %6560 = vmatpush2.msra.mxu0 0.0
    %6561 = vmatprep.subr.mxu0 0.0
    %6562 = vmatpush2.msra.mxu0 0.0
    %6563 = vmatprep.subr.mxu0 0.0
    %6564 = vmatpush2.msra.mxu0 0.0
    %6565 = vmatprep.mubr.f32.mxu0 0.0
    %6566 = vmatmul.mubr.f32.gmra.mxu0 %v6499
    %v6567 = vpop.f32.mrf.mxu0
    %v6568 = vadd.f32 0.0, %v6567
    %v6569 = vpop.f32.mrf.mxu0
    %6570 = vdwg.mxu0
    %v6572 = vsel %vm4578, %v5979, 0
    %6574 = vmatprep.subr.mxu0 0.0
    %6575 = vmatpush1.msra.mxu0 0.0
    %6576 = vmatprep.subr.mxu0 0.0
    %6577 = vmatpush1.msra.mxu0 0.0
    %6578 = vmatprep.subr.mxu0 0.0
    %6579 = vmatpush1.msra.mxu0 0.0
    %6580 = vmatprep.subr.mxu0 0.0
    %6581 = vmatpush1.msra.mxu0 0.0
    %6582 = vmatprep.subr.mxu0 0.0
    %6583 = vmatpush1.msra.mxu0 0.0
    %6584 = vmatprep.subr.mxu0 0.0
    %6585 = vmatpush1.msra.mxu0 0.0
    %6586 = vmatprep.subr.mxu0 0.0
    %6587 = vmatpush1.msra.mxu0 0.0
    %6588 = vmatprep.subr.mxu0 0.0
    %6589 = vmatpush1.msra.mxu0 0.0
    %6590 = vmatprep.subr.mxu0 0.0
    %6591 = vmatpush1.msra.mxu0 0.0
    %6592 = vmatprep.subr.mxu0 0.0
    %6593 = vmatpush1.msra.mxu0 0.0
    %6594 = vmatprep.subr.mxu0 0.0
    %6595 = vmatpush1.msra.mxu0 0.0
    %6596 = vmatprep.subr.mxu0 0.0
    %6597 = vmatpush1.msra.mxu0 0.0
    %6598 = vmatprep.subr.mxu0 0.0
    %6599 = vmatpush1.msra.mxu0 0.0
    %6600 = vmatprep.subr.mxu0 0.0
    %6601 = vmatpush1.msra.mxu0 0.0
    %6602 = vmatprep.subr.mxu0 0.0
    %6603 = vmatpush1.msra.mxu0 0.0
    %6604 = vmatprep.subr.mxu0 0.0
    %6605 = vmatpush1.msra.mxu0 %v4345
    %6606 = vmatprep.subr.mxu0 0.0
    %6607 = vmatpush2.msra.mxu0 0.0
    %6608 = vmatprep.subr.mxu0 0.0
    %6609 = vmatpush2.msra.mxu0 0.0
    %6610 = vmatprep.subr.mxu0 0.0
    %6611 = vmatpush2.msra.mxu0 0.0
    %6612 = vmatprep.subr.mxu0 0.0
    %6613 = vmatpush2.msra.mxu0 0.0
    %6614 = vmatprep.subr.mxu0 0.0
    %6615 = vmatpush2.msra.mxu0 0.0
    %6616 = vmatprep.subr.mxu0 0.0
    %6617 = vmatpush2.msra.mxu0 0.0
    %6618 = vmatprep.subr.mxu0 0.0
    %6619 = vmatpush2.msra.mxu0 0.0
    %6620 = vmatprep.subr.mxu0 0.0
    %6621 = vmatpush2.msra.mxu0 0.0
    %6622 = vmatprep.subr.mxu0 0.0
    %6623 = vmatpush2.msra.mxu0 0.0
    %6624 = vmatprep.subr.mxu0 0.0
    %6625 = vmatpush2.msra.mxu0 0.0
    %6626 = vmatprep.subr.mxu0 0.0
    %6627 = vmatpush2.msra.mxu0 0.0
    %6628 = vmatprep.subr.mxu0 0.0
    %6629 = vmatpush2.msra.mxu0 0.0
    %6630 = vmatprep.subr.mxu0 0.0
    %6631 = vmatpush2.msra.mxu0 0.0
    %6632 = vmatprep.subr.mxu0 0.0
    %6633 = vmatpush2.msra.mxu0 0.0
    %6634 = vmatprep.subr.mxu0 0.0
    %6635 = vmatpush2.msra.mxu0 0.0
    %6636 = vmatprep.subr.mxu0 0.0
    %6637 = vmatpush2.msra.mxu0 0.0
    %6638 = vmatprep.mubr.f32.mxu0 0.0
    %6639 = vmatmul.mubr.f32.gmra.mxu0 %v6572
    %v6640 = vpop.f32.mrf.mxu0
    %v6641 = vadd.f32 0.0, %v6640
    %v6642 = vpop.f32.mrf.mxu0
    %6643 = vdwg.mxu0
    %v6645 = vsel %vm4578, %v5980, 0
    %6647 = vmatprep.subr.mxu0 0.0
    %6648 = vmatpush1.msra.mxu0 0.0
    %6649 = vmatprep.subr.mxu0 0.0
    %6650 = vmatpush1.msra.mxu0 0.0
    %6651 = vmatprep.subr.mxu0 0.0
    %6652 = vmatpush1.msra.mxu0 0.0
    %6653 = vmatprep.subr.mxu0 0.0
    %6654 = vmatpush1.msra.mxu0 0.0
    %6655 = vmatprep.subr.mxu0 0.0
    %6656 = vmatpush1.msra.mxu0 0.0
    %6657 = vmatprep.subr.mxu0 0.0
    %6658 = vmatpush1.msra.mxu0 0.0
    %6659 = vmatprep.subr.mxu0 0.0
    %6660 = vmatpush1.msra.mxu0 0.0
    %6661 = vmatprep.subr.mxu0 0.0
    %6662 = vmatpush1.msra.mxu0 0.0
    %6663 = vmatprep.subr.mxu0 0.0
    %6664 = vmatpush1.msra.mxu0 0.0
    %6665 = vmatprep.subr.mxu0 0.0
    %6666 = vmatpush1.msra.mxu0 0.0
    %6667 = vmatprep.subr.mxu0 0.0
    %6668 = vmatpush1.msra.mxu0 0.0
    %6669 = vmatprep.subr.mxu0 0.0
    %6670 = vmatpush1.msra.mxu0 0.0
    %6671 = vmatprep.subr.mxu0 0.0
    %6672 = vmatpush1.msra.mxu0 0.0
    %6673 = vmatprep.subr.mxu0 0.0
    %6674 = vmatpush1.msra.mxu0 0.0
    %6675 = vmatprep.subr.mxu0 0.0
    %6676 = vmatpush1.msra.mxu0 0.0
    %6677 = vmatprep.subr.mxu0 0.0
    %6678 = vmatpush1.msra.mxu0 %v4350
    %6679 = vmatprep.subr.mxu0 0.0
    %6680 = vmatpush2.msra.mxu0 0.0
    %6681 = vmatprep.subr.mxu0 0.0
    %6682 = vmatpush2.msra.mxu0 0.0
    %6683 = vmatprep.subr.mxu0 0.0
    %6684 = vmatpush2.msra.mxu0 0.0
    %6685 = vmatprep.subr.mxu0 0.0
    %6686 = vmatpush2.msra.mxu0 0.0
    %6687 = vmatprep.subr.mxu0 0.0
    %6688 = vmatpush2.msra.mxu0 0.0
    %6689 = vmatprep.subr.mxu0 0.0
    %6690 = vmatpush2.msra.mxu0 0.0
    %6691 = vmatprep.subr.mxu0 0.0
    %6692 = vmatpush2.msra.mxu0 0.0
    %6693 = vmatprep.subr.mxu0 0.0
    %6694 = vmatpush2.msra.mxu0 0.0
    %6695 = vmatprep.subr.mxu0 0.0
    %6696 = vmatpush2.msra.mxu0 0.0
    %6697 = vmatprep.subr.mxu0 0.0
    %6698 = vmatpush2.msra.mxu0 0.0
    %6699 = vmatprep.subr.mxu0 0.0
    %6700 = vmatpush2.msra.mxu0 0.0
    %6701 = vmatprep.subr.mxu0 0.0
    %6702 = vmatpush2.msra.mxu0 0.0
    %6703 = vmatprep.subr.mxu0 0.0
    %6704 = vmatpush2.msra.mxu0 0.0
    %6705 = vmatprep.subr.mxu0 0.0
    %6706 = vmatpush2.msra.mxu0 0.0
    %6707 = vmatprep.subr.mxu0 0.0
    %6708 = vmatpush2.msra.mxu0 0.0
    %6709 = vmatprep.subr.mxu0 0.0
    %6710 = vmatpush2.msra.mxu0 0.0
    %6711 = vmatprep.mubr.f32.mxu0 0.0
    %6712 = vmatmul.mubr.f32.gmra.mxu0 %v6645
    %v6713 = vpop.f32.mrf.mxu0
    %v6714 = vadd.f32 0.0, %v6713
    %v6715 = vpop.f32.mrf.mxu0
    %6716 = vdwg.mxu0
    %v6718 = vsel %vm4578, %v5981, 0
    %6720 = vmatprep.subr.mxu0 0.0
    %6721 = vmatpush1.msra.mxu0 0.0
    %6722 = vmatprep.subr.mxu0 0.0
    %6723 = vmatpush1.msra.mxu0 0.0
    %6724 = vmatprep.subr.mxu0 0.0
    %6725 = vmatpush1.msra.mxu0 0.0
    %6726 = vmatprep.subr.mxu0 0.0
    %6727 = vmatpush1.msra.mxu0 0.0
    %6728 = vmatprep.subr.mxu0 0.0
    %6729 = vmatpush1.msra.mxu0 0.0
    %6730 = vmatprep.subr.mxu0 0.0
    %6731 = vmatpush1.msra.mxu0 0.0
    %6732 = vmatprep.subr.mxu0 0.0
    %6733 = vmatpush1.msra.mxu0 0.0
    %6734 = vmatprep.subr.mxu0 0.0
    %6735 = vmatpush1.msra.mxu0 0.0
    %6736 = vmatprep.subr.mxu0 0.0
    %6737 = vmatpush1.msra.mxu0 0.0
    %6738 = vmatprep.subr.mxu0 0.0
    %6739 = vmatpush1.msra.mxu0 0.0
    %6740 = vmatprep.subr.mxu0 0.0
    %6741 = vmatpush1.msra.mxu0 0.0
    %6742 = vmatprep.subr.mxu0 0.0
    %6743 = vmatpush1.msra.mxu0 0.0
    %6744 = vmatprep.subr.mxu0 0.0
    %6745 = vmatpush1.msra.mxu0 0.0
    %6746 = vmatprep.subr.mxu0 0.0
    %6747 = vmatpush1.msra.mxu0 0.0
    %6748 = vmatprep.subr.mxu0 0.0
    %6749 = vmatpush1.msra.mxu0 0.0
    %6750 = vmatprep.subr.mxu0 0.0
    %6751 = vmatpush1.msra.mxu0 %v4420
    %6752 = vmatprep.subr.mxu0 0.0
    %6753 = vmatpush2.msra.mxu0 0.0
    %6754 = vmatprep.subr.mxu0 0.0
    %6755 = vmatpush2.msra.mxu0 0.0
    %6756 = vmatprep.subr.mxu0 0.0
    %6757 = vmatpush2.msra.mxu0 0.0
    %6758 = vmatprep.subr.mxu0 0.0
    %6759 = vmatpush2.msra.mxu0 0.0
    %6760 = vmatprep.subr.mxu0 0.0
    %6761 = vmatpush2.msra.mxu0 0.0
    %6762 = vmatprep.subr.mxu0 0.0
    %6763 = vmatpush2.msra.mxu0 0.0
    %6764 = vmatprep.subr.mxu0 0.0
    %6765 = vmatpush2.msra.mxu0 0.0
    %6766 = vmatprep.subr.mxu0 0.0
    %6767 = vmatpush2.msra.mxu0 0.0
    %6768 = vmatprep.subr.mxu0 0.0
    %6769 = vmatpush2.msra.mxu0 0.0
    %6770 = vmatprep.subr.mxu0 0.0
    %6771 = vmatpush2.msra.mxu0 0.0
    %6772 = vmatprep.subr.mxu0 0.0
    %6773 = vmatpush2.msra.mxu0 0.0
    %6774 = vmatprep.subr.mxu0 0.0
    %6775 = vmatpush2.msra.mxu0 0.0
    %6776 = vmatprep.subr.mxu0 0.0
    %6777 = vmatpush2.msra.mxu0 0.0
    %6778 = vmatprep.subr.mxu0 0.0
    %6779 = vmatpush2.msra.mxu0 0.0
    %6780 = vmatprep.subr.mxu0 0.0
    %6781 = vmatpush2.msra.mxu0 0.0
    %6782 = vmatprep.subr.mxu0 0.0
    %6783 = vmatpush2.msra.mxu0 0.0
    %6784 = vmatprep.mubr.f32.mxu0 0.0
    %6785 = vmatmul.mubr.f32.gmra.mxu0 %v6718
    %v6786 = vpop.f32.mrf.mxu0
    %v6787 = vadd.f32 0.0, %v6786
    %v6788 = vpop.f32.mrf.mxu0
    %6789 = vdwg.mxu0
    %v6791 = vsel %vm4578, %v5982, 0
    %6793 = vmatprep.subr.mxu0 0.0
    %6794 = vmatpush1.msra.mxu0 0.0
    %6795 = vmatprep.subr.mxu0 0.0
    %6796 = vmatpush1.msra.mxu0 0.0
    %6797 = vmatprep.subr.mxu0 0.0
    %6798 = vmatpush1.msra.mxu0 0.0
    %6799 = vmatprep.subr.mxu0 0.0
    %6800 = vmatpush1.msra.mxu0 0.0
    %6801 = vmatprep.subr.mxu0 0.0
    %6802 = vmatpush1.msra.mxu0 0.0
    %6803 = vmatprep.subr.mxu0 0.0
    %6804 = vmatpush1.msra.mxu0 0.0
    %6805 = vmatprep.subr.mxu0 0.0
    %6806 = vmatpush1.msra.mxu0 0.0
    %6807 = vmatprep.subr.mxu0 0.0
    %6808 = vmatpush1.msra.mxu0 0.0
    %6809 = vmatprep.subr.mxu0 0.0
    %6810 = vmatpush1.msra.mxu0 0.0
    %6811 = vmatprep.subr.mxu0 0.0
    %6812 = vmatpush1.msra.mxu0 0.0
    %6813 = vmatprep.subr.mxu0 0.0
    %6814 = vmatpush1.msra.mxu0 0.0
    %6815 = vmatprep.subr.mxu0 0.0
    %6816 = vmatpush1.msra.mxu0 0.0
    %6817 = vmatprep.subr.mxu0 0.0
    %6818 = vmatpush1.msra.mxu0 0.0
    %6819 = vmatprep.subr.mxu0 0.0
    %6820 = vmatpush1.msra.mxu0 0.0
    %6821 = vmatprep.subr.mxu0 0.0
    %6822 = vmatpush1.msra.mxu0 0.0
    %6823 = vmatprep.subr.mxu0 0.0
    %6824 = vmatpush1.msra.mxu0 %v4425
    %6825 = vmatprep.subr.mxu0 0.0
    %6826 = vmatpush2.msra.mxu0 0.0
    %6827 = vmatprep.subr.mxu0 0.0
    %6828 = vmatpush2.msra.mxu0 0.0
    %6829 = vmatprep.subr.mxu0 0.0
    %6830 = vmatpush2.msra.mxu0 0.0
    %6831 = vmatprep.subr.mxu0 0.0
    %6832 = vmatpush2.msra.mxu0 0.0
    %6833 = vmatprep.subr.mxu0 0.0
    %6834 = vmatpush2.msra.mxu0 0.0
    %6835 = vmatprep.subr.mxu0 0.0
    %6836 = vmatpush2.msra.mxu0 0.0
    %6837 = vmatprep.subr.mxu0 0.0
    %6838 = vmatpush2.msra.mxu0 0.0
    %6839 = vmatprep.subr.mxu0 0.0
    %6840 = vmatpush2.msra.mxu0 0.0
    %6841 = vmatprep.subr.mxu0 0.0
    %6842 = vmatpush2.msra.mxu0 0.0
    %6843 = vmatprep.subr.mxu0 0.0
    %6844 = vmatpush2.msra.mxu0 0.0
    %6845 = vmatprep.subr.mxu0 0.0
    %6846 = vmatpush2.msra.mxu0 0.0
    %6847 = vmatprep.subr.mxu0 0.0
    %6848 = vmatpush2.msra.mxu0 0.0
    %6849 = vmatprep.subr.mxu0 0.0
    %6850 = vmatpush2.msra.mxu0 0.0
    %6851 = vmatprep.subr.mxu0 0.0
    %6852 = vmatpush2.msra.mxu0 0.0
    %6853 = vmatprep.subr.mxu0 0.0
    %6854 = vmatpush2.msra.mxu0 0.0
    %6855 = vmatprep.subr.mxu0 0.0
    %6856 = vmatpush2.msra.mxu0 0.0
    %6857 = vmatprep.mubr.f32.mxu0 0.0
    %6858 = vmatmul.mubr.f32.gmra.mxu0 %v6791
    %v6859 = vpop.f32.mrf.mxu0
    %v6860 = vadd.f32 0.0, %v6859
    %v6861 = vpop.f32.mrf.mxu0
    %6862 = vdwg.mxu0
    %v6864 = vsel %vm4578, %v5983, 0
    %6866 = vmatprep.subr.mxu0 0.0
    %6867 = vmatpush1.msra.mxu0 0.0
    %6868 = vmatprep.subr.mxu0 0.0
    %6869 = vmatpush1.msra.mxu0 0.0
    %6870 = vmatprep.subr.mxu0 0.0
    %6871 = vmatpush1.msra.mxu0 0.0
    %6872 = vmatprep.subr.mxu0 0.0
    %6873 = vmatpush1.msra.mxu0 0.0
    %6874 = vmatprep.subr.mxu0 0.0
    %6875 = vmatpush1.msra.mxu0 0.0
    %6876 = vmatprep.subr.mxu0 0.0
    %6877 = vmatpush1.msra.mxu0 0.0
    %6878 = vmatprep.subr.mxu0 0.0
    %6879 = vmatpush1.msra.mxu0 0.0
    %6880 = vmatprep.subr.mxu0 0.0
    %6881 = vmatpush1.msra.mxu0 0.0
    %6882 = vmatprep.subr.mxu0 0.0
    %6883 = vmatpush1.msra.mxu0 0.0
    %6884 = vmatprep.subr.mxu0 0.0
    %6885 = vmatpush1.msra.mxu0 0.0
    %6886 = vmatprep.subr.mxu0 0.0
    %6887 = vmatpush1.msra.mxu0 0.0
    %6888 = vmatprep.subr.mxu0 0.0
    %6889 = vmatpush1.msra.mxu0 0.0
    %6890 = vmatprep.subr.mxu0 0.0
    %6891 = vmatpush1.msra.mxu0 0.0
    %6892 = vmatprep.subr.mxu0 0.0
    %6893 = vmatpush1.msra.mxu0 0.0
    %6894 = vmatprep.subr.mxu0 0.0
    %6895 = vmatpush1.msra.mxu0 0.0
    %6896 = vmatprep.subr.mxu0 0.0
    %6897 = vmatpush1.msra.mxu0 %v4495
    %6898 = vmatprep.subr.mxu0 0.0
    %6899 = vmatpush2.msra.mxu0 0.0
    %6900 = vmatprep.subr.mxu0 0.0
    %6901 = vmatpush2.msra.mxu0 0.0
    %6902 = vmatprep.subr.mxu0 0.0
    %6903 = vmatpush2.msra.mxu0 0.0
    %6904 = vmatprep.subr.mxu0 0.0
    %6905 = vmatpush2.msra.mxu0 0.0
    %6906 = vmatprep.subr.mxu0 0.0
    %6907 = vmatpush2.msra.mxu0 0.0
    %6908 = vmatprep.subr.mxu0 0.0
    %6909 = vmatpush2.msra.mxu0 0.0
    %6910 = vmatprep.subr.mxu0 0.0
    %6911 = vmatpush2.msra.mxu0 0.0
    %6912 = vmatprep.subr.mxu0 0.0
    %6913 = vmatpush2.msra.mxu0 0.0
    %6914 = vmatprep.subr.mxu0 0.0
    %6915 = vmatpush2.msra.mxu0 0.0
    %6916 = vmatprep.subr.mxu0 0.0
    %6917 = vmatpush2.msra.mxu0 0.0
    %6918 = vmatprep.subr.mxu0 0.0
    %6919 = vmatpush2.msra.mxu0 0.0
    %6920 = vmatprep.subr.mxu0 0.0
    %6921 = vmatpush2.msra.mxu0 0.0
    %6922 = vmatprep.subr.mxu0 0.0
    %6923 = vmatpush2.msra.mxu0 0.0
    %6924 = vmatprep.subr.mxu0 0.0
    %6925 = vmatpush2.msra.mxu0 0.0
    %6926 = vmatprep.subr.mxu0 0.0
    %6927 = vmatpush2.msra.mxu0 0.0
    %6928 = vmatprep.subr.mxu0 0.0
    %6929 = vmatpush2.msra.mxu0 0.0
    %6930 = vmatprep.mubr.f32.mxu0 0.0
    %6931 = vmatmul.mubr.f32.gmra.mxu0 %v6864
    %v6932 = vpop.f32.mrf.mxu0
    %v6933 = vadd.f32 0.0, %v6932
    %v6934 = vpop.f32.mrf.mxu0
    %6935 = vdwg.mxu0
    %v6937 = vsel %vm4578, %v5984, 0
    %6939 = vmatprep.subr.mxu0 0.0
    %6940 = vmatpush1.msra.mxu0 0.0
    %6941 = vmatprep.subr.mxu0 0.0
    %6942 = vmatpush1.msra.mxu0 0.0
    %6943 = vmatprep.subr.mxu0 0.0
    %6944 = vmatpush1.msra.mxu0 0.0
    %6945 = vmatprep.subr.mxu0 0.0
    %6946 = vmatpush1.msra.mxu0 0.0
    %6947 = vmatprep.subr.mxu0 0.0
    %6948 = vmatpush1.msra.mxu0 0.0
    %6949 = vmatprep.subr.mxu0 0.0
    %6950 = vmatpush1.msra.mxu0 0.0
    %6951 = vmatprep.subr.mxu0 0.0
    %6952 = vmatpush1.msra.mxu0 0.0
    %6953 = vmatprep.subr.mxu0 0.0
    %6954 = vmatpush1.msra.mxu0 0.0
    %6955 = vmatprep.subr.mxu0 0.0
    %6956 = vmatpush1.msra.mxu0 0.0
    %6957 = vmatprep.subr.mxu0 0.0
    %6958 = vmatpush1.msra.mxu0 0.0
    %6959 = vmatprep.subr.mxu0 0.0
    %6960 = vmatpush1.msra.mxu0 0.0
    %6961 = vmatprep.subr.mxu0 0.0
    %6962 = vmatpush1.msra.mxu0 0.0
    %6963 = vmatprep.subr.mxu0 0.0
    %6964 = vmatpush1.msra.mxu0 0.0
    %6965 = vmatprep.subr.mxu0 0.0
    %6966 = vmatpush1.msra.mxu0 0.0
    %6967 = vmatprep.subr.mxu0 0.0
    %6968 = vmatpush1.msra.mxu0 0.0
    %6969 = vmatprep.subr.mxu0 0.0
    %6970 = vmatpush1.msra.mxu0 %v4500
    %6971 = vmatprep.subr.mxu0 0.0
    %6972 = vmatpush2.msra.mxu0 0.0
    %6973 = vmatprep.subr.mxu0 0.0
    %6974 = vmatpush2.msra.mxu0 0.0
    %6975 = vmatprep.subr.mxu0 0.0
    %6976 = vmatpush2.msra.mxu0 0.0
    %6977 = vmatprep.subr.mxu0 0.0
    %6978 = vmatpush2.msra.mxu0 0.0
    %6979 = vmatprep.subr.mxu0 0.0
    %6980 = vmatpush2.msra.mxu0 0.0
    %6981 = vmatprep.subr.mxu0 0.0
    %6982 = vmatpush2.msra.mxu0 0.0
    %6983 = vmatprep.subr.mxu0 0.0
    %6984 = vmatpush2.msra.mxu0 0.0
    %6985 = vmatprep.subr.mxu0 0.0
    %6986 = vmatpush2.msra.mxu0 0.0
    %6987 = vmatprep.subr.mxu0 0.0
    %6988 = vmatpush2.msra.mxu0 0.0
    %6989 = vmatprep.subr.mxu0 0.0
    %6990 = vmatpush2.msra.mxu0 0.0
    %6991 = vmatprep.subr.mxu0 0.0
    %6992 = vmatpush2.msra.mxu0 0.0
    %6993 = vmatprep.subr.mxu0 0.0
    %6994 = vmatpush2.msra.mxu0 0.0
    %6995 = vmatprep.subr.mxu0 0.0
    %6996 = vmatpush2.msra.mxu0 0.0
    %6997 = vmatprep.subr.mxu0 0.0
    %6998 = vmatpush2.msra.mxu0 0.0
    %6999 = vmatprep.subr.mxu0 0.0
    %7000 = vmatpush2.msra.mxu0 0.0
    %7001 = vmatprep.subr.mxu0 0.0
    %7002 = vmatpush2.msra.mxu0 0.0
    %7003 = vmatprep.mubr.f32.mxu0 0.0
    %7004 = vmatmul.mubr.f32.gmra.mxu0 %v6937
    %v7005 = vpop.f32.mrf.mxu0
    %v7006 = vadd.f32 0.0, %v7005
    %v7007 = vpop.f32.mrf.mxu0
    %7008 = vdwg.mxu0
    %v7010 = vsel %vm4578, %v5985, 0
    %7012 = vmatprep.subr.mxu0 0.0
    %7013 = vmatpush1.msra.mxu0 0.0
    %7014 = vmatprep.subr.mxu0 0.0
    %7015 = vmatpush1.msra.mxu0 0.0
    %7016 = vmatprep.subr.mxu0 0.0
    %7017 = vmatpush1.msra.mxu0 0.0
    %7018 = vmatprep.subr.mxu0 0.0
    %7019 = vmatpush1.msra.mxu0 0.0
    %7020 = vmatprep.subr.mxu0 0.0
    %7021 = vmatpush1.msra.mxu0 0.0
    %7022 = vmatprep.subr.mxu0 0.0
    %7023 = vmatpush1.msra.mxu0 0.0
    %7024 = vmatprep.subr.mxu0 0.0
    %7025 = vmatpush1.msra.mxu0 0.0
    %7026 = vmatprep.subr.mxu0 0.0
    %7027 = vmatpush1.msra.mxu0 0.0
    %7028 = vmatprep.subr.mxu0 0.0
    %7029 = vmatpush1.msra.mxu0 0.0
    %7030 = vmatprep.subr.mxu0 0.0
    %7031 = vmatpush1.msra.mxu0 0.0
    %7032 = vmatprep.subr.mxu0 0.0
    %7033 = vmatpush1.msra.mxu0 0.0
    %7034 = vmatprep.subr.mxu0 0.0
    %7035 = vmatpush1.msra.mxu0 0.0
    %7036 = vmatprep.subr.mxu0 0.0
    %7037 = vmatpush1.msra.mxu0 0.0
    %7038 = vmatprep.subr.mxu0 0.0
    %7039 = vmatpush1.msra.mxu0 0.0
    %7040 = vmatprep.subr.mxu0 0.0
    %7041 = vmatpush1.msra.mxu0 0.0
    %7042 = vmatprep.subr.mxu0 0.0
    %7043 = vmatpush1.msra.mxu0 %v4570
    %7044 = vmatprep.subr.mxu0 0.0
    %7045 = vmatpush2.msra.mxu0 0.0
    %7046 = vmatprep.subr.mxu0 0.0
    %7047 = vmatpush2.msra.mxu0 0.0
    %7048 = vmatprep.subr.mxu0 0.0
    %7049 = vmatpush2.msra.mxu0 0.0
    %7050 = vmatprep.subr.mxu0 0.0
    %7051 = vmatpush2.msra.mxu0 0.0
    %7052 = vmatprep.subr.mxu0 0.0
    %7053 = vmatpush2.msra.mxu0 0.0
    %7054 = vmatprep.subr.mxu0 0.0
    %7055 = vmatpush2.msra.mxu0 0.0
    %7056 = vmatprep.subr.mxu0 0.0
    %7057 = vmatpush2.msra.mxu0 0.0
    %7058 = vmatprep.subr.mxu0 0.0
    %7059 = vmatpush2.msra.mxu0 0.0
    %7060 = vmatprep.subr.mxu0 0.0
    %7061 = vmatpush2.msra.mxu0 0.0
    %7062 = vmatprep.subr.mxu0 0.0
    %7063 = vmatpush2.msra.mxu0 0.0
    %7064 = vmatprep.subr.mxu0 0.0
    %7065 = vmatpush2.msra.mxu0 0.0
    %7066 = vmatprep.subr.mxu0 0.0
    %7067 = vmatpush2.msra.mxu0 0.0
    %7068 = vmatprep.subr.mxu0 0.0
    %7069 = vmatpush2.msra.mxu0 0.0
    %7070 = vmatprep.subr.mxu0 0.0
    %7071 = vmatpush2.msra.mxu0 0.0
    %7072 = vmatprep.subr.mxu0 0.0
    %7073 = vmatpush2.msra.mxu0 0.0
    %7074 = vmatprep.subr.mxu0 0.0
    %7075 = vmatpush2.msra.mxu0 0.0
    %7076 = vmatprep.mubr.f32.mxu0 0.0
    %7077 = vmatmul.mubr.f32.gmra.mxu0 %v7010
    %v7078 = vpop.f32.mrf.mxu0
    %v7079 = vadd.f32 0.0, %v7078
    %v7080 = vpop.f32.mrf.mxu0
    %7081 = vdwg.mxu0
    %v7083 = vsel %vm4578, %v5986, 0
    %7085 = vmatprep.subr.mxu0 0.0
    %7086 = vmatpush1.msra.mxu0 0.0
    %7087 = vmatprep.subr.mxu0 0.0
    %7088 = vmatpush1.msra.mxu0 0.0
    %7089 = vmatprep.subr.mxu0 0.0
    %7090 = vmatpush1.msra.mxu0 0.0
    %7091 = vmatprep.subr.mxu0 0.0
    %7092 = vmatpush1.msra.mxu0 0.0
    %7093 = vmatprep.subr.mxu0 0.0
    %7094 = vmatpush1.msra.mxu0 0.0
    %7095 = vmatprep.subr.mxu0 0.0
    %7096 = vmatpush1.msra.mxu0 0.0
    %7097 = vmatprep.subr.mxu0 0.0
    %7098 = vmatpush1.msra.mxu0 0.0
    %7099 = vmatprep.subr.mxu0 0.0
    %7100 = vmatpush1.msra.mxu0 0.0
    %7101 = vmatprep.subr.mxu0 0.0
    %7102 = vmatpush1.msra.mxu0 0.0
    %7103 = vmatprep.subr.mxu0 0.0
    %7104 = vmatpush1.msra.mxu0 0.0
    %7105 = vmatprep.subr.mxu0 0.0
    %7106 = vmatpush1.msra.mxu0 0.0
    %7107 = vmatprep.subr.mxu0 0.0
    %7108 = vmatpush1.msra.mxu0 0.0
    %7109 = vmatprep.subr.mxu0 0.0
    %7110 = vmatpush1.msra.mxu0 0.0
    %7111 = vmatprep.subr.mxu0 0.0
    %7112 = vmatpush1.msra.mxu0 0.0
    %7113 = vmatprep.subr.mxu0 0.0
    %7114 = vmatpush1.msra.mxu0 0.0
    %7115 = vmatprep.subr.mxu0 0.0
    %7116 = vmatpush1.msra.mxu0 %v4575
    %7117 = vmatprep.subr.mxu0 0.0
    %7118 = vmatpush2.msra.mxu0 0.0
    %7119 = vmatprep.subr.mxu0 0.0
    %7120 = vmatpush2.msra.mxu0 0.0
    %7121 = vmatprep.subr.mxu0 0.0
    %7122 = vmatpush2.msra.mxu0 0.0
    %7123 = vmatprep.subr.mxu0 0.0
    %7124 = vmatpush2.msra.mxu0 0.0
    %7125 = vmatprep.subr.mxu0 0.0
    %7126 = vmatpush2.msra.mxu0 0.0
    %7127 = vmatprep.subr.mxu0 0.0
    %7128 = vmatpush2.msra.mxu0 0.0
    %7129 = vmatprep.subr.mxu0 0.0
    %7130 = vmatpush2.msra.mxu0 0.0
    %7131 = vmatprep.subr.mxu0 0.0
    %7132 = vmatpush2.msra.mxu0 0.0
    %7133 = vmatprep.subr.mxu0 0.0
    %7134 = vmatpush2.msra.mxu0 0.0
    %7135 = vmatprep.subr.mxu0 0.0
    %7136 = vmatpush2.msra.mxu0 0.0
    %7137 = vmatprep.subr.mxu0 0.0
    %7138 = vmatpush2.msra.mxu0 0.0
    %7139 = vmatprep.subr.mxu0 0.0
    %7140 = vmatpush2.msra.mxu0 0.0
    %7141 = vmatprep.subr.mxu0 0.0
    %7142 = vmatpush2.msra.mxu0 0.0
    %7143 = vmatprep.subr.mxu0 0.0
    %7144 = vmatpush2.msra.mxu0 0.0
    %7145 = vmatprep.subr.mxu0 0.0
    %7146 = vmatpush2.msra.mxu0 0.0
    %7147 = vmatprep.subr.mxu0 0.0
    %7148 = vmatpush2.msra.mxu0 0.0
    %7149 = vmatprep.mubr.f32.mxu0 0.0
    %7150 = vmatmul.mubr.f32.gmra.mxu0 %v7083
    %v7151 = vpop.f32.mrf.mxu0
    %v7152 = vadd.f32 0.0, %v7151
    %v7153 = vpop.f32.mrf.mxu0
    %7154 = vdwg.mxu0
    %v7155 = vsel %vm4578, %v6057, 0.0
    %v7156 = vrot.slane %v7155, 4
    %v7157 = vadd.f32 %v7155, %v7156
    %v7158 = vrot.slane %v7157, 2
    %v7159 = vadd.f32 %v7157, %v7158
    %v7160 = vrot.slane %v7159, 1
    %v7161 = vadd.f32 %v7159, %v7160
    %v7162 = vsel %vm4578, %v6130, 0.0
    %v7163 = vrot.slane %v7162, 4
    %v7164 = vadd.f32 %v7162, %v7163
    %v7165 = vrot.slane %v7164, 2
    %v7166 = vadd.f32 %v7164, %v7165
    %v7167 = vrot.slane %v7166, 1
    %v7168 = vadd.f32 %v7166, %v7167
    %v7169 = vsel %vm4578, %v6203, 0.0
    %v7170 = vrot.slane %v7169, 4
    %v7171 = vadd.f32 %v7169, %v7170
    %v7172 = vrot.slane %v7171, 2
    %v7173 = vadd.f32 %v7171, %v7172
    %v7174 = vrot.slane %v7173, 1
    %v7175 = vadd.f32 %v7173, %v7174
    %v7176 = vsel %vm4578, %v6276, 0.0
    %v7177 = vrot.slane %v7176, 4
    %v7178 = vadd.f32 %v7176, %v7177
    %v7179 = vrot.slane %v7178, 2
    %v7180 = vadd.f32 %v7178, %v7179
    %v7181 = vrot.slane %v7180, 1
    %v7182 = vadd.f32 %v7180, %v7181
    %v7183 = vsel %vm4578, %v6349, 0.0
    %v7184 = vrot.slane %v7183, 4
    %v7185 = vadd.f32 %v7183, %v7184
    %v7186 = vrot.slane %v7185, 2
    %v7187 = vadd.f32 %v7185, %v7186
    %v7188 = vrot.slane %v7187, 1
    %v7189 = vadd.f32 %v7187, %v7188
    %v7190 = vsel %vm4578, %v6422, 0.0
    %v7191 = vrot.slane %v7190, 4
    %v7192 = vadd.f32 %v7190, %v7191
    %v7193 = vrot.slane %v7192, 2
    %v7194 = vadd.f32 %v7192, %v7193
    %v7195 = vrot.slane %v7194, 1
    %v7196 = vadd.f32 %v7194, %v7195
    %v7197 = vsel %vm4578, %v6495, 0.0
    %v7198 = vrot.slane %v7197, 4
    %v7199 = vadd.f32 %v7197, %v7198
    %v7200 = vrot.slane %v7199, 2
    %v7201 = vadd.f32 %v7199, %v7200
    %v7202 = vrot.slane %v7201, 1
    %v7203 = vadd.f32 %v7201, %v7202
    %v7204 = vsel %vm4578, %v6568, 0.0
    %v7205 = vrot.slane %v7204, 4
    %v7206 = vadd.f32 %v7204, %v7205
    %v7207 = vrot.slane %v7206, 2
    %v7208 = vadd.f32 %v7206, %v7207
    %v7209 = vrot.slane %v7208, 1
    %v7210 = vadd.f32 %v7208, %v7209
    %v7211 = vsel %vm4578, %v6641, 0.0
    %v7212 = vrot.slane %v7211, 4
    %v7213 = vadd.f32 %v7211, %v7212
    %v7214 = vrot.slane %v7213, 2
    %v7215 = vadd.f32 %v7213, %v7214
    %v7216 = vrot.slane %v7215, 1
    %v7217 = vadd.f32 %v7215, %v7216
    %v7218 = vsel %vm4578, %v6714, 0.0
    %v7219 = vrot.slane %v7218, 4
    %v7220 = vadd.f32 %v7218, %v7219
    %v7221 = vrot.slane %v7220, 2
    %v7222 = vadd.f32 %v7220, %v7221
    %v7223 = vrot.slane %v7222, 1
    %v7224 = vadd.f32 %v7222, %v7223
    %v7225 = vsel %vm4578, %v6787, 0.0
    %v7226 = vrot.slane %v7225, 4
    %v7227 = vadd.f32 %v7225, %v7226
    %v7228 = vrot.slane %v7227, 2
    %v7229 = vadd.f32 %v7227, %v7228
    %v7230 = vrot.slane %v7229, 1
    %v7231 = vadd.f32 %v7229, %v7230
    %v7232 = vsel %vm4578, %v6860, 0.0
    %v7233 = vrot.slane %v7232, 4
    %v7234 = vadd.f32 %v7232, %v7233
    %v7235 = vrot.slane %v7234, 2
    %v7236 = vadd.f32 %v7234, %v7235
    %v7237 = vrot.slane %v7236, 1
    %v7238 = vadd.f32 %v7236, %v7237
    %v7239 = vsel %vm4578, %v6933, 0.0
    %v7240 = vrot.slane %v7239, 4
    %v7241 = vadd.f32 %v7239, %v7240
    %v7242 = vrot.slane %v7241, 2
    %v7243 = vadd.f32 %v7241, %v7242
    %v7244 = vrot.slane %v7243, 1
    %v7245 = vadd.f32 %v7243, %v7244
    %v7246 = vsel %vm4578, %v7006, 0.0
    %v7247 = vrot.slane %v7246, 4
    %v7248 = vadd.f32 %v7246, %v7247
    %v7249 = vrot.slane %v7248, 2
    %v7250 = vadd.f32 %v7248, %v7249
    %v7251 = vrot.slane %v7250, 1
    %v7252 = vadd.f32 %v7250, %v7251
    %v7253 = vsel %vm4578, %v7079, 0.0
    %v7254 = vrot.slane %v7253, 4
    %v7255 = vadd.f32 %v7253, %v7254
    %v7256 = vrot.slane %v7255, 2
    %v7257 = vadd.f32 %v7255, %v7256
    %v7258 = vrot.slane %v7257, 1
    %v7259 = vadd.f32 %v7257, %v7258
    %v7260 = vsel %vm4578, %v7152, 0.0
    %v7261 = vrot.slane %v7260, 4
    %v7262 = vadd.f32 %v7260, %v7261
    %v7263 = vrot.slane %v7262, 2
    %v7264 = vadd.f32 %v7262, %v7263
    %v7265 = vrot.slane %v7264, 1
    %v7266 = vadd.f32 %v7264, %v7265
    %v7267 = vrcp.pop 8.0
    %v7268 = vmul.f32 %v7161, %v7267
    %v7269 = vmul.f32 %v7168, %v7267
    %v7270 = vmul.f32 %v7175, %v7267
    %v7271 = vmul.f32 %v7182, %v7267
    %v7272 = vmul.f32 %v7189, %v7267
    %v7273 = vmul.f32 %v7196, %v7267
    %v7274 = vmul.f32 %v7203, %v7267
    %v7275 = vmul.f32 %v7210, %v7267
    %v7276 = vmul.f32 %v7217, %v7267
    %v7277 = vmul.f32 %v7224, %v7267
    %v7278 = vmul.f32 %v7231, %v7267
    %v7279 = vmul.f32 %v7238, %v7267
    %v7280 = vmul.f32 %v7245, %v7267
    %v7281 = vmul.f32 %v7252, %v7267
    %v7282 = vmul.f32 %v7259, %v7267
    %v7283 = vmul.f32 %v7266, %v7267
    %v7284 = vld [vmem:[%s9] sm:$0xff]
    %v7285 = vld [vmem:[%s9 + $0x8] sm:$0xff]
    %v7286 = vld [vmem:[%s9 + $0x10] sm:$0xff]
    %v7287 = vld [vmem:[%s9 + $0x18] sm:$0xff]
    %v7288 = vld [vmem:[%s9 + $0x20] sm:$0xff]
    %v7289 = vld [vmem:[%s9 + $0x28] sm:$0xff]
    %v7290 = vld [vmem:[%s9 + $0x30] sm:$0xff]
    %v7291 = vld [vmem:[%s9 + $0x38] sm:$0xff]
    %v7294 = vsel %vm350, %v7269, %v7268
    %v7295 = vsel %vm4578, %v7294, 0
    %7297 = vmatprep.subr.mxu0 0.0
    %7298 = vmatpush1.msra.mxu0 0.0
    %7299 = vmatprep.subr.mxu0 0.0
    %7300 = vmatpush1.msra.mxu0 0.0
    %7301 = vmatprep.subr.mxu0 0.0
    %7302 = vmatpush1.msra.mxu0 0.0
    %7303 = vmatprep.subr.mxu0 0.0
    %7304 = vmatpush1.msra.mxu0 0.0
    %7305 = vmatprep.subr.mxu0 0.0
    %7306 = vmatpush1.msra.mxu0 0.0
    %7307 = vmatprep.subr.mxu0 0.0
    %7308 = vmatpush1.msra.mxu0 0.0
    %7309 = vmatprep.subr.mxu0 0.0
    %7310 = vmatpush1.msra.mxu0 0.0
    %7311 = vmatprep.subr.mxu0 0.0
    %7312 = vmatpush1.msra.mxu0 0.0
    %7313 = vmatprep.subr.mxu0 0.0
    %7314 = vmatpush1.msra.mxu0 0.0
    %7315 = vmatprep.subr.mxu0 0.0
    %7316 = vmatpush1.msra.mxu0 0.0
    %7317 = vmatprep.subr.mxu0 0.0
    %7318 = vmatpush1.msra.mxu0 0.0
    %7319 = vmatprep.subr.mxu0 0.0
    %7320 = vmatpush1.msra.mxu0 0.0
    %7321 = vmatprep.subr.mxu0 0.0
    %7322 = vmatpush1.msra.mxu0 0.0
    %7323 = vmatprep.subr.mxu0 0.0
    %7324 = vmatpush1.msra.mxu0 0.0
    %7325 = vmatprep.subr.mxu0 0.0
    %7326 = vmatpush1.msra.mxu0 0.0
    %7327 = vmatprep.subr.mxu0 0.0
    %7328 = vmatpush1.msra.mxu0 %v7284
    %7329 = vmatprep.subr.mxu0 0.0
    %7330 = vmatpush2.msra.mxu0 0.0
    %7331 = vmatprep.subr.mxu0 0.0
    %7332 = vmatpush2.msra.mxu0 0.0
    %7333 = vmatprep.subr.mxu0 0.0
    %7334 = vmatpush2.msra.mxu0 0.0
    %7335 = vmatprep.subr.mxu0 0.0
    %7336 = vmatpush2.msra.mxu0 0.0
    %7337 = vmatprep.subr.mxu0 0.0
    %7338 = vmatpush2.msra.mxu0 0.0
    %7339 = vmatprep.subr.mxu0 0.0
    %7340 = vmatpush2.msra.mxu0 0.0
    %7341 = vmatprep.subr.mxu0 0.0
    %7342 = vmatpush2.msra.mxu0 0.0
    %7343 = vmatprep.subr.mxu0 0.0
    %7344 = vmatpush2.msra.mxu0 0.0
    %7345 = vmatprep.subr.mxu0 0.0
    %7346 = vmatpush2.msra.mxu0 0.0
    %7347 = vmatprep.subr.mxu0 0.0
    %7348 = vmatpush2.msra.mxu0 0.0
    %7349 = vmatprep.subr.mxu0 0.0
    %7350 = vmatpush2.msra.mxu0 0.0
    %7351 = vmatprep.subr.mxu0 0.0
    %7352 = vmatpush2.msra.mxu0 0.0
    %7353 = vmatprep.subr.mxu0 0.0
    %7354 = vmatpush2.msra.mxu0 0.0
    %7355 = vmatprep.subr.mxu0 0.0
    %7356 = vmatpush2.msra.mxu0 0.0
    %7357 = vmatprep.subr.mxu0 0.0
    %7358 = vmatpush2.msra.mxu0 0.0
    %7359 = vmatprep.subr.mxu0 0.0
    %7360 = vmatpush2.msra.mxu0 0.0
    %7361 = vmatprep.mubr.f32.mxu0 0.0
    %7362 = vmatmul.mubr.f32.gmra.mxu0 %v7295
    %v7363 = vpop.f32.mrf.mxu0
    %v7364 = vadd.f32 0.0, %v7363
    %v7365 = vpop.f32.mrf.mxu0
    %7366 = vdwg.mxu0
    %v7369 = vsel %vm350, %v7271, %v7270
    %v7370 = vsel %vm4578, %v7369, 0
    %7372 = vmatprep.subr.mxu0 0.0
    %7373 = vmatpush1.msra.mxu0 0.0
    %7374 = vmatprep.subr.mxu0 0.0
    %7375 = vmatpush1.msra.mxu0 0.0
    %7376 = vmatprep.subr.mxu0 0.0
    %7377 = vmatpush1.msra.mxu0 0.0
    %7378 = vmatprep.subr.mxu0 0.0
    %7379 = vmatpush1.msra.mxu0 0.0
    %7380 = vmatprep.subr.mxu0 0.0
    %7381 = vmatpush1.msra.mxu0 0.0
    %7382 = vmatprep.subr.mxu0 0.0
    %7383 = vmatpush1.msra.mxu0 0.0
    %7384 = vmatprep.subr.mxu0 0.0
    %7385 = vmatpush1.msra.mxu0 0.0
    %7386 = vmatprep.subr.mxu0 0.0
    %7387 = vmatpush1.msra.mxu0 0.0
    %7388 = vmatprep.subr.mxu0 0.0
    %7389 = vmatpush1.msra.mxu0 0.0
    %7390 = vmatprep.subr.mxu0 0.0
    %7391 = vmatpush1.msra.mxu0 0.0
    %7392 = vmatprep.subr.mxu0 0.0
    %7393 = vmatpush1.msra.mxu0 0.0
    %7394 = vmatprep.subr.mxu0 0.0
    %7395 = vmatpush1.msra.mxu0 0.0
    %7396 = vmatprep.subr.mxu0 0.0
    %7397 = vmatpush1.msra.mxu0 0.0
    %7398 = vmatprep.subr.mxu0 0.0
    %7399 = vmatpush1.msra.mxu0 0.0
    %7400 = vmatprep.subr.mxu0 0.0
    %7401 = vmatpush1.msra.mxu0 0.0
    %7402 = vmatprep.subr.mxu0 0.0
    %7403 = vmatpush1.msra.mxu0 %v7285
    %7404 = vmatprep.subr.mxu0 0.0
    %7405 = vmatpush2.msra.mxu0 0.0
    %7406 = vmatprep.subr.mxu0 0.0
    %7407 = vmatpush2.msra.mxu0 0.0
    %7408 = vmatprep.subr.mxu0 0.0
    %7409 = vmatpush2.msra.mxu0 0.0
    %7410 = vmatprep.subr.mxu0 0.0
    %7411 = vmatpush2.msra.mxu0 0.0
    %7412 = vmatprep.subr.mxu0 0.0
    %7413 = vmatpush2.msra.mxu0 0.0
    %7414 = vmatprep.subr.mxu0 0.0
    %7415 = vmatpush2.msra.mxu0 0.0
    %7416 = vmatprep.subr.mxu0 0.0
    %7417 = vmatpush2.msra.mxu0 0.0
    %7418 = vmatprep.subr.mxu0 0.0
    %7419 = vmatpush2.msra.mxu0 0.0
    %7420 = vmatprep.subr.mxu0 0.0
    %7421 = vmatpush2.msra.mxu0 0.0
    %7422 = vmatprep.subr.mxu0 0.0
    %7423 = vmatpush2.msra.mxu0 0.0
    %7424 = vmatprep.subr.mxu0 0.0
    %7425 = vmatpush2.msra.mxu0 0.0
    %7426 = vmatprep.subr.mxu0 0.0
    %7427 = vmatpush2.msra.mxu0 0.0
    %7428 = vmatprep.subr.mxu0 0.0
    %7429 = vmatpush2.msra.mxu0 0.0
    %7430 = vmatprep.subr.mxu0 0.0
    %7431 = vmatpush2.msra.mxu0 0.0
    %7432 = vmatprep.subr.mxu0 0.0
    %7433 = vmatpush2.msra.mxu0 0.0
    %7434 = vmatprep.subr.mxu0 0.0
    %7435 = vmatpush2.msra.mxu0 0.0
    %7436 = vmatprep.mubr.f32.mxu0 0.0
    %7437 = vmatmul.mubr.f32.gmra.mxu0 %v7370
    %v7438 = vpop.f32.mrf.mxu0
    %v7439 = vadd.f32 0.0, %v7438
    %v7440 = vpop.f32.mrf.mxu0
    %7441 = vdwg.mxu0
    %v7444 = vsel %vm350, %v7273, %v7272
    %v7445 = vsel %vm4578, %v7444, 0
    %7447 = vmatprep.subr.mxu0 0.0
    %7448 = vmatpush1.msra.mxu0 0.0
    %7449 = vmatprep.subr.mxu0 0.0
    %7450 = vmatpush1.msra.mxu0 0.0
    %7451 = vmatprep.subr.mxu0 0.0
    %7452 = vmatpush1.msra.mxu0 0.0
    %7453 = vmatprep.subr.mxu0 0.0
    %7454 = vmatpush1.msra.mxu0 0.0
    %7455 = vmatprep.subr.mxu0 0.0
    %7456 = vmatpush1.msra.mxu0 0.0
    %7457 = vmatprep.subr.mxu0 0.0
    %7458 = vmatpush1.msra.mxu0 0.0
    %7459 = vmatprep.subr.mxu0 0.0
    %7460 = vmatpush1.msra.mxu0 0.0
    %7461 = vmatprep.subr.mxu0 0.0
    %7462 = vmatpush1.msra.mxu0 0.0
    %7463 = vmatprep.subr.mxu0 0.0
    %7464 = vmatpush1.msra.mxu0 0.0
    %7465 = vmatprep.subr.mxu0 0.0
    %7466 = vmatpush1.msra.mxu0 0.0
    %7467 = vmatprep.subr.mxu0 0.0
    %7468 = vmatpush1.msra.mxu0 0.0
    %7469 = vmatprep.subr.mxu0 0.0
    %7470 = vmatpush1.msra.mxu0 0.0
    %7471 = vmatprep.subr.mxu0 0.0
    %7472 = vmatpush1.msra.mxu0 0.0
    %7473 = vmatprep.subr.mxu0 0.0
    %7474 = vmatpush1.msra.mxu0 0.0
    %7475 = vmatprep.subr.mxu0 0.0
    %7476 = vmatpush1.msra.mxu0 0.0
    %7477 = vmatprep.subr.mxu0 0.0
    %7478 = vmatpush1.msra.mxu0 %v7286
    %7479 = vmatprep.subr.mxu0 0.0
    %7480 = vmatpush2.msra.mxu0 0.0
    %7481 = vmatprep.subr.mxu0 0.0
    %7482 = vmatpush2.msra.mxu0 0.0
    %7483 = vmatprep.subr.mxu0 0.0
    %7484 = vmatpush2.msra.mxu0 0.0
    %7485 = vmatprep.subr.mxu0 0.0
    %7486 = vmatpush2.msra.mxu0 0.0
    %7487 = vmatprep.subr.mxu0 0.0
    %7488 = vmatpush2.msra.mxu0 0.0
    %7489 = vmatprep.subr.mxu0 0.0
    %7490 = vmatpush2.msra.mxu0 0.0
    %7491 = vmatprep.subr.mxu0 0.0
    %7492 = vmatpush2.msra.mxu0 0.0
    %7493 = vmatprep.subr.mxu0 0.0
    %7494 = vmatpush2.msra.mxu0 0.0
    %7495 = vmatprep.subr.mxu0 0.0
    %7496 = vmatpush2.msra.mxu0 0.0
    %7497 = vmatprep.subr.mxu0 0.0
    %7498 = vmatpush2.msra.mxu0 0.0
    %7499 = vmatprep.subr.mxu0 0.0
    %7500 = vmatpush2.msra.mxu0 0.0
    %7501 = vmatprep.subr.mxu0 0.0
    %7502 = vmatpush2.msra.mxu0 0.0
    %7503 = vmatprep.subr.mxu0 0.0
    %7504 = vmatpush2.msra.mxu0 0.0
    %7505 = vmatprep.subr.mxu0 0.0
    %7506 = vmatpush2.msra.mxu0 0.0
    %7507 = vmatprep.subr.mxu0 0.0
    %7508 = vmatpush2.msra.mxu0 0.0
    %7509 = vmatprep.subr.mxu0 0.0
    %7510 = vmatpush2.msra.mxu0 0.0
    %7511 = vmatprep.mubr.f32.mxu0 0.0
    %7512 = vmatmul.mubr.f32.gmra.mxu0 %v7445
    %v7513 = vpop.f32.mrf.mxu0
    %v7514 = vadd.f32 0.0, %v7513
    %v7515 = vpop.f32.mrf.mxu0
    %7516 = vdwg.mxu0
    %v7519 = vsel %vm350, %v7275, %v7274
    %v7520 = vsel %vm4578, %v7519, 0
    %7522 = vmatprep.subr.mxu0 0.0
    %7523 = vmatpush1.msra.mxu0 0.0
    %7524 = vmatprep.subr.mxu0 0.0
    %7525 = vmatpush1.msra.mxu0 0.0
    %7526 = vmatprep.subr.mxu0 0.0
    %7527 = vmatpush1.msra.mxu0 0.0
    %7528 = vmatprep.subr.mxu0 0.0
    %7529 = vmatpush1.msra.mxu0 0.0
    %7530 = vmatprep.subr.mxu0 0.0
    %7531 = vmatpush1.msra.mxu0 0.0
    %7532 = vmatprep.subr.mxu0 0.0
    %7533 = vmatpush1.msra.mxu0 0.0
    %7534 = vmatprep.subr.mxu0 0.0
    %7535 = vmatpush1.msra.mxu0 0.0
    %7536 = vmatprep.subr.mxu0 0.0
    %7537 = vmatpush1.msra.mxu0 0.0
    %7538 = vmatprep.subr.mxu0 0.0
    %7539 = vmatpush1.msra.mxu0 0.0
    %7540 = vmatprep.subr.mxu0 0.0
    %7541 = vmatpush1.msra.mxu0 0.0
    %7542 = vmatprep.subr.mxu0 0.0
    %7543 = vmatpush1.msra.mxu0 0.0
    %7544 = vmatprep.subr.mxu0 0.0
    %7545 = vmatpush1.msra.mxu0 0.0
    %7546 = vmatprep.subr.mxu0 0.0
    %7547 = vmatpush1.msra.mxu0 0.0
    %7548 = vmatprep.subr.mxu0 0.0
    %7549 = vmatpush1.msra.mxu0 0.0
    %7550 = vmatprep.subr.mxu0 0.0
    %7551 = vmatpush1.msra.mxu0 0.0
    %7552 = vmatprep.subr.mxu0 0.0
    %7553 = vmatpush1.msra.mxu0 %v7287
    %7554 = vmatprep.subr.mxu0 0.0
    %7555 = vmatpush2.msra.mxu0 0.0
    %7556 = vmatprep.subr.mxu0 0.0
    %7557 = vmatpush2.msra.mxu0 0.0
    %7558 = vmatprep.subr.mxu0 0.0
    %7559 = vmatpush2.msra.mxu0 0.0
    %7560 = vmatprep.subr.mxu0 0.0
    %7561 = vmatpush2.msra.mxu0 0.0
    %7562 = vmatprep.subr.mxu0 0.0
    %7563 = vmatpush2.msra.mxu0 0.0
    %7564 = vmatprep.subr.mxu0 0.0
    %7565 = vmatpush2.msra.mxu0 0.0
    %7566 = vmatprep.subr.mxu0 0.0
    %7567 = vmatpush2.msra.mxu0 0.0
    %7568 = vmatprep.subr.mxu0 0.0
    %7569 = vmatpush2.msra.mxu0 0.0
    %7570 = vmatprep.subr.mxu0 0.0
    %7571 = vmatpush2.msra.mxu0 0.0
    %7572 = vmatprep.subr.mxu0 0.0
    %7573 = vmatpush2.msra.mxu0 0.0
    %7574 = vmatprep.subr.mxu0 0.0
    %7575 = vmatpush2.msra.mxu0 0.0
    %7576 = vmatprep.subr.mxu0 0.0
    %7577 = vmatpush2.msra.mxu0 0.0
    %7578 = vmatprep.subr.mxu0 0.0
    %7579 = vmatpush2.msra.mxu0 0.0
    %7580 = vmatprep.subr.mxu0 0.0
    %7581 = vmatpush2.msra.mxu0 0.0
    %7582 = vmatprep.subr.mxu0 0.0
    %7583 = vmatpush2.msra.mxu0 0.0
    %7584 = vmatprep.subr.mxu0 0.0
    %7585 = vmatpush2.msra.mxu0 0.0
    %7586 = vmatprep.mubr.f32.mxu0 0.0
    %7587 = vmatmul.mubr.f32.gmra.mxu0 %v7520
    %v7588 = vpop.f32.mrf.mxu0
    %v7589 = vadd.f32 0.0, %v7588
    %v7590 = vpop.f32.mrf.mxu0
    %7591 = vdwg.mxu0
    %v7594 = vsel %vm350, %v7277, %v7276
    %v7595 = vsel %vm4578, %v7594, 0
    %7597 = vmatprep.subr.mxu0 0.0
    %7598 = vmatpush1.msra.mxu0 0.0
    %7599 = vmatprep.subr.mxu0 0.0
    %7600 = vmatpush1.msra.mxu0 0.0
    %7601 = vmatprep.subr.mxu0 0.0
    %7602 = vmatpush1.msra.mxu0 0.0
    %7603 = vmatprep.subr.mxu0 0.0
    %7604 = vmatpush1.msra.mxu0 0.0
    %7605 = vmatprep.subr.mxu0 0.0
    %7606 = vmatpush1.msra.mxu0 0.0
    %7607 = vmatprep.subr.mxu0 0.0
    %7608 = vmatpush1.msra.mxu0 0.0
    %7609 = vmatprep.subr.mxu0 0.0
    %7610 = vmatpush1.msra.mxu0 0.0
    %7611 = vmatprep.subr.mxu0 0.0
    %7612 = vmatpush1.msra.mxu0 0.0
    %7613 = vmatprep.subr.mxu0 0.0
    %7614 = vmatpush1.msra.mxu0 0.0
    %7615 = vmatprep.subr.mxu0 0.0
    %7616 = vmatpush1.msra.mxu0 0.0
    %7617 = vmatprep.subr.mxu0 0.0
    %7618 = vmatpush1.msra.mxu0 0.0
    %7619 = vmatprep.subr.mxu0 0.0
    %7620 = vmatpush1.msra.mxu0 0.0
    %7621 = vmatprep.subr.mxu0 0.0
    %7622 = vmatpush1.msra.mxu0 0.0
    %7623 = vmatprep.subr.mxu0 0.0
    %7624 = vmatpush1.msra.mxu0 0.0
    %7625 = vmatprep.subr.mxu0 0.0
    %7626 = vmatpush1.msra.mxu0 0.0
    %7627 = vmatprep.subr.mxu0 0.0
    %7628 = vmatpush1.msra.mxu0 %v7288
    %7629 = vmatprep.subr.mxu0 0.0
    %7630 = vmatpush2.msra.mxu0 0.0
    %7631 = vmatprep.subr.mxu0 0.0
    %7632 = vmatpush2.msra.mxu0 0.0
    %7633 = vmatprep.subr.mxu0 0.0
    %7634 = vmatpush2.msra.mxu0 0.0
    %7635 = vmatprep.subr.mxu0 0.0
    %7636 = vmatpush2.msra.mxu0 0.0
    %7637 = vmatprep.subr.mxu0 0.0
    %7638 = vmatpush2.msra.mxu0 0.0
    %7639 = vmatprep.subr.mxu0 0.0
    %7640 = vmatpush2.msra.mxu0 0.0
    %7641 = vmatprep.subr.mxu0 0.0
    %7642 = vmatpush2.msra.mxu0 0.0
    %7643 = vmatprep.subr.mxu0 0.0
    %7644 = vmatpush2.msra.mxu0 0.0
    %7645 = vmatprep.subr.mxu0 0.0
    %7646 = vmatpush2.msra.mxu0 0.0
    %7647 = vmatprep.subr.mxu0 0.0
    %7648 = vmatpush2.msra.mxu0 0.0
    %7649 = vmatprep.subr.mxu0 0.0
    %7650 = vmatpush2.msra.mxu0 0.0
    %7651 = vmatprep.subr.mxu0 0.0
    %7652 = vmatpush2.msra.mxu0 0.0
    %7653 = vmatprep.subr.mxu0 0.0
    %7654 = vmatpush2.msra.mxu0 0.0
    %7655 = vmatprep.subr.mxu0 0.0
    %7656 = vmatpush2.msra.mxu0 0.0
    %7657 = vmatprep.subr.mxu0 0.0
    %7658 = vmatpush2.msra.mxu0 0.0
    %7659 = vmatprep.subr.mxu0 0.0
    %7660 = vmatpush2.msra.mxu0 0.0
    %7661 = vmatprep.mubr.f32.mxu0 0.0
    %7662 = vmatmul.mubr.f32.gmra.mxu0 %v7595
    %v7663 = vpop.f32.mrf.mxu0
    %v7664 = vadd.f32 0.0, %v7663
    %v7665 = vpop.f32.mrf.mxu0
    %7666 = vdwg.mxu0
    %v7669 = vsel %vm350, %v7279, %v7278
    %v7670 = vsel %vm4578, %v7669, 0
    %7672 = vmatprep.subr.mxu0 0.0
    %7673 = vmatpush1.msra.mxu0 0.0
    %7674 = vmatprep.subr.mxu0 0.0
    %7675 = vmatpush1.msra.mxu0 0.0
    %7676 = vmatprep.subr.mxu0 0.0
    %7677 = vmatpush1.msra.mxu0 0.0
    %7678 = vmatprep.subr.mxu0 0.0
    %7679 = vmatpush1.msra.mxu0 0.0
    %7680 = vmatprep.subr.mxu0 0.0
    %7681 = vmatpush1.msra.mxu0 0.0
    %7682 = vmatprep.subr.mxu0 0.0
    %7683 = vmatpush1.msra.mxu0 0.0
    %7684 = vmatprep.subr.mxu0 0.0
    %7685 = vmatpush1.msra.mxu0 0.0
    %7686 = vmatprep.subr.mxu0 0.0
    %7687 = vmatpush1.msra.mxu0 0.0
    %7688 = vmatprep.subr.mxu0 0.0
    %7689 = vmatpush1.msra.mxu0 0.0
    %7690 = vmatprep.subr.mxu0 0.0
    %7691 = vmatpush1.msra.mxu0 0.0
    %7692 = vmatprep.subr.mxu0 0.0
    %7693 = vmatpush1.msra.mxu0 0.0
    %7694 = vmatprep.subr.mxu0 0.0
    %7695 = vmatpush1.msra.mxu0 0.0
    %7696 = vmatprep.subr.mxu0 0.0
    %7697 = vmatpush1.msra.mxu0 0.0
    %7698 = vmatprep.subr.mxu0 0.0
    %7699 = vmatpush1.msra.mxu0 0.0
    %7700 = vmatprep.subr.mxu0 0.0
    %7701 = vmatpush1.msra.mxu0 0.0
    %7702 = vmatprep.subr.mxu0 0.0
    %7703 = vmatpush1.msra.mxu0 %v7289
    %7704 = vmatprep.subr.mxu0 0.0
    %7705 = vmatpush2.msra.mxu0 0.0
    %7706 = vmatprep.subr.mxu0 0.0
    %7707 = vmatpush2.msra.mxu0 0.0
    %7708 = vmatprep.subr.mxu0 0.0
    %7709 = vmatpush2.msra.mxu0 0.0
    %7710 = vmatprep.subr.mxu0 0.0
    %7711 = vmatpush2.msra.mxu0 0.0
    %7712 = vmatprep.subr.mxu0 0.0
    %7713 = vmatpush2.msra.mxu0 0.0
    %7714 = vmatprep.subr.mxu0 0.0
    %7715 = vmatpush2.msra.mxu0 0.0
    %7716 = vmatprep.subr.mxu0 0.0
    %7717 = vmatpush2.msra.mxu0 0.0
    %7718 = vmatprep.subr.mxu0 0.0
    %7719 = vmatpush2.msra.mxu0 0.0
    %7720 = vmatprep.subr.mxu0 0.0
    %7721 = vmatpush2.msra.mxu0 0.0
    %7722 = vmatprep.subr.mxu0 0.0
    %7723 = vmatpush2.msra.mxu0 0.0
    %7724 = vmatprep.subr.mxu0 0.0
    %7725 = vmatpush2.msra.mxu0 0.0
    %7726 = vmatprep.subr.mxu0 0.0
    %7727 = vmatpush2.msra.mxu0 0.0
    %7728 = vmatprep.subr.mxu0 0.0
    %7729 = vmatpush2.msra.mxu0 0.0
    %7730 = vmatprep.subr.mxu0 0.0
    %7731 = vmatpush2.msra.mxu0 0.0
    %7732 = vmatprep.subr.mxu0 0.0
    %7733 = vmatpush2.msra.mxu0 0.0
    %7734 = vmatprep.subr.mxu0 0.0
    %7735 = vmatpush2.msra.mxu0 0.0
    %7736 = vmatprep.mubr.f32.mxu0 0.0
    %7737 = vmatmul.mubr.f32.gmra.mxu0 %v7670
    %v7738 = vpop.f32.mrf.mxu0
    %v7739 = vadd.f32 0.0, %v7738
    %v7740 = vpop.f32.mrf.mxu0
    %7741 = vdwg.mxu0
    %v7744 = vsel %vm350, %v7281, %v7280
    %v7745 = vsel %vm4578, %v7744, 0
    %7747 = vmatprep.subr.mxu0 0.0
    %7748 = vmatpush1.msra.mxu0 0.0
    %7749 = vmatprep.subr.mxu0 0.0
    %7750 = vmatpush1.msra.mxu0 0.0
    %7751 = vmatprep.subr.mxu0 0.0
    %7752 = vmatpush1.msra.mxu0 0.0
    %7753 = vmatprep.subr.mxu0 0.0
    %7754 = vmatpush1.msra.mxu0 0.0
    %7755 = vmatprep.subr.mxu0 0.0
    %7756 = vmatpush1.msra.mxu0 0.0
    %7757 = vmatprep.subr.mxu0 0.0
    %7758 = vmatpush1.msra.mxu0 0.0
    %7759 = vmatprep.subr.mxu0 0.0
    %7760 = vmatpush1.msra.mxu0 0.0
    %7761 = vmatprep.subr.mxu0 0.0
    %7762 = vmatpush1.msra.mxu0 0.0
    %7763 = vmatprep.subr.mxu0 0.0
    %7764 = vmatpush1.msra.mxu0 0.0
    %7765 = vmatprep.subr.mxu0 0.0
    %7766 = vmatpush1.msra.mxu0 0.0
    %7767 = vmatprep.subr.mxu0 0.0
    %7768 = vmatpush1.msra.mxu0 0.0
    %7769 = vmatprep.subr.mxu0 0.0
    %7770 = vmatpush1.msra.mxu0 0.0
    %7771 = vmatprep.subr.mxu0 0.0
    %7772 = vmatpush1.msra.mxu0 0.0
    %7773 = vmatprep.subr.mxu0 0.0
    %7774 = vmatpush1.msra.mxu0 0.0
    %7775 = vmatprep.subr.mxu0 0.0
    %7776 = vmatpush1.msra.mxu0 0.0
    %7777 = vmatprep.subr.mxu0 0.0
    %7778 = vmatpush1.msra.mxu0 %v7290
    %7779 = vmatprep.subr.mxu0 0.0
    %7780 = vmatpush2.msra.mxu0 0.0
    %7781 = vmatprep.subr.mxu0 0.0
    %7782 = vmatpush2.msra.mxu0 0.0
    %7783 = vmatprep.subr.mxu0 0.0
    %7784 = vmatpush2.msra.mxu0 0.0
    %7785 = vmatprep.subr.mxu0 0.0
    %7786 = vmatpush2.msra.mxu0 0.0
    %7787 = vmatprep.subr.mxu0 0.0
    %7788 = vmatpush2.msra.mxu0 0.0
    %7789 = vmatprep.subr.mxu0 0.0
    %7790 = vmatpush2.msra.mxu0 0.0
    %7791 = vmatprep.subr.mxu0 0.0
    %7792 = vmatpush2.msra.mxu0 0.0
    %7793 = vmatprep.subr.mxu0 0.0
    %7794 = vmatpush2.msra.mxu0 0.0
    %7795 = vmatprep.subr.mxu0 0.0
    %7796 = vmatpush2.msra.mxu0 0.0
    %7797 = vmatprep.subr.mxu0 0.0
    %7798 = vmatpush2.msra.mxu0 0.0
    %7799 = vmatprep.subr.mxu0 0.0
    %7800 = vmatpush2.msra.mxu0 0.0
    %7801 = vmatprep.subr.mxu0 0.0
    %7802 = vmatpush2.msra.mxu0 0.0
    %7803 = vmatprep.subr.mxu0 0.0
    %7804 = vmatpush2.msra.mxu0 0.0
    %7805 = vmatprep.subr.mxu0 0.0
    %7806 = vmatpush2.msra.mxu0 0.0
    %7807 = vmatprep.subr.mxu0 0.0
    %7808 = vmatpush2.msra.mxu0 0.0
    %7809 = vmatprep.subr.mxu0 0.0
    %7810 = vmatpush2.msra.mxu0 0.0
    %7811 = vmatprep.mubr.f32.mxu0 0.0
    %7812 = vmatmul.mubr.f32.gmra.mxu0 %v7745
    %v7813 = vpop.f32.mrf.mxu0
    %v7814 = vadd.f32 0.0, %v7813
    %v7815 = vpop.f32.mrf.mxu0
    %7816 = vdwg.mxu0
    %v7819 = vsel %vm350, %v7283, %v7282
    %v7820 = vsel %vm4578, %v7819, 0
    %7822 = vmatprep.subr.mxu0 0.0
    %7823 = vmatpush1.msra.mxu0 0.0
    %7824 = vmatprep.subr.mxu0 0.0
    %7825 = vmatpush1.msra.mxu0 0.0
    %7826 = vmatprep.subr.mxu0 0.0
    %7827 = vmatpush1.msra.mxu0 0.0
    %7828 = vmatprep.subr.mxu0 0.0
    %7829 = vmatpush1.msra.mxu0 0.0
    %7830 = vmatprep.subr.mxu0 0.0
    %7831 = vmatpush1.msra.mxu0 0.0
    %7832 = vmatprep.subr.mxu0 0.0
    %7833 = vmatpush1.msra.mxu0 0.0
    %7834 = vmatprep.subr.mxu0 0.0
    %7835 = vmatpush1.msra.mxu0 0.0
    %7836 = vmatprep.subr.mxu0 0.0
    %7837 = vmatpush1.msra.mxu0 0.0
    %7838 = vmatprep.subr.mxu0 0.0
    %7839 = vmatpush1.msra.mxu0 0.0
    %7840 = vmatprep.subr.mxu0 0.0
    %7841 = vmatpush1.msra.mxu0 0.0
    %7842 = vmatprep.subr.mxu0 0.0
    %7843 = vmatpush1.msra.mxu0 0.0
    %7844 = vmatprep.subr.mxu0 0.0
    %7845 = vmatpush1.msra.mxu0 0.0
    %7846 = vmatprep.subr.mxu0 0.0
    %7847 = vmatpush1.msra.mxu0 0.0
    %7848 = vmatprep.subr.mxu0 0.0
    %7849 = vmatpush1.msra.mxu0 0.0
    %7850 = vmatprep.subr.mxu0 0.0
    %7851 = vmatpush1.msra.mxu0 0.0
    %7852 = vmatprep.subr.mxu0 0.0
    %7853 = vmatpush1.msra.mxu0 %v7291
    %7854 = vmatprep.subr.mxu0 0.0
    %7855 = vmatpush2.msra.mxu0 0.0
    %7856 = vmatprep.subr.mxu0 0.0
    %7857 = vmatpush2.msra.mxu0 0.0
    %7858 = vmatprep.subr.mxu0 0.0
    %7859 = vmatpush2.msra.mxu0 0.0
    %7860 = vmatprep.subr.mxu0 0.0
    %7861 = vmatpush2.msra.mxu0 0.0
    %7862 = vmatprep.subr.mxu0 0.0
    %7863 = vmatpush2.msra.mxu0 0.0
    %7864 = vmatprep.subr.mxu0 0.0
    %7865 = vmatpush2.msra.mxu0 0.0
    %7866 = vmatprep.subr.mxu0 0.0
    %7867 = vmatpush2.msra.mxu0 0.0
    %7868 = vmatprep.subr.mxu0 0.0
    %7869 = vmatpush2.msra.mxu0 0.0
    %7870 = vmatprep.subr.mxu0 0.0
    %7871 = vmatpush2.msra.mxu0 0.0
    %7872 = vmatprep.subr.mxu0 0.0
    %7873 = vmatpush2.msra.mxu0 0.0
    %7874 = vmatprep.subr.mxu0 0.0
    %7875 = vmatpush2.msra.mxu0 0.0
    %7876 = vmatprep.subr.mxu0 0.0
    %7877 = vmatpush2.msra.mxu0 0.0
    %7878 = vmatprep.subr.mxu0 0.0
    %7879 = vmatpush2.msra.mxu0 0.0
    %7880 = vmatprep.subr.mxu0 0.0
    %7881 = vmatpush2.msra.mxu0 0.0
    %7882 = vmatprep.subr.mxu0 0.0
    %7883 = vmatpush2.msra.mxu0 0.0
    %7884 = vmatprep.subr.mxu0 0.0
    %7885 = vmatpush2.msra.mxu0 0.0
    %7886 = vmatprep.mubr.f32.mxu0 0.0
    %7887 = vmatmul.mubr.f32.gmra.mxu0 %v7820
    %v7888 = vpop.f32.mrf.mxu0
    %v7889 = vadd.f32 0.0, %v7888
    %v7890 = vpop.f32.mrf.mxu0
    %7891 = vdwg.mxu0
    %vm7892 = vcmask 517120
    %v7893 = vsel %vm7892, %v7364, 0.0
    %v7894 = vsel %vm7892, %v7439, 0.0
    %v7895 = vadd.f32 %v7893, %v7894
    %v7896 = vsel %vm7892, %v7514, 0.0
    %v7897 = vadd.f32 %v7895, %v7896
    %v7898 = vsel %vm7892, %v7589, 0.0
    %v7899 = vadd.f32 %v7897, %v7898
    %v7900 = vsel %vm7892, %v7664, 0.0
    %v7901 = vadd.f32 %v7899, %v7900
    %v7902 = vsel %vm7892, %v7739, 0.0
    %v7903 = vadd.f32 %v7901, %v7902
    %v7904 = vsel %vm7892, %v7814, 0.0
    %v7905 = vadd.f32 %v7903, %v7904
    %v7906 = vsel %vm7892, %v7889, 0.0
    %v7907 = vadd.f32 %v7905, %v7906
    %v7908 = vld [vmem:[%s10] sm:$0x1]
    %v7910 = vlaneseq
    %v7911 = vshrl.u32 %v7910, 7
    %v7912 = vsub.s32 0, %v7911
    %v7913 = vrot.slane %v7908, %v7912
    %v7915 = vadd.f32 %v7907, %v7913
    %v7916 = vld [vmem:[%s11] sm:$0xff]
    %v7917 = vld [vmem:[%s11 + $0x8] sm:$0xff]
    %v7918 = vld [vmem:[%s11 + $0x10] sm:$0xff]
    %v7919 = vld [vmem:[%s11 + $0x18] sm:$0xff]
    %v7920 = vld [vmem:[%s11 + $0x20] sm:$0xff]
    %v7921 = vld [vmem:[%s11 + $0x28] sm:$0xff]
    %v7922 = vld [vmem:[%s11 + $0x30] sm:$0xff]
    %v7923 = vld [vmem:[%s11 + $0x38] sm:$0xff]
    %v7924 = vld [vmem:[%s12] sm:$0x1]
    %v7926 = vlaneseq
    %v7927 = vshrl.u32 %v7926, 7
    %v7928 = vsub.s32 0, %v7927
    %v7929 = vrot.slane %v7924, %v7928
    %v7932 = vsel %vm200, %v7915, 0
    %7934 = vmatprep.subr.mxu0 0.0
    %7935 = vmatpush1.msra.mxu0 0.0
    %7936 = vmatprep.subr.mxu0 0.0
    %7937 = vmatpush1.msra.mxu0 0.0
    %7938 = vmatprep.subr.mxu0 0.0
    %7939 = vmatpush1.msra.mxu0 0.0
    %7940 = vmatprep.subr.mxu0 0.0
    %7941 = vmatpush1.msra.mxu0 0.0
    %7942 = vmatprep.subr.mxu0 0.0
    %7943 = vmatpush1.msra.mxu0 0.0
    %7944 = vmatprep.subr.mxu0 0.0
    %7945 = vmatpush1.msra.mxu0 0.0
    %7946 = vmatprep.subr.mxu0 0.0
    %7947 = vmatpush1.msra.mxu0 0.0
    %7948 = vmatprep.subr.mxu0 0.0
    %7949 = vmatpush1.msra.mxu0 0.0
    %7950 = vmatprep.subr.mxu0 0.0
    %7951 = vmatpush1.msra.mxu0 %v7923
    %7952 = vmatprep.subr.mxu0 0.0
    %7953 = vmatpush1.msra.mxu0 %v7922
    %7954 = vmatprep.subr.mxu0 0.0
    %7955 = vmatpush1.msra.mxu0 %v7921
    %7956 = vmatprep.subr.mxu0 0.0
    %7957 = vmatpush1.msra.mxu0 %v7920
    %7958 = vmatprep.subr.mxu0 0.0
    %7959 = vmatpush1.msra.mxu0 %v7919
    %7960 = vmatprep.subr.mxu0 0.0
    %7961 = vmatpush1.msra.mxu0 %v7918
    %7962 = vmatprep.subr.mxu0 0.0
    %7963 = vmatpush1.msra.mxu0 %v7917
    %7964 = vmatprep.subr.mxu0 0.0
    %7965 = vmatpush1.msra.mxu0 %v7916
    %7966 = vmatprep.subr.mxu0 0.0
    %7967 = vmatpush2.msra.mxu0 0.0
    %7968 = vmatprep.subr.mxu0 0.0
    %7969 = vmatpush2.msra.mxu0 0.0
    %7970 = vmatprep.subr.mxu0 0.0
    %7971 = vmatpush2.msra.mxu0 0.0
    %7972 = vmatprep.subr.mxu0 0.0
    %7973 = vmatpush2.msra.mxu0 0.0
    %7974 = vmatprep.subr.mxu0 0.0
    %7975 = vmatpush2.msra.mxu0 0.0
    %7976 = vmatprep.subr.mxu0 0.0
    %7977 = vmatpush2.msra.mxu0 0.0
    %7978 = vmatprep.subr.mxu0 0.0
    %7979 = vmatpush2.msra.mxu0 0.0
    %7980 = vmatprep.subr.mxu0 0.0
    %7981 = vmatpush2.msra.mxu0 0.0
    %7982 = vmatprep.subr.mxu0 0.0
    %7983 = vmatpush2.msra.mxu0 0.0
    %7984 = vmatprep.subr.mxu0 0.0
    %7985 = vmatpush2.msra.mxu0 0.0
    %7986 = vmatprep.subr.mxu0 0.0
    %7987 = vmatpush2.msra.mxu0 0.0
    %7988 = vmatprep.subr.mxu0 0.0
    %7989 = vmatpush2.msra.mxu0 0.0
    %7990 = vmatprep.subr.mxu0 0.0
    %7991 = vmatpush2.msra.mxu0 0.0
    %7992 = vmatprep.subr.mxu0 0.0
    %7993 = vmatpush2.msra.mxu0 0.0
    %7994 = vmatprep.subr.mxu0 0.0
    %7995 = vmatpush2.msra.mxu0 0.0
    %7996 = vmatprep.subr.mxu0 0.0
    %7997 = vmatpush2.msra.mxu0 0.0
    %7998 = vmatprep.mubr.f32.mxu0 0.0
    %7999 = vmatmul.mubr.f32.gmra.mxu0 %v7932
    %v8000 = vpop.f32.mrf.mxu0
    %v8001 = vadd.f32 %v7929, %v8000
    %v8002 = vpop.f32.mrf.mxu0
    %8003 = vdwg.mxu0
    %v8004 = vmax.f32 %v8001, 0.0
    %8005 = vst [vmem:[#allocation3] sm:$0x3] %v8004
    // Predicated region
    $region54: #{tpu_custom_call.1} parent=1 // pred_check
      _
    $region55: #{tpu_custom_call.1} parent=1 // pred_check_branch
      %8007 = sbr.rel (0) target = $region57
    $region56: #{tpu_custom_call.1} parent=1 // pred_region
      %s8009 = ssub.s32 32, 32
      %8010 = vsyncadd [#allocation4], %s8009
      %s8012 = sshll.u32 [#allocation3], 4
      %s8013 = int_to_ptr.vmem [resolvable:$true] %s8012
      %8015 = dma.vmem_to_hbm [thread:$0]  %s8013, 32, %s13, [#allocation4]
    $region57: #{tpu_custom_call.1} parent=1 // pred_fallthru
      _
    // Predicated region
    $region58: #{tpu_custom_call.1} parent=1 // pred_check
      _
    $region59: #{tpu_custom_call.1} parent=1 // pred_check_branch
      %8017 = sbr.rel (0) target = $region61
    $region60: #{tpu_custom_call.1} parent=1 // pred_region
      %8018 = dma.done [#allocation4], 32
    $region61: #{tpu_custom_call.1} parent=1 // pred_fallthru
      _
    %8019 = vsyncpa [#allocation4], 1

</llo_original>
